<compile_context>
chip_gen: v7x
topology: tpu7x:2x2x1
jax: 0.10.0
libtpu: 0.0.40
codegen_flags: <defaults>
</compile_context>

<pallas_src>
import functools
import math

import jax
import jax.numpy as jnp
from jax import lax
from jax.experimental import pallas as pl
from jax.experimental.pallas import tpu as pltpu


# ----------------------------- kernels ------------------------------------


def _pair_score(head, re_rel, im_rel, tail, gamma):
    """Shared math: complex rotation of head/tail halves, |.| per lane, row sum."""
    half = head.shape[-1] // 2

    # Lane-axis slices: free when (D/2) % 128 == 0, else a cheap relayout.
    re_head, im_head = head[:, :half], head[:, half:]
    re_tail, im_tail = tail[:, :half], tail[:, half:]
    re_rel_head, re_rel_tail = re_rel[:, :half], re_rel[:, half:]
    im_rel_head, im_rel_tail = im_rel[:, :half], im_rel[:, half:]

    head_re = re_head * re_rel_head - im_head * im_rel_head
    head_im = re_head * im_rel_head + im_head * re_rel_head
    tail_re = re_tail * re_rel_tail - im_tail * im_rel_tail
    tail_im = re_tail * im_rel_tail + im_tail * re_rel_tail

    re_score = head_re - tail_re
    im_score = head_im - tail_im

    s2 = re_score * re_score + im_score * im_score
    # sqrt(s2) == s2 * rsqrt(s2); rsqrt runs on the (otherwise idle) EUP slot.
    score = s2 * lax.rsqrt(jnp.maximum(s2, 1e-30))

    # gamma - score.sum(-1); keepdims keeps the natural (sublane, lane) layout.
    return gamma - jnp.sum(score, axis=-1, keepdims=True)


def _pair_rotate_kernel(head_ref, rel_ref, tail_ref, out_ref, *, gamma, inv_scale):
    """One (block_e, D) tile of edges; in-kernel sin/cos of the relation phase."""
    # Upcast right after load so bf16 inputs work on all chips (v5e has no
    # bf16 VPU/EUP); no-op for f32.
    head = head_ref[...].astype(jnp.float32)
    rel = rel_ref[...].astype(jnp.float32)
    tail = tail_ref[...].astype(jnp.float32)

    # phase_rel = rel / (emb_init / pi) == rel * (pi / emb_init)
    phase = rel * inv_scale
    re_rel = jnp.cos(phase)
    im_rel = jnp.sin(phase)

    out_ref[...] = _pair_score(head, re_rel, im_rel, tail, gamma).astype(out_ref.dtype)


def _pair_rotate_trig_kernel(head_ref, cos_ref, sin_ref, tail_ref, out_ref, *, gamma):
    """Same score, but cos/sin of the relation phase are precomputed inputs."""
    head = head_ref[...].astype(jnp.float32)
    re_rel = cos_ref[...].astype(jnp.float32)
    im_rel = sin_ref[...].astype(jnp.float32)
    tail = tail_ref[...].astype(jnp.float32)
    out_ref[...] = _pair_score(head, re_rel, im_rel, tail, gamma).astype(out_ref.dtype)


# --------------------------- tiling / launch -------------------------------


def _vmem_budgets():
    """(input-tile budget, vmem_limit_bytes) per TPU generation."""
    try:
        cap = int(pltpu.get_tpu_info().vmem_capacity_bytes)
    except Exception:  # be conservative if the query is unavailable
        cap = 64 * 1024 * 1024
    if cap >= 100 * 1024 * 1024:  # v5e / v6e: 128 MiB physical VMEM
        return 64 * 1024 * 1024, 96 * 1024 * 1024
    return 24 * 1024 * 1024, 40 * 1024 * 1024  # v7x: 64 MiB per TensorCore


def _choose_block_e(E, D, itemsize, n_inputs, block_e, input_budget):
    """Largest 128-multiple block_e whose double-buffered input tiles plus the
    f32 working set fit the budget, then capped so the grid has several steps."""
    max_rows = pl.cdiv(E, 128) * 128
    if block_e is not None:
        block_e = max(128, (int(block_e) // 128) * 128)
        return min(block_e, max_rows)

    # 2 pipeline buffers x n_inputs arrays at input width + n_inputs f32
    # upcast working copies for the tile currently being computed.
    bytes_per_row = 2 * n_inputs * D * itemsize + n_inputs * D * 4
    block_e = max(128, min(8192, (input_budget // bytes_per_row) // 128 * 128))

    # Keep the grid multi-step: aim for ~8 blocks (v7x megacore split + DMA
    # overlap) while preferring >=512-row tiles; never a 1-step grid if the
    # problem is bigger than one 128-row tile.
    min_blocks = min(8, max(1, E // 512))
    min_blocks = max(min_blocks, min(2, pl.cdiv(E, 128)))
    cap = max(128, (E // min_blocks) // 128 * 128)
    return min(block_e, cap, max_rows)


def _launch(kernel, inputs, *, block_e, vmem_limit, cost):
    E, D = inputs[0].shape
    num_blocks = pl.cdiv(E, block_e)
    emb_spec = pl.BlockSpec((block_e, D), lambda i: (i, 0))

    out = pl.pallas_call(
        kernel,
        out_shape=jax.ShapeDtypeStruct((E, 1), jnp.float32),
        grid_spec=pltpu.PrefetchScalarGridSpec(
            num_scalar_prefetch=0,
            grid=(num_blocks,),
            in_specs=[emb_spec] * len(inputs),
            out_specs=pl.BlockSpec((block_e, 1), lambda i: (i, 0)),
        ),
        compiler_params=pltpu.CompilerParams(
            dimension_semantics=("parallel",),
            vmem_limit_bytes=vmem_limit,
        ),
        cost_estimate=cost,
    )(*inputs)
    return out[:, 0]


# ----------------------------- public API ----------------------------------


def pair_rotate_score(head_emb, rel_emb, tail_emb, *, gamma, emb_init, block_e=None):
    """Equivalent of PairRotatEScore.edge_func over E edges.

    head_emb, rel_emb, tail_emb: (E, D) float32 or bfloat16
    returns: (E,) float32 per-edge score
    """
    E, D = head_emb.shape
    assert rel_emb.shape == (E, D) and tail_emb.shape == (E, D)
    assert D % 2 == 0
    itemsize = jnp.dtype(head_emb.dtype).itemsize

    input_budget, vmem_limit = _vmem_budgets()
    block_e = _choose_block_e(E, D, itemsize, 3, block_e, input_budget)

    kernel = functools.partial(
        _pair_rotate_kernel, gamma=float(gamma), inv_scale=float(math.pi / emb_init)
    )
    cost = pl.CostEstimate(
        flops=10 * E * D,
        transcendentals=2 * E * D + E * (D // 2),
        bytes_accessed=3 * E * D * itemsize + E * 4,
    )
    return _launch(kernel, (head_emb, rel_emb, tail_emb),
                   block_e=block_e, vmem_limit=vmem_limit, cost=cost)


def pair_rotate_score_from_trig(head_emb, rel_cos, rel_sin, tail_emb, *, gamma,
                                block_e=None):
    """Same score with precomputed cos/sin of the relation phase (skips all
    in-kernel trig -- the dominant cost on v7x).  Callers should gather
    rel_cos/rel_sin per *unique* relation from a small precomputed table."""
    E, D = head_emb.shape
    assert rel_cos.shape == (E, D) and rel_sin.shape == (E, D)
    assert tail_emb.shape == (E, D) and D % 2 == 0
    itemsize = jnp.dtype(head_emb.dtype).itemsize

    input_budget, vmem_limit = _vmem_budgets()
    block_e = _choose_block_e(E, D, itemsize, 4, block_e, input_budget)

    kernel = functools.partial(_pair_rotate_trig_kernel, gamma=float(gamma))
    cost = pl.CostEstimate(
        flops=10 * E * D,
        transcendentals=E * (D // 2),
        bytes_accessed=4 * E * D * itemsize + E * 4,
    )
    return _launch(kernel, (head_emb, rel_cos, rel_sin, tail_emb),
                   block_e=block_e, vmem_limit=vmem_limit, cost=cost)


# ----------------------------- reference -----------------------------------


def _reference(head, rel, tail, gamma, emb_init):
    half = head.shape[-1] // 2
    re_h, im_h = head[:, :half], head[:, half:]
    re_t, im_t = tail[:, :half], tail[:, half:]
    phase = rel / (emb_init / math.pi)
    re_r, im_r = jnp.cos(phase), jnp.sin(phase)
    re_rh, re_rt = re_r[:, :half], re_r[:, half:]
    im_rh, im_rt = im_r[:, :half], im_r[:, half:]
    h_re = re_h * re_rh - im_h * im_rh
    h_im = re_h * im_rh + im_h * re_rh
    t_re = re_t * re_rt - im_t * im_rt
    t_im = re_t * im_rt + im_t * re_rt
    score = jnp.sqrt((h_re - t_re) ** 2 + (h_im - t_im) ** 2)
    return gamma - jnp.sum(score, axis=-1)


if __name__ == "__main__":
    # Small RotatE-consistent shapes: E edges, hidden dim D (real+imag halves).
    # D/2 is 128-aligned (relayout-free re/im split); E is NOT a multiple of
    # 128 so the ragged last-block path (no input padding) is exercised.
    E, D = 300, 256
    gamma = 12.0
    emb_init = (gamma + 2.0) / D  # standard dglke emb_init = (gamma + eps) / dim

    key = jax.random.PRNGKey(0)
    k1, k2, k3 = jax.random.split(key, 3)
    head = jax.random.normal(k1, (E, D), dtype=jnp.float32)
    rel = jax.random.uniform(k2, (E, D), dtype=jnp.float32,
                             minval=-emb_init, maxval=emb_init)
    tail = jax.random.normal(k3, (E, D), dtype=jnp.float32)

    ref = _reference(head, rel, tail, gamma, emb_init)

    # 1) Auto-sized tile (multi-step ragged grid even at this toy size).
    out = jax.block_until_ready(
        pair_rotate_score(head, rel, tail, gamma=gamma, emb_init=emb_init))
    assert out.shape == (E,) and out.dtype == jnp.float32
    assert jnp.allclose(out, ref, atol=1e-4, rtol=1e-4)

    # 2) Explicit small tile: multi-step grid + ragged final block, no padding.
    out_small = jax.block_until_ready(
        pair_rotate_score(head, rel, tail, gamma=gamma, emb_init=emb_init,
                          block_e=128))
    assert jnp.allclose(out_small, ref, atol=1e-4, rtol=1e-4)

    # 3) Precomputed-trig path (the v7x lever): cos/sin supplied by the caller.
    phase = rel * (math.pi / emb_init)
    out_trig = jax.block_until_ready(
        pair_rotate_score_from_trig(head, jnp.cos(phase), jnp.sin(phase), tail,
                                    gamma=gamma))
    assert jnp.allclose(out_trig, ref, atol=1e-4, rtol=1e-4)

    # 4) bf16 inputs (halves HBM traffic on v5e/v6e); kernel upcasts to f32,
    #    output stays f32.
    head_b, rel_b, tail_b = (x.astype(jnp.bfloat16) for x in (head, rel, tail))
    ref_b = _reference(head_b.astype(jnp.float32), rel_b.astype(jnp.float32),
                       tail_b.astype(jnp.float32), gamma, emb_init)
    out_b = jax.block_until_ready(
        pair_rotate_score(head_b, rel_b, tail_b, gamma=gamma, emb_init=emb_init))
    assert out_b.dtype == jnp.float32
    assert jnp.allclose(out_b, ref_b, atol=1e-3, rtol=1e-3)

    print("KERNEL_OK")
</pallas_src>

<mosaic_0001>
module attributes {stable_mosaic.version = 11 : i64} {
  func.func @_pair_rotate_kernel(%arg0: i32, %arg1: memref<128x256xf32, #tpu.memory_space<vmem>>, %arg2: memref<128x256xf32, #tpu.memory_space<vmem>>, %arg3: memref<128x256xf32, #tpu.memory_space<vmem>>, %arg4: memref<128x1xf32, #tpu.memory_space<vmem>>) attributes {dimension_semantics = [#tpu.dimension_semantics<parallel>], iteration_bounds = array<i64: 3>, scalar_prefetch = 0 : i64, scratch_operands = 0 : i64, tpu.core_type = #tpu.core_type<tc>, window_params = [{transform_indices = @transform_0, window_bounds = array<i64: 128, 256>}, {transform_indices = @transform_1, window_bounds = array<i64: 128, 256>}, {transform_indices = @transform_2, window_bounds = array<i64: 128, 256>}, {transform_indices = @transform_3, window_bounds = array<i64: 128, 1>}]} {
    %c0 = arith.constant 0 : index
    %c0_0 = arith.constant 0 : index
    %0 = vector.load %arg1[%c0, %c0_0] : memref<128x256xf32, #tpu.memory_space<vmem>>, vector<128x256xf32>
    %c0_1 = arith.constant 0 : index
    %c0_2 = arith.constant 0 : index
    %1 = vector.load %arg2[%c0_1, %c0_2] : memref<128x256xf32, #tpu.memory_space<vmem>>, vector<128x256xf32>
    %c0_3 = arith.constant 0 : index
    %c0_4 = arith.constant 0 : index
    %2 = vector.load %arg3[%c0_3, %c0_4] : memref<128x256xf32, #tpu.memory_space<vmem>>, vector<128x256xf32>
    %cst = arith.constant 57.4462662 : f32
    %3 = vector.broadcast %cst : f32 to vector<128x256xf32>
    %4 = arith.mulf %1, %3 : vector<128x256xf32>
    %5 = math.cos %4 : vector<128x256xf32>
    %6 = math.sin %4 : vector<128x256xf32>
    %7 = vector.extract_strided_slice %0 {offsets = [0, 0], sizes = [128, 128], strides = [1, 1]} : vector<128x256xf32> to vector<128x128xf32>
    %8 = vector.extract_strided_slice %0 {offsets = [0, 128], sizes = [128, 128], strides = [1, 1]} : vector<128x256xf32> to vector<128x128xf32>
    %9 = vector.extract_strided_slice %2 {offsets = [0, 0], sizes = [128, 128], strides = [1, 1]} : vector<128x256xf32> to vector<128x128xf32>
    %10 = vector.extract_strided_slice %2 {offsets = [0, 128], sizes = [128, 128], strides = [1, 1]} : vector<128x256xf32> to vector<128x128xf32>
    %11 = vector.extract_strided_slice %5 {offsets = [0, 0], sizes = [128, 128], strides = [1, 1]} : vector<128x256xf32> to vector<128x128xf32>
    %12 = vector.extract_strided_slice %5 {offsets = [0, 128], sizes = [128, 128], strides = [1, 1]} : vector<128x256xf32> to vector<128x128xf32>
    %13 = vector.extract_strided_slice %6 {offsets = [0, 0], sizes = [128, 128], strides = [1, 1]} : vector<128x256xf32> to vector<128x128xf32>
    %14 = vector.extract_strided_slice %6 {offsets = [0, 128], sizes = [128, 128], strides = [1, 1]} : vector<128x256xf32> to vector<128x128xf32>
    %15 = arith.mulf %7, %11 : vector<128x128xf32>
    %16 = arith.mulf %8, %13 : vector<128x128xf32>
    %17 = arith.subf %15, %16 : vector<128x128xf32>
    %18 = arith.mulf %7, %13 : vector<128x128xf32>
    %19 = arith.mulf %8, %11 : vector<128x128xf32>
    %20 = arith.addf %18, %19 : vector<128x128xf32>
    %21 = arith.mulf %9, %12 : vector<128x128xf32>
    %22 = arith.mulf %10, %14 : vector<128x128xf32>
    %23 = arith.subf %21, %22 : vector<128x128xf32>
    %24 = arith.mulf %9, %14 : vector<128x128xf32>
    %25 = arith.mulf %10, %12 : vector<128x128xf32>
    %26 = arith.addf %24, %25 : vector<128x128xf32>
    %27 = arith.subf %17, %23 : vector<128x128xf32>
    %28 = arith.subf %20, %26 : vector<128x128xf32>
    %29 = arith.mulf %27, %27 : vector<128x128xf32>
    %30 = arith.mulf %28, %28 : vector<128x128xf32>
    %31 = arith.addf %29, %30 : vector<128x128xf32>
    %cst_5 = arith.constant 1.000000e-30 : f32
    %32 = vector.broadcast %cst_5 : f32 to vector<128x128xf32>
    %33 = arith.maximumf %31, %32 : vector<128x128xf32>
    %34 = math.rsqrt %33 : vector<128x128xf32>
    %35 = arith.mulf %31, %34 : vector<128x128xf32>
    %cst_6 = arith.constant dense<0.000000e+00> : vector<128xf32>
    %36 = vector.multi_reduction <add>, %35, %cst_6 [1] : vector<128x128xf32> to vector<128xf32>
    %37 = vector.shape_cast %36 : vector<128xf32> to vector<128x1xf32>
    %cst_7 = arith.constant 1.200000e+01 : f32
    %38 = vector.broadcast %cst_7 : f32 to vector<128x1xf32>
    %39 = arith.subf %38, %37 : vector<128x1xf32>
    %c0_8 = arith.constant 0 : index
    %c0_9 = arith.constant 0 : index
    %40 = vector.load %arg4[%c0_8, %c0_9] : memref<128x1xf32, #tpu.memory_space<vmem>>, vector<128x1xf32>
    tpu.vector_store %arg4[%c0_8, %c0_9], %39 {strides = array<i32>} : memref<128x1xf32, #tpu.memory_space<vmem>>, vector<128x1xf32>,
    return
  }
  func.func @transform_0(%arg0: i32) -> (i32, i32) {
    %c0_i32 = arith.constant 0 : i32
    %c0_i32_0 = arith.constant 0 : i32
    return %arg0, %c0_i32 : i32, i32
  }
  func.func @transform_1(%arg0: i32) -> (i32, i32) {
    %c0_i32 = arith.constant 0 : i32
    %c0_i32_0 = arith.constant 0 : i32
    return %arg0, %c0_i32 : i32, i32
  }
  func.func @transform_2(%arg0: i32) -> (i32, i32) {
    %c0_i32 = arith.constant 0 : i32
    %c0_i32_0 = arith.constant 0 : i32
    return %arg0, %c0_i32 : i32, i32
  }
  func.func @transform_3(%arg0: i32) -> (i32, i32) {
    %c0_i32 = arith.constant 0 : i32
    %c0_i32_0 = arith.constant 0 : i32
    return %arg0, %c0_i32 : i32, i32
  }
}

</mosaic_0001>

<llo_original>
// kernel: tpu_custom_call.1
$region0: #{tpu_custom_call.1}
  #allocation0 [shape = 'u32[]', space=smem, size = 0x4, offset = 0x4, fixed_abs, tag = 'smem constant byte address 0x4 - core index']
  #allocation1 [shape = 'u32[144,128]{1,0:T(1,128)}', space=vmem, size = 0x12000, scoped, tag = 'internal scratch']
  %s0 = inlined_call_operand.hbm [shape: f32[300,256], index: 0, kind: input, shape index: {}]
  %s1 = inlined_call_operand.hbm [shape: f32[300,256], index: 1, kind: input, shape index: {}]
  %s2 = inlined_call_operand.hbm [shape: f32[300,256], index: 2, kind: input, shape index: {}]
  %s3 = inlined_call_operand.vmem [shape: f32[300,1], index: 3, kind: output, shape index: {}]
  %s4 = sld [smem:[#allocation0]]
  $region105: #{tpu_custom_call.1} parent=0
    _
  %s6 = ssub.s32 1, %s4
  %s7 = scalar_select 0, %s6, %s4
  $region1: #{tpu_custom_call.1} parent=0
    #allocation2 [shape = 'u8[262144]{0}', space=vmem, size = 0x40000, scoped, tag = 'input window, operand 0']
    #allocation3 [shape = 's32[2]{0}', space=sflag, size = 0x8, scoped, tag = 'scoped memory for tpu_custom_call.1']
    #allocation4 [shape = 'u8[262144]{0}', space=vmem, size = 0x40000, scoped, tag = 'input window, operand 1']
    #allocation5 [shape = 's32[2]{0}', space=sflag, size = 0x8, scoped, tag = 'scoped memory for tpu_custom_call.1']
    #allocation6 [shape = 'u8[262144]{0}', space=vmem, size = 0x40000, scoped, tag = 'input window, operand 2']
    #allocation7 [shape = 'u8[131072]{0}', space=vmem, size = 0x20000, scoped, tag = 'output window, operand 0']
    %8 = vsyncpa [#allocation3], 0
    %s9 = scalar_lea.sflag [#allocation3], 1
    %10 = vsyncpa %s9, 0
    %11 = vsyncpa [#allocation5], 0
    %s12 = scalar_lea.sflag [#allocation5], 1
    %13 = vsyncpa %s12, 0
    loop: start=0, step=1, limit=5
    $region2: #{tpu_custom_call.1} parent=1 // loop_pre_header
      _
    $region3: #{tpu_custom_call.1} parent=1 // loop_header
      %s15 = sphi 0, %s19
      %p16 = scmp.ge.s32.totalorder %s15, 5
      %s25 = sphi 0, %s27
      %s28 = sphi 0, %s25
      %s29 = sphi 0, %s28
      %s45 = sphi 0, %s29
      %s51 = sphi 0, %s53
      %s54 = sphi 0, %s51
      %s55 = sphi 0, %s54
      %s71 = sphi 0, %s55
      %s77 = sphi 0, %s79
      %s80 = sphi 0, %s77
      %s81 = sphi 0, %s80
      %s97 = sphi 0, %s81
      %s103 = sphi 0, %s105
      %s106 = sphi 0, %s103
      %s107 = sphi 0, %s106
      %s123 = sphi 0, %s107
    $region4: #{tpu_custom_call.1} parent=1 // loop_header_branch
      %18 = sbr.rel (%p16) target = $region8
    $region5: #{tpu_custom_call.1} parent=1 // loop_body
      %s20 = ssub.s32 %s15, 1
      %s21 = ssub.s32 %s15, 2
      %s22 = sadd.s32 %s15, 1
      %s23 = ssub.s32 %s15, %s22
      %p24 = scmp.eq.s32.totalorder %s23, 0
      %s26 = sadd.s32 %s25, 1
      %s27 = scalar_select %p24, %s25, %s26
      %p30 = pneg %p24
      %p31 = scmp.eq.s32.totalorder %s15, 2
      %p32 = por %p30, %p31
      %p33 = scmp.ne.s32.totalorder %s25, %s28
      %p34 = scmp.eq.s32.totalorder %s15, 0
      %p35 = por %p33, %p34
      %p36 = scmp.ne.s32.totalorder %s25, %s28
      %p37 = scmp.eq.s32.totalorder %s20, 2
      %p38 = por %p36, %p37
      %p39 = scmp.ne.s32.totalorder %s28, %s29
      %p40 = scmp.eq.s32.totalorder %s20, 0
      %p41 = por %p39, %p40
      %p42 = scmp.ne.s32.totalorder %s28, %s29
      %p43 = scmp.eq.s32.totalorder %s21, 2
      %p44 = por %p42, %p43
      %p46 = scmp.ne.s32.totalorder %s29, %s45
      %p47 = scmp.eq.s32.totalorder %s21, 0
      %p48 = por %p46, %p47
      %s49 = ssub.s32 %s15, %s22
      %p50 = scmp.eq.s32.totalorder %s49, 0
      %s52 = sadd.s32 %s51, 1
      %s53 = scalar_select %p50, %s51, %s52
      %p56 = pneg %p50
      %p57 = scmp.eq.s32.totalorder %s15, 2
      %p58 = por %p56, %p57
      %p59 = scmp.ne.s32.totalorder %s51, %s54
      %p60 = scmp.eq.s32.totalorder %s15, 0
      %p61 = por %p59, %p60
      %p62 = scmp.ne.s32.totalorder %s51, %s54
      %p63 = scmp.eq.s32.totalorder %s20, 2
      %p64 = por %p62, %p63
      %p65 = scmp.ne.s32.totalorder %s54, %s55
      %p66 = scmp.eq.s32.totalorder %s20, 0
      %p67 = por %p65, %p66
      %p68 = scmp.ne.s32.totalorder %s54, %s55
      %p69 = scmp.eq.s32.totalorder %s21, 2
      %p70 = por %p68, %p69
      %p72 = scmp.ne.s32.totalorder %s55, %s71
      %p73 = scmp.eq.s32.totalorder %s21, 0
      %p74 = por %p72, %p73
      %s75 = ssub.s32 %s15, %s22
      %p76 = scmp.eq.s32.totalorder %s75, 0
      %s78 = sadd.s32 %s77, 1
      %s79 = scalar_select %p76, %s77, %s78
      %p82 = pneg %p76
      %p83 = scmp.eq.s32.totalorder %s15, 2
      %p84 = por %p82, %p83
      %p85 = scmp.ne.s32.totalorder %s77, %s80
      %p86 = scmp.eq.s32.totalorder %s15, 0
      %p87 = por %p85, %p86
      %p88 = scmp.ne.s32.totalorder %s77, %s80
      %p89 = scmp.eq.s32.totalorder %s20, 2
      %p90 = por %p88, %p89
      %p91 = scmp.ne.s32.totalorder %s80, %s81
      %p92 = scmp.eq.s32.totalorder %s20, 0
      %p93 = por %p91, %p92
      %p94 = scmp.ne.s32.totalorder %s80, %s81
      %p95 = scmp.eq.s32.totalorder %s21, 2
      %p96 = por %p94, %p95
      %p98 = scmp.ne.s32.totalorder %s81, %s97
      %p99 = scmp.eq.s32.totalorder %s21, 0
      %p100 = por %p98, %p99
      %s101 = ssub.s32 %s15, %s22
      %p102 = scmp.eq.s32.totalorder %s101, 0
      %s104 = sadd.s32 %s103, 1
      %s105 = scalar_select %p102, %s103, %s104
      %p108 = pneg %p102
      %p109 = scmp.eq.s32.totalorder %s15, 2
      %p110 = por %p108, %p109
      %p111 = scmp.ne.s32.totalorder %s103, %s106
      %p112 = scmp.eq.s32.totalorder %s15, 0
      %p113 = por %p111, %p112
      %p114 = scmp.ne.s32.totalorder %s103, %s106
      %p115 = scmp.eq.s32.totalorder %s20, 2
      %p116 = por %p114, %p115
      %p117 = scmp.ne.s32.totalorder %s106, %s107
      %p118 = scmp.eq.s32.totalorder %s20, 0
      %p119 = por %p117, %p118
      %p120 = scmp.ne.s32.totalorder %s106, %s107
      %p121 = scmp.eq.s32.totalorder %s21, 2
      %p122 = por %p120, %p121
      %p124 = scmp.ne.s32.totalorder %s107, %s123
      %p125 = scmp.eq.s32.totalorder %s21, 0
      %p126 = por %p124, %p125
      %p127 = scmp.le.s32.totalorder 1, %s15
      %p128 = scmp.lt.s32.totalorder %s15, 4
      %p129 = pnand %p127, %p128
      %p130 = pneg %p129
      // Predicated region
      $region9: #{tpu_custom_call.1} parent=5 // pred_check
        _
      $region10: #{tpu_custom_call.1} parent=5 // pred_check_branch
        %132 = sbr.rel (%p129) target = $region12
      $region11: #{tpu_custom_call.1} parent=5 // pred_region
        %s133 = ssub.s32 %s15, 1
      $region12: #{tpu_custom_call.1} parent=5 // pred_fallthru
        _
      %p134 = scmp.lt.s32.totalorder %s15, 3
      // Predicated region
      $region13: #{tpu_custom_call.1} parent=5 // pred_check
        %p135 = pneg %p134
      $region14: #{tpu_custom_call.1} parent=5 // pred_check_branch
        %137 = sbr.rel (%p135) target = $region16
      $region15: #{tpu_custom_call.1} parent=5 // pred_region
        // Predicated region
        $region17: #{tpu_custom_call.1} parent=15 // pred_check
          %p138 = pneg %p35
        $region18: #{tpu_custom_call.1} parent=15 // pred_check_branch
          %140 = sbr.rel (%p138) target = $region20
        $region19: #{tpu_custom_call.1} parent=15 // pred_region
          %s141 = sand.u32 %s25, 1
          %s142 = scalar_lea.sflag [#allocation3], %s141
          %s143 = sand.u32 %s25, 1
          %s144 = smul.addr %s143, 256
          %s145 = scalar_lea.vmem [#allocation2], %s144
          %s146 = smul.u32 16, %s15
          %s147 = ssub.s32 38, %s146
          %p148 = scmp.lt.s32.totalorder %s147, 16
          %s149 = scalar_select %p148, %s147, 16
          %s150 = smul.u32 128, %s149
          %s151 = smul.u32 %s150, 2
          %s153 = ssub.s32 4096, %s151
          %154 = vsyncadd %s142, %s153
          %p155 = scmp.ne.s32.totalorder 0, %s151
          %s156 = smul.addr %s146, 2
          %s157 = smul.addr %s156, 128
          %s158 = scalar_lea.hbm %s0, %s157
          %s159 = smul.u32 16, %s149
          %s160 = sshll.u32 %s145, 4
          %s161 = int_to_ptr.vmem [resolvable:$true] %s160
          %s162 = sshll.u32 %s159, 4
          %166 = dma.hbm_to_vmem [thread:$0]  (%p155), %s158, %s162, %s161, %s142, 256, 256, 16
        $region20: #{tpu_custom_call.1} parent=15 // pred_fallthru
          _
        // Predicated region
        $region21: #{tpu_custom_call.1} parent=15 // pred_check
          %p167 = pneg %p61
        $region22: #{tpu_custom_call.1} parent=15 // pred_check_branch
          %169 = sbr.rel (%p167) target = $region24
        $region23: #{tpu_custom_call.1} parent=15 // pred_region
          %s170 = sand.u32 %s15, 1
          %s171 = scalar_lea.sflag [#allocation5], %s170
          %s172 = sand.u32 %s51, 1
          %s173 = smul.addr %s172, 256
          %s174 = scalar_lea.vmem [#allocation4], %s173
          %s175 = smul.u32 16, %s15
          %s176 = ssub.s32 38, %s175
          %p177 = scmp.lt.s32.totalorder %s176, 16
          %s178 = scalar_select %p177, %s176, 16
          %s179 = smul.u32 128, %s178
          %s180 = smul.u32 %s179, 2
          %s182 = ssub.s32 4096, %s180
          %183 = vsyncadd %s171, %s182
          %p184 = scmp.ne.s32.totalorder 0, %s180
          %s185 = smul.addr %s175, 2
          %s186 = smul.addr %s185, 128
          %s187 = scalar_lea.hbm %s1, %s186
          %s188 = smul.u32 16, %s178
          %s189 = sshll.u32 %s174, 4
          %s190 = int_to_ptr.vmem [resolvable:$true] %s189
          %s191 = sshll.u32 %s188, 4
          %195 = dma.hbm_to_vmem [thread:$0]  (%p184), %s187, %s191, %s190, %s171, 256, 256, 16
        $region24: #{tpu_custom_call.1} parent=15 // pred_fallthru
          _
        // Predicated region
        $region25: #{tpu_custom_call.1} parent=15 // pred_check
          %p196 = pneg %p87
        $region26: #{tpu_custom_call.1} parent=15 // pred_check_branch
          %198 = sbr.rel (%p196) target = $region28
        $region27: #{tpu_custom_call.1} parent=15 // pred_region
          %s199 = sand.u32 %s15, 1
          %s200 = scalar_lea.sflag [#allocation5], %s199
          %s201 = sand.u32 %s77, 1
          %s202 = smul.addr %s201, 256
          %s203 = scalar_lea.vmem [#allocation6], %s202
          %s204 = smul.u32 16, %s15
          %s205 = ssub.s32 38, %s204
          %p206 = scmp.lt.s32.totalorder %s205, 16
          %s207 = scalar_select %p206, %s205, 16
          %s208 = smul.u32 128, %s207
          %s209 = smul.u32 %s208, 2
          %s211 = ssub.s32 4096, %s209
          %212 = vsyncadd %s200, %s211
          %p213 = scmp.ne.s32.totalorder 0, %s209
          %s214 = smul.addr %s204, 2
          %s215 = smul.addr %s214, 128
          %s216 = scalar_lea.hbm %s2, %s215
          %s217 = smul.u32 16, %s207
          %s218 = sshll.u32 %s203, 4
          %s219 = int_to_ptr.vmem [resolvable:$true] %s218
          %s220 = sshll.u32 %s217, 4
          %224 = dma.hbm_to_vmem [thread:$0]  (%p213), %s216, %s220, %s219, %s200, 256, 256, 16
        $region28: #{tpu_custom_call.1} parent=15 // pred_fallthru
          _
      $region16: #{tpu_custom_call.1} parent=5 // pred_fallthru
        _
      %p225 = scmp.le.s32.totalorder 1, %s15
      %p226 = scmp.lt.s32.totalorder %s15, 4
      %p227 = pnand %p225, %p226
      %p228 = pneg %p227
      // Predicated region
      $region29: #{tpu_custom_call.1} parent=5 // pred_check
        _
      $region30: #{tpu_custom_call.1} parent=5 // pred_check_branch
        %230 = sbr.rel (%p227) target = $region32
      $region31: #{tpu_custom_call.1} parent=5 // pred_region
        %s231 = ssub.s32 %s15, 1
        %s232 = sand.u32 %s28, 1
        %s233 = scalar_lea.sflag [#allocation3], %s232
        %s234 = sand.u32 %s28, 1
        %s235 = smul.addr %s234, 256
        %s236 = scalar_lea.vmem [#allocation2], %s235
        // Predicated region
        $region33: #{tpu_custom_call.1} parent=31 // pred_check
          %p237 = pneg %p41
        $region34: #{tpu_custom_call.1} parent=31 // pred_check_branch
          %239 = sbr.rel (%p237) target = $region36
        $region35: #{tpu_custom_call.1} parent=31 // pred_region
          %240 = dma.done %s233, 4096
        $region36: #{tpu_custom_call.1} parent=31 // pred_fallthru
          _
        %s241 = sand.u32 %s20, 1
        %s242 = scalar_lea.sflag [#allocation5], %s241
        %s243 = sand.u32 %s54, 1
        %s244 = smul.addr %s243, 256
        %s245 = scalar_lea.vmem [#allocation4], %s244
        // Predicated region
        $region37: #{tpu_custom_call.1} parent=31 // pred_check
          %p246 = pneg %p67
        $region38: #{tpu_custom_call.1} parent=31 // pred_check_branch
          %248 = sbr.rel (%p246) target = $region40
        $region39: #{tpu_custom_call.1} parent=31 // pred_region
          %249 = dma.done %s242, 4096
        $region40: #{tpu_custom_call.1} parent=31 // pred_fallthru
          _
        %s250 = sand.u32 %s20, 1
        %s251 = scalar_lea.sflag [#allocation5], %s250
        %s252 = sand.u32 %s80, 1
        %s253 = smul.addr %s252, 256
        %s254 = scalar_lea.vmem [#allocation6], %s253
        // Predicated region
        $region41: #{tpu_custom_call.1} parent=31 // pred_check
          %p255 = pneg %p93
        $region42: #{tpu_custom_call.1} parent=31 // pred_check_branch
          %257 = sbr.rel (%p255) target = $region44
        $region43: #{tpu_custom_call.1} parent=31 // pred_region
          %258 = dma.done %s251, 4096
        $region44: #{tpu_custom_call.1} parent=31 // pred_fallthru
          _
        %s259 = sand.u32 %s28, 1
        %s260 = scalar_lea.sflag [#allocation3], %s259
        %s261 = sand.u32 %s28, 1
        %s262 = smul.addr %s261, 256
        %s263 = scalar_lea.vmem [#allocation2], %s262
        %p264 = pneg %p41
        %p265 = pneg %p38
        %s266 = sand.u32 %s20, 1
        %s267 = scalar_lea.sflag [#allocation5], %s266
        %s268 = sand.u32 %s54, 1
        %s269 = smul.addr %s268, 256
        %s270 = scalar_lea.vmem [#allocation4], %s269
        %p271 = pneg %p67
        %p272 = pneg %p64
        %s273 = sand.u32 %s20, 1
        %s274 = scalar_lea.sflag [#allocation5], %s273
        %s275 = sand.u32 %s80, 1
        %s276 = smul.addr %s275, 256
        %s277 = scalar_lea.vmem [#allocation6], %s276
        %p278 = pneg %p93
        %p279 = pneg %p90
        %p280 = pneg %p119
        %p281 = pneg %p116
        %s282 = sand.u32 %s106, 1
        %s283 = sand.u32 %s106, 1
        %s284 = smul.addr %s283, 128
        %s285 = scalar_lea.vmem [#allocation7], %s284
        %s286 = smul.u32 16, %s20
        %s287 = ssub.s32 38, %s286
        %p288 = scmp.lt.s32.totalorder %s287, 16
        %s289 = scalar_select %p288, %s287, 16
        %s290 = smul.u32 128, %s289
        %s291 = smul.u32 %s290, 2
        %s292 = smul.u32 16, %s20
        %s293 = ssub.s32 38, %s292
        %p294 = scmp.lt.s32.totalorder %s293, 16
        %s295 = scalar_select %p294, %s293, 16
        %s296 = smul.u32 128, %s295
        %s297 = smul.u32 %s296, 2
        %s298 = smul.u32 16, %s20
        %s299 = ssub.s32 38, %s298
        %p300 = scmp.lt.s32.totalorder %s299, 16
        %s301 = scalar_select %p300, %s299, 16
        %s302 = smul.u32 128, %s301
        %s303 = smul.u32 %s302, 2
        %s304 = smul.u32 16, %s20
        %s305 = ssub.s32 38, %s304
        %p306 = scmp.lt.s32.totalorder %s305, 16
        %s307 = scalar_select %p306, %s305, 16
        %s308 = smul.u32 128, %s307
        %v309 = vld [vmem:[%s236] sm:$0xff]
        %v310 = vld [vmem:[%s236 + $0x8] sm:$0xff]
        %v311 = vld [vmem:[%s236 + $0x10] sm:$0xff]
        %v312 = vld [vmem:[%s236 + $0x18] sm:$0xff]
        %v313 = vld [vmem:[%s236 + $0x20] sm:$0xff]
        %v314 = vld [vmem:[%s236 + $0x28] sm:$0xff]
        %v315 = vld [vmem:[%s236 + $0x30] sm:$0xff]
        %v316 = vld [vmem:[%s236 + $0x38] sm:$0xff]
        %v317 = vld [vmem:[%s236 + $0x40] sm:$0xff]
        %v318 = vld [vmem:[%s236 + $0x48] sm:$0xff]
        %v319 = vld [vmem:[%s236 + $0x50] sm:$0xff]
        %v320 = vld [vmem:[%s236 + $0x58] sm:$0xff]
        %v321 = vld [vmem:[%s236 + $0x60] sm:$0xff]
        %v322 = vld [vmem:[%s236 + $0x68] sm:$0xff]
        %v323 = vld [vmem:[%s236 + $0x70] sm:$0xff]
        %v324 = vld [vmem:[%s236 + $0x78] sm:$0xff]
        %v325 = vld [vmem:[%s236 + $0x80] sm:$0xff]
        %v326 = vld [vmem:[%s236 + $0x88] sm:$0xff]
        %v327 = vld [vmem:[%s236 + $0x90] sm:$0xff]
        %v328 = vld [vmem:[%s236 + $0x98] sm:$0xff]
        %v329 = vld [vmem:[%s236 + $0xa0] sm:$0xff]
        %v330 = vld [vmem:[%s236 + $0xa8] sm:$0xff]
        %v331 = vld [vmem:[%s236 + $0xb0] sm:$0xff]
        %v332 = vld [vmem:[%s236 + $0xb8] sm:$0xff]
        %v333 = vld [vmem:[%s236 + $0xc0] sm:$0xff]
        %v334 = vld [vmem:[%s236 + $0xc8] sm:$0xff]
        %v335 = vld [vmem:[%s236 + $0xd0] sm:$0xff]
        %v336 = vld [vmem:[%s236 + $0xd8] sm:$0xff]
        %v337 = vld [vmem:[%s236 + $0xe0] sm:$0xff]
        %v338 = vld [vmem:[%s236 + $0xe8] sm:$0xff]
        %v339 = vld [vmem:[%s236 + $0xf0] sm:$0xff]
        %v340 = vld [vmem:[%s236 + $0xf8] sm:$0xff]
        %v341 = vld [vmem:[%s245] sm:$0xff]
        %v342 = vld [vmem:[%s245 + $0x8] sm:$0xff]
        %v343 = vld [vmem:[%s245 + $0x10] sm:$0xff]
        %v344 = vld [vmem:[%s245 + $0x18] sm:$0xff]
        %v345 = vld [vmem:[%s245 + $0x20] sm:$0xff]
        %v346 = vld [vmem:[%s245 + $0x28] sm:$0xff]
        %v347 = vld [vmem:[%s245 + $0x30] sm:$0xff]
        %v348 = vld [vmem:[%s245 + $0x38] sm:$0xff]
        %v349 = vld [vmem:[%s245 + $0x40] sm:$0xff]
        %v350 = vld [vmem:[%s245 + $0x48] sm:$0xff]
        %v351 = vld [vmem:[%s245 + $0x50] sm:$0xff]
        %v352 = vld [vmem:[%s245 + $0x58] sm:$0xff]
        %v353 = vld [vmem:[%s245 + $0x60] sm:$0xff]
        %v354 = vld [vmem:[%s245 + $0x68] sm:$0xff]
        %v355 = vld [vmem:[%s245 + $0x70] sm:$0xff]
        %v356 = vld [vmem:[%s245 + $0x78] sm:$0xff]
        %v357 = vld [vmem:[%s245 + $0x80] sm:$0xff]
        %v358 = vld [vmem:[%s245 + $0x88] sm:$0xff]
        %v359 = vld [vmem:[%s245 + $0x90] sm:$0xff]
        %v360 = vld [vmem:[%s245 + $0x98] sm:$0xff]
        %v361 = vld [vmem:[%s245 + $0xa0] sm:$0xff]
        %v362 = vld [vmem:[%s245 + $0xa8] sm:$0xff]
        %v363 = vld [vmem:[%s245 + $0xb0] sm:$0xff]
        %v364 = vld [vmem:[%s245 + $0xb8] sm:$0xff]
        %v365 = vld [vmem:[%s245 + $0xc0] sm:$0xff]
        %v366 = vld [vmem:[%s245 + $0xc8] sm:$0xff]
        %v367 = vld [vmem:[%s245 + $0xd0] sm:$0xff]
        %v368 = vld [vmem:[%s245 + $0xd8] sm:$0xff]
        %v369 = vld [vmem:[%s245 + $0xe0] sm:$0xff]
        %v370 = vld [vmem:[%s245 + $0xe8] sm:$0xff]
        %v371 = vld [vmem:[%s245 + $0xf0] sm:$0xff]
        %v372 = vld [vmem:[%s245 + $0xf8] sm:$0xff]
        %v373 = vld [vmem:[%s254] sm:$0xff]
        %v374 = vld [vmem:[%s254 + $0x8] sm:$0xff]
        %v375 = vld [vmem:[%s254 + $0x10] sm:$0xff]
        %v376 = vld [vmem:[%s254 + $0x18] sm:$0xff]
        %v377 = vld [vmem:[%s254 + $0x20] sm:$0xff]
        %v378 = vld [vmem:[%s254 + $0x28] sm:$0xff]
        %v379 = vld [vmem:[%s254 + $0x30] sm:$0xff]
        %v380 = vld [vmem:[%s254 + $0x38] sm:$0xff]
        %v381 = vld [vmem:[%s254 + $0x40] sm:$0xff]
        %v382 = vld [vmem:[%s254 + $0x48] sm:$0xff]
        %v383 = vld [vmem:[%s254 + $0x50] sm:$0xff]
        %v384 = vld [vmem:[%s254 + $0x58] sm:$0xff]
        %v385 = vld [vmem:[%s254 + $0x60] sm:$0xff]
        %v386 = vld [vmem:[%s254 + $0x68] sm:$0xff]
        %v387 = vld [vmem:[%s254 + $0x70] sm:$0xff]
        %v388 = vld [vmem:[%s254 + $0x78] sm:$0xff]
        %v389 = vld [vmem:[%s254 + $0x80] sm:$0xff]
        %v390 = vld [vmem:[%s254 + $0x88] sm:$0xff]
        %v391 = vld [vmem:[%s254 + $0x90] sm:$0xff]
        %v392 = vld [vmem:[%s254 + $0x98] sm:$0xff]
        %v393 = vld [vmem:[%s254 + $0xa0] sm:$0xff]
        %v394 = vld [vmem:[%s254 + $0xa8] sm:$0xff]
        %v395 = vld [vmem:[%s254 + $0xb0] sm:$0xff]
        %v396 = vld [vmem:[%s254 + $0xb8] sm:$0xff]
        %v397 = vld [vmem:[%s254 + $0xc0] sm:$0xff]
        %v398 = vld [vmem:[%s254 + $0xc8] sm:$0xff]
        %v399 = vld [vmem:[%s254 + $0xd0] sm:$0xff]
        %v400 = vld [vmem:[%s254 + $0xd8] sm:$0xff]
        %v401 = vld [vmem:[%s254 + $0xe0] sm:$0xff]
        %v402 = vld [vmem:[%s254 + $0xe8] sm:$0xff]
        %v403 = vld [vmem:[%s254 + $0xf0] sm:$0xff]
        %v404 = vld [vmem:[%s254 + $0xf8] sm:$0xff]
        %v405 = vmul.f32 %v341, 57.446266
        %v406 = vmul.f32 %v342, 57.446266
        %v407 = vmul.f32 %v343, 57.446266
        %v408 = vmul.f32 %v344, 57.446266
        %v409 = vmul.f32 %v345, 57.446266
        %v410 = vmul.f32 %v346, 57.446266
        %v411 = vmul.f32 %v347, 57.446266
        %v412 = vmul.f32 %v348, 57.446266
        %v413 = vmul.f32 %v349, 57.446266
        %v414 = vmul.f32 %v350, 57.446266
        %v415 = vmul.f32 %v351, 57.446266
        %v416 = vmul.f32 %v352, 57.446266
        %v417 = vmul.f32 %v353, 57.446266
        %v418 = vmul.f32 %v354, 57.446266
        %v419 = vmul.f32 %v355, 57.446266
        %v420 = vmul.f32 %v356, 57.446266
        %v421 = vmul.f32 %v357, 57.446266
        %v422 = vmul.f32 %v358, 57.446266
        %v423 = vmul.f32 %v359, 57.446266
        %v424 = vmul.f32 %v360, 57.446266
        %v425 = vmul.f32 %v361, 57.446266
        %v426 = vmul.f32 %v362, 57.446266
        %v427 = vmul.f32 %v363, 57.446266
        %v428 = vmul.f32 %v364, 57.446266
        %v429 = vmul.f32 %v365, 57.446266
        %v430 = vmul.f32 %v366, 57.446266
        %v431 = vmul.f32 %v367, 57.446266
        %v432 = vmul.f32 %v368, 57.446266
        %v433 = vmul.f32 %v369, 57.446266
        %v434 = vmul.f32 %v370, 57.446266
        %v435 = vmul.f32 %v371, 57.446266
        %v436 = vmul.f32 %v372, 57.446266
        %v437 = vand.u32 2147483647, %v405
        %vm438 = vcmp.le.f32.partialorder %v437, 0.7853982
        %vm439 = vcmp.lt.s32.totalorder %v405, 0
        %v440 = vand.u32 %v405, 2139095040
        %v441 = vshrl.u32 %v440, 23
        %v442 = vsub.s32 %v441, 127
        %v443 = vand.u32 2147483647, %v405
        %v444 = vand.u32 %v443, 8388607
        %v445 = vor.u32 %v444, 8388608
        %v446 = vsub.s32 0, %v445
        %v447 = vadd.s32 %v442, 1
        %vm448 = vcmp.gt.s32.totalorder %v447, 0
        %v449 = vsel %vm448, %v447, 0
        %v450 = vshrl.u32 %v449, 5
        %v451 = vand.u32 %v449, 31
        %v452 = vsub.s32 32, %v451
        %v453 = vshrl.u32 683565275, %v452
        %v454 = vshll.u32 683565275, %v451
        %v455 = vshrl.u32 2475754826, %v452
        %v456 = vor.u32 %v454, %v455
        %v457 = vshll.u32 2475754826, %v451
        %v458 = vshrl.u32 2131351028, %v452
        %v459 = vor.u32 %v457, %v458
        %v460 = vshll.u32 2131351028, %v451
        %v461 = vshrl.u32 2102212464, %v452
        %v462 = vor.u32 %v460, %v461
        %v463 = vshll.u32 2102212464, %v451
        %v464 = vshrl.u32 920167782, %v452
        %v465 = vor.u32 %v463, %v464
        %v466 = vshll.u32 920167782, %v451
        %v467 = vshrl.u32 1326507024, %v452
        %v468 = vor.u32 %v466, %v467
        %vm469 = vcmp.lt.s32.totalorder %v450, 1
        %vm470 = vcmp.lt.s32.totalorder %v450, 2
        %vm471 = vcmp.lt.s32.totalorder %v450, 3
        %vm472 = vcmp.lt.s32.totalorder %v450, 4
        %v473 = vsel %vm469, %v453, %v456
        %v474 = vsel %vm472, %v462, 2102212464
        %v475 = vsel %vm471, %v459, %v474
        %v476 = vsel %vm470, %v473, %v475
        %v477 = vsel %vm469, %v456, %v459
        %v478 = vsel %vm472, %v465, 920167782
        %v479 = vsel %vm471, %v462, %v478
        %v480 = vsel %vm470, %v477, %v479
        %v481 = vsel %vm469, %v459, %v462
        %v482 = vsel %vm472, %v468, 1326507024
        %v483 = vsel %vm471, %v465, %v482
        %v484 = vsel %vm470, %v481, %v483
        %v485 = vshll.u32 %v445, 8
        %v486 = vmul.u32.u64.compose %v485, %v484
        %v487 = vextract.low.u32 %v486
        %v488 = vextract.high.u32 %v486
        %v489 = vmul.u32.u64.compose %v485, %v480
        %v490 = vextract.low.u32 %v489
        %v491 = vextract.high.u32 %v489
        %v492 = vmul.u32 %v485, %v476
        %v493 = vadd.s32 %v488, %v490
        %vm494 = vc.u32 %v488, %v490
        %v495 = vadd.s32 %v491, 1
        %v496 = vsel %vm494, %v495, %v491
        %v497 = vadd.s32 %v492, %v496
        %v498 = vadd.s32 %v497, 536870912
        %v499 = vshrl.u32 %v498, 30
        %v500 = vshll.u32 %v499, 30
        %v501 = vsub.s32 %v497, %v500
        %vm502 = vcmp.lt.s32.totalorder %v501, 0
        %v503 = vsub.s32 0, %v501
        %v504 = vsel %vm502, %v503, %v501
        %v505 = vclz %v504
        %v506 = vsub.s32 %v505, 2
        %vm507 = vcmp.gt.s32.totalorder 0, %v506
        %v508 = vsel %vm507, 0, %v506
        %v509 = vsub.s32 32, %v508
        %v510 = vshll.u32 %v501, %v508
        %v511 = vshrl.u32 %v493, %v509
        %v512 = vor.u32 %v510, %v511
        %v513 = vsub.s32 4294967266, %v508
        %v514 = vadd.s32 %v513, 127
        %v515 = vshll.u32 %v514, 23
        %v516 = vor.u32 4788187, %v515
        %v517 = vand.u32 2147483647, %v516
        %v519 = vcvt.s32.f32 %v512
        %v520 = vmul.f32 %v519, %v517
        %v521 = vxor.u32 %v520, 2147483648
        %v522 = vsel %vm439, %v521, %v520
        %v523 = vsub.s32 4, %v499
        %v524 = vsel %vm439, %v523, %v499
        %v525 = vsel %vm438, %v405, %v522
        %v526 = vsel %vm438, 0, %v524
        %v527 = vcosq.f32.pop %v525
        %v528 = vsinq.f32.pop %v525
        %vm529 = vweird.f32 %v405
        %v530 = vand.u32 %v526, 3
        %vm531 = vcmp.lt.s32.totalorder %v530, 2
        %vm532 = vcmp.eq.s32.totalorder %v530, 0
        %v533 = vxor.u32 %v528, 2147483648
        %v534 = vsel %vm532, %v527, %v533
        %vm535 = vcmp.eq.s32.totalorder %v530, 2
        %v536 = vxor.u32 %v527, 2147483648
        %v537 = vsel %vm535, %v536, %v528
        %v538 = vsel %vm531, %v534, %v537
        %v539 = vsel %vm529, nan, %v538
        %v540 = vand.u32 2147483647, %v406
        %vm541 = vcmp.le.f32.partialorder %v540, 0.7853982
        %vm542 = vcmp.lt.s32.totalorder %v406, 0
        %v543 = vand.u32 %v406, 2139095040
        %v544 = vshrl.u32 %v543, 23
        %v545 = vsub.s32 %v544, 127
        %v546 = vand.u32 2147483647, %v406
        %v547 = vand.u32 %v546, 8388607
        %v548 = vor.u32 %v547, 8388608
        %v549 = vsub.s32 0, %v548
        %v550 = vadd.s32 %v545, 1
        %vm551 = vcmp.gt.s32.totalorder %v550, 0
        %v552 = vsel %vm551, %v550, 0
        %v553 = vshrl.u32 %v552, 5
        %v554 = vand.u32 %v552, 31
        %v555 = vsub.s32 32, %v554
        %v556 = vshrl.u32 683565275, %v555
        %v557 = vshll.u32 683565275, %v554
        %v558 = vshrl.u32 2475754826, %v555
        %v559 = vor.u32 %v557, %v558
        %v560 = vshll.u32 2475754826, %v554
        %v561 = vshrl.u32 2131351028, %v555
        %v562 = vor.u32 %v560, %v561
        %v563 = vshll.u32 2131351028, %v554
        %v564 = vshrl.u32 2102212464, %v555
        %v565 = vor.u32 %v563, %v564
        %v566 = vshll.u32 2102212464, %v554
        %v567 = vshrl.u32 920167782, %v555
        %v568 = vor.u32 %v566, %v567
        %v569 = vshll.u32 920167782, %v554
        %v570 = vshrl.u32 1326507024, %v555
        %v571 = vor.u32 %v569, %v570
        %vm572 = vcmp.lt.s32.totalorder %v553, 1
        %vm573 = vcmp.lt.s32.totalorder %v553, 2
        %vm574 = vcmp.lt.s32.totalorder %v553, 3
        %vm575 = vcmp.lt.s32.totalorder %v553, 4
        %v576 = vsel %vm572, %v556, %v559
        %v577 = vsel %vm575, %v565, 2102212464
        %v578 = vsel %vm574, %v562, %v577
        %v579 = vsel %vm573, %v576, %v578
        %v580 = vsel %vm572, %v559, %v562
        %v581 = vsel %vm575, %v568, 920167782
        %v582 = vsel %vm574, %v565, %v581
        %v583 = vsel %vm573, %v580, %v582
        %v584 = vsel %vm572, %v562, %v565
        %v585 = vsel %vm575, %v571, 1326507024
        %v586 = vsel %vm574, %v568, %v585
        %v587 = vsel %vm573, %v584, %v586
        %v588 = vshll.u32 %v548, 8
        %v589 = vmul.u32.u64.compose %v588, %v587
        %v590 = vextract.low.u32 %v589
        %v591 = vextract.high.u32 %v589
        %v592 = vmul.u32.u64.compose %v588, %v583
        %v593 = vextract.low.u32 %v592
        %v594 = vextract.high.u32 %v592
        %v595 = vmul.u32 %v588, %v579
        %v596 = vadd.s32 %v591, %v593
        %vm597 = vc.u32 %v591, %v593
        %v598 = vadd.s32 %v594, 1
        %v599 = vsel %vm597, %v598, %v594
        %v600 = vadd.s32 %v595, %v599
        %v601 = vadd.s32 %v600, 536870912
        %v602 = vshrl.u32 %v601, 30
        %v603 = vshll.u32 %v602, 30
        %v604 = vsub.s32 %v600, %v603
        %vm605 = vcmp.lt.s32.totalorder %v604, 0
        %v606 = vsub.s32 0, %v604
        %v607 = vsel %vm605, %v606, %v604
        %v608 = vclz %v607
        %v609 = vsub.s32 %v608, 2
        %vm610 = vcmp.gt.s32.totalorder 0, %v609
        %v611 = vsel %vm610, 0, %v609
        %v612 = vsub.s32 32, %v611
        %v613 = vshll.u32 %v604, %v611
        %v614 = vshrl.u32 %v596, %v612
        %v615 = vor.u32 %v613, %v614
        %v616 = vsub.s32 4294967266, %v611
        %v617 = vadd.s32 %v616, 127
        %v618 = vshll.u32 %v617, 23
        %v619 = vor.u32 4788187, %v618
        %v620 = vand.u32 2147483647, %v619
        %v622 = vcvt.s32.f32 %v615
        %v623 = vmul.f32 %v622, %v620
        %v624 = vxor.u32 %v623, 2147483648
        %v625 = vsel %vm542, %v624, %v623
        %v626 = vsub.s32 4, %v602
        %v627 = vsel %vm542, %v626, %v602
        %v628 = vsel %vm541, %v406, %v625
        %v629 = vsel %vm541, 0, %v627
        %v630 = vcosq.f32.pop %v628
        %v631 = vsinq.f32.pop %v628
        %vm632 = vweird.f32 %v406
        %v633 = vand.u32 %v629, 3
        %vm634 = vcmp.lt.s32.totalorder %v633, 2
        %vm635 = vcmp.eq.s32.totalorder %v633, 0
        %v636 = vxor.u32 %v631, 2147483648
        %v637 = vsel %vm635, %v630, %v636
        %vm638 = vcmp.eq.s32.totalorder %v633, 2
        %v639 = vxor.u32 %v630, 2147483648
        %v640 = vsel %vm638, %v639, %v631
        %v641 = vsel %vm634, %v637, %v640
        %v642 = vsel %vm632, nan, %v641
        %v643 = vand.u32 2147483647, %v407
        %vm644 = vcmp.le.f32.partialorder %v643, 0.7853982
        %vm645 = vcmp.lt.s32.totalorder %v407, 0
        %v646 = vand.u32 %v407, 2139095040
        %v647 = vshrl.u32 %v646, 23
        %v648 = vsub.s32 %v647, 127
        %v649 = vand.u32 2147483647, %v407
        %v650 = vand.u32 %v649, 8388607
        %v651 = vor.u32 %v650, 8388608
        %v652 = vsub.s32 0, %v651
        %v653 = vadd.s32 %v648, 1
        %vm654 = vcmp.gt.s32.totalorder %v653, 0
        %v655 = vsel %vm654, %v653, 0
        %v656 = vshrl.u32 %v655, 5
        %v657 = vand.u32 %v655, 31
        %v658 = vsub.s32 32, %v657
        %v659 = vshrl.u32 683565275, %v658
        %v660 = vshll.u32 683565275, %v657
        %v661 = vshrl.u32 2475754826, %v658
        %v662 = vor.u32 %v660, %v661
        %v663 = vshll.u32 2475754826, %v657
        %v664 = vshrl.u32 2131351028, %v658
        %v665 = vor.u32 %v663, %v664
        %v666 = vshll.u32 2131351028, %v657
        %v667 = vshrl.u32 2102212464, %v658
        %v668 = vor.u32 %v666, %v667
        %v669 = vshll.u32 2102212464, %v657
        %v670 = vshrl.u32 920167782, %v658
        %v671 = vor.u32 %v669, %v670
        %v672 = vshll.u32 920167782, %v657
        %v673 = vshrl.u32 1326507024, %v658
        %v674 = vor.u32 %v672, %v673
        %vm675 = vcmp.lt.s32.totalorder %v656, 1
        %vm676 = vcmp.lt.s32.totalorder %v656, 2
        %vm677 = vcmp.lt.s32.totalorder %v656, 3
        %vm678 = vcmp.lt.s32.totalorder %v656, 4
        %v679 = vsel %vm675, %v659, %v662
        %v680 = vsel %vm678, %v668, 2102212464
        %v681 = vsel %vm677, %v665, %v680
        %v682 = vsel %vm676, %v679, %v681
        %v683 = vsel %vm675, %v662, %v665
        %v684 = vsel %vm678, %v671, 920167782
        %v685 = vsel %vm677, %v668, %v684
        %v686 = vsel %vm676, %v683, %v685
        %v687 = vsel %vm675, %v665, %v668
        %v688 = vsel %vm678, %v674, 1326507024
        %v689 = vsel %vm677, %v671, %v688
        %v690 = vsel %vm676, %v687, %v689
        %v691 = vshll.u32 %v651, 8
        %v692 = vmul.u32.u64.compose %v691, %v690
        %v693 = vextract.low.u32 %v692
        %v694 = vextract.high.u32 %v692
        %v695 = vmul.u32.u64.compose %v691, %v686
        %v696 = vextract.low.u32 %v695
        %v697 = vextract.high.u32 %v695
        %v698 = vmul.u32 %v691, %v682
        %v699 = vadd.s32 %v694, %v696
        %vm700 = vc.u32 %v694, %v696
        %v701 = vadd.s32 %v697, 1
        %v702 = vsel %vm700, %v701, %v697
        %v703 = vadd.s32 %v698, %v702
        %v704 = vadd.s32 %v703, 536870912
        %v705 = vshrl.u32 %v704, 30
        %v706 = vshll.u32 %v705, 30
        %v707 = vsub.s32 %v703, %v706
        %vm708 = vcmp.lt.s32.totalorder %v707, 0
        %v709 = vsub.s32 0, %v707
        %v710 = vsel %vm708, %v709, %v707
        %v711 = vclz %v710
        %v712 = vsub.s32 %v711, 2
        %vm713 = vcmp.gt.s32.totalorder 0, %v712
        %v714 = vsel %vm713, 0, %v712
        %v715 = vsub.s32 32, %v714
        %v716 = vshll.u32 %v707, %v714
        %v717 = vshrl.u32 %v699, %v715
        %v718 = vor.u32 %v716, %v717
        %v719 = vsub.s32 4294967266, %v714
        %v720 = vadd.s32 %v719, 127
        %v721 = vshll.u32 %v720, 23
        %v722 = vor.u32 4788187, %v721
        %v723 = vand.u32 2147483647, %v722
        %v725 = vcvt.s32.f32 %v718
        %v726 = vmul.f32 %v725, %v723
        %v727 = vxor.u32 %v726, 2147483648
        %v728 = vsel %vm645, %v727, %v726
        %v729 = vsub.s32 4, %v705
        %v730 = vsel %vm645, %v729, %v705
        %v731 = vsel %vm644, %v407, %v728
        %v732 = vsel %vm644, 0, %v730
        %v733 = vcosq.f32.pop %v731
        %v734 = vsinq.f32.pop %v731
        %vm735 = vweird.f32 %v407
        %v736 = vand.u32 %v732, 3
        %vm737 = vcmp.lt.s32.totalorder %v736, 2
        %vm738 = vcmp.eq.s32.totalorder %v736, 0
        %v739 = vxor.u32 %v734, 2147483648
        %v740 = vsel %vm738, %v733, %v739
        %vm741 = vcmp.eq.s32.totalorder %v736, 2
        %v742 = vxor.u32 %v733, 2147483648
        %v743 = vsel %vm741, %v742, %v734
        %v744 = vsel %vm737, %v740, %v743
        %v745 = vsel %vm735, nan, %v744
        %v746 = vand.u32 2147483647, %v408
        %vm747 = vcmp.le.f32.partialorder %v746, 0.7853982
        %vm748 = vcmp.lt.s32.totalorder %v408, 0
        %v749 = vand.u32 %v408, 2139095040
        %v750 = vshrl.u32 %v749, 23
        %v751 = vsub.s32 %v750, 127
        %v752 = vand.u32 2147483647, %v408
        %v753 = vand.u32 %v752, 8388607
        %v754 = vor.u32 %v753, 8388608
        %v755 = vsub.s32 0, %v754
        %v756 = vadd.s32 %v751, 1
        %vm757 = vcmp.gt.s32.totalorder %v756, 0
        %v758 = vsel %vm757, %v756, 0
        %v759 = vshrl.u32 %v758, 5
        %v760 = vand.u32 %v758, 31
        %v761 = vsub.s32 32, %v760
        %v762 = vshrl.u32 683565275, %v761
        %v763 = vshll.u32 683565275, %v760
        %v764 = vshrl.u32 2475754826, %v761
        %v765 = vor.u32 %v763, %v764
        %v766 = vshll.u32 2475754826, %v760
        %v767 = vshrl.u32 2131351028, %v761
        %v768 = vor.u32 %v766, %v767
        %v769 = vshll.u32 2131351028, %v760
        %v770 = vshrl.u32 2102212464, %v761
        %v771 = vor.u32 %v769, %v770
        %v772 = vshll.u32 2102212464, %v760
        %v773 = vshrl.u32 920167782, %v761
        %v774 = vor.u32 %v772, %v773
        %v775 = vshll.u32 920167782, %v760
        %v776 = vshrl.u32 1326507024, %v761
        %v777 = vor.u32 %v775, %v776
        %vm778 = vcmp.lt.s32.totalorder %v759, 1
        %vm779 = vcmp.lt.s32.totalorder %v759, 2
        %vm780 = vcmp.lt.s32.totalorder %v759, 3
        %vm781 = vcmp.lt.s32.totalorder %v759, 4
        %v782 = vsel %vm778, %v762, %v765
        %v783 = vsel %vm781, %v771, 2102212464
        %v784 = vsel %vm780, %v768, %v783
        %v785 = vsel %vm779, %v782, %v784
        %v786 = vsel %vm778, %v765, %v768
        %v787 = vsel %vm781, %v774, 920167782
        %v788 = vsel %vm780, %v771, %v787
        %v789 = vsel %vm779, %v786, %v788
        %v790 = vsel %vm778, %v768, %v771
        %v791 = vsel %vm781, %v777, 1326507024
        %v792 = vsel %vm780, %v774, %v791
        %v793 = vsel %vm779, %v790, %v792
        %v794 = vshll.u32 %v754, 8
        %v795 = vmul.u32.u64.compose %v794, %v793
        %v796 = vextract.low.u32 %v795
        %v797 = vextract.high.u32 %v795
        %v798 = vmul.u32.u64.compose %v794, %v789
        %v799 = vextract.low.u32 %v798
        %v800 = vextract.high.u32 %v798
        %v801 = vmul.u32 %v794, %v785
        %v802 = vadd.s32 %v797, %v799
        %vm803 = vc.u32 %v797, %v799
        %v804 = vadd.s32 %v800, 1
        %v805 = vsel %vm803, %v804, %v800
        %v806 = vadd.s32 %v801, %v805
        %v807 = vadd.s32 %v806, 536870912
        %v808 = vshrl.u32 %v807, 30
        %v809 = vshll.u32 %v808, 30
        %v810 = vsub.s32 %v806, %v809
        %vm811 = vcmp.lt.s32.totalorder %v810, 0
        %v812 = vsub.s32 0, %v810
        %v813 = vsel %vm811, %v812, %v810
        %v814 = vclz %v813
        %v815 = vsub.s32 %v814, 2
        %vm816 = vcmp.gt.s32.totalorder 0, %v815
        %v817 = vsel %vm816, 0, %v815
        %v818 = vsub.s32 32, %v817
        %v819 = vshll.u32 %v810, %v817
        %v820 = vshrl.u32 %v802, %v818
        %v821 = vor.u32 %v819, %v820
        %v822 = vsub.s32 4294967266, %v817
        %v823 = vadd.s32 %v822, 127
        %v824 = vshll.u32 %v823, 23
        %v825 = vor.u32 4788187, %v824
        %v826 = vand.u32 2147483647, %v825
        %v828 = vcvt.s32.f32 %v821
        %v829 = vmul.f32 %v828, %v826
        %v830 = vxor.u32 %v829, 2147483648
        %v831 = vsel %vm748, %v830, %v829
        %v832 = vsub.s32 4, %v808
        %v833 = vsel %vm748, %v832, %v808
        %v834 = vsel %vm747, %v408, %v831
        %v835 = vsel %vm747, 0, %v833
        %v836 = vcosq.f32.pop %v834
        %v837 = vsinq.f32.pop %v834
        %vm838 = vweird.f32 %v408
        %v839 = vand.u32 %v835, 3
        %vm840 = vcmp.lt.s32.totalorder %v839, 2
        %vm841 = vcmp.eq.s32.totalorder %v839, 0
        %v842 = vxor.u32 %v837, 2147483648
        %v843 = vsel %vm841, %v836, %v842
        %vm844 = vcmp.eq.s32.totalorder %v839, 2
        %v845 = vxor.u32 %v836, 2147483648
        %v846 = vsel %vm844, %v845, %v837
        %v847 = vsel %vm840, %v843, %v846
        %v848 = vsel %vm838, nan, %v847
        %v849 = vand.u32 2147483647, %v409
        %vm850 = vcmp.le.f32.partialorder %v849, 0.7853982
        %vm851 = vcmp.lt.s32.totalorder %v409, 0
        %v852 = vand.u32 %v409, 2139095040
        %v853 = vshrl.u32 %v852, 23
        %v854 = vsub.s32 %v853, 127
        %v855 = vand.u32 2147483647, %v409
        %v856 = vand.u32 %v855, 8388607
        %v857 = vor.u32 %v856, 8388608
        %v858 = vsub.s32 0, %v857
        %v859 = vadd.s32 %v854, 1
        %vm860 = vcmp.gt.s32.totalorder %v859, 0
        %v861 = vsel %vm860, %v859, 0
        %v862 = vshrl.u32 %v861, 5
        %v863 = vand.u32 %v861, 31
        %v864 = vsub.s32 32, %v863
        %v865 = vshrl.u32 683565275, %v864
        %v866 = vshll.u32 683565275, %v863
        %v867 = vshrl.u32 2475754826, %v864
        %v868 = vor.u32 %v866, %v867
        %v869 = vshll.u32 2475754826, %v863
        %v870 = vshrl.u32 2131351028, %v864
        %v871 = vor.u32 %v869, %v870
        %v872 = vshll.u32 2131351028, %v863
        %v873 = vshrl.u32 2102212464, %v864
        %v874 = vor.u32 %v872, %v873
        %v875 = vshll.u32 2102212464, %v863
        %v876 = vshrl.u32 920167782, %v864
        %v877 = vor.u32 %v875, %v876
        %v878 = vshll.u32 920167782, %v863
        %v879 = vshrl.u32 1326507024, %v864
        %v880 = vor.u32 %v878, %v879
        %vm881 = vcmp.lt.s32.totalorder %v862, 1
        %vm882 = vcmp.lt.s32.totalorder %v862, 2
        %vm883 = vcmp.lt.s32.totalorder %v862, 3
        %vm884 = vcmp.lt.s32.totalorder %v862, 4
        %v885 = vsel %vm881, %v865, %v868
        %v886 = vsel %vm884, %v874, 2102212464
        %v887 = vsel %vm883, %v871, %v886
        %v888 = vsel %vm882, %v885, %v887
        %v889 = vsel %vm881, %v868, %v871
        %v890 = vsel %vm884, %v877, 920167782
        %v891 = vsel %vm883, %v874, %v890
        %v892 = vsel %vm882, %v889, %v891
        %v893 = vsel %vm881, %v871, %v874
        %v894 = vsel %vm884, %v880, 1326507024
        %v895 = vsel %vm883, %v877, %v894
        %v896 = vsel %vm882, %v893, %v895
        %v897 = vshll.u32 %v857, 8
        %v898 = vmul.u32.u64.compose %v897, %v896
        %v899 = vextract.low.u32 %v898
        %v900 = vextract.high.u32 %v898
        %v901 = vmul.u32.u64.compose %v897, %v892
        %v902 = vextract.low.u32 %v901
        %v903 = vextract.high.u32 %v901
        %v904 = vmul.u32 %v897, %v888
        %v905 = vadd.s32 %v900, %v902
        %vm906 = vc.u32 %v900, %v902
        %v907 = vadd.s32 %v903, 1
        %v908 = vsel %vm906, %v907, %v903
        %v909 = vadd.s32 %v904, %v908
        %v910 = vadd.s32 %v909, 536870912
        %v911 = vshrl.u32 %v910, 30
        %v912 = vshll.u32 %v911, 30
        %v913 = vsub.s32 %v909, %v912
        %vm914 = vcmp.lt.s32.totalorder %v913, 0
        %v915 = vsub.s32 0, %v913
        %v916 = vsel %vm914, %v915, %v913
        %v917 = vclz %v916
        %v918 = vsub.s32 %v917, 2
        %vm919 = vcmp.gt.s32.totalorder 0, %v918
        %v920 = vsel %vm919, 0, %v918
        %v921 = vsub.s32 32, %v920
        %v922 = vshll.u32 %v913, %v920
        %v923 = vshrl.u32 %v905, %v921
        %v924 = vor.u32 %v922, %v923
        %v925 = vsub.s32 4294967266, %v920
        %v926 = vadd.s32 %v925, 127
        %v927 = vshll.u32 %v926, 23
        %v928 = vor.u32 4788187, %v927
        %v929 = vand.u32 2147483647, %v928
        %v931 = vcvt.s32.f32 %v924
        %v932 = vmul.f32 %v931, %v929
        %v933 = vxor.u32 %v932, 2147483648
        %v934 = vsel %vm851, %v933, %v932
        %v935 = vsub.s32 4, %v911
        %v936 = vsel %vm851, %v935, %v911
        %v937 = vsel %vm850, %v409, %v934
        %v938 = vsel %vm850, 0, %v936
        %v939 = vcosq.f32.pop %v937
        %v940 = vsinq.f32.pop %v937
        %vm941 = vweird.f32 %v409
        %v942 = vand.u32 %v938, 3
        %vm943 = vcmp.lt.s32.totalorder %v942, 2
        %vm944 = vcmp.eq.s32.totalorder %v942, 0
        %v945 = vxor.u32 %v940, 2147483648
        %v946 = vsel %vm944, %v939, %v945
        %vm947 = vcmp.eq.s32.totalorder %v942, 2
        %v948 = vxor.u32 %v939, 2147483648
        %v949 = vsel %vm947, %v948, %v940
        %v950 = vsel %vm943, %v946, %v949
        %v951 = vsel %vm941, nan, %v950
        %v952 = vand.u32 2147483647, %v410
        %vm953 = vcmp.le.f32.partialorder %v952, 0.7853982
        %vm954 = vcmp.lt.s32.totalorder %v410, 0
        %v955 = vand.u32 %v410, 2139095040
        %v956 = vshrl.u32 %v955, 23
        %v957 = vsub.s32 %v956, 127
        %v958 = vand.u32 2147483647, %v410
        %v959 = vand.u32 %v958, 8388607
        %v960 = vor.u32 %v959, 8388608
        %v961 = vsub.s32 0, %v960
        %v962 = vadd.s32 %v957, 1
        %vm963 = vcmp.gt.s32.totalorder %v962, 0
        %v964 = vsel %vm963, %v962, 0
        %v965 = vshrl.u32 %v964, 5
        %v966 = vand.u32 %v964, 31
        %v967 = vsub.s32 32, %v966
        %v968 = vshrl.u32 683565275, %v967
        %v969 = vshll.u32 683565275, %v966
        %v970 = vshrl.u32 2475754826, %v967
        %v971 = vor.u32 %v969, %v970
        %v972 = vshll.u32 2475754826, %v966
        %v973 = vshrl.u32 2131351028, %v967
        %v974 = vor.u32 %v972, %v973
        %v975 = vshll.u32 2131351028, %v966
        %v976 = vshrl.u32 2102212464, %v967
        %v977 = vor.u32 %v975, %v976
        %v978 = vshll.u32 2102212464, %v966
        %v979 = vshrl.u32 920167782, %v967
        %v980 = vor.u32 %v978, %v979
        %v981 = vshll.u32 920167782, %v966
        %v982 = vshrl.u32 1326507024, %v967
        %v983 = vor.u32 %v981, %v982
        %vm984 = vcmp.lt.s32.totalorder %v965, 1
        %vm985 = vcmp.lt.s32.totalorder %v965, 2
        %vm986 = vcmp.lt.s32.totalorder %v965, 3
        %vm987 = vcmp.lt.s32.totalorder %v965, 4
        %v988 = vsel %vm984, %v968, %v971
        %v989 = vsel %vm987, %v977, 2102212464
        %v990 = vsel %vm986, %v974, %v989
        %v991 = vsel %vm985, %v988, %v990
        %v992 = vsel %vm984, %v971, %v974
        %v993 = vsel %vm987, %v980, 920167782
        %v994 = vsel %vm986, %v977, %v993
        %v995 = vsel %vm985, %v992, %v994
        %v996 = vsel %vm984, %v974, %v977
        %v997 = vsel %vm987, %v983, 1326507024
        %v998 = vsel %vm986, %v980, %v997
        %v999 = vsel %vm985, %v996, %v998
        %v1000 = vshll.u32 %v960, 8
        %v1001 = vmul.u32.u64.compose %v1000, %v999
        %v1002 = vextract.low.u32 %v1001
        %v1003 = vextract.high.u32 %v1001
        %v1004 = vmul.u32.u64.compose %v1000, %v995
        %v1005 = vextract.low.u32 %v1004
        %v1006 = vextract.high.u32 %v1004
        %v1007 = vmul.u32 %v1000, %v991
        %v1008 = vadd.s32 %v1003, %v1005
        %vm1009 = vc.u32 %v1003, %v1005
        %v1010 = vadd.s32 %v1006, 1
        %v1011 = vsel %vm1009, %v1010, %v1006
        %v1012 = vadd.s32 %v1007, %v1011
        %v1013 = vadd.s32 %v1012, 536870912
        %v1014 = vshrl.u32 %v1013, 30
        %v1015 = vshll.u32 %v1014, 30
        %v1016 = vsub.s32 %v1012, %v1015
        %vm1017 = vcmp.lt.s32.totalorder %v1016, 0
        %v1018 = vsub.s32 0, %v1016
        %v1019 = vsel %vm1017, %v1018, %v1016
        %v1020 = vclz %v1019
        %v1021 = vsub.s32 %v1020, 2
        %vm1022 = vcmp.gt.s32.totalorder 0, %v1021
        %v1023 = vsel %vm1022, 0, %v1021
        %v1024 = vsub.s32 32, %v1023
        %v1025 = vshll.u32 %v1016, %v1023
        %v1026 = vshrl.u32 %v1008, %v1024
        %v1027 = vor.u32 %v1025, %v1026
        %v1028 = vsub.s32 4294967266, %v1023
        %v1029 = vadd.s32 %v1028, 127
        %v1030 = vshll.u32 %v1029, 23
        %v1031 = vor.u32 4788187, %v1030
        %v1032 = vand.u32 2147483647, %v1031
        %v1034 = vcvt.s32.f32 %v1027
        %v1035 = vmul.f32 %v1034, %v1032
        %v1036 = vxor.u32 %v1035, 2147483648
        %v1037 = vsel %vm954, %v1036, %v1035
        %v1038 = vsub.s32 4, %v1014
        %v1039 = vsel %vm954, %v1038, %v1014
        %v1040 = vsel %vm953, %v410, %v1037
        %v1041 = vsel %vm953, 0, %v1039
        %v1042 = vcosq.f32.pop %v1040
        %v1043 = vsinq.f32.pop %v1040
        %vm1044 = vweird.f32 %v410
        %v1045 = vand.u32 %v1041, 3
        %vm1046 = vcmp.lt.s32.totalorder %v1045, 2
        %vm1047 = vcmp.eq.s32.totalorder %v1045, 0
        %v1048 = vxor.u32 %v1043, 2147483648
        %v1049 = vsel %vm1047, %v1042, %v1048
        %vm1050 = vcmp.eq.s32.totalorder %v1045, 2
        %v1051 = vxor.u32 %v1042, 2147483648
        %v1052 = vsel %vm1050, %v1051, %v1043
        %v1053 = vsel %vm1046, %v1049, %v1052
        %v1054 = vsel %vm1044, nan, %v1053
        %v1055 = vand.u32 2147483647, %v411
        %vm1056 = vcmp.le.f32.partialorder %v1055, 0.7853982
        %vm1057 = vcmp.lt.s32.totalorder %v411, 0
        %v1058 = vand.u32 %v411, 2139095040
        %v1059 = vshrl.u32 %v1058, 23
        %v1060 = vsub.s32 %v1059, 127
        %v1061 = vand.u32 2147483647, %v411
        %v1062 = vand.u32 %v1061, 8388607
        %v1063 = vor.u32 %v1062, 8388608
        %v1064 = vsub.s32 0, %v1063
        %v1065 = vadd.s32 %v1060, 1
        %vm1066 = vcmp.gt.s32.totalorder %v1065, 0
        %v1067 = vsel %vm1066, %v1065, 0
        %v1068 = vshrl.u32 %v1067, 5
        %v1069 = vand.u32 %v1067, 31
        %v1070 = vsub.s32 32, %v1069
        %v1071 = vshrl.u32 683565275, %v1070
        %v1072 = vshll.u32 683565275, %v1069
        %v1073 = vshrl.u32 2475754826, %v1070
        %v1074 = vor.u32 %v1072, %v1073
        %v1075 = vshll.u32 2475754826, %v1069
        %v1076 = vshrl.u32 2131351028, %v1070
        %v1077 = vor.u32 %v1075, %v1076
        %v1078 = vshll.u32 2131351028, %v1069
        %v1079 = vshrl.u32 2102212464, %v1070
        %v1080 = vor.u32 %v1078, %v1079
        %v1081 = vshll.u32 2102212464, %v1069
        %v1082 = vshrl.u32 920167782, %v1070
        %v1083 = vor.u32 %v1081, %v1082
        %v1084 = vshll.u32 920167782, %v1069
        %v1085 = vshrl.u32 1326507024, %v1070
        %v1086 = vor.u32 %v1084, %v1085
        %vm1087 = vcmp.lt.s32.totalorder %v1068, 1
        %vm1088 = vcmp.lt.s32.totalorder %v1068, 2
        %vm1089 = vcmp.lt.s32.totalorder %v1068, 3
        %vm1090 = vcmp.lt.s32.totalorder %v1068, 4
        %v1091 = vsel %vm1087, %v1071, %v1074
        %v1092 = vsel %vm1090, %v1080, 2102212464
        %v1093 = vsel %vm1089, %v1077, %v1092
        %v1094 = vsel %vm1088, %v1091, %v1093
        %v1095 = vsel %vm1087, %v1074, %v1077
        %v1096 = vsel %vm1090, %v1083, 920167782
        %v1097 = vsel %vm1089, %v1080, %v1096
        %v1098 = vsel %vm1088, %v1095, %v1097
        %v1099 = vsel %vm1087, %v1077, %v1080
        %v1100 = vsel %vm1090, %v1086, 1326507024
        %v1101 = vsel %vm1089, %v1083, %v1100
        %v1102 = vsel %vm1088, %v1099, %v1101
        %v1103 = vshll.u32 %v1063, 8
        %v1104 = vmul.u32.u64.compose %v1103, %v1102
        %v1105 = vextract.low.u32 %v1104
        %v1106 = vextract.high.u32 %v1104
        %v1107 = vmul.u32.u64.compose %v1103, %v1098
        %v1108 = vextract.low.u32 %v1107
        %v1109 = vextract.high.u32 %v1107
        %v1110 = vmul.u32 %v1103, %v1094
        %v1111 = vadd.s32 %v1106, %v1108
        %vm1112 = vc.u32 %v1106, %v1108
        %v1113 = vadd.s32 %v1109, 1
        %v1114 = vsel %vm1112, %v1113, %v1109
        %v1115 = vadd.s32 %v1110, %v1114
        %v1116 = vadd.s32 %v1115, 536870912
        %v1117 = vshrl.u32 %v1116, 30
        %v1118 = vshll.u32 %v1117, 30
        %v1119 = vsub.s32 %v1115, %v1118
        %vm1120 = vcmp.lt.s32.totalorder %v1119, 0
        %v1121 = vsub.s32 0, %v1119
        %v1122 = vsel %vm1120, %v1121, %v1119
        %v1123 = vclz %v1122
        %v1124 = vsub.s32 %v1123, 2
        %vm1125 = vcmp.gt.s32.totalorder 0, %v1124
        %v1126 = vsel %vm1125, 0, %v1124
        %v1127 = vsub.s32 32, %v1126
        %v1128 = vshll.u32 %v1119, %v1126
        %v1129 = vshrl.u32 %v1111, %v1127
        %v1130 = vor.u32 %v1128, %v1129
        %v1131 = vsub.s32 4294967266, %v1126
        %v1132 = vadd.s32 %v1131, 127
        %v1133 = vshll.u32 %v1132, 23
        %v1134 = vor.u32 4788187, %v1133
        %v1135 = vand.u32 2147483647, %v1134
        %v1137 = vcvt.s32.f32 %v1130
        %v1138 = vmul.f32 %v1137, %v1135
        %v1139 = vxor.u32 %v1138, 2147483648
        %v1140 = vsel %vm1057, %v1139, %v1138
        %v1141 = vsub.s32 4, %v1117
        %v1142 = vsel %vm1057, %v1141, %v1117
        %v1143 = vsel %vm1056, %v411, %v1140
        %v1144 = vsel %vm1056, 0, %v1142
        %v1145 = vcosq.f32.pop %v1143
        %v1146 = vsinq.f32.pop %v1143
        %vm1147 = vweird.f32 %v411
        %v1148 = vand.u32 %v1144, 3
        %vm1149 = vcmp.lt.s32.totalorder %v1148, 2
        %vm1150 = vcmp.eq.s32.totalorder %v1148, 0
        %v1151 = vxor.u32 %v1146, 2147483648
        %v1152 = vsel %vm1150, %v1145, %v1151
        %vm1153 = vcmp.eq.s32.totalorder %v1148, 2
        %v1154 = vxor.u32 %v1145, 2147483648
        %v1155 = vsel %vm1153, %v1154, %v1146
        %v1156 = vsel %vm1149, %v1152, %v1155
        %v1157 = vsel %vm1147, nan, %v1156
        %v1158 = vand.u32 2147483647, %v412
        %vm1159 = vcmp.le.f32.partialorder %v1158, 0.7853982
        %vm1160 = vcmp.lt.s32.totalorder %v412, 0
        %v1161 = vand.u32 %v412, 2139095040
        %v1162 = vshrl.u32 %v1161, 23
        %v1163 = vsub.s32 %v1162, 127
        %v1164 = vand.u32 2147483647, %v412
        %v1165 = vand.u32 %v1164, 8388607
        %v1166 = vor.u32 %v1165, 8388608
        %v1167 = vsub.s32 0, %v1166
        %v1168 = vadd.s32 %v1163, 1
        %vm1169 = vcmp.gt.s32.totalorder %v1168, 0
        %v1170 = vsel %vm1169, %v1168, 0
        %v1171 = vshrl.u32 %v1170, 5
        %v1172 = vand.u32 %v1170, 31
        %v1173 = vsub.s32 32, %v1172
        %v1174 = vshrl.u32 683565275, %v1173
        %v1175 = vshll.u32 683565275, %v1172
        %v1176 = vshrl.u32 2475754826, %v1173
        %v1177 = vor.u32 %v1175, %v1176
        %v1178 = vshll.u32 2475754826, %v1172
        %v1179 = vshrl.u32 2131351028, %v1173
        %v1180 = vor.u32 %v1178, %v1179
        %v1181 = vshll.u32 2131351028, %v1172
        %v1182 = vshrl.u32 2102212464, %v1173
        %v1183 = vor.u32 %v1181, %v1182
        %v1184 = vshll.u32 2102212464, %v1172
        %v1185 = vshrl.u32 920167782, %v1173
        %v1186 = vor.u32 %v1184, %v1185
        %v1187 = vshll.u32 920167782, %v1172
        %v1188 = vshrl.u32 1326507024, %v1173
        %v1189 = vor.u32 %v1187, %v1188
        %vm1190 = vcmp.lt.s32.totalorder %v1171, 1
        %vm1191 = vcmp.lt.s32.totalorder %v1171, 2
        %vm1192 = vcmp.lt.s32.totalorder %v1171, 3
        %vm1193 = vcmp.lt.s32.totalorder %v1171, 4
        %v1194 = vsel %vm1190, %v1174, %v1177
        %v1195 = vsel %vm1193, %v1183, 2102212464
        %v1196 = vsel %vm1192, %v1180, %v1195
        %v1197 = vsel %vm1191, %v1194, %v1196
        %v1198 = vsel %vm1190, %v1177, %v1180
        %v1199 = vsel %vm1193, %v1186, 920167782
        %v1200 = vsel %vm1192, %v1183, %v1199
        %v1201 = vsel %vm1191, %v1198, %v1200
        %v1202 = vsel %vm1190, %v1180, %v1183
        %v1203 = vsel %vm1193, %v1189, 1326507024
        %v1204 = vsel %vm1192, %v1186, %v1203
        %v1205 = vsel %vm1191, %v1202, %v1204
        %v1206 = vshll.u32 %v1166, 8
        %v1207 = vmul.u32.u64.compose %v1206, %v1205
        %v1208 = vextract.low.u32 %v1207
        %v1209 = vextract.high.u32 %v1207
        %v1210 = vmul.u32.u64.compose %v1206, %v1201
        %v1211 = vextract.low.u32 %v1210
        %v1212 = vextract.high.u32 %v1210
        %v1213 = vmul.u32 %v1206, %v1197
        %v1214 = vadd.s32 %v1209, %v1211
        %vm1215 = vc.u32 %v1209, %v1211
        %v1216 = vadd.s32 %v1212, 1
        %v1217 = vsel %vm1215, %v1216, %v1212
        %v1218 = vadd.s32 %v1213, %v1217
        %v1219 = vadd.s32 %v1218, 536870912
        %v1220 = vshrl.u32 %v1219, 30
        %v1221 = vshll.u32 %v1220, 30
        %v1222 = vsub.s32 %v1218, %v1221
        %vm1223 = vcmp.lt.s32.totalorder %v1222, 0
        %v1224 = vsub.s32 0, %v1222
        %v1225 = vsel %vm1223, %v1224, %v1222
        %v1226 = vclz %v1225
        %v1227 = vsub.s32 %v1226, 2
        %vm1228 = vcmp.gt.s32.totalorder 0, %v1227
        %v1229 = vsel %vm1228, 0, %v1227
        %v1230 = vsub.s32 32, %v1229
        %v1231 = vshll.u32 %v1222, %v1229
        %v1232 = vshrl.u32 %v1214, %v1230
        %v1233 = vor.u32 %v1231, %v1232
        %v1234 = vsub.s32 4294967266, %v1229
        %v1235 = vadd.s32 %v1234, 127
        %v1236 = vshll.u32 %v1235, 23
        %v1237 = vor.u32 4788187, %v1236
        %v1238 = vand.u32 2147483647, %v1237
        %v1240 = vcvt.s32.f32 %v1233
        %v1241 = vmul.f32 %v1240, %v1238
        %v1242 = vxor.u32 %v1241, 2147483648
        %v1243 = vsel %vm1160, %v1242, %v1241
        %v1244 = vsub.s32 4, %v1220
        %v1245 = vsel %vm1160, %v1244, %v1220
        %v1246 = vsel %vm1159, %v412, %v1243
        %v1247 = vsel %vm1159, 0, %v1245
        %v1248 = vcosq.f32.pop %v1246
        %v1249 = vsinq.f32.pop %v1246
        %vm1250 = vweird.f32 %v412
        %v1251 = vand.u32 %v1247, 3
        %vm1252 = vcmp.lt.s32.totalorder %v1251, 2
        %vm1253 = vcmp.eq.s32.totalorder %v1251, 0
        %v1254 = vxor.u32 %v1249, 2147483648
        %v1255 = vsel %vm1253, %v1248, %v1254
        %vm1256 = vcmp.eq.s32.totalorder %v1251, 2
        %v1257 = vxor.u32 %v1248, 2147483648
        %v1258 = vsel %vm1256, %v1257, %v1249
        %v1259 = vsel %vm1252, %v1255, %v1258
        %v1260 = vsel %vm1250, nan, %v1259
        %v1261 = vand.u32 2147483647, %v413
        %vm1262 = vcmp.le.f32.partialorder %v1261, 0.7853982
        %vm1263 = vcmp.lt.s32.totalorder %v413, 0
        %v1264 = vand.u32 %v413, 2139095040
        %v1265 = vshrl.u32 %v1264, 23
        %v1266 = vsub.s32 %v1265, 127
        %v1267 = vand.u32 2147483647, %v413
        %v1268 = vand.u32 %v1267, 8388607
        %v1269 = vor.u32 %v1268, 8388608
        %v1270 = vsub.s32 0, %v1269
        %v1271 = vadd.s32 %v1266, 1
        %vm1272 = vcmp.gt.s32.totalorder %v1271, 0
        %v1273 = vsel %vm1272, %v1271, 0
        %v1274 = vshrl.u32 %v1273, 5
        %v1275 = vand.u32 %v1273, 31
        %v1276 = vsub.s32 32, %v1275
        %v1277 = vshrl.u32 683565275, %v1276
        %v1278 = vshll.u32 683565275, %v1275
        %v1279 = vshrl.u32 2475754826, %v1276
        %v1280 = vor.u32 %v1278, %v1279
        %v1281 = vshll.u32 2475754826, %v1275
        %v1282 = vshrl.u32 2131351028, %v1276
        %v1283 = vor.u32 %v1281, %v1282
        %v1284 = vshll.u32 2131351028, %v1275
        %v1285 = vshrl.u32 2102212464, %v1276
        %v1286 = vor.u32 %v1284, %v1285
        %v1287 = vshll.u32 2102212464, %v1275
        %v1288 = vshrl.u32 920167782, %v1276
        %v1289 = vor.u32 %v1287, %v1288
        %v1290 = vshll.u32 920167782, %v1275
        %v1291 = vshrl.u32 1326507024, %v1276
        %v1292 = vor.u32 %v1290, %v1291
        %vm1293 = vcmp.lt.s32.totalorder %v1274, 1
        %vm1294 = vcmp.lt.s32.totalorder %v1274, 2
        %vm1295 = vcmp.lt.s32.totalorder %v1274, 3
        %vm1296 = vcmp.lt.s32.totalorder %v1274, 4
        %v1297 = vsel %vm1293, %v1277, %v1280
        %v1298 = vsel %vm1296, %v1286, 2102212464
        %v1299 = vsel %vm1295, %v1283, %v1298
        %v1300 = vsel %vm1294, %v1297, %v1299
        %v1301 = vsel %vm1293, %v1280, %v1283
        %v1302 = vsel %vm1296, %v1289, 920167782
        %v1303 = vsel %vm1295, %v1286, %v1302
        %v1304 = vsel %vm1294, %v1301, %v1303
        %v1305 = vsel %vm1293, %v1283, %v1286
        %v1306 = vsel %vm1296, %v1292, 1326507024
        %v1307 = vsel %vm1295, %v1289, %v1306
        %v1308 = vsel %vm1294, %v1305, %v1307
        %v1309 = vshll.u32 %v1269, 8
        %v1310 = vmul.u32.u64.compose %v1309, %v1308
        %v1311 = vextract.low.u32 %v1310
        %v1312 = vextract.high.u32 %v1310
        %v1313 = vmul.u32.u64.compose %v1309, %v1304
        %v1314 = vextract.low.u32 %v1313
        %v1315 = vextract.high.u32 %v1313
        %v1316 = vmul.u32 %v1309, %v1300
        %v1317 = vadd.s32 %v1312, %v1314
        %vm1318 = vc.u32 %v1312, %v1314
        %v1319 = vadd.s32 %v1315, 1
        %v1320 = vsel %vm1318, %v1319, %v1315
        %v1321 = vadd.s32 %v1316, %v1320
        %v1322 = vadd.s32 %v1321, 536870912
        %v1323 = vshrl.u32 %v1322, 30
        %v1324 = vshll.u32 %v1323, 30
        %v1325 = vsub.s32 %v1321, %v1324
        %vm1326 = vcmp.lt.s32.totalorder %v1325, 0
        %v1327 = vsub.s32 0, %v1325
        %v1328 = vsel %vm1326, %v1327, %v1325
        %v1329 = vclz %v1328
        %v1330 = vsub.s32 %v1329, 2
        %vm1331 = vcmp.gt.s32.totalorder 0, %v1330
        %v1332 = vsel %vm1331, 0, %v1330
        %v1333 = vsub.s32 32, %v1332
        %v1334 = vshll.u32 %v1325, %v1332
        %v1335 = vshrl.u32 %v1317, %v1333
        %v1336 = vor.u32 %v1334, %v1335
        %v1337 = vsub.s32 4294967266, %v1332
        %v1338 = vadd.s32 %v1337, 127
        %v1339 = vshll.u32 %v1338, 23
        %v1340 = vor.u32 4788187, %v1339
        %v1341 = vand.u32 2147483647, %v1340
        %v1343 = vcvt.s32.f32 %v1336
        %v1344 = vmul.f32 %v1343, %v1341
        %v1345 = vxor.u32 %v1344, 2147483648
        %v1346 = vsel %vm1263, %v1345, %v1344
        %v1347 = vsub.s32 4, %v1323
        %v1348 = vsel %vm1263, %v1347, %v1323
        %v1349 = vsel %vm1262, %v413, %v1346
        %v1350 = vsel %vm1262, 0, %v1348
        %v1351 = vcosq.f32.pop %v1349
        %v1352 = vsinq.f32.pop %v1349
        %vm1353 = vweird.f32 %v413
        %v1354 = vand.u32 %v1350, 3
        %vm1355 = vcmp.lt.s32.totalorder %v1354, 2
        %vm1356 = vcmp.eq.s32.totalorder %v1354, 0
        %v1357 = vxor.u32 %v1352, 2147483648
        %v1358 = vsel %vm1356, %v1351, %v1357
        %vm1359 = vcmp.eq.s32.totalorder %v1354, 2
        %v1360 = vxor.u32 %v1351, 2147483648
        %v1361 = vsel %vm1359, %v1360, %v1352
        %v1362 = vsel %vm1355, %v1358, %v1361
        %v1363 = vsel %vm1353, nan, %v1362
        %v1364 = vand.u32 2147483647, %v414
        %vm1365 = vcmp.le.f32.partialorder %v1364, 0.7853982
        %vm1366 = vcmp.lt.s32.totalorder %v414, 0
        %v1367 = vand.u32 %v414, 2139095040
        %v1368 = vshrl.u32 %v1367, 23
        %v1369 = vsub.s32 %v1368, 127
        %v1370 = vand.u32 2147483647, %v414
        %v1371 = vand.u32 %v1370, 8388607
        %v1372 = vor.u32 %v1371, 8388608
        %v1373 = vsub.s32 0, %v1372
        %v1374 = vadd.s32 %v1369, 1
        %vm1375 = vcmp.gt.s32.totalorder %v1374, 0
        %v1376 = vsel %vm1375, %v1374, 0
        %v1377 = vshrl.u32 %v1376, 5
        %v1378 = vand.u32 %v1376, 31
        %v1379 = vsub.s32 32, %v1378
        %v1380 = vshrl.u32 683565275, %v1379
        %v1381 = vshll.u32 683565275, %v1378
        %v1382 = vshrl.u32 2475754826, %v1379
        %v1383 = vor.u32 %v1381, %v1382
        %v1384 = vshll.u32 2475754826, %v1378
        %v1385 = vshrl.u32 2131351028, %v1379
        %v1386 = vor.u32 %v1384, %v1385
        %v1387 = vshll.u32 2131351028, %v1378
        %v1388 = vshrl.u32 2102212464, %v1379
        %v1389 = vor.u32 %v1387, %v1388
        %v1390 = vshll.u32 2102212464, %v1378
        %v1391 = vshrl.u32 920167782, %v1379
        %v1392 = vor.u32 %v1390, %v1391
        %v1393 = vshll.u32 920167782, %v1378
        %v1394 = vshrl.u32 1326507024, %v1379
        %v1395 = vor.u32 %v1393, %v1394
        %vm1396 = vcmp.lt.s32.totalorder %v1377, 1
        %vm1397 = vcmp.lt.s32.totalorder %v1377, 2
        %vm1398 = vcmp.lt.s32.totalorder %v1377, 3
        %vm1399 = vcmp.lt.s32.totalorder %v1377, 4
        %v1400 = vsel %vm1396, %v1380, %v1383
        %v1401 = vsel %vm1399, %v1389, 2102212464
        %v1402 = vsel %vm1398, %v1386, %v1401
        %v1403 = vsel %vm1397, %v1400, %v1402
        %v1404 = vsel %vm1396, %v1383, %v1386
        %v1405 = vsel %vm1399, %v1392, 920167782
        %v1406 = vsel %vm1398, %v1389, %v1405
        %v1407 = vsel %vm1397, %v1404, %v1406
        %v1408 = vsel %vm1396, %v1386, %v1389
        %v1409 = vsel %vm1399, %v1395, 1326507024
        %v1410 = vsel %vm1398, %v1392, %v1409
        %v1411 = vsel %vm1397, %v1408, %v1410
        %v1412 = vshll.u32 %v1372, 8
        %v1413 = vmul.u32.u64.compose %v1412, %v1411
        %v1414 = vextract.low.u32 %v1413
        %v1415 = vextract.high.u32 %v1413
        %v1416 = vmul.u32.u64.compose %v1412, %v1407
        %v1417 = vextract.low.u32 %v1416
        %v1418 = vextract.high.u32 %v1416
        %v1419 = vmul.u32 %v1412, %v1403
        %v1420 = vadd.s32 %v1415, %v1417
        %vm1421 = vc.u32 %v1415, %v1417
        %v1422 = vadd.s32 %v1418, 1
        %v1423 = vsel %vm1421, %v1422, %v1418
        %v1424 = vadd.s32 %v1419, %v1423
        %v1425 = vadd.s32 %v1424, 536870912
        %v1426 = vshrl.u32 %v1425, 30
        %v1427 = vshll.u32 %v1426, 30
        %v1428 = vsub.s32 %v1424, %v1427
        %vm1429 = vcmp.lt.s32.totalorder %v1428, 0
        %v1430 = vsub.s32 0, %v1428
        %v1431 = vsel %vm1429, %v1430, %v1428
        %v1432 = vclz %v1431
        %v1433 = vsub.s32 %v1432, 2
        %vm1434 = vcmp.gt.s32.totalorder 0, %v1433
        %v1435 = vsel %vm1434, 0, %v1433
        %v1436 = vsub.s32 32, %v1435
        %v1437 = vshll.u32 %v1428, %v1435
        %v1438 = vshrl.u32 %v1420, %v1436
        %v1439 = vor.u32 %v1437, %v1438
        %v1440 = vsub.s32 4294967266, %v1435
        %v1441 = vadd.s32 %v1440, 127
        %v1442 = vshll.u32 %v1441, 23
        %v1443 = vor.u32 4788187, %v1442
        %v1444 = vand.u32 2147483647, %v1443
        %v1446 = vcvt.s32.f32 %v1439
        %v1447 = vmul.f32 %v1446, %v1444
        %v1448 = vxor.u32 %v1447, 2147483648
        %v1449 = vsel %vm1366, %v1448, %v1447
        %v1450 = vsub.s32 4, %v1426
        %v1451 = vsel %vm1366, %v1450, %v1426
        %v1452 = vsel %vm1365, %v414, %v1449
        %v1453 = vsel %vm1365, 0, %v1451
        %v1454 = vcosq.f32.pop %v1452
        %v1455 = vsinq.f32.pop %v1452
        %vm1456 = vweird.f32 %v414
        %v1457 = vand.u32 %v1453, 3
        %vm1458 = vcmp.lt.s32.totalorder %v1457, 2
        %vm1459 = vcmp.eq.s32.totalorder %v1457, 0
        %v1460 = vxor.u32 %v1455, 2147483648
        %v1461 = vsel %vm1459, %v1454, %v1460
        %vm1462 = vcmp.eq.s32.totalorder %v1457, 2
        %v1463 = vxor.u32 %v1454, 2147483648
        %v1464 = vsel %vm1462, %v1463, %v1455
        %v1465 = vsel %vm1458, %v1461, %v1464
        %v1466 = vsel %vm1456, nan, %v1465
        %v1467 = vand.u32 2147483647, %v415
        %vm1468 = vcmp.le.f32.partialorder %v1467, 0.7853982
        %vm1469 = vcmp.lt.s32.totalorder %v415, 0
        %v1470 = vand.u32 %v415, 2139095040
        %v1471 = vshrl.u32 %v1470, 23
        %v1472 = vsub.s32 %v1471, 127
        %v1473 = vand.u32 2147483647, %v415
        %v1474 = vand.u32 %v1473, 8388607
        %v1475 = vor.u32 %v1474, 8388608
        %v1476 = vsub.s32 0, %v1475
        %v1477 = vadd.s32 %v1472, 1
        %vm1478 = vcmp.gt.s32.totalorder %v1477, 0
        %v1479 = vsel %vm1478, %v1477, 0
        %v1480 = vshrl.u32 %v1479, 5
        %v1481 = vand.u32 %v1479, 31
        %v1482 = vsub.s32 32, %v1481
        %v1483 = vshrl.u32 683565275, %v1482
        %v1484 = vshll.u32 683565275, %v1481
        %v1485 = vshrl.u32 2475754826, %v1482
        %v1486 = vor.u32 %v1484, %v1485
        %v1487 = vshll.u32 2475754826, %v1481
        %v1488 = vshrl.u32 2131351028, %v1482
        %v1489 = vor.u32 %v1487, %v1488
        %v1490 = vshll.u32 2131351028, %v1481
        %v1491 = vshrl.u32 2102212464, %v1482
        %v1492 = vor.u32 %v1490, %v1491
        %v1493 = vshll.u32 2102212464, %v1481
        %v1494 = vshrl.u32 920167782, %v1482
        %v1495 = vor.u32 %v1493, %v1494
        %v1496 = vshll.u32 920167782, %v1481
        %v1497 = vshrl.u32 1326507024, %v1482
        %v1498 = vor.u32 %v1496, %v1497
        %vm1499 = vcmp.lt.s32.totalorder %v1480, 1
        %vm1500 = vcmp.lt.s32.totalorder %v1480, 2
        %vm1501 = vcmp.lt.s32.totalorder %v1480, 3
        %vm1502 = vcmp.lt.s32.totalorder %v1480, 4
        %v1503 = vsel %vm1499, %v1483, %v1486
        %v1504 = vsel %vm1502, %v1492, 2102212464
        %v1505 = vsel %vm1501, %v1489, %v1504
        %v1506 = vsel %vm1500, %v1503, %v1505
        %v1507 = vsel %vm1499, %v1486, %v1489
        %v1508 = vsel %vm1502, %v1495, 920167782
        %v1509 = vsel %vm1501, %v1492, %v1508
        %v1510 = vsel %vm1500, %v1507, %v1509
        %v1511 = vsel %vm1499, %v1489, %v1492
        %v1512 = vsel %vm1502, %v1498, 1326507024
        %v1513 = vsel %vm1501, %v1495, %v1512
        %v1514 = vsel %vm1500, %v1511, %v1513
        %v1515 = vshll.u32 %v1475, 8
        %v1516 = vmul.u32.u64.compose %v1515, %v1514
        %v1517 = vextract.low.u32 %v1516
        %v1518 = vextract.high.u32 %v1516
        %v1519 = vmul.u32.u64.compose %v1515, %v1510
        %v1520 = vextract.low.u32 %v1519
        %v1521 = vextract.high.u32 %v1519
        %v1522 = vmul.u32 %v1515, %v1506
        %v1523 = vadd.s32 %v1518, %v1520
        %vm1524 = vc.u32 %v1518, %v1520
        %v1525 = vadd.s32 %v1521, 1
        %v1526 = vsel %vm1524, %v1525, %v1521
        %v1527 = vadd.s32 %v1522, %v1526
        %v1528 = vadd.s32 %v1527, 536870912
        %v1529 = vshrl.u32 %v1528, 30
        %v1530 = vshll.u32 %v1529, 30
        %v1531 = vsub.s32 %v1527, %v1530
        %vm1532 = vcmp.lt.s32.totalorder %v1531, 0
        %v1533 = vsub.s32 0, %v1531
        %v1534 = vsel %vm1532, %v1533, %v1531
        %v1535 = vclz %v1534
        %v1536 = vsub.s32 %v1535, 2
        %vm1537 = vcmp.gt.s32.totalorder 0, %v1536
        %v1538 = vsel %vm1537, 0, %v1536
        %v1539 = vsub.s32 32, %v1538
        %v1540 = vshll.u32 %v1531, %v1538
        %v1541 = vshrl.u32 %v1523, %v1539
        %v1542 = vor.u32 %v1540, %v1541
        %v1543 = vsub.s32 4294967266, %v1538
        %v1544 = vadd.s32 %v1543, 127
        %v1545 = vshll.u32 %v1544, 23
        %v1546 = vor.u32 4788187, %v1545
        %v1547 = vand.u32 2147483647, %v1546
        %v1549 = vcvt.s32.f32 %v1542
        %v1550 = vmul.f32 %v1549, %v1547
        %v1551 = vxor.u32 %v1550, 2147483648
        %v1552 = vsel %vm1469, %v1551, %v1550
        %v1553 = vsub.s32 4, %v1529
        %v1554 = vsel %vm1469, %v1553, %v1529
        %v1555 = vsel %vm1468, %v415, %v1552
        %v1556 = vsel %vm1468, 0, %v1554
        %v1557 = vcosq.f32.pop %v1555
        %v1558 = vsinq.f32.pop %v1555
        %vm1559 = vweird.f32 %v415
        %v1560 = vand.u32 %v1556, 3
        %vm1561 = vcmp.lt.s32.totalorder %v1560, 2
        %vm1562 = vcmp.eq.s32.totalorder %v1560, 0
        %v1563 = vxor.u32 %v1558, 2147483648
        %v1564 = vsel %vm1562, %v1557, %v1563
        %vm1565 = vcmp.eq.s32.totalorder %v1560, 2
        %v1566 = vxor.u32 %v1557, 2147483648
        %v1567 = vsel %vm1565, %v1566, %v1558
        %v1568 = vsel %vm1561, %v1564, %v1567
        %v1569 = vsel %vm1559, nan, %v1568
        %v1570 = vand.u32 2147483647, %v416
        %vm1571 = vcmp.le.f32.partialorder %v1570, 0.7853982
        %vm1572 = vcmp.lt.s32.totalorder %v416, 0
        %v1573 = vand.u32 %v416, 2139095040
        %v1574 = vshrl.u32 %v1573, 23
        %v1575 = vsub.s32 %v1574, 127
        %v1576 = vand.u32 2147483647, %v416
        %v1577 = vand.u32 %v1576, 8388607
        %v1578 = vor.u32 %v1577, 8388608
        %v1579 = vsub.s32 0, %v1578
        %v1580 = vadd.s32 %v1575, 1
        %vm1581 = vcmp.gt.s32.totalorder %v1580, 0
        %v1582 = vsel %vm1581, %v1580, 0
        %v1583 = vshrl.u32 %v1582, 5
        %v1584 = vand.u32 %v1582, 31
        %v1585 = vsub.s32 32, %v1584
        %v1586 = vshrl.u32 683565275, %v1585
        %v1587 = vshll.u32 683565275, %v1584
        %v1588 = vshrl.u32 2475754826, %v1585
        %v1589 = vor.u32 %v1587, %v1588
        %v1590 = vshll.u32 2475754826, %v1584
        %v1591 = vshrl.u32 2131351028, %v1585
        %v1592 = vor.u32 %v1590, %v1591
        %v1593 = vshll.u32 2131351028, %v1584
        %v1594 = vshrl.u32 2102212464, %v1585
        %v1595 = vor.u32 %v1593, %v1594
        %v1596 = vshll.u32 2102212464, %v1584
        %v1597 = vshrl.u32 920167782, %v1585
        %v1598 = vor.u32 %v1596, %v1597
        %v1599 = vshll.u32 920167782, %v1584
        %v1600 = vshrl.u32 1326507024, %v1585
        %v1601 = vor.u32 %v1599, %v1600
        %vm1602 = vcmp.lt.s32.totalorder %v1583, 1
        %vm1603 = vcmp.lt.s32.totalorder %v1583, 2
        %vm1604 = vcmp.lt.s32.totalorder %v1583, 3
        %vm1605 = vcmp.lt.s32.totalorder %v1583, 4
        %v1606 = vsel %vm1602, %v1586, %v1589
        %v1607 = vsel %vm1605, %v1595, 2102212464
        %v1608 = vsel %vm1604, %v1592, %v1607
        %v1609 = vsel %vm1603, %v1606, %v1608
        %v1610 = vsel %vm1602, %v1589, %v1592
        %v1611 = vsel %vm1605, %v1598, 920167782
        %v1612 = vsel %vm1604, %v1595, %v1611
        %v1613 = vsel %vm1603, %v1610, %v1612
        %v1614 = vsel %vm1602, %v1592, %v1595
        %v1615 = vsel %vm1605, %v1601, 1326507024
        %v1616 = vsel %vm1604, %v1598, %v1615
        %v1617 = vsel %vm1603, %v1614, %v1616
        %v1618 = vshll.u32 %v1578, 8
        %v1619 = vmul.u32.u64.compose %v1618, %v1617
        %v1620 = vextract.low.u32 %v1619
        %v1621 = vextract.high.u32 %v1619
        %v1622 = vmul.u32.u64.compose %v1618, %v1613
        %v1623 = vextract.low.u32 %v1622
        %v1624 = vextract.high.u32 %v1622
        %v1625 = vmul.u32 %v1618, %v1609
        %v1626 = vadd.s32 %v1621, %v1623
        %vm1627 = vc.u32 %v1621, %v1623
        %v1628 = vadd.s32 %v1624, 1
        %v1629 = vsel %vm1627, %v1628, %v1624
        %v1630 = vadd.s32 %v1625, %v1629
        %v1631 = vadd.s32 %v1630, 536870912
        %v1632 = vshrl.u32 %v1631, 30
        %v1633 = vshll.u32 %v1632, 30
        %v1634 = vsub.s32 %v1630, %v1633
        %vm1635 = vcmp.lt.s32.totalorder %v1634, 0
        %v1636 = vsub.s32 0, %v1634
        %v1637 = vsel %vm1635, %v1636, %v1634
        %v1638 = vclz %v1637
        %v1639 = vsub.s32 %v1638, 2
        %vm1640 = vcmp.gt.s32.totalorder 0, %v1639
        %v1641 = vsel %vm1640, 0, %v1639
        %v1642 = vsub.s32 32, %v1641
        %v1643 = vshll.u32 %v1634, %v1641
        %v1644 = vshrl.u32 %v1626, %v1642
        %v1645 = vor.u32 %v1643, %v1644
        %v1646 = vsub.s32 4294967266, %v1641
        %v1647 = vadd.s32 %v1646, 127
        %v1648 = vshll.u32 %v1647, 23
        %v1649 = vor.u32 4788187, %v1648
        %v1650 = vand.u32 2147483647, %v1649
        %v1652 = vcvt.s32.f32 %v1645
        %v1653 = vmul.f32 %v1652, %v1650
        %v1654 = vxor.u32 %v1653, 2147483648
        %v1655 = vsel %vm1572, %v1654, %v1653
        %v1656 = vsub.s32 4, %v1632
        %v1657 = vsel %vm1572, %v1656, %v1632
        %v1658 = vsel %vm1571, %v416, %v1655
        %v1659 = vsel %vm1571, 0, %v1657
        %v1660 = vcosq.f32.pop %v1658
        %v1661 = vsinq.f32.pop %v1658
        %vm1662 = vweird.f32 %v416
        %v1663 = vand.u32 %v1659, 3
        %vm1664 = vcmp.lt.s32.totalorder %v1663, 2
        %vm1665 = vcmp.eq.s32.totalorder %v1663, 0
        %v1666 = vxor.u32 %v1661, 2147483648
        %v1667 = vsel %vm1665, %v1660, %v1666
        %vm1668 = vcmp.eq.s32.totalorder %v1663, 2
        %v1669 = vxor.u32 %v1660, 2147483648
        %v1670 = vsel %vm1668, %v1669, %v1661
        %v1671 = vsel %vm1664, %v1667, %v1670
        %v1672 = vsel %vm1662, nan, %v1671
        %v1673 = vand.u32 2147483647, %v417
        %vm1674 = vcmp.le.f32.partialorder %v1673, 0.7853982
        %vm1675 = vcmp.lt.s32.totalorder %v417, 0
        %v1676 = vand.u32 %v417, 2139095040
        %v1677 = vshrl.u32 %v1676, 23
        %v1678 = vsub.s32 %v1677, 127
        %v1679 = vand.u32 2147483647, %v417
        %v1680 = vand.u32 %v1679, 8388607
        %v1681 = vor.u32 %v1680, 8388608
        %v1682 = vsub.s32 0, %v1681
        %v1683 = vadd.s32 %v1678, 1
        %vm1684 = vcmp.gt.s32.totalorder %v1683, 0
        %v1685 = vsel %vm1684, %v1683, 0
        %v1686 = vshrl.u32 %v1685, 5
        %v1687 = vand.u32 %v1685, 31
        %v1688 = vsub.s32 32, %v1687
        %v1689 = vshrl.u32 683565275, %v1688
        %v1690 = vshll.u32 683565275, %v1687
        %v1691 = vshrl.u32 2475754826, %v1688
        %v1692 = vor.u32 %v1690, %v1691
        %v1693 = vshll.u32 2475754826, %v1687
        %v1694 = vshrl.u32 2131351028, %v1688
        %v1695 = vor.u32 %v1693, %v1694
        %v1696 = vshll.u32 2131351028, %v1687
        %v1697 = vshrl.u32 2102212464, %v1688
        %v1698 = vor.u32 %v1696, %v1697
        %v1699 = vshll.u32 2102212464, %v1687
        %v1700 = vshrl.u32 920167782, %v1688
        %v1701 = vor.u32 %v1699, %v1700
        %v1702 = vshll.u32 920167782, %v1687
        %v1703 = vshrl.u32 1326507024, %v1688
        %v1704 = vor.u32 %v1702, %v1703
        %vm1705 = vcmp.lt.s32.totalorder %v1686, 1
        %vm1706 = vcmp.lt.s32.totalorder %v1686, 2
        %vm1707 = vcmp.lt.s32.totalorder %v1686, 3
        %vm1708 = vcmp.lt.s32.totalorder %v1686, 4
        %v1709 = vsel %vm1705, %v1689, %v1692
        %v1710 = vsel %vm1708, %v1698, 2102212464
        %v1711 = vsel %vm1707, %v1695, %v1710
        %v1712 = vsel %vm1706, %v1709, %v1711
        %v1713 = vsel %vm1705, %v1692, %v1695
        %v1714 = vsel %vm1708, %v1701, 920167782
        %v1715 = vsel %vm1707, %v1698, %v1714
        %v1716 = vsel %vm1706, %v1713, %v1715
        %v1717 = vsel %vm1705, %v1695, %v1698
        %v1718 = vsel %vm1708, %v1704, 1326507024
        %v1719 = vsel %vm1707, %v1701, %v1718
        %v1720 = vsel %vm1706, %v1717, %v1719
        %v1721 = vshll.u32 %v1681, 8
        %v1722 = vmul.u32.u64.compose %v1721, %v1720
        %v1723 = vextract.low.u32 %v1722
        %v1724 = vextract.high.u32 %v1722
        %v1725 = vmul.u32.u64.compose %v1721, %v1716
        %v1726 = vextract.low.u32 %v1725
        %v1727 = vextract.high.u32 %v1725
        %v1728 = vmul.u32 %v1721, %v1712
        %v1729 = vadd.s32 %v1724, %v1726
        %vm1730 = vc.u32 %v1724, %v1726
        %v1731 = vadd.s32 %v1727, 1
        %v1732 = vsel %vm1730, %v1731, %v1727
        %v1733 = vadd.s32 %v1728, %v1732
        %v1734 = vadd.s32 %v1733, 536870912
        %v1735 = vshrl.u32 %v1734, 30
        %v1736 = vshll.u32 %v1735, 30
        %v1737 = vsub.s32 %v1733, %v1736
        %vm1738 = vcmp.lt.s32.totalorder %v1737, 0
        %v1739 = vsub.s32 0, %v1737
        %v1740 = vsel %vm1738, %v1739, %v1737
        %v1741 = vclz %v1740
        %v1742 = vsub.s32 %v1741, 2
        %vm1743 = vcmp.gt.s32.totalorder 0, %v1742
        %v1744 = vsel %vm1743, 0, %v1742
        %v1745 = vsub.s32 32, %v1744
        %v1746 = vshll.u32 %v1737, %v1744
        %v1747 = vshrl.u32 %v1729, %v1745
        %v1748 = vor.u32 %v1746, %v1747
        %v1749 = vsub.s32 4294967266, %v1744
        %v1750 = vadd.s32 %v1749, 127
        %v1751 = vshll.u32 %v1750, 23
        %v1752 = vor.u32 4788187, %v1751
        %v1753 = vand.u32 2147483647, %v1752
        %v1755 = vcvt.s32.f32 %v1748
        %v1756 = vmul.f32 %v1755, %v1753
        %v1757 = vxor.u32 %v1756, 2147483648
        %v1758 = vsel %vm1675, %v1757, %v1756
        %v1759 = vsub.s32 4, %v1735
        %v1760 = vsel %vm1675, %v1759, %v1735
        %v1761 = vsel %vm1674, %v417, %v1758
        %v1762 = vsel %vm1674, 0, %v1760
        %v1763 = vcosq.f32.pop %v1761
        %v1764 = vsinq.f32.pop %v1761
        %vm1765 = vweird.f32 %v417
        %v1766 = vand.u32 %v1762, 3
        %vm1767 = vcmp.lt.s32.totalorder %v1766, 2
        %vm1768 = vcmp.eq.s32.totalorder %v1766, 0
        %v1769 = vxor.u32 %v1764, 2147483648
        %v1770 = vsel %vm1768, %v1763, %v1769
        %vm1771 = vcmp.eq.s32.totalorder %v1766, 2
        %v1772 = vxor.u32 %v1763, 2147483648
        %v1773 = vsel %vm1771, %v1772, %v1764
        %v1774 = vsel %vm1767, %v1770, %v1773
        %v1775 = vsel %vm1765, nan, %v1774
        %v1776 = vand.u32 2147483647, %v418
        %vm1777 = vcmp.le.f32.partialorder %v1776, 0.7853982
        %vm1778 = vcmp.lt.s32.totalorder %v418, 0
        %v1779 = vand.u32 %v418, 2139095040
        %v1780 = vshrl.u32 %v1779, 23
        %v1781 = vsub.s32 %v1780, 127
        %v1782 = vand.u32 2147483647, %v418
        %v1783 = vand.u32 %v1782, 8388607
        %v1784 = vor.u32 %v1783, 8388608
        %v1785 = vsub.s32 0, %v1784
        %v1786 = vadd.s32 %v1781, 1
        %vm1787 = vcmp.gt.s32.totalorder %v1786, 0
        %v1788 = vsel %vm1787, %v1786, 0
        %v1789 = vshrl.u32 %v1788, 5
        %v1790 = vand.u32 %v1788, 31
        %v1791 = vsub.s32 32, %v1790
        %v1792 = vshrl.u32 683565275, %v1791
        %v1793 = vshll.u32 683565275, %v1790
        %v1794 = vshrl.u32 2475754826, %v1791
        %v1795 = vor.u32 %v1793, %v1794
        %v1796 = vshll.u32 2475754826, %v1790
        %v1797 = vshrl.u32 2131351028, %v1791
        %v1798 = vor.u32 %v1796, %v1797
        %v1799 = vshll.u32 2131351028, %v1790
        %v1800 = vshrl.u32 2102212464, %v1791
        %v1801 = vor.u32 %v1799, %v1800
        %v1802 = vshll.u32 2102212464, %v1790
        %v1803 = vshrl.u32 920167782, %v1791
        %v1804 = vor.u32 %v1802, %v1803
        %v1805 = vshll.u32 920167782, %v1790
        %v1806 = vshrl.u32 1326507024, %v1791
        %v1807 = vor.u32 %v1805, %v1806
        %vm1808 = vcmp.lt.s32.totalorder %v1789, 1
        %vm1809 = vcmp.lt.s32.totalorder %v1789, 2
        %vm1810 = vcmp.lt.s32.totalorder %v1789, 3
        %vm1811 = vcmp.lt.s32.totalorder %v1789, 4
        %v1812 = vsel %vm1808, %v1792, %v1795
        %v1813 = vsel %vm1811, %v1801, 2102212464
        %v1814 = vsel %vm1810, %v1798, %v1813
        %v1815 = vsel %vm1809, %v1812, %v1814
        %v1816 = vsel %vm1808, %v1795, %v1798
        %v1817 = vsel %vm1811, %v1804, 920167782
        %v1818 = vsel %vm1810, %v1801, %v1817
        %v1819 = vsel %vm1809, %v1816, %v1818
        %v1820 = vsel %vm1808, %v1798, %v1801
        %v1821 = vsel %vm1811, %v1807, 1326507024
        %v1822 = vsel %vm1810, %v1804, %v1821
        %v1823 = vsel %vm1809, %v1820, %v1822
        %v1824 = vshll.u32 %v1784, 8
        %v1825 = vmul.u32.u64.compose %v1824, %v1823
        %v1826 = vextract.low.u32 %v1825
        %v1827 = vextract.high.u32 %v1825
        %v1828 = vmul.u32.u64.compose %v1824, %v1819
        %v1829 = vextract.low.u32 %v1828
        %v1830 = vextract.high.u32 %v1828
        %v1831 = vmul.u32 %v1824, %v1815
        %v1832 = vadd.s32 %v1827, %v1829
        %vm1833 = vc.u32 %v1827, %v1829
        %v1834 = vadd.s32 %v1830, 1
        %v1835 = vsel %vm1833, %v1834, %v1830
        %v1836 = vadd.s32 %v1831, %v1835
        %v1837 = vadd.s32 %v1836, 536870912
        %v1838 = vshrl.u32 %v1837, 30
        %v1839 = vshll.u32 %v1838, 30
        %v1840 = vsub.s32 %v1836, %v1839
        %vm1841 = vcmp.lt.s32.totalorder %v1840, 0
        %v1842 = vsub.s32 0, %v1840
        %v1843 = vsel %vm1841, %v1842, %v1840
        %v1844 = vclz %v1843
        %v1845 = vsub.s32 %v1844, 2
        %vm1846 = vcmp.gt.s32.totalorder 0, %v1845
        %v1847 = vsel %vm1846, 0, %v1845
        %v1848 = vsub.s32 32, %v1847
        %v1849 = vshll.u32 %v1840, %v1847
        %v1850 = vshrl.u32 %v1832, %v1848
        %v1851 = vor.u32 %v1849, %v1850
        %v1852 = vsub.s32 4294967266, %v1847
        %v1853 = vadd.s32 %v1852, 127
        %v1854 = vshll.u32 %v1853, 23
        %v1855 = vor.u32 4788187, %v1854
        %v1856 = vand.u32 2147483647, %v1855
        %v1858 = vcvt.s32.f32 %v1851
        %v1859 = vmul.f32 %v1858, %v1856
        %v1860 = vxor.u32 %v1859, 2147483648
        %v1861 = vsel %vm1778, %v1860, %v1859
        %v1862 = vsub.s32 4, %v1838
        %v1863 = vsel %vm1778, %v1862, %v1838
        %v1864 = vsel %vm1777, %v418, %v1861
        %v1865 = vsel %vm1777, 0, %v1863
        %v1866 = vcosq.f32.pop %v1864
        %v1867 = vsinq.f32.pop %v1864
        %vm1868 = vweird.f32 %v418
        %v1869 = vand.u32 %v1865, 3
        %vm1870 = vcmp.lt.s32.totalorder %v1869, 2
        %vm1871 = vcmp.eq.s32.totalorder %v1869, 0
        %v1872 = vxor.u32 %v1867, 2147483648
        %v1873 = vsel %vm1871, %v1866, %v1872
        %vm1874 = vcmp.eq.s32.totalorder %v1869, 2
        %v1875 = vxor.u32 %v1866, 2147483648
        %v1876 = vsel %vm1874, %v1875, %v1867
        %v1877 = vsel %vm1870, %v1873, %v1876
        %v1878 = vsel %vm1868, nan, %v1877
        %v1879 = vand.u32 2147483647, %v419
        %vm1880 = vcmp.le.f32.partialorder %v1879, 0.7853982
        %vm1881 = vcmp.lt.s32.totalorder %v419, 0
        %v1882 = vand.u32 %v419, 2139095040
        %v1883 = vshrl.u32 %v1882, 23
        %v1884 = vsub.s32 %v1883, 127
        %v1885 = vand.u32 2147483647, %v419
        %v1886 = vand.u32 %v1885, 8388607
        %v1887 = vor.u32 %v1886, 8388608
        %v1888 = vsub.s32 0, %v1887
        %v1889 = vadd.s32 %v1884, 1
        %vm1890 = vcmp.gt.s32.totalorder %v1889, 0
        %v1891 = vsel %vm1890, %v1889, 0
        %v1892 = vshrl.u32 %v1891, 5
        %v1893 = vand.u32 %v1891, 31
        %v1894 = vsub.s32 32, %v1893
        %v1895 = vshrl.u32 683565275, %v1894
        %v1896 = vshll.u32 683565275, %v1893
        %v1897 = vshrl.u32 2475754826, %v1894
        %v1898 = vor.u32 %v1896, %v1897
        %v1899 = vshll.u32 2475754826, %v1893
        %v1900 = vshrl.u32 2131351028, %v1894
        %v1901 = vor.u32 %v1899, %v1900
        %v1902 = vshll.u32 2131351028, %v1893
        %v1903 = vshrl.u32 2102212464, %v1894
        %v1904 = vor.u32 %v1902, %v1903
        %v1905 = vshll.u32 2102212464, %v1893
        %v1906 = vshrl.u32 920167782, %v1894
        %v1907 = vor.u32 %v1905, %v1906
        %v1908 = vshll.u32 920167782, %v1893
        %v1909 = vshrl.u32 1326507024, %v1894
        %v1910 = vor.u32 %v1908, %v1909
        %vm1911 = vcmp.lt.s32.totalorder %v1892, 1
        %vm1912 = vcmp.lt.s32.totalorder %v1892, 2
        %vm1913 = vcmp.lt.s32.totalorder %v1892, 3
        %vm1914 = vcmp.lt.s32.totalorder %v1892, 4
        %v1915 = vsel %vm1911, %v1895, %v1898
        %v1916 = vsel %vm1914, %v1904, 2102212464
        %v1917 = vsel %vm1913, %v1901, %v1916
        %v1918 = vsel %vm1912, %v1915, %v1917
        %v1919 = vsel %vm1911, %v1898, %v1901
        %v1920 = vsel %vm1914, %v1907, 920167782
        %v1921 = vsel %vm1913, %v1904, %v1920
        %v1922 = vsel %vm1912, %v1919, %v1921
        %v1923 = vsel %vm1911, %v1901, %v1904
        %v1924 = vsel %vm1914, %v1910, 1326507024
        %v1925 = vsel %vm1913, %v1907, %v1924
        %v1926 = vsel %vm1912, %v1923, %v1925
        %v1927 = vshll.u32 %v1887, 8
        %v1928 = vmul.u32.u64.compose %v1927, %v1926
        %v1929 = vextract.low.u32 %v1928
        %v1930 = vextract.high.u32 %v1928
        %v1931 = vmul.u32.u64.compose %v1927, %v1922
        %v1932 = vextract.low.u32 %v1931
        %v1933 = vextract.high.u32 %v1931
        %v1934 = vmul.u32 %v1927, %v1918
        %v1935 = vadd.s32 %v1930, %v1932
        %vm1936 = vc.u32 %v1930, %v1932
        %v1937 = vadd.s32 %v1933, 1
        %v1938 = vsel %vm1936, %v1937, %v1933
        %v1939 = vadd.s32 %v1934, %v1938
        %v1940 = vadd.s32 %v1939, 536870912
        %v1941 = vshrl.u32 %v1940, 30
        %v1942 = vshll.u32 %v1941, 30
        %v1943 = vsub.s32 %v1939, %v1942
        %vm1944 = vcmp.lt.s32.totalorder %v1943, 0
        %v1945 = vsub.s32 0, %v1943
        %v1946 = vsel %vm1944, %v1945, %v1943
        %v1947 = vclz %v1946
        %v1948 = vsub.s32 %v1947, 2
        %vm1949 = vcmp.gt.s32.totalorder 0, %v1948
        %v1950 = vsel %vm1949, 0, %v1948
        %v1951 = vsub.s32 32, %v1950
        %v1952 = vshll.u32 %v1943, %v1950
        %v1953 = vshrl.u32 %v1935, %v1951
        %v1954 = vor.u32 %v1952, %v1953
        %v1955 = vsub.s32 4294967266, %v1950
        %v1956 = vadd.s32 %v1955, 127
        %v1957 = vshll.u32 %v1956, 23
        %v1958 = vor.u32 4788187, %v1957
        %v1959 = vand.u32 2147483647, %v1958
        %v1961 = vcvt.s32.f32 %v1954
        %v1962 = vmul.f32 %v1961, %v1959
        %v1963 = vxor.u32 %v1962, 2147483648
        %v1964 = vsel %vm1881, %v1963, %v1962
        %v1965 = vsub.s32 4, %v1941
        %v1966 = vsel %vm1881, %v1965, %v1941
        %v1967 = vsel %vm1880, %v419, %v1964
        %v1968 = vsel %vm1880, 0, %v1966
        %v1969 = vcosq.f32.pop %v1967
        %v1970 = vsinq.f32.pop %v1967
        %vm1971 = vweird.f32 %v419
        %v1972 = vand.u32 %v1968, 3
        %vm1973 = vcmp.lt.s32.totalorder %v1972, 2
        %vm1974 = vcmp.eq.s32.totalorder %v1972, 0
        %v1975 = vxor.u32 %v1970, 2147483648
        %v1976 = vsel %vm1974, %v1969, %v1975
        %vm1977 = vcmp.eq.s32.totalorder %v1972, 2
        %v1978 = vxor.u32 %v1969, 2147483648
        %v1979 = vsel %vm1977, %v1978, %v1970
        %v1980 = vsel %vm1973, %v1976, %v1979
        %v1981 = vsel %vm1971, nan, %v1980
        %v1982 = vand.u32 2147483647, %v420
        %vm1983 = vcmp.le.f32.partialorder %v1982, 0.7853982
        %vm1984 = vcmp.lt.s32.totalorder %v420, 0
        %v1985 = vand.u32 %v420, 2139095040
        %v1986 = vshrl.u32 %v1985, 23
        %v1987 = vsub.s32 %v1986, 127
        %v1988 = vand.u32 2147483647, %v420
        %v1989 = vand.u32 %v1988, 8388607
        %v1990 = vor.u32 %v1989, 8388608
        %v1991 = vsub.s32 0, %v1990
        %v1992 = vadd.s32 %v1987, 1
        %vm1993 = vcmp.gt.s32.totalorder %v1992, 0
        %v1994 = vsel %vm1993, %v1992, 0
        %v1995 = vshrl.u32 %v1994, 5
        %v1996 = vand.u32 %v1994, 31
        %v1997 = vsub.s32 32, %v1996
        %v1998 = vshrl.u32 683565275, %v1997
        %v1999 = vshll.u32 683565275, %v1996
        %v2000 = vshrl.u32 2475754826, %v1997
        %v2001 = vor.u32 %v1999, %v2000
        %v2002 = vshll.u32 2475754826, %v1996
        %v2003 = vshrl.u32 2131351028, %v1997
        %v2004 = vor.u32 %v2002, %v2003
        %v2005 = vshll.u32 2131351028, %v1996
        %v2006 = vshrl.u32 2102212464, %v1997
        %v2007 = vor.u32 %v2005, %v2006
        %v2008 = vshll.u32 2102212464, %v1996
        %v2009 = vshrl.u32 920167782, %v1997
        %v2010 = vor.u32 %v2008, %v2009
        %v2011 = vshll.u32 920167782, %v1996
        %v2012 = vshrl.u32 1326507024, %v1997
        %v2013 = vor.u32 %v2011, %v2012
        %vm2014 = vcmp.lt.s32.totalorder %v1995, 1
        %vm2015 = vcmp.lt.s32.totalorder %v1995, 2
        %vm2016 = vcmp.lt.s32.totalorder %v1995, 3
        %vm2017 = vcmp.lt.s32.totalorder %v1995, 4
        %v2018 = vsel %vm2014, %v1998, %v2001
        %v2019 = vsel %vm2017, %v2007, 2102212464
        %v2020 = vsel %vm2016, %v2004, %v2019
        %v2021 = vsel %vm2015, %v2018, %v2020
        %v2022 = vsel %vm2014, %v2001, %v2004
        %v2023 = vsel %vm2017, %v2010, 920167782
        %v2024 = vsel %vm2016, %v2007, %v2023
        %v2025 = vsel %vm2015, %v2022, %v2024
        %v2026 = vsel %vm2014, %v2004, %v2007
        %v2027 = vsel %vm2017, %v2013, 1326507024
        %v2028 = vsel %vm2016, %v2010, %v2027
        %v2029 = vsel %vm2015, %v2026, %v2028
        %v2030 = vshll.u32 %v1990, 8
        %v2031 = vmul.u32.u64.compose %v2030, %v2029
        %v2032 = vextract.low.u32 %v2031
        %v2033 = vextract.high.u32 %v2031
        %v2034 = vmul.u32.u64.compose %v2030, %v2025
        %v2035 = vextract.low.u32 %v2034
        %v2036 = vextract.high.u32 %v2034
        %v2037 = vmul.u32 %v2030, %v2021
        %v2038 = vadd.s32 %v2033, %v2035
        %vm2039 = vc.u32 %v2033, %v2035
        %v2040 = vadd.s32 %v2036, 1
        %v2041 = vsel %vm2039, %v2040, %v2036
        %v2042 = vadd.s32 %v2037, %v2041
        %v2043 = vadd.s32 %v2042, 536870912
        %v2044 = vshrl.u32 %v2043, 30
        %v2045 = vshll.u32 %v2044, 30
        %v2046 = vsub.s32 %v2042, %v2045
        %vm2047 = vcmp.lt.s32.totalorder %v2046, 0
        %v2048 = vsub.s32 0, %v2046
        %v2049 = vsel %vm2047, %v2048, %v2046
        %v2050 = vclz %v2049
        %v2051 = vsub.s32 %v2050, 2
        %vm2052 = vcmp.gt.s32.totalorder 0, %v2051
        %v2053 = vsel %vm2052, 0, %v2051
        %v2054 = vsub.s32 32, %v2053
        %v2055 = vshll.u32 %v2046, %v2053
        %v2056 = vshrl.u32 %v2038, %v2054
        %v2057 = vor.u32 %v2055, %v2056
        %v2058 = vsub.s32 4294967266, %v2053
        %v2059 = vadd.s32 %v2058, 127
        %v2060 = vshll.u32 %v2059, 23
        %v2061 = vor.u32 4788187, %v2060
        %v2062 = vand.u32 2147483647, %v2061
        %v2064 = vcvt.s32.f32 %v2057
        %v2065 = vmul.f32 %v2064, %v2062
        %v2066 = vxor.u32 %v2065, 2147483648
        %v2067 = vsel %vm1984, %v2066, %v2065
        %v2068 = vsub.s32 4, %v2044
        %v2069 = vsel %vm1984, %v2068, %v2044
        %v2070 = vsel %vm1983, %v420, %v2067
        %v2071 = vsel %vm1983, 0, %v2069
        %v2072 = vcosq.f32.pop %v2070
        %v2073 = vsinq.f32.pop %v2070
        %vm2074 = vweird.f32 %v420
        %v2075 = vand.u32 %v2071, 3
        %vm2076 = vcmp.lt.s32.totalorder %v2075, 2
        %vm2077 = vcmp.eq.s32.totalorder %v2075, 0
        %v2078 = vxor.u32 %v2073, 2147483648
        %v2079 = vsel %vm2077, %v2072, %v2078
        %vm2080 = vcmp.eq.s32.totalorder %v2075, 2
        %v2081 = vxor.u32 %v2072, 2147483648
        %v2082 = vsel %vm2080, %v2081, %v2073
        %v2083 = vsel %vm2076, %v2079, %v2082
        %v2084 = vsel %vm2074, nan, %v2083
        %v2085 = vand.u32 2147483647, %v421
        %vm2086 = vcmp.le.f32.partialorder %v2085, 0.7853982
        %vm2087 = vcmp.lt.s32.totalorder %v421, 0
        %v2088 = vand.u32 %v421, 2139095040
        %v2089 = vshrl.u32 %v2088, 23
        %v2090 = vsub.s32 %v2089, 127
        %v2091 = vand.u32 2147483647, %v421
        %v2092 = vand.u32 %v2091, 8388607
        %v2093 = vor.u32 %v2092, 8388608
        %v2094 = vsub.s32 0, %v2093
        %v2095 = vadd.s32 %v2090, 1
        %vm2096 = vcmp.gt.s32.totalorder %v2095, 0
        %v2097 = vsel %vm2096, %v2095, 0
        %v2098 = vshrl.u32 %v2097, 5
        %v2099 = vand.u32 %v2097, 31
        %v2100 = vsub.s32 32, %v2099
        %v2101 = vshrl.u32 683565275, %v2100
        %v2102 = vshll.u32 683565275, %v2099
        %v2103 = vshrl.u32 2475754826, %v2100
        %v2104 = vor.u32 %v2102, %v2103
        %v2105 = vshll.u32 2475754826, %v2099
        %v2106 = vshrl.u32 2131351028, %v2100
        %v2107 = vor.u32 %v2105, %v2106
        %v2108 = vshll.u32 2131351028, %v2099
        %v2109 = vshrl.u32 2102212464, %v2100
        %v2110 = vor.u32 %v2108, %v2109
        %v2111 = vshll.u32 2102212464, %v2099
        %v2112 = vshrl.u32 920167782, %v2100
        %v2113 = vor.u32 %v2111, %v2112
        %v2114 = vshll.u32 920167782, %v2099
        %v2115 = vshrl.u32 1326507024, %v2100
        %v2116 = vor.u32 %v2114, %v2115
        %vm2117 = vcmp.lt.s32.totalorder %v2098, 1
        %vm2118 = vcmp.lt.s32.totalorder %v2098, 2
        %vm2119 = vcmp.lt.s32.totalorder %v2098, 3
        %vm2120 = vcmp.lt.s32.totalorder %v2098, 4
        %v2121 = vsel %vm2117, %v2101, %v2104
        %v2122 = vsel %vm2120, %v2110, 2102212464
        %v2123 = vsel %vm2119, %v2107, %v2122
        %v2124 = vsel %vm2118, %v2121, %v2123
        %v2125 = vsel %vm2117, %v2104, %v2107
        %v2126 = vsel %vm2120, %v2113, 920167782
        %v2127 = vsel %vm2119, %v2110, %v2126
        %v2128 = vsel %vm2118, %v2125, %v2127
        %v2129 = vsel %vm2117, %v2107, %v2110
        %v2130 = vsel %vm2120, %v2116, 1326507024
        %v2131 = vsel %vm2119, %v2113, %v2130
        %v2132 = vsel %vm2118, %v2129, %v2131
        %v2133 = vshll.u32 %v2093, 8
        %v2134 = vmul.u32.u64.compose %v2133, %v2132
        %v2135 = vextract.low.u32 %v2134
        %v2136 = vextract.high.u32 %v2134
        %v2137 = vmul.u32.u64.compose %v2133, %v2128
        %v2138 = vextract.low.u32 %v2137
        %v2139 = vextract.high.u32 %v2137
        %v2140 = vmul.u32 %v2133, %v2124
        %v2141 = vadd.s32 %v2136, %v2138
        %vm2142 = vc.u32 %v2136, %v2138
        %v2143 = vadd.s32 %v2139, 1
        %v2144 = vsel %vm2142, %v2143, %v2139
        %v2145 = vadd.s32 %v2140, %v2144
        %v2146 = vadd.s32 %v2145, 536870912
        %v2147 = vshrl.u32 %v2146, 30
        %v2148 = vshll.u32 %v2147, 30
        %v2149 = vsub.s32 %v2145, %v2148
        %vm2150 = vcmp.lt.s32.totalorder %v2149, 0
        %v2151 = vsub.s32 0, %v2149
        %v2152 = vsel %vm2150, %v2151, %v2149
        %v2153 = vclz %v2152
        %v2154 = vsub.s32 %v2153, 2
        %vm2155 = vcmp.gt.s32.totalorder 0, %v2154
        %v2156 = vsel %vm2155, 0, %v2154
        %v2157 = vsub.s32 32, %v2156
        %v2158 = vshll.u32 %v2149, %v2156
        %v2159 = vshrl.u32 %v2141, %v2157
        %v2160 = vor.u32 %v2158, %v2159
        %v2161 = vsub.s32 4294967266, %v2156
        %v2162 = vadd.s32 %v2161, 127
        %v2163 = vshll.u32 %v2162, 23
        %v2164 = vor.u32 4788187, %v2163
        %v2165 = vand.u32 2147483647, %v2164
        %v2167 = vcvt.s32.f32 %v2160
        %v2168 = vmul.f32 %v2167, %v2165
        %v2169 = vxor.u32 %v2168, 2147483648
        %v2170 = vsel %vm2087, %v2169, %v2168
        %v2171 = vsub.s32 4, %v2147
        %v2172 = vsel %vm2087, %v2171, %v2147
        %v2173 = vsel %vm2086, %v421, %v2170
        %v2174 = vsel %vm2086, 0, %v2172
        %v2175 = vcosq.f32.pop %v2173
        %v2176 = vsinq.f32.pop %v2173
        %vm2177 = vweird.f32 %v421
        %v2178 = vand.u32 %v2174, 3
        %vm2179 = vcmp.lt.s32.totalorder %v2178, 2
        %vm2180 = vcmp.eq.s32.totalorder %v2178, 0
        %v2181 = vxor.u32 %v2176, 2147483648
        %v2182 = vsel %vm2180, %v2175, %v2181
        %vm2183 = vcmp.eq.s32.totalorder %v2178, 2
        %v2184 = vxor.u32 %v2175, 2147483648
        %v2185 = vsel %vm2183, %v2184, %v2176
        %v2186 = vsel %vm2179, %v2182, %v2185
        %v2187 = vsel %vm2177, nan, %v2186
        %v2188 = vand.u32 2147483647, %v422
        %vm2189 = vcmp.le.f32.partialorder %v2188, 0.7853982
        %vm2190 = vcmp.lt.s32.totalorder %v422, 0
        %v2191 = vand.u32 %v422, 2139095040
        %v2192 = vshrl.u32 %v2191, 23
        %v2193 = vsub.s32 %v2192, 127
        %v2194 = vand.u32 2147483647, %v422
        %v2195 = vand.u32 %v2194, 8388607
        %v2196 = vor.u32 %v2195, 8388608
        %v2197 = vsub.s32 0, %v2196
        %v2198 = vadd.s32 %v2193, 1
        %vm2199 = vcmp.gt.s32.totalorder %v2198, 0
        %v2200 = vsel %vm2199, %v2198, 0
        %v2201 = vshrl.u32 %v2200, 5
        %v2202 = vand.u32 %v2200, 31
        %v2203 = vsub.s32 32, %v2202
        %v2204 = vshrl.u32 683565275, %v2203
        %v2205 = vshll.u32 683565275, %v2202
        %v2206 = vshrl.u32 2475754826, %v2203
        %v2207 = vor.u32 %v2205, %v2206
        %v2208 = vshll.u32 2475754826, %v2202
        %v2209 = vshrl.u32 2131351028, %v2203
        %v2210 = vor.u32 %v2208, %v2209
        %v2211 = vshll.u32 2131351028, %v2202
        %v2212 = vshrl.u32 2102212464, %v2203
        %v2213 = vor.u32 %v2211, %v2212
        %v2214 = vshll.u32 2102212464, %v2202
        %v2215 = vshrl.u32 920167782, %v2203
        %v2216 = vor.u32 %v2214, %v2215
        %v2217 = vshll.u32 920167782, %v2202
        %v2218 = vshrl.u32 1326507024, %v2203
        %v2219 = vor.u32 %v2217, %v2218
        %vm2220 = vcmp.lt.s32.totalorder %v2201, 1
        %vm2221 = vcmp.lt.s32.totalorder %v2201, 2
        %vm2222 = vcmp.lt.s32.totalorder %v2201, 3
        %vm2223 = vcmp.lt.s32.totalorder %v2201, 4
        %v2224 = vsel %vm2220, %v2204, %v2207
        %v2225 = vsel %vm2223, %v2213, 2102212464
        %v2226 = vsel %vm2222, %v2210, %v2225
        %v2227 = vsel %vm2221, %v2224, %v2226
        %v2228 = vsel %vm2220, %v2207, %v2210
        %v2229 = vsel %vm2223, %v2216, 920167782
        %v2230 = vsel %vm2222, %v2213, %v2229
        %v2231 = vsel %vm2221, %v2228, %v2230
        %v2232 = vsel %vm2220, %v2210, %v2213
        %v2233 = vsel %vm2223, %v2219, 1326507024
        %v2234 = vsel %vm2222, %v2216, %v2233
        %v2235 = vsel %vm2221, %v2232, %v2234
        %v2236 = vshll.u32 %v2196, 8
        %v2237 = vmul.u32.u64.compose %v2236, %v2235
        %v2238 = vextract.low.u32 %v2237
        %v2239 = vextract.high.u32 %v2237
        %v2240 = vmul.u32.u64.compose %v2236, %v2231
        %v2241 = vextract.low.u32 %v2240
        %v2242 = vextract.high.u32 %v2240
        %v2243 = vmul.u32 %v2236, %v2227
        %v2244 = vadd.s32 %v2239, %v2241
        %vm2245 = vc.u32 %v2239, %v2241
        %v2246 = vadd.s32 %v2242, 1
        %v2247 = vsel %vm2245, %v2246, %v2242
        %v2248 = vadd.s32 %v2243, %v2247
        %v2249 = vadd.s32 %v2248, 536870912
        %v2250 = vshrl.u32 %v2249, 30
        %v2251 = vshll.u32 %v2250, 30
        %v2252 = vsub.s32 %v2248, %v2251
        %vm2253 = vcmp.lt.s32.totalorder %v2252, 0
        %v2254 = vsub.s32 0, %v2252
        %v2255 = vsel %vm2253, %v2254, %v2252
        %v2256 = vclz %v2255
        %v2257 = vsub.s32 %v2256, 2
        %vm2258 = vcmp.gt.s32.totalorder 0, %v2257
        %v2259 = vsel %vm2258, 0, %v2257
        %v2260 = vsub.s32 32, %v2259
        %v2261 = vshll.u32 %v2252, %v2259
        %v2262 = vshrl.u32 %v2244, %v2260
        %v2263 = vor.u32 %v2261, %v2262
        %v2264 = vsub.s32 4294967266, %v2259
        %v2265 = vadd.s32 %v2264, 127
        %v2266 = vshll.u32 %v2265, 23
        %v2267 = vor.u32 4788187, %v2266
        %v2268 = vand.u32 2147483647, %v2267
        %v2270 = vcvt.s32.f32 %v2263
        %v2271 = vmul.f32 %v2270, %v2268
        %v2272 = vxor.u32 %v2271, 2147483648
        %v2273 = vsel %vm2190, %v2272, %v2271
        %v2274 = vsub.s32 4, %v2250
        %v2275 = vsel %vm2190, %v2274, %v2250
        %v2276 = vsel %vm2189, %v422, %v2273
        %v2277 = vsel %vm2189, 0, %v2275
        %v2278 = vcosq.f32.pop %v2276
        %v2279 = vsinq.f32.pop %v2276
        %vm2280 = vweird.f32 %v422
        %v2281 = vand.u32 %v2277, 3
        %vm2282 = vcmp.lt.s32.totalorder %v2281, 2
        %vm2283 = vcmp.eq.s32.totalorder %v2281, 0
        %v2284 = vxor.u32 %v2279, 2147483648
        %v2285 = vsel %vm2283, %v2278, %v2284
        %vm2286 = vcmp.eq.s32.totalorder %v2281, 2
        %v2287 = vxor.u32 %v2278, 2147483648
        %v2288 = vsel %vm2286, %v2287, %v2279
        %v2289 = vsel %vm2282, %v2285, %v2288
        %v2290 = vsel %vm2280, nan, %v2289
        %v2291 = vand.u32 2147483647, %v423
        %vm2292 = vcmp.le.f32.partialorder %v2291, 0.7853982
        %vm2293 = vcmp.lt.s32.totalorder %v423, 0
        %v2294 = vand.u32 %v423, 2139095040
        %v2295 = vshrl.u32 %v2294, 23
        %v2296 = vsub.s32 %v2295, 127
        %v2297 = vand.u32 2147483647, %v423
        %v2298 = vand.u32 %v2297, 8388607
        %v2299 = vor.u32 %v2298, 8388608
        %v2300 = vsub.s32 0, %v2299
        %v2301 = vadd.s32 %v2296, 1
        %vm2302 = vcmp.gt.s32.totalorder %v2301, 0
        %v2303 = vsel %vm2302, %v2301, 0
        %v2304 = vshrl.u32 %v2303, 5
        %v2305 = vand.u32 %v2303, 31
        %v2306 = vsub.s32 32, %v2305
        %v2307 = vshrl.u32 683565275, %v2306
        %v2308 = vshll.u32 683565275, %v2305
        %v2309 = vshrl.u32 2475754826, %v2306
        %v2310 = vor.u32 %v2308, %v2309
        %v2311 = vshll.u32 2475754826, %v2305
        %v2312 = vshrl.u32 2131351028, %v2306
        %v2313 = vor.u32 %v2311, %v2312
        %v2314 = vshll.u32 2131351028, %v2305
        %v2315 = vshrl.u32 2102212464, %v2306
        %v2316 = vor.u32 %v2314, %v2315
        %v2317 = vshll.u32 2102212464, %v2305
        %v2318 = vshrl.u32 920167782, %v2306
        %v2319 = vor.u32 %v2317, %v2318
        %v2320 = vshll.u32 920167782, %v2305
        %v2321 = vshrl.u32 1326507024, %v2306
        %v2322 = vor.u32 %v2320, %v2321
        %vm2323 = vcmp.lt.s32.totalorder %v2304, 1
        %vm2324 = vcmp.lt.s32.totalorder %v2304, 2
        %vm2325 = vcmp.lt.s32.totalorder %v2304, 3
        %vm2326 = vcmp.lt.s32.totalorder %v2304, 4
        %v2327 = vsel %vm2323, %v2307, %v2310
        %v2328 = vsel %vm2326, %v2316, 2102212464
        %v2329 = vsel %vm2325, %v2313, %v2328
        %v2330 = vsel %vm2324, %v2327, %v2329
        %v2331 = vsel %vm2323, %v2310, %v2313
        %v2332 = vsel %vm2326, %v2319, 920167782
        %v2333 = vsel %vm2325, %v2316, %v2332
        %v2334 = vsel %vm2324, %v2331, %v2333
        %v2335 = vsel %vm2323, %v2313, %v2316
        %v2336 = vsel %vm2326, %v2322, 1326507024
        %v2337 = vsel %vm2325, %v2319, %v2336
        %v2338 = vsel %vm2324, %v2335, %v2337
        %v2339 = vshll.u32 %v2299, 8
        %v2340 = vmul.u32.u64.compose %v2339, %v2338
        %v2341 = vextract.low.u32 %v2340
        %v2342 = vextract.high.u32 %v2340
        %v2343 = vmul.u32.u64.compose %v2339, %v2334
        %v2344 = vextract.low.u32 %v2343
        %v2345 = vextract.high.u32 %v2343
        %v2346 = vmul.u32 %v2339, %v2330
        %v2347 = vadd.s32 %v2342, %v2344
        %vm2348 = vc.u32 %v2342, %v2344
        %v2349 = vadd.s32 %v2345, 1
        %v2350 = vsel %vm2348, %v2349, %v2345
        %v2351 = vadd.s32 %v2346, %v2350
        %v2352 = vadd.s32 %v2351, 536870912
        %v2353 = vshrl.u32 %v2352, 30
        %v2354 = vshll.u32 %v2353, 30
        %v2355 = vsub.s32 %v2351, %v2354
        %vm2356 = vcmp.lt.s32.totalorder %v2355, 0
        %v2357 = vsub.s32 0, %v2355
        %v2358 = vsel %vm2356, %v2357, %v2355
        %v2359 = vclz %v2358
        %v2360 = vsub.s32 %v2359, 2
        %vm2361 = vcmp.gt.s32.totalorder 0, %v2360
        %v2362 = vsel %vm2361, 0, %v2360
        %v2363 = vsub.s32 32, %v2362
        %v2364 = vshll.u32 %v2355, %v2362
        %v2365 = vshrl.u32 %v2347, %v2363
        %v2366 = vor.u32 %v2364, %v2365
        %v2367 = vsub.s32 4294967266, %v2362
        %v2368 = vadd.s32 %v2367, 127
        %v2369 = vshll.u32 %v2368, 23
        %v2370 = vor.u32 4788187, %v2369
        %v2371 = vand.u32 2147483647, %v2370
        %v2373 = vcvt.s32.f32 %v2366
        %v2374 = vmul.f32 %v2373, %v2371
        %v2375 = vxor.u32 %v2374, 2147483648
        %v2376 = vsel %vm2293, %v2375, %v2374
        %v2377 = vsub.s32 4, %v2353
        %v2378 = vsel %vm2293, %v2377, %v2353
        %v2379 = vsel %vm2292, %v423, %v2376
        %v2380 = vsel %vm2292, 0, %v2378
        %v2381 = vcosq.f32.pop %v2379
        %v2382 = vsinq.f32.pop %v2379
        %vm2383 = vweird.f32 %v423
        %v2384 = vand.u32 %v2380, 3
        %vm2385 = vcmp.lt.s32.totalorder %v2384, 2
        %vm2386 = vcmp.eq.s32.totalorder %v2384, 0
        %v2387 = vxor.u32 %v2382, 2147483648
        %v2388 = vsel %vm2386, %v2381, %v2387
        %vm2389 = vcmp.eq.s32.totalorder %v2384, 2
        %v2390 = vxor.u32 %v2381, 2147483648
        %v2391 = vsel %vm2389, %v2390, %v2382
        %v2392 = vsel %vm2385, %v2388, %v2391
        %v2393 = vsel %vm2383, nan, %v2392
        %v2394 = vand.u32 2147483647, %v424
        %vm2395 = vcmp.le.f32.partialorder %v2394, 0.7853982
        %vm2396 = vcmp.lt.s32.totalorder %v424, 0
        %v2397 = vand.u32 %v424, 2139095040
        %v2398 = vshrl.u32 %v2397, 23
        %v2399 = vsub.s32 %v2398, 127
        %v2400 = vand.u32 2147483647, %v424
        %v2401 = vand.u32 %v2400, 8388607
        %v2402 = vor.u32 %v2401, 8388608
        %v2403 = vsub.s32 0, %v2402
        %v2404 = vadd.s32 %v2399, 1
        %vm2405 = vcmp.gt.s32.totalorder %v2404, 0
        %v2406 = vsel %vm2405, %v2404, 0
        %v2407 = vshrl.u32 %v2406, 5
        %v2408 = vand.u32 %v2406, 31
        %v2409 = vsub.s32 32, %v2408
        %v2410 = vshrl.u32 683565275, %v2409
        %v2411 = vshll.u32 683565275, %v2408
        %v2412 = vshrl.u32 2475754826, %v2409
        %v2413 = vor.u32 %v2411, %v2412
        %v2414 = vshll.u32 2475754826, %v2408
        %v2415 = vshrl.u32 2131351028, %v2409
        %v2416 = vor.u32 %v2414, %v2415
        %v2417 = vshll.u32 2131351028, %v2408
        %v2418 = vshrl.u32 2102212464, %v2409
        %v2419 = vor.u32 %v2417, %v2418
        %v2420 = vshll.u32 2102212464, %v2408
        %v2421 = vshrl.u32 920167782, %v2409
        %v2422 = vor.u32 %v2420, %v2421
        %v2423 = vshll.u32 920167782, %v2408
        %v2424 = vshrl.u32 1326507024, %v2409
        %v2425 = vor.u32 %v2423, %v2424
        %vm2426 = vcmp.lt.s32.totalorder %v2407, 1
        %vm2427 = vcmp.lt.s32.totalorder %v2407, 2
        %vm2428 = vcmp.lt.s32.totalorder %v2407, 3
        %vm2429 = vcmp.lt.s32.totalorder %v2407, 4
        %v2430 = vsel %vm2426, %v2410, %v2413
        %v2431 = vsel %vm2429, %v2419, 2102212464
        %v2432 = vsel %vm2428, %v2416, %v2431
        %v2433 = vsel %vm2427, %v2430, %v2432
        %v2434 = vsel %vm2426, %v2413, %v2416
        %v2435 = vsel %vm2429, %v2422, 920167782
        %v2436 = vsel %vm2428, %v2419, %v2435
        %v2437 = vsel %vm2427, %v2434, %v2436
        %v2438 = vsel %vm2426, %v2416, %v2419
        %v2439 = vsel %vm2429, %v2425, 1326507024
        %v2440 = vsel %vm2428, %v2422, %v2439
        %v2441 = vsel %vm2427, %v2438, %v2440
        %v2442 = vshll.u32 %v2402, 8
        %v2443 = vmul.u32.u64.compose %v2442, %v2441
        %v2444 = vextract.low.u32 %v2443
        %v2445 = vextract.high.u32 %v2443
        %v2446 = vmul.u32.u64.compose %v2442, %v2437
        %v2447 = vextract.low.u32 %v2446
        %v2448 = vextract.high.u32 %v2446
        %v2449 = vmul.u32 %v2442, %v2433
        %v2450 = vadd.s32 %v2445, %v2447
        %vm2451 = vc.u32 %v2445, %v2447
        %v2452 = vadd.s32 %v2448, 1
        %v2453 = vsel %vm2451, %v2452, %v2448
        %v2454 = vadd.s32 %v2449, %v2453
        %v2455 = vadd.s32 %v2454, 536870912
        %v2456 = vshrl.u32 %v2455, 30
        %v2457 = vshll.u32 %v2456, 30
        %v2458 = vsub.s32 %v2454, %v2457
        %vm2459 = vcmp.lt.s32.totalorder %v2458, 0
        %v2460 = vsub.s32 0, %v2458
        %v2461 = vsel %vm2459, %v2460, %v2458
        %v2462 = vclz %v2461
        %v2463 = vsub.s32 %v2462, 2
        %vm2464 = vcmp.gt.s32.totalorder 0, %v2463
        %v2465 = vsel %vm2464, 0, %v2463
        %v2466 = vsub.s32 32, %v2465
        %v2467 = vshll.u32 %v2458, %v2465
        %v2468 = vshrl.u32 %v2450, %v2466
        %v2469 = vor.u32 %v2467, %v2468
        %v2470 = vsub.s32 4294967266, %v2465
        %v2471 = vadd.s32 %v2470, 127
        %v2472 = vshll.u32 %v2471, 23
        %v2473 = vor.u32 4788187, %v2472
        %v2474 = vand.u32 2147483647, %v2473
        %v2476 = vcvt.s32.f32 %v2469
        %v2477 = vmul.f32 %v2476, %v2474
        %v2478 = vxor.u32 %v2477, 2147483648
        %v2479 = vsel %vm2396, %v2478, %v2477
        %v2480 = vsub.s32 4, %v2456
        %v2481 = vsel %vm2396, %v2480, %v2456
        %v2482 = vsel %vm2395, %v424, %v2479
        %v2483 = vsel %vm2395, 0, %v2481
        %v2484 = vcosq.f32.pop %v2482
        %v2485 = vsinq.f32.pop %v2482
        %vm2486 = vweird.f32 %v424
        %v2487 = vand.u32 %v2483, 3
        %vm2488 = vcmp.lt.s32.totalorder %v2487, 2
        %vm2489 = vcmp.eq.s32.totalorder %v2487, 0
        %v2490 = vxor.u32 %v2485, 2147483648
        %v2491 = vsel %vm2489, %v2484, %v2490
        %vm2492 = vcmp.eq.s32.totalorder %v2487, 2
        %v2493 = vxor.u32 %v2484, 2147483648
        %v2494 = vsel %vm2492, %v2493, %v2485
        %v2495 = vsel %vm2488, %v2491, %v2494
        %v2496 = vsel %vm2486, nan, %v2495
        %v2497 = vand.u32 2147483647, %v425
        %vm2498 = vcmp.le.f32.partialorder %v2497, 0.7853982
        %vm2499 = vcmp.lt.s32.totalorder %v425, 0
        %v2500 = vand.u32 %v425, 2139095040
        %v2501 = vshrl.u32 %v2500, 23
        %v2502 = vsub.s32 %v2501, 127
        %v2503 = vand.u32 2147483647, %v425
        %v2504 = vand.u32 %v2503, 8388607
        %v2505 = vor.u32 %v2504, 8388608
        %v2506 = vsub.s32 0, %v2505
        %v2507 = vadd.s32 %v2502, 1
        %vm2508 = vcmp.gt.s32.totalorder %v2507, 0
        %v2509 = vsel %vm2508, %v2507, 0
        %v2510 = vshrl.u32 %v2509, 5
        %v2511 = vand.u32 %v2509, 31
        %v2512 = vsub.s32 32, %v2511
        %v2513 = vshrl.u32 683565275, %v2512
        %v2514 = vshll.u32 683565275, %v2511
        %v2515 = vshrl.u32 2475754826, %v2512
        %v2516 = vor.u32 %v2514, %v2515
        %v2517 = vshll.u32 2475754826, %v2511
        %v2518 = vshrl.u32 2131351028, %v2512
        %v2519 = vor.u32 %v2517, %v2518
        %v2520 = vshll.u32 2131351028, %v2511
        %v2521 = vshrl.u32 2102212464, %v2512
        %v2522 = vor.u32 %v2520, %v2521
        %v2523 = vshll.u32 2102212464, %v2511
        %v2524 = vshrl.u32 920167782, %v2512
        %v2525 = vor.u32 %v2523, %v2524
        %v2526 = vshll.u32 920167782, %v2511
        %v2527 = vshrl.u32 1326507024, %v2512
        %v2528 = vor.u32 %v2526, %v2527
        %vm2529 = vcmp.lt.s32.totalorder %v2510, 1
        %vm2530 = vcmp.lt.s32.totalorder %v2510, 2
        %vm2531 = vcmp.lt.s32.totalorder %v2510, 3
        %vm2532 = vcmp.lt.s32.totalorder %v2510, 4
        %v2533 = vsel %vm2529, %v2513, %v2516
        %v2534 = vsel %vm2532, %v2522, 2102212464
        %v2535 = vsel %vm2531, %v2519, %v2534
        %v2536 = vsel %vm2530, %v2533, %v2535
        %v2537 = vsel %vm2529, %v2516, %v2519
        %v2538 = vsel %vm2532, %v2525, 920167782
        %v2539 = vsel %vm2531, %v2522, %v2538
        %v2540 = vsel %vm2530, %v2537, %v2539
        %v2541 = vsel %vm2529, %v2519, %v2522
        %v2542 = vsel %vm2532, %v2528, 1326507024
        %v2543 = vsel %vm2531, %v2525, %v2542
        %v2544 = vsel %vm2530, %v2541, %v2543
        %v2545 = vshll.u32 %v2505, 8
        %v2546 = vmul.u32.u64.compose %v2545, %v2544
        %v2547 = vextract.low.u32 %v2546
        %v2548 = vextract.high.u32 %v2546
        %v2549 = vmul.u32.u64.compose %v2545, %v2540
        %v2550 = vextract.low.u32 %v2549
        %v2551 = vextract.high.u32 %v2549
        %v2552 = vmul.u32 %v2545, %v2536
        %v2553 = vadd.s32 %v2548, %v2550
        %vm2554 = vc.u32 %v2548, %v2550
        %v2555 = vadd.s32 %v2551, 1
        %v2556 = vsel %vm2554, %v2555, %v2551
        %v2557 = vadd.s32 %v2552, %v2556
        %v2558 = vadd.s32 %v2557, 536870912
        %v2559 = vshrl.u32 %v2558, 30
        %v2560 = vshll.u32 %v2559, 30
        %v2561 = vsub.s32 %v2557, %v2560
        %vm2562 = vcmp.lt.s32.totalorder %v2561, 0
        %v2563 = vsub.s32 0, %v2561
        %v2564 = vsel %vm2562, %v2563, %v2561
        %v2565 = vclz %v2564
        %v2566 = vsub.s32 %v2565, 2
        %vm2567 = vcmp.gt.s32.totalorder 0, %v2566
        %v2568 = vsel %vm2567, 0, %v2566
        %v2569 = vsub.s32 32, %v2568
        %v2570 = vshll.u32 %v2561, %v2568
        %v2571 = vshrl.u32 %v2553, %v2569
        %v2572 = vor.u32 %v2570, %v2571
        %v2573 = vsub.s32 4294967266, %v2568
        %v2574 = vadd.s32 %v2573, 127
        %v2575 = vshll.u32 %v2574, 23
        %v2576 = vor.u32 4788187, %v2575
        %v2577 = vand.u32 2147483647, %v2576
        %v2579 = vcvt.s32.f32 %v2572
        %v2580 = vmul.f32 %v2579, %v2577
        %v2581 = vxor.u32 %v2580, 2147483648
        %v2582 = vsel %vm2499, %v2581, %v2580
        %v2583 = vsub.s32 4, %v2559
        %v2584 = vsel %vm2499, %v2583, %v2559
        %v2585 = vsel %vm2498, %v425, %v2582
        %v2586 = vsel %vm2498, 0, %v2584
        %v2587 = vcosq.f32.pop %v2585
        %v2588 = vsinq.f32.pop %v2585
        %vm2589 = vweird.f32 %v425
        %v2590 = vand.u32 %v2586, 3
        %vm2591 = vcmp.lt.s32.totalorder %v2590, 2
        %vm2592 = vcmp.eq.s32.totalorder %v2590, 0
        %v2593 = vxor.u32 %v2588, 2147483648
        %v2594 = vsel %vm2592, %v2587, %v2593
        %vm2595 = vcmp.eq.s32.totalorder %v2590, 2
        %v2596 = vxor.u32 %v2587, 2147483648
        %v2597 = vsel %vm2595, %v2596, %v2588
        %v2598 = vsel %vm2591, %v2594, %v2597
        %v2599 = vsel %vm2589, nan, %v2598
        %v2600 = vand.u32 2147483647, %v426
        %vm2601 = vcmp.le.f32.partialorder %v2600, 0.7853982
        %vm2602 = vcmp.lt.s32.totalorder %v426, 0
        %v2603 = vand.u32 %v426, 2139095040
        %v2604 = vshrl.u32 %v2603, 23
        %v2605 = vsub.s32 %v2604, 127
        %v2606 = vand.u32 2147483647, %v426
        %v2607 = vand.u32 %v2606, 8388607
        %v2608 = vor.u32 %v2607, 8388608
        %v2609 = vsub.s32 0, %v2608
        %v2610 = vadd.s32 %v2605, 1
        %vm2611 = vcmp.gt.s32.totalorder %v2610, 0
        %v2612 = vsel %vm2611, %v2610, 0
        %v2613 = vshrl.u32 %v2612, 5
        %v2614 = vand.u32 %v2612, 31
        %v2615 = vsub.s32 32, %v2614
        %v2616 = vshrl.u32 683565275, %v2615
        %v2617 = vshll.u32 683565275, %v2614
        %v2618 = vshrl.u32 2475754826, %v2615
        %v2619 = vor.u32 %v2617, %v2618
        %v2620 = vshll.u32 2475754826, %v2614
        %v2621 = vshrl.u32 2131351028, %v2615
        %v2622 = vor.u32 %v2620, %v2621
        %v2623 = vshll.u32 2131351028, %v2614
        %v2624 = vshrl.u32 2102212464, %v2615
        %v2625 = vor.u32 %v2623, %v2624
        %v2626 = vshll.u32 2102212464, %v2614
        %v2627 = vshrl.u32 920167782, %v2615
        %v2628 = vor.u32 %v2626, %v2627
        %v2629 = vshll.u32 920167782, %v2614
        %v2630 = vshrl.u32 1326507024, %v2615
        %v2631 = vor.u32 %v2629, %v2630
        %vm2632 = vcmp.lt.s32.totalorder %v2613, 1
        %vm2633 = vcmp.lt.s32.totalorder %v2613, 2
        %vm2634 = vcmp.lt.s32.totalorder %v2613, 3
        %vm2635 = vcmp.lt.s32.totalorder %v2613, 4
        %v2636 = vsel %vm2632, %v2616, %v2619
        %v2637 = vsel %vm2635, %v2625, 2102212464
        %v2638 = vsel %vm2634, %v2622, %v2637
        %v2639 = vsel %vm2633, %v2636, %v2638
        %v2640 = vsel %vm2632, %v2619, %v2622
        %v2641 = vsel %vm2635, %v2628, 920167782
        %v2642 = vsel %vm2634, %v2625, %v2641
        %v2643 = vsel %vm2633, %v2640, %v2642
        %v2644 = vsel %vm2632, %v2622, %v2625
        %v2645 = vsel %vm2635, %v2631, 1326507024
        %v2646 = vsel %vm2634, %v2628, %v2645
        %v2647 = vsel %vm2633, %v2644, %v2646
        %v2648 = vshll.u32 %v2608, 8
        %v2649 = vmul.u32.u64.compose %v2648, %v2647
        %v2650 = vextract.low.u32 %v2649
        %v2651 = vextract.high.u32 %v2649
        %v2652 = vmul.u32.u64.compose %v2648, %v2643
        %v2653 = vextract.low.u32 %v2652
        %v2654 = vextract.high.u32 %v2652
        %v2655 = vmul.u32 %v2648, %v2639
        %v2656 = vadd.s32 %v2651, %v2653
        %vm2657 = vc.u32 %v2651, %v2653
        %v2658 = vadd.s32 %v2654, 1
        %v2659 = vsel %vm2657, %v2658, %v2654
        %v2660 = vadd.s32 %v2655, %v2659
        %v2661 = vadd.s32 %v2660, 536870912
        %v2662 = vshrl.u32 %v2661, 30
        %v2663 = vshll.u32 %v2662, 30
        %v2664 = vsub.s32 %v2660, %v2663
        %vm2665 = vcmp.lt.s32.totalorder %v2664, 0
        %v2666 = vsub.s32 0, %v2664
        %v2667 = vsel %vm2665, %v2666, %v2664
        %v2668 = vclz %v2667
        %v2669 = vsub.s32 %v2668, 2
        %vm2670 = vcmp.gt.s32.totalorder 0, %v2669
        %v2671 = vsel %vm2670, 0, %v2669
        %v2672 = vsub.s32 32, %v2671
        %v2673 = vshll.u32 %v2664, %v2671
        %v2674 = vshrl.u32 %v2656, %v2672
        %v2675 = vor.u32 %v2673, %v2674
        %v2676 = vsub.s32 4294967266, %v2671
        %v2677 = vadd.s32 %v2676, 127
        %v2678 = vshll.u32 %v2677, 23
        %v2679 = vor.u32 4788187, %v2678
        %v2680 = vand.u32 2147483647, %v2679
        %v2682 = vcvt.s32.f32 %v2675
        %v2683 = vmul.f32 %v2682, %v2680
        %v2684 = vxor.u32 %v2683, 2147483648
        %v2685 = vsel %vm2602, %v2684, %v2683
        %v2686 = vsub.s32 4, %v2662
        %v2687 = vsel %vm2602, %v2686, %v2662
        %v2688 = vsel %vm2601, %v426, %v2685
        %v2689 = vsel %vm2601, 0, %v2687
        %v2690 = vcosq.f32.pop %v2688
        %v2691 = vsinq.f32.pop %v2688
        %vm2692 = vweird.f32 %v426
        %v2693 = vand.u32 %v2689, 3
        %vm2694 = vcmp.lt.s32.totalorder %v2693, 2
        %vm2695 = vcmp.eq.s32.totalorder %v2693, 0
        %v2696 = vxor.u32 %v2691, 2147483648
        %v2697 = vsel %vm2695, %v2690, %v2696
        %vm2698 = vcmp.eq.s32.totalorder %v2693, 2
        %v2699 = vxor.u32 %v2690, 2147483648
        %v2700 = vsel %vm2698, %v2699, %v2691
        %v2701 = vsel %vm2694, %v2697, %v2700
        %v2702 = vsel %vm2692, nan, %v2701
        %v2703 = vand.u32 2147483647, %v427
        %vm2704 = vcmp.le.f32.partialorder %v2703, 0.7853982
        %vm2705 = vcmp.lt.s32.totalorder %v427, 0
        %v2706 = vand.u32 %v427, 2139095040
        %v2707 = vshrl.u32 %v2706, 23
        %v2708 = vsub.s32 %v2707, 127
        %v2709 = vand.u32 2147483647, %v427
        %v2710 = vand.u32 %v2709, 8388607
        %v2711 = vor.u32 %v2710, 8388608
        %v2712 = vsub.s32 0, %v2711
        %v2713 = vadd.s32 %v2708, 1
        %vm2714 = vcmp.gt.s32.totalorder %v2713, 0
        %v2715 = vsel %vm2714, %v2713, 0
        %v2716 = vshrl.u32 %v2715, 5
        %v2717 = vand.u32 %v2715, 31
        %v2718 = vsub.s32 32, %v2717
        %v2719 = vshrl.u32 683565275, %v2718
        %v2720 = vshll.u32 683565275, %v2717
        %v2721 = vshrl.u32 2475754826, %v2718
        %v2722 = vor.u32 %v2720, %v2721
        %v2723 = vshll.u32 2475754826, %v2717
        %v2724 = vshrl.u32 2131351028, %v2718
        %v2725 = vor.u32 %v2723, %v2724
        %v2726 = vshll.u32 2131351028, %v2717
        %v2727 = vshrl.u32 2102212464, %v2718
        %v2728 = vor.u32 %v2726, %v2727
        %v2729 = vshll.u32 2102212464, %v2717
        %v2730 = vshrl.u32 920167782, %v2718
        %v2731 = vor.u32 %v2729, %v2730
        %v2732 = vshll.u32 920167782, %v2717
        %v2733 = vshrl.u32 1326507024, %v2718
        %v2734 = vor.u32 %v2732, %v2733
        %vm2735 = vcmp.lt.s32.totalorder %v2716, 1
        %vm2736 = vcmp.lt.s32.totalorder %v2716, 2
        %vm2737 = vcmp.lt.s32.totalorder %v2716, 3
        %vm2738 = vcmp.lt.s32.totalorder %v2716, 4
        %v2739 = vsel %vm2735, %v2719, %v2722
        %v2740 = vsel %vm2738, %v2728, 2102212464
        %v2741 = vsel %vm2737, %v2725, %v2740
        %v2742 = vsel %vm2736, %v2739, %v2741
        %v2743 = vsel %vm2735, %v2722, %v2725
        %v2744 = vsel %vm2738, %v2731, 920167782
        %v2745 = vsel %vm2737, %v2728, %v2744
        %v2746 = vsel %vm2736, %v2743, %v2745
        %v2747 = vsel %vm2735, %v2725, %v2728
        %v2748 = vsel %vm2738, %v2734, 1326507024
        %v2749 = vsel %vm2737, %v2731, %v2748
        %v2750 = vsel %vm2736, %v2747, %v2749
        %v2751 = vshll.u32 %v2711, 8
        %v2752 = vmul.u32.u64.compose %v2751, %v2750
        %v2753 = vextract.low.u32 %v2752
        %v2754 = vextract.high.u32 %v2752
        %v2755 = vmul.u32.u64.compose %v2751, %v2746
        %v2756 = vextract.low.u32 %v2755
        %v2757 = vextract.high.u32 %v2755
        %v2758 = vmul.u32 %v2751, %v2742
        %v2759 = vadd.s32 %v2754, %v2756
        %vm2760 = vc.u32 %v2754, %v2756
        %v2761 = vadd.s32 %v2757, 1
        %v2762 = vsel %vm2760, %v2761, %v2757
        %v2763 = vadd.s32 %v2758, %v2762
        %v2764 = vadd.s32 %v2763, 536870912
        %v2765 = vshrl.u32 %v2764, 30
        %v2766 = vshll.u32 %v2765, 30
        %v2767 = vsub.s32 %v2763, %v2766
        %vm2768 = vcmp.lt.s32.totalorder %v2767, 0
        %v2769 = vsub.s32 0, %v2767
        %v2770 = vsel %vm2768, %v2769, %v2767
        %v2771 = vclz %v2770
        %v2772 = vsub.s32 %v2771, 2
        %vm2773 = vcmp.gt.s32.totalorder 0, %v2772
        %v2774 = vsel %vm2773, 0, %v2772
        %v2775 = vsub.s32 32, %v2774
        %v2776 = vshll.u32 %v2767, %v2774
        %v2777 = vshrl.u32 %v2759, %v2775
        %v2778 = vor.u32 %v2776, %v2777
        %v2779 = vsub.s32 4294967266, %v2774
        %v2780 = vadd.s32 %v2779, 127
        %v2781 = vshll.u32 %v2780, 23
        %v2782 = vor.u32 4788187, %v2781
        %v2783 = vand.u32 2147483647, %v2782
        %v2785 = vcvt.s32.f32 %v2778
        %v2786 = vmul.f32 %v2785, %v2783
        %v2787 = vxor.u32 %v2786, 2147483648
        %v2788 = vsel %vm2705, %v2787, %v2786
        %v2789 = vsub.s32 4, %v2765
        %v2790 = vsel %vm2705, %v2789, %v2765
        %v2791 = vsel %vm2704, %v427, %v2788
        %v2792 = vsel %vm2704, 0, %v2790
        %v2793 = vcosq.f32.pop %v2791
        %v2794 = vsinq.f32.pop %v2791
        %vm2795 = vweird.f32 %v427
        %v2796 = vand.u32 %v2792, 3
        %vm2797 = vcmp.lt.s32.totalorder %v2796, 2
        %vm2798 = vcmp.eq.s32.totalorder %v2796, 0
        %v2799 = vxor.u32 %v2794, 2147483648
        %v2800 = vsel %vm2798, %v2793, %v2799
        %vm2801 = vcmp.eq.s32.totalorder %v2796, 2
        %v2802 = vxor.u32 %v2793, 2147483648
        %v2803 = vsel %vm2801, %v2802, %v2794
        %v2804 = vsel %vm2797, %v2800, %v2803
        %v2805 = vsel %vm2795, nan, %v2804
        %v2806 = vand.u32 2147483647, %v428
        %vm2807 = vcmp.le.f32.partialorder %v2806, 0.7853982
        %vm2808 = vcmp.lt.s32.totalorder %v428, 0
        %v2809 = vand.u32 %v428, 2139095040
        %v2810 = vshrl.u32 %v2809, 23
        %v2811 = vsub.s32 %v2810, 127
        %v2812 = vand.u32 2147483647, %v428
        %v2813 = vand.u32 %v2812, 8388607
        %v2814 = vor.u32 %v2813, 8388608
        %v2815 = vsub.s32 0, %v2814
        %v2816 = vadd.s32 %v2811, 1
        %vm2817 = vcmp.gt.s32.totalorder %v2816, 0
        %v2818 = vsel %vm2817, %v2816, 0
        %v2819 = vshrl.u32 %v2818, 5
        %v2820 = vand.u32 %v2818, 31
        %v2821 = vsub.s32 32, %v2820
        %v2822 = vshrl.u32 683565275, %v2821
        %v2823 = vshll.u32 683565275, %v2820
        %v2824 = vshrl.u32 2475754826, %v2821
        %v2825 = vor.u32 %v2823, %v2824
        %v2826 = vshll.u32 2475754826, %v2820
        %v2827 = vshrl.u32 2131351028, %v2821
        %v2828 = vor.u32 %v2826, %v2827
        %v2829 = vshll.u32 2131351028, %v2820
        %v2830 = vshrl.u32 2102212464, %v2821
        %v2831 = vor.u32 %v2829, %v2830
        %v2832 = vshll.u32 2102212464, %v2820
        %v2833 = vshrl.u32 920167782, %v2821
        %v2834 = vor.u32 %v2832, %v2833
        %v2835 = vshll.u32 920167782, %v2820
        %v2836 = vshrl.u32 1326507024, %v2821
        %v2837 = vor.u32 %v2835, %v2836
        %vm2838 = vcmp.lt.s32.totalorder %v2819, 1
        %vm2839 = vcmp.lt.s32.totalorder %v2819, 2
        %vm2840 = vcmp.lt.s32.totalorder %v2819, 3
        %vm2841 = vcmp.lt.s32.totalorder %v2819, 4
        %v2842 = vsel %vm2838, %v2822, %v2825
        %v2843 = vsel %vm2841, %v2831, 2102212464
        %v2844 = vsel %vm2840, %v2828, %v2843
        %v2845 = vsel %vm2839, %v2842, %v2844
        %v2846 = vsel %vm2838, %v2825, %v2828
        %v2847 = vsel %vm2841, %v2834, 920167782
        %v2848 = vsel %vm2840, %v2831, %v2847
        %v2849 = vsel %vm2839, %v2846, %v2848
        %v2850 = vsel %vm2838, %v2828, %v2831
        %v2851 = vsel %vm2841, %v2837, 1326507024
        %v2852 = vsel %vm2840, %v2834, %v2851
        %v2853 = vsel %vm2839, %v2850, %v2852
        %v2854 = vshll.u32 %v2814, 8
        %v2855 = vmul.u32.u64.compose %v2854, %v2853
        %v2856 = vextract.low.u32 %v2855
        %v2857 = vextract.high.u32 %v2855
        %v2858 = vmul.u32.u64.compose %v2854, %v2849
        %v2859 = vextract.low.u32 %v2858
        %v2860 = vextract.high.u32 %v2858
        %v2861 = vmul.u32 %v2854, %v2845
        %v2862 = vadd.s32 %v2857, %v2859
        %vm2863 = vc.u32 %v2857, %v2859
        %v2864 = vadd.s32 %v2860, 1
        %v2865 = vsel %vm2863, %v2864, %v2860
        %v2866 = vadd.s32 %v2861, %v2865
        %v2867 = vadd.s32 %v2866, 536870912
        %v2868 = vshrl.u32 %v2867, 30
        %v2869 = vshll.u32 %v2868, 30
        %v2870 = vsub.s32 %v2866, %v2869
        %vm2871 = vcmp.lt.s32.totalorder %v2870, 0
        %v2872 = vsub.s32 0, %v2870
        %v2873 = vsel %vm2871, %v2872, %v2870
        %v2874 = vclz %v2873
        %v2875 = vsub.s32 %v2874, 2
        %vm2876 = vcmp.gt.s32.totalorder 0, %v2875
        %v2877 = vsel %vm2876, 0, %v2875
        %v2878 = vsub.s32 32, %v2877
        %v2879 = vshll.u32 %v2870, %v2877
        %v2880 = vshrl.u32 %v2862, %v2878
        %v2881 = vor.u32 %v2879, %v2880
        %v2882 = vsub.s32 4294967266, %v2877
        %v2883 = vadd.s32 %v2882, 127
        %v2884 = vshll.u32 %v2883, 23
        %v2885 = vor.u32 4788187, %v2884
        %v2886 = vand.u32 2147483647, %v2885
        %v2888 = vcvt.s32.f32 %v2881
        %v2889 = vmul.f32 %v2888, %v2886
        %v2890 = vxor.u32 %v2889, 2147483648
        %v2891 = vsel %vm2808, %v2890, %v2889
        %v2892 = vsub.s32 4, %v2868
        %v2893 = vsel %vm2808, %v2892, %v2868
        %v2894 = vsel %vm2807, %v428, %v2891
        %v2895 = vsel %vm2807, 0, %v2893
        %v2896 = vcosq.f32.pop %v2894
        %v2897 = vsinq.f32.pop %v2894
        %vm2898 = vweird.f32 %v428
        %v2899 = vand.u32 %v2895, 3
        %vm2900 = vcmp.lt.s32.totalorder %v2899, 2
        %vm2901 = vcmp.eq.s32.totalorder %v2899, 0
        %v2902 = vxor.u32 %v2897, 2147483648
        %v2903 = vsel %vm2901, %v2896, %v2902
        %vm2904 = vcmp.eq.s32.totalorder %v2899, 2
        %v2905 = vxor.u32 %v2896, 2147483648
        %v2906 = vsel %vm2904, %v2905, %v2897
        %v2907 = vsel %vm2900, %v2903, %v2906
        %v2908 = vsel %vm2898, nan, %v2907
        %v2909 = vand.u32 2147483647, %v429
        %vm2910 = vcmp.le.f32.partialorder %v2909, 0.7853982
        %vm2911 = vcmp.lt.s32.totalorder %v429, 0
        %v2912 = vand.u32 %v429, 2139095040
        %v2913 = vshrl.u32 %v2912, 23
        %v2914 = vsub.s32 %v2913, 127
        %v2915 = vand.u32 2147483647, %v429
        %v2916 = vand.u32 %v2915, 8388607
        %v2917 = vor.u32 %v2916, 8388608
        %v2918 = vsub.s32 0, %v2917
        %v2919 = vadd.s32 %v2914, 1
        %vm2920 = vcmp.gt.s32.totalorder %v2919, 0
        %v2921 = vsel %vm2920, %v2919, 0
        %v2922 = vshrl.u32 %v2921, 5
        %v2923 = vand.u32 %v2921, 31
        %v2924 = vsub.s32 32, %v2923
        %v2925 = vshrl.u32 683565275, %v2924
        %v2926 = vshll.u32 683565275, %v2923
        %v2927 = vshrl.u32 2475754826, %v2924
        %v2928 = vor.u32 %v2926, %v2927
        %v2929 = vshll.u32 2475754826, %v2923
        %v2930 = vshrl.u32 2131351028, %v2924
        %v2931 = vor.u32 %v2929, %v2930
        %v2932 = vshll.u32 2131351028, %v2923
        %v2933 = vshrl.u32 2102212464, %v2924
        %v2934 = vor.u32 %v2932, %v2933
        %v2935 = vshll.u32 2102212464, %v2923
        %v2936 = vshrl.u32 920167782, %v2924
        %v2937 = vor.u32 %v2935, %v2936
        %v2938 = vshll.u32 920167782, %v2923
        %v2939 = vshrl.u32 1326507024, %v2924
        %v2940 = vor.u32 %v2938, %v2939
        %vm2941 = vcmp.lt.s32.totalorder %v2922, 1
        %vm2942 = vcmp.lt.s32.totalorder %v2922, 2
        %vm2943 = vcmp.lt.s32.totalorder %v2922, 3
        %vm2944 = vcmp.lt.s32.totalorder %v2922, 4
        %v2945 = vsel %vm2941, %v2925, %v2928
        %v2946 = vsel %vm2944, %v2934, 2102212464
        %v2947 = vsel %vm2943, %v2931, %v2946
        %v2948 = vsel %vm2942, %v2945, %v2947
        %v2949 = vsel %vm2941, %v2928, %v2931
        %v2950 = vsel %vm2944, %v2937, 920167782
        %v2951 = vsel %vm2943, %v2934, %v2950
        %v2952 = vsel %vm2942, %v2949, %v2951
        %v2953 = vsel %vm2941, %v2931, %v2934
        %v2954 = vsel %vm2944, %v2940, 1326507024
        %v2955 = vsel %vm2943, %v2937, %v2954
        %v2956 = vsel %vm2942, %v2953, %v2955
        %v2957 = vshll.u32 %v2917, 8
        %v2958 = vmul.u32.u64.compose %v2957, %v2956
        %v2959 = vextract.low.u32 %v2958
        %v2960 = vextract.high.u32 %v2958
        %v2961 = vmul.u32.u64.compose %v2957, %v2952
        %v2962 = vextract.low.u32 %v2961
        %v2963 = vextract.high.u32 %v2961
        %v2964 = vmul.u32 %v2957, %v2948
        %v2965 = vadd.s32 %v2960, %v2962
        %vm2966 = vc.u32 %v2960, %v2962
        %v2967 = vadd.s32 %v2963, 1
        %v2968 = vsel %vm2966, %v2967, %v2963
        %v2969 = vadd.s32 %v2964, %v2968
        %v2970 = vadd.s32 %v2969, 536870912
        %v2971 = vshrl.u32 %v2970, 30
        %v2972 = vshll.u32 %v2971, 30
        %v2973 = vsub.s32 %v2969, %v2972
        %vm2974 = vcmp.lt.s32.totalorder %v2973, 0
        %v2975 = vsub.s32 0, %v2973
        %v2976 = vsel %vm2974, %v2975, %v2973
        %v2977 = vclz %v2976
        %v2978 = vsub.s32 %v2977, 2
        %vm2979 = vcmp.gt.s32.totalorder 0, %v2978
        %v2980 = vsel %vm2979, 0, %v2978
        %v2981 = vsub.s32 32, %v2980
        %v2982 = vshll.u32 %v2973, %v2980
        %v2983 = vshrl.u32 %v2965, %v2981
        %v2984 = vor.u32 %v2982, %v2983
        %v2985 = vsub.s32 4294967266, %v2980
        %v2986 = vadd.s32 %v2985, 127
        %v2987 = vshll.u32 %v2986, 23
        %v2988 = vor.u32 4788187, %v2987
        %v2989 = vand.u32 2147483647, %v2988
        %v2991 = vcvt.s32.f32 %v2984
        %v2992 = vmul.f32 %v2991, %v2989
        %v2993 = vxor.u32 %v2992, 2147483648
        %v2994 = vsel %vm2911, %v2993, %v2992
        %v2995 = vsub.s32 4, %v2971
        %v2996 = vsel %vm2911, %v2995, %v2971
        %v2997 = vsel %vm2910, %v429, %v2994
        %v2998 = vsel %vm2910, 0, %v2996
        %v2999 = vcosq.f32.pop %v2997
        %v3000 = vsinq.f32.pop %v2997
        %vm3001 = vweird.f32 %v429
        %v3002 = vand.u32 %v2998, 3
        %vm3003 = vcmp.lt.s32.totalorder %v3002, 2
        %vm3004 = vcmp.eq.s32.totalorder %v3002, 0
        %v3005 = vxor.u32 %v3000, 2147483648
        %v3006 = vsel %vm3004, %v2999, %v3005
        %vm3007 = vcmp.eq.s32.totalorder %v3002, 2
        %v3008 = vxor.u32 %v2999, 2147483648
        %v3009 = vsel %vm3007, %v3008, %v3000
        %v3010 = vsel %vm3003, %v3006, %v3009
        %v3011 = vsel %vm3001, nan, %v3010
        %v3012 = vand.u32 2147483647, %v430
        %vm3013 = vcmp.le.f32.partialorder %v3012, 0.7853982
        %vm3014 = vcmp.lt.s32.totalorder %v430, 0
        %v3015 = vand.u32 %v430, 2139095040
        %v3016 = vshrl.u32 %v3015, 23
        %v3017 = vsub.s32 %v3016, 127
        %v3018 = vand.u32 2147483647, %v430
        %v3019 = vand.u32 %v3018, 8388607
        %v3020 = vor.u32 %v3019, 8388608
        %v3021 = vsub.s32 0, %v3020
        %v3022 = vadd.s32 %v3017, 1
        %vm3023 = vcmp.gt.s32.totalorder %v3022, 0
        %v3024 = vsel %vm3023, %v3022, 0
        %v3025 = vshrl.u32 %v3024, 5
        %v3026 = vand.u32 %v3024, 31
        %v3027 = vsub.s32 32, %v3026
        %v3028 = vshrl.u32 683565275, %v3027
        %v3029 = vshll.u32 683565275, %v3026
        %v3030 = vshrl.u32 2475754826, %v3027
        %v3031 = vor.u32 %v3029, %v3030
        %v3032 = vshll.u32 2475754826, %v3026
        %v3033 = vshrl.u32 2131351028, %v3027
        %v3034 = vor.u32 %v3032, %v3033
        %v3035 = vshll.u32 2131351028, %v3026
        %v3036 = vshrl.u32 2102212464, %v3027
        %v3037 = vor.u32 %v3035, %v3036
        %v3038 = vshll.u32 2102212464, %v3026
        %v3039 = vshrl.u32 920167782, %v3027
        %v3040 = vor.u32 %v3038, %v3039
        %v3041 = vshll.u32 920167782, %v3026
        %v3042 = vshrl.u32 1326507024, %v3027
        %v3043 = vor.u32 %v3041, %v3042
        %vm3044 = vcmp.lt.s32.totalorder %v3025, 1
        %vm3045 = vcmp.lt.s32.totalorder %v3025, 2
        %vm3046 = vcmp.lt.s32.totalorder %v3025, 3
        %vm3047 = vcmp.lt.s32.totalorder %v3025, 4
        %v3048 = vsel %vm3044, %v3028, %v3031
        %v3049 = vsel %vm3047, %v3037, 2102212464
        %v3050 = vsel %vm3046, %v3034, %v3049
        %v3051 = vsel %vm3045, %v3048, %v3050
        %v3052 = vsel %vm3044, %v3031, %v3034
        %v3053 = vsel %vm3047, %v3040, 920167782
        %v3054 = vsel %vm3046, %v3037, %v3053
        %v3055 = vsel %vm3045, %v3052, %v3054
        %v3056 = vsel %vm3044, %v3034, %v3037
        %v3057 = vsel %vm3047, %v3043, 1326507024
        %v3058 = vsel %vm3046, %v3040, %v3057
        %v3059 = vsel %vm3045, %v3056, %v3058
        %v3060 = vshll.u32 %v3020, 8
        %v3061 = vmul.u32.u64.compose %v3060, %v3059
        %v3062 = vextract.low.u32 %v3061
        %v3063 = vextract.high.u32 %v3061
        %v3064 = vmul.u32.u64.compose %v3060, %v3055
        %v3065 = vextract.low.u32 %v3064
        %v3066 = vextract.high.u32 %v3064
        %v3067 = vmul.u32 %v3060, %v3051
        %v3068 = vadd.s32 %v3063, %v3065
        %vm3069 = vc.u32 %v3063, %v3065
        %v3070 = vadd.s32 %v3066, 1
        %v3071 = vsel %vm3069, %v3070, %v3066
        %v3072 = vadd.s32 %v3067, %v3071
        %v3073 = vadd.s32 %v3072, 536870912
        %v3074 = vshrl.u32 %v3073, 30
        %v3075 = vshll.u32 %v3074, 30
        %v3076 = vsub.s32 %v3072, %v3075
        %vm3077 = vcmp.lt.s32.totalorder %v3076, 0
        %v3078 = vsub.s32 0, %v3076
        %v3079 = vsel %vm3077, %v3078, %v3076
        %v3080 = vclz %v3079
        %v3081 = vsub.s32 %v3080, 2
        %vm3082 = vcmp.gt.s32.totalorder 0, %v3081
        %v3083 = vsel %vm3082, 0, %v3081
        %v3084 = vsub.s32 32, %v3083
        %v3085 = vshll.u32 %v3076, %v3083
        %v3086 = vshrl.u32 %v3068, %v3084
        %v3087 = vor.u32 %v3085, %v3086
        %v3088 = vsub.s32 4294967266, %v3083
        %v3089 = vadd.s32 %v3088, 127
        %v3090 = vshll.u32 %v3089, 23
        %v3091 = vor.u32 4788187, %v3090
        %v3092 = vand.u32 2147483647, %v3091
        %v3094 = vcvt.s32.f32 %v3087
        %v3095 = vmul.f32 %v3094, %v3092
        %v3096 = vxor.u32 %v3095, 2147483648
        %v3097 = vsel %vm3014, %v3096, %v3095
        %v3098 = vsub.s32 4, %v3074
        %v3099 = vsel %vm3014, %v3098, %v3074
        %v3100 = vsel %vm3013, %v430, %v3097
        %v3101 = vsel %vm3013, 0, %v3099
        %v3102 = vcosq.f32.pop %v3100
        %v3103 = vsinq.f32.pop %v3100
        %vm3104 = vweird.f32 %v430
        %v3105 = vand.u32 %v3101, 3
        %vm3106 = vcmp.lt.s32.totalorder %v3105, 2
        %vm3107 = vcmp.eq.s32.totalorder %v3105, 0
        %v3108 = vxor.u32 %v3103, 2147483648
        %v3109 = vsel %vm3107, %v3102, %v3108
        %vm3110 = vcmp.eq.s32.totalorder %v3105, 2
        %v3111 = vxor.u32 %v3102, 2147483648
        %v3112 = vsel %vm3110, %v3111, %v3103
        %v3113 = vsel %vm3106, %v3109, %v3112
        %v3114 = vsel %vm3104, nan, %v3113
        %v3115 = vand.u32 2147483647, %v431
        %vm3116 = vcmp.le.f32.partialorder %v3115, 0.7853982
        %vm3117 = vcmp.lt.s32.totalorder %v431, 0
        %v3118 = vand.u32 %v431, 2139095040
        %v3119 = vshrl.u32 %v3118, 23
        %v3120 = vsub.s32 %v3119, 127
        %v3121 = vand.u32 2147483647, %v431
        %v3122 = vand.u32 %v3121, 8388607
        %v3123 = vor.u32 %v3122, 8388608
        %v3124 = vsub.s32 0, %v3123
        %v3125 = vadd.s32 %v3120, 1
        %vm3126 = vcmp.gt.s32.totalorder %v3125, 0
        %v3127 = vsel %vm3126, %v3125, 0
        %v3128 = vshrl.u32 %v3127, 5
        %v3129 = vand.u32 %v3127, 31
        %v3130 = vsub.s32 32, %v3129
        %v3131 = vshrl.u32 683565275, %v3130
        %v3132 = vshll.u32 683565275, %v3129
        %v3133 = vshrl.u32 2475754826, %v3130
        %v3134 = vor.u32 %v3132, %v3133
        %v3135 = vshll.u32 2475754826, %v3129
        %v3136 = vshrl.u32 2131351028, %v3130
        %v3137 = vor.u32 %v3135, %v3136
        %v3138 = vshll.u32 2131351028, %v3129
        %v3139 = vshrl.u32 2102212464, %v3130
        %v3140 = vor.u32 %v3138, %v3139
        %v3141 = vshll.u32 2102212464, %v3129
        %v3142 = vshrl.u32 920167782, %v3130
        %v3143 = vor.u32 %v3141, %v3142
        %v3144 = vshll.u32 920167782, %v3129
        %v3145 = vshrl.u32 1326507024, %v3130
        %v3146 = vor.u32 %v3144, %v3145
        %vm3147 = vcmp.lt.s32.totalorder %v3128, 1
        %vm3148 = vcmp.lt.s32.totalorder %v3128, 2
        %vm3149 = vcmp.lt.s32.totalorder %v3128, 3
        %vm3150 = vcmp.lt.s32.totalorder %v3128, 4
        %v3151 = vsel %vm3147, %v3131, %v3134
        %v3152 = vsel %vm3150, %v3140, 2102212464
        %v3153 = vsel %vm3149, %v3137, %v3152
        %v3154 = vsel %vm3148, %v3151, %v3153
        %v3155 = vsel %vm3147, %v3134, %v3137
        %v3156 = vsel %vm3150, %v3143, 920167782
        %v3157 = vsel %vm3149, %v3140, %v3156
        %v3158 = vsel %vm3148, %v3155, %v3157
        %v3159 = vsel %vm3147, %v3137, %v3140
        %v3160 = vsel %vm3150, %v3146, 1326507024
        %v3161 = vsel %vm3149, %v3143, %v3160
        %v3162 = vsel %vm3148, %v3159, %v3161
        %v3163 = vshll.u32 %v3123, 8
        %v3164 = vmul.u32.u64.compose %v3163, %v3162
        %v3165 = vextract.low.u32 %v3164
        %v3166 = vextract.high.u32 %v3164
        %v3167 = vmul.u32.u64.compose %v3163, %v3158
        %v3168 = vextract.low.u32 %v3167
        %v3169 = vextract.high.u32 %v3167
        %v3170 = vmul.u32 %v3163, %v3154
        %v3171 = vadd.s32 %v3166, %v3168
        %vm3172 = vc.u32 %v3166, %v3168
        %v3173 = vadd.s32 %v3169, 1
        %v3174 = vsel %vm3172, %v3173, %v3169
        %v3175 = vadd.s32 %v3170, %v3174
        %v3176 = vadd.s32 %v3175, 536870912
        %v3177 = vshrl.u32 %v3176, 30
        %v3178 = vshll.u32 %v3177, 30
        %v3179 = vsub.s32 %v3175, %v3178
        %vm3180 = vcmp.lt.s32.totalorder %v3179, 0
        %v3181 = vsub.s32 0, %v3179
        %v3182 = vsel %vm3180, %v3181, %v3179
        %v3183 = vclz %v3182
        %v3184 = vsub.s32 %v3183, 2
        %vm3185 = vcmp.gt.s32.totalorder 0, %v3184
        %v3186 = vsel %vm3185, 0, %v3184
        %v3187 = vsub.s32 32, %v3186
        %v3188 = vshll.u32 %v3179, %v3186
        %v3189 = vshrl.u32 %v3171, %v3187
        %v3190 = vor.u32 %v3188, %v3189
        %v3191 = vsub.s32 4294967266, %v3186
        %v3192 = vadd.s32 %v3191, 127
        %v3193 = vshll.u32 %v3192, 23
        %v3194 = vor.u32 4788187, %v3193
        %v3195 = vand.u32 2147483647, %v3194
        %v3197 = vcvt.s32.f32 %v3190
        %v3198 = vmul.f32 %v3197, %v3195
        %v3199 = vxor.u32 %v3198, 2147483648
        %v3200 = vsel %vm3117, %v3199, %v3198
        %v3201 = vsub.s32 4, %v3177
        %v3202 = vsel %vm3117, %v3201, %v3177
        %v3203 = vsel %vm3116, %v431, %v3200
        %v3204 = vsel %vm3116, 0, %v3202
        %v3205 = vcosq.f32.pop %v3203
        %v3206 = vsinq.f32.pop %v3203
        %vm3207 = vweird.f32 %v431
        %v3208 = vand.u32 %v3204, 3
        %vm3209 = vcmp.lt.s32.totalorder %v3208, 2
        %vm3210 = vcmp.eq.s32.totalorder %v3208, 0
        %v3211 = vxor.u32 %v3206, 2147483648
        %v3212 = vsel %vm3210, %v3205, %v3211
        %vm3213 = vcmp.eq.s32.totalorder %v3208, 2
        %v3214 = vxor.u32 %v3205, 2147483648
        %v3215 = vsel %vm3213, %v3214, %v3206
        %v3216 = vsel %vm3209, %v3212, %v3215
        %v3217 = vsel %vm3207, nan, %v3216
        %v3218 = vand.u32 2147483647, %v432
        %vm3219 = vcmp.le.f32.partialorder %v3218, 0.7853982
        %vm3220 = vcmp.lt.s32.totalorder %v432, 0
        %v3221 = vand.u32 %v432, 2139095040
        %v3222 = vshrl.u32 %v3221, 23
        %v3223 = vsub.s32 %v3222, 127
        %v3224 = vand.u32 2147483647, %v432
        %v3225 = vand.u32 %v3224, 8388607
        %v3226 = vor.u32 %v3225, 8388608
        %v3227 = vsub.s32 0, %v3226
        %v3228 = vadd.s32 %v3223, 1
        %vm3229 = vcmp.gt.s32.totalorder %v3228, 0
        %v3230 = vsel %vm3229, %v3228, 0
        %v3231 = vshrl.u32 %v3230, 5
        %v3232 = vand.u32 %v3230, 31
        %v3233 = vsub.s32 32, %v3232
        %v3234 = vshrl.u32 683565275, %v3233
        %v3235 = vshll.u32 683565275, %v3232
        %v3236 = vshrl.u32 2475754826, %v3233
        %v3237 = vor.u32 %v3235, %v3236
        %v3238 = vshll.u32 2475754826, %v3232
        %v3239 = vshrl.u32 2131351028, %v3233
        %v3240 = vor.u32 %v3238, %v3239
        %v3241 = vshll.u32 2131351028, %v3232
        %v3242 = vshrl.u32 2102212464, %v3233
        %v3243 = vor.u32 %v3241, %v3242
        %v3244 = vshll.u32 2102212464, %v3232
        %v3245 = vshrl.u32 920167782, %v3233
        %v3246 = vor.u32 %v3244, %v3245
        %v3247 = vshll.u32 920167782, %v3232
        %v3248 = vshrl.u32 1326507024, %v3233
        %v3249 = vor.u32 %v3247, %v3248
        %vm3250 = vcmp.lt.s32.totalorder %v3231, 1
        %vm3251 = vcmp.lt.s32.totalorder %v3231, 2
        %vm3252 = vcmp.lt.s32.totalorder %v3231, 3
        %vm3253 = vcmp.lt.s32.totalorder %v3231, 4
        %v3254 = vsel %vm3250, %v3234, %v3237
        %v3255 = vsel %vm3253, %v3243, 2102212464
        %v3256 = vsel %vm3252, %v3240, %v3255
        %v3257 = vsel %vm3251, %v3254, %v3256
        %v3258 = vsel %vm3250, %v3237, %v3240
        %v3259 = vsel %vm3253, %v3246, 920167782
        %v3260 = vsel %vm3252, %v3243, %v3259
        %v3261 = vsel %vm3251, %v3258, %v3260
        %v3262 = vsel %vm3250, %v3240, %v3243
        %v3263 = vsel %vm3253, %v3249, 1326507024
        %v3264 = vsel %vm3252, %v3246, %v3263
        %v3265 = vsel %vm3251, %v3262, %v3264
        %v3266 = vshll.u32 %v3226, 8
        %v3267 = vmul.u32.u64.compose %v3266, %v3265
        %v3268 = vextract.low.u32 %v3267
        %v3269 = vextract.high.u32 %v3267
        %v3270 = vmul.u32.u64.compose %v3266, %v3261
        %v3271 = vextract.low.u32 %v3270
        %v3272 = vextract.high.u32 %v3270
        %v3273 = vmul.u32 %v3266, %v3257
        %v3274 = vadd.s32 %v3269, %v3271
        %vm3275 = vc.u32 %v3269, %v3271
        %v3276 = vadd.s32 %v3272, 1
        %v3277 = vsel %vm3275, %v3276, %v3272
        %v3278 = vadd.s32 %v3273, %v3277
        %v3279 = vadd.s32 %v3278, 536870912
        %v3280 = vshrl.u32 %v3279, 30
        %v3281 = vshll.u32 %v3280, 30
        %v3282 = vsub.s32 %v3278, %v3281
        %vm3283 = vcmp.lt.s32.totalorder %v3282, 0
        %v3284 = vsub.s32 0, %v3282
        %v3285 = vsel %vm3283, %v3284, %v3282
        %v3286 = vclz %v3285
        %v3287 = vsub.s32 %v3286, 2
        %vm3288 = vcmp.gt.s32.totalorder 0, %v3287
        %v3289 = vsel %vm3288, 0, %v3287
        %v3290 = vsub.s32 32, %v3289
        %v3291 = vshll.u32 %v3282, %v3289
        %v3292 = vshrl.u32 %v3274, %v3290
        %v3293 = vor.u32 %v3291, %v3292
        %v3294 = vsub.s32 4294967266, %v3289
        %v3295 = vadd.s32 %v3294, 127
        %v3296 = vshll.u32 %v3295, 23
        %v3297 = vor.u32 4788187, %v3296
        %v3298 = vand.u32 2147483647, %v3297
        %v3300 = vcvt.s32.f32 %v3293
        %v3301 = vmul.f32 %v3300, %v3298
        %v3302 = vxor.u32 %v3301, 2147483648
        %v3303 = vsel %vm3220, %v3302, %v3301
        %v3304 = vsub.s32 4, %v3280
        %v3305 = vsel %vm3220, %v3304, %v3280
        %v3306 = vsel %vm3219, %v432, %v3303
        %v3307 = vsel %vm3219, 0, %v3305
        %v3308 = vcosq.f32.pop %v3306
        %v3309 = vsinq.f32.pop %v3306
        %vm3310 = vweird.f32 %v432
        %v3311 = vand.u32 %v3307, 3
        %vm3312 = vcmp.lt.s32.totalorder %v3311, 2
        %vm3313 = vcmp.eq.s32.totalorder %v3311, 0
        %v3314 = vxor.u32 %v3309, 2147483648
        %v3315 = vsel %vm3313, %v3308, %v3314
        %vm3316 = vcmp.eq.s32.totalorder %v3311, 2
        %v3317 = vxor.u32 %v3308, 2147483648
        %v3318 = vsel %vm3316, %v3317, %v3309
        %v3319 = vsel %vm3312, %v3315, %v3318
        %v3320 = vsel %vm3310, nan, %v3319
        %v3321 = vand.u32 2147483647, %v433
        %vm3322 = vcmp.le.f32.partialorder %v3321, 0.7853982
        %vm3323 = vcmp.lt.s32.totalorder %v433, 0
        %v3324 = vand.u32 %v433, 2139095040
        %v3325 = vshrl.u32 %v3324, 23
        %v3326 = vsub.s32 %v3325, 127
        %v3327 = vand.u32 2147483647, %v433
        %v3328 = vand.u32 %v3327, 8388607
        %v3329 = vor.u32 %v3328, 8388608
        %v3330 = vsub.s32 0, %v3329
        %v3331 = vadd.s32 %v3326, 1
        %vm3332 = vcmp.gt.s32.totalorder %v3331, 0
        %v3333 = vsel %vm3332, %v3331, 0
        %v3334 = vshrl.u32 %v3333, 5
        %v3335 = vand.u32 %v3333, 31
        %v3336 = vsub.s32 32, %v3335
        %v3337 = vshrl.u32 683565275, %v3336
        %v3338 = vshll.u32 683565275, %v3335
        %v3339 = vshrl.u32 2475754826, %v3336
        %v3340 = vor.u32 %v3338, %v3339
        %v3341 = vshll.u32 2475754826, %v3335
        %v3342 = vshrl.u32 2131351028, %v3336
        %v3343 = vor.u32 %v3341, %v3342
        %v3344 = vshll.u32 2131351028, %v3335
        %v3345 = vshrl.u32 2102212464, %v3336
        %v3346 = vor.u32 %v3344, %v3345
        %v3347 = vshll.u32 2102212464, %v3335
        %v3348 = vshrl.u32 920167782, %v3336
        %v3349 = vor.u32 %v3347, %v3348
        %v3350 = vshll.u32 920167782, %v3335
        %v3351 = vshrl.u32 1326507024, %v3336
        %v3352 = vor.u32 %v3350, %v3351
        %vm3353 = vcmp.lt.s32.totalorder %v3334, 1
        %vm3354 = vcmp.lt.s32.totalorder %v3334, 2
        %vm3355 = vcmp.lt.s32.totalorder %v3334, 3
        %vm3356 = vcmp.lt.s32.totalorder %v3334, 4
        %v3357 = vsel %vm3353, %v3337, %v3340
        %v3358 = vsel %vm3356, %v3346, 2102212464
        %v3359 = vsel %vm3355, %v3343, %v3358
        %v3360 = vsel %vm3354, %v3357, %v3359
        %v3361 = vsel %vm3353, %v3340, %v3343
        %v3362 = vsel %vm3356, %v3349, 920167782
        %v3363 = vsel %vm3355, %v3346, %v3362
        %v3364 = vsel %vm3354, %v3361, %v3363
        %v3365 = vsel %vm3353, %v3343, %v3346
        %v3366 = vsel %vm3356, %v3352, 1326507024
        %v3367 = vsel %vm3355, %v3349, %v3366
        %v3368 = vsel %vm3354, %v3365, %v3367
        %v3369 = vshll.u32 %v3329, 8
        %v3370 = vmul.u32.u64.compose %v3369, %v3368
        %v3371 = vextract.low.u32 %v3370
        %v3372 = vextract.high.u32 %v3370
        %v3373 = vmul.u32.u64.compose %v3369, %v3364
        %v3374 = vextract.low.u32 %v3373
        %v3375 = vextract.high.u32 %v3373
        %v3376 = vmul.u32 %v3369, %v3360
        %v3377 = vadd.s32 %v3372, %v3374
        %vm3378 = vc.u32 %v3372, %v3374
        %v3379 = vadd.s32 %v3375, 1
        %v3380 = vsel %vm3378, %v3379, %v3375
        %v3381 = vadd.s32 %v3376, %v3380
        %v3382 = vadd.s32 %v3381, 536870912
        %v3383 = vshrl.u32 %v3382, 30
        %v3384 = vshll.u32 %v3383, 30
        %v3385 = vsub.s32 %v3381, %v3384
        %vm3386 = vcmp.lt.s32.totalorder %v3385, 0
        %v3387 = vsub.s32 0, %v3385
        %v3388 = vsel %vm3386, %v3387, %v3385
        %v3389 = vclz %v3388
        %v3390 = vsub.s32 %v3389, 2
        %vm3391 = vcmp.gt.s32.totalorder 0, %v3390
        %v3392 = vsel %vm3391, 0, %v3390
        %v3393 = vsub.s32 32, %v3392
        %v3394 = vshll.u32 %v3385, %v3392
        %v3395 = vshrl.u32 %v3377, %v3393
        %v3396 = vor.u32 %v3394, %v3395
        %v3397 = vsub.s32 4294967266, %v3392
        %v3398 = vadd.s32 %v3397, 127
        %v3399 = vshll.u32 %v3398, 23
        %v3400 = vor.u32 4788187, %v3399
        %v3401 = vand.u32 2147483647, %v3400
        %v3403 = vcvt.s32.f32 %v3396
        %v3404 = vmul.f32 %v3403, %v3401
        %v3405 = vxor.u32 %v3404, 2147483648
        %v3406 = vsel %vm3323, %v3405, %v3404
        %v3407 = vsub.s32 4, %v3383
        %v3408 = vsel %vm3323, %v3407, %v3383
        %v3409 = vsel %vm3322, %v433, %v3406
        %v3410 = vsel %vm3322, 0, %v3408
        %v3411 = vcosq.f32.pop %v3409
        %v3412 = vsinq.f32.pop %v3409
        %vm3413 = vweird.f32 %v433
        %v3414 = vand.u32 %v3410, 3
        %vm3415 = vcmp.lt.s32.totalorder %v3414, 2
        %vm3416 = vcmp.eq.s32.totalorder %v3414, 0
        %v3417 = vxor.u32 %v3412, 2147483648
        %v3418 = vsel %vm3416, %v3411, %v3417
        %vm3419 = vcmp.eq.s32.totalorder %v3414, 2
        %v3420 = vxor.u32 %v3411, 2147483648
        %v3421 = vsel %vm3419, %v3420, %v3412
        %v3422 = vsel %vm3415, %v3418, %v3421
        %v3423 = vsel %vm3413, nan, %v3422
        %v3424 = vand.u32 2147483647, %v434
        %vm3425 = vcmp.le.f32.partialorder %v3424, 0.7853982
        %vm3426 = vcmp.lt.s32.totalorder %v434, 0
        %v3427 = vand.u32 %v434, 2139095040
        %v3428 = vshrl.u32 %v3427, 23
        %v3429 = vsub.s32 %v3428, 127
        %v3430 = vand.u32 2147483647, %v434
        %v3431 = vand.u32 %v3430, 8388607
        %v3432 = vor.u32 %v3431, 8388608
        %v3433 = vsub.s32 0, %v3432
        %v3434 = vadd.s32 %v3429, 1
        %vm3435 = vcmp.gt.s32.totalorder %v3434, 0
        %v3436 = vsel %vm3435, %v3434, 0
        %v3437 = vshrl.u32 %v3436, 5
        %v3438 = vand.u32 %v3436, 31
        %v3439 = vsub.s32 32, %v3438
        %v3440 = vshrl.u32 683565275, %v3439
        %v3441 = vshll.u32 683565275, %v3438
        %v3442 = vshrl.u32 2475754826, %v3439
        %v3443 = vor.u32 %v3441, %v3442
        %v3444 = vshll.u32 2475754826, %v3438
        %v3445 = vshrl.u32 2131351028, %v3439
        %v3446 = vor.u32 %v3444, %v3445
        %v3447 = vshll.u32 2131351028, %v3438
        %v3448 = vshrl.u32 2102212464, %v3439
        %v3449 = vor.u32 %v3447, %v3448
        %v3450 = vshll.u32 2102212464, %v3438
        %v3451 = vshrl.u32 920167782, %v3439
        %v3452 = vor.u32 %v3450, %v3451
        %v3453 = vshll.u32 920167782, %v3438
        %v3454 = vshrl.u32 1326507024, %v3439
        %v3455 = vor.u32 %v3453, %v3454
        %vm3456 = vcmp.lt.s32.totalorder %v3437, 1
        %vm3457 = vcmp.lt.s32.totalorder %v3437, 2
        %vm3458 = vcmp.lt.s32.totalorder %v3437, 3
        %vm3459 = vcmp.lt.s32.totalorder %v3437, 4
        %v3460 = vsel %vm3456, %v3440, %v3443
        %v3461 = vsel %vm3459, %v3449, 2102212464
        %v3462 = vsel %vm3458, %v3446, %v3461
        %v3463 = vsel %vm3457, %v3460, %v3462
        %v3464 = vsel %vm3456, %v3443, %v3446
        %v3465 = vsel %vm3459, %v3452, 920167782
        %v3466 = vsel %vm3458, %v3449, %v3465
        %v3467 = vsel %vm3457, %v3464, %v3466
        %v3468 = vsel %vm3456, %v3446, %v3449
        %v3469 = vsel %vm3459, %v3455, 1326507024
        %v3470 = vsel %vm3458, %v3452, %v3469
        %v3471 = vsel %vm3457, %v3468, %v3470
        %v3472 = vshll.u32 %v3432, 8
        %v3473 = vmul.u32.u64.compose %v3472, %v3471
        %v3474 = vextract.low.u32 %v3473
        %v3475 = vextract.high.u32 %v3473
        %v3476 = vmul.u32.u64.compose %v3472, %v3467
        %v3477 = vextract.low.u32 %v3476
        %v3478 = vextract.high.u32 %v3476
        %v3479 = vmul.u32 %v3472, %v3463
        %v3480 = vadd.s32 %v3475, %v3477
        %vm3481 = vc.u32 %v3475, %v3477
        %v3482 = vadd.s32 %v3478, 1
        %v3483 = vsel %vm3481, %v3482, %v3478
        %v3484 = vadd.s32 %v3479, %v3483
        %v3485 = vadd.s32 %v3484, 536870912
        %v3486 = vshrl.u32 %v3485, 30
        %v3487 = vshll.u32 %v3486, 30
        %v3488 = vsub.s32 %v3484, %v3487
        %vm3489 = vcmp.lt.s32.totalorder %v3488, 0
        %v3490 = vsub.s32 0, %v3488
        %v3491 = vsel %vm3489, %v3490, %v3488
        %v3492 = vclz %v3491
        %v3493 = vsub.s32 %v3492, 2
        %vm3494 = vcmp.gt.s32.totalorder 0, %v3493
        %v3495 = vsel %vm3494, 0, %v3493
        %v3496 = vsub.s32 32, %v3495
        %v3497 = vshll.u32 %v3488, %v3495
        %v3498 = vshrl.u32 %v3480, %v3496
        %v3499 = vor.u32 %v3497, %v3498
        %v3500 = vsub.s32 4294967266, %v3495
        %v3501 = vadd.s32 %v3500, 127
        %v3502 = vshll.u32 %v3501, 23
        %v3503 = vor.u32 4788187, %v3502
        %v3504 = vand.u32 2147483647, %v3503
        %v3506 = vcvt.s32.f32 %v3499
        %v3507 = vmul.f32 %v3506, %v3504
        %v3508 = vxor.u32 %v3507, 2147483648
        %v3509 = vsel %vm3426, %v3508, %v3507
        %v3510 = vsub.s32 4, %v3486
        %v3511 = vsel %vm3426, %v3510, %v3486
        %v3512 = vsel %vm3425, %v434, %v3509
        %v3513 = vsel %vm3425, 0, %v3511
        %v3514 = vcosq.f32.pop %v3512
        %v3515 = vsinq.f32.pop %v3512
        %vm3516 = vweird.f32 %v434
        %v3517 = vand.u32 %v3513, 3
        %vm3518 = vcmp.lt.s32.totalorder %v3517, 2
        %vm3519 = vcmp.eq.s32.totalorder %v3517, 0
        %v3520 = vxor.u32 %v3515, 2147483648
        %v3521 = vsel %vm3519, %v3514, %v3520
        %vm3522 = vcmp.eq.s32.totalorder %v3517, 2
        %v3523 = vxor.u32 %v3514, 2147483648
        %v3524 = vsel %vm3522, %v3523, %v3515
        %v3525 = vsel %vm3518, %v3521, %v3524
        %v3526 = vsel %vm3516, nan, %v3525
        %v3527 = vand.u32 2147483647, %v435
        %vm3528 = vcmp.le.f32.partialorder %v3527, 0.7853982
        %vm3529 = vcmp.lt.s32.totalorder %v435, 0
        %v3530 = vand.u32 %v435, 2139095040
        %v3531 = vshrl.u32 %v3530, 23
        %v3532 = vsub.s32 %v3531, 127
        %v3533 = vand.u32 2147483647, %v435
        %v3534 = vand.u32 %v3533, 8388607
        %v3535 = vor.u32 %v3534, 8388608
        %v3536 = vsub.s32 0, %v3535
        %v3537 = vadd.s32 %v3532, 1
        %vm3538 = vcmp.gt.s32.totalorder %v3537, 0
        %v3539 = vsel %vm3538, %v3537, 0
        %v3540 = vshrl.u32 %v3539, 5
        %v3541 = vand.u32 %v3539, 31
        %v3542 = vsub.s32 32, %v3541
        %v3543 = vshrl.u32 683565275, %v3542
        %v3544 = vshll.u32 683565275, %v3541
        %v3545 = vshrl.u32 2475754826, %v3542
        %v3546 = vor.u32 %v3544, %v3545
        %v3547 = vshll.u32 2475754826, %v3541
        %v3548 = vshrl.u32 2131351028, %v3542
        %v3549 = vor.u32 %v3547, %v3548
        %v3550 = vshll.u32 2131351028, %v3541
        %v3551 = vshrl.u32 2102212464, %v3542
        %v3552 = vor.u32 %v3550, %v3551
        %v3553 = vshll.u32 2102212464, %v3541
        %v3554 = vshrl.u32 920167782, %v3542
        %v3555 = vor.u32 %v3553, %v3554
        %v3556 = vshll.u32 920167782, %v3541
        %v3557 = vshrl.u32 1326507024, %v3542
        %v3558 = vor.u32 %v3556, %v3557
        %vm3559 = vcmp.lt.s32.totalorder %v3540, 1
        %vm3560 = vcmp.lt.s32.totalorder %v3540, 2
        %vm3561 = vcmp.lt.s32.totalorder %v3540, 3
        %vm3562 = vcmp.lt.s32.totalorder %v3540, 4
        %v3563 = vsel %vm3559, %v3543, %v3546
        %v3564 = vsel %vm3562, %v3552, 2102212464
        %v3565 = vsel %vm3561, %v3549, %v3564
        %v3566 = vsel %vm3560, %v3563, %v3565
        %v3567 = vsel %vm3559, %v3546, %v3549
        %v3568 = vsel %vm3562, %v3555, 920167782
        %v3569 = vsel %vm3561, %v3552, %v3568
        %v3570 = vsel %vm3560, %v3567, %v3569
        %v3571 = vsel %vm3559, %v3549, %v3552
        %v3572 = vsel %vm3562, %v3558, 1326507024
        %v3573 = vsel %vm3561, %v3555, %v3572
        %v3574 = vsel %vm3560, %v3571, %v3573
        %v3575 = vshll.u32 %v3535, 8
        %v3576 = vmul.u32.u64.compose %v3575, %v3574
        %v3577 = vextract.low.u32 %v3576
        %v3578 = vextract.high.u32 %v3576
        %v3579 = vmul.u32.u64.compose %v3575, %v3570
        %v3580 = vextract.low.u32 %v3579
        %v3581 = vextract.high.u32 %v3579
        %v3582 = vmul.u32 %v3575, %v3566
        %v3583 = vadd.s32 %v3578, %v3580
        %vm3584 = vc.u32 %v3578, %v3580
        %v3585 = vadd.s32 %v3581, 1
        %v3586 = vsel %vm3584, %v3585, %v3581
        %v3587 = vadd.s32 %v3582, %v3586
        %v3588 = vadd.s32 %v3587, 536870912
        %v3589 = vshrl.u32 %v3588, 30
        %v3590 = vshll.u32 %v3589, 30
        %v3591 = vsub.s32 %v3587, %v3590
        %vm3592 = vcmp.lt.s32.totalorder %v3591, 0
        %v3593 = vsub.s32 0, %v3591
        %v3594 = vsel %vm3592, %v3593, %v3591
        %v3595 = vclz %v3594
        %v3596 = vsub.s32 %v3595, 2
        %vm3597 = vcmp.gt.s32.totalorder 0, %v3596
        %v3598 = vsel %vm3597, 0, %v3596
        %v3599 = vsub.s32 32, %v3598
        %v3600 = vshll.u32 %v3591, %v3598
        %v3601 = vshrl.u32 %v3583, %v3599
        %v3602 = vor.u32 %v3600, %v3601
        %v3603 = vsub.s32 4294967266, %v3598
        %v3604 = vadd.s32 %v3603, 127
        %v3605 = vshll.u32 %v3604, 23
        %v3606 = vor.u32 4788187, %v3605
        %v3607 = vand.u32 2147483647, %v3606
        %v3609 = vcvt.s32.f32 %v3602
        %v3610 = vmul.f32 %v3609, %v3607
        %v3611 = vxor.u32 %v3610, 2147483648
        %v3612 = vsel %vm3529, %v3611, %v3610
        %v3613 = vsub.s32 4, %v3589
        %v3614 = vsel %vm3529, %v3613, %v3589
        %v3615 = vsel %vm3528, %v435, %v3612
        %v3616 = vsel %vm3528, 0, %v3614
        %v3617 = vcosq.f32.pop %v3615
        %v3618 = vsinq.f32.pop %v3615
        %vm3619 = vweird.f32 %v435
        %v3620 = vand.u32 %v3616, 3
        %vm3621 = vcmp.lt.s32.totalorder %v3620, 2
        %vm3622 = vcmp.eq.s32.totalorder %v3620, 0
        %v3623 = vxor.u32 %v3618, 2147483648
        %v3624 = vsel %vm3622, %v3617, %v3623
        %vm3625 = vcmp.eq.s32.totalorder %v3620, 2
        %v3626 = vxor.u32 %v3617, 2147483648
        %v3627 = vsel %vm3625, %v3626, %v3618
        %v3628 = vsel %vm3621, %v3624, %v3627
        %v3629 = vsel %vm3619, nan, %v3628
        %v3630 = vand.u32 2147483647, %v436
        %vm3631 = vcmp.le.f32.partialorder %v3630, 0.7853982
        %vm3632 = vcmp.lt.s32.totalorder %v436, 0
        %v3633 = vand.u32 %v436, 2139095040
        %v3634 = vshrl.u32 %v3633, 23
        %v3635 = vsub.s32 %v3634, 127
        %v3636 = vand.u32 2147483647, %v436
        %v3637 = vand.u32 %v3636, 8388607
        %v3638 = vor.u32 %v3637, 8388608
        %v3639 = vsub.s32 0, %v3638
        %v3640 = vadd.s32 %v3635, 1
        %vm3641 = vcmp.gt.s32.totalorder %v3640, 0
        %v3642 = vsel %vm3641, %v3640, 0
        %v3643 = vshrl.u32 %v3642, 5
        %v3644 = vand.u32 %v3642, 31
        %v3645 = vsub.s32 32, %v3644
        %v3646 = vshrl.u32 683565275, %v3645
        %v3647 = vshll.u32 683565275, %v3644
        %v3648 = vshrl.u32 2475754826, %v3645
        %v3649 = vor.u32 %v3647, %v3648
        %v3650 = vshll.u32 2475754826, %v3644
        %v3651 = vshrl.u32 2131351028, %v3645
        %v3652 = vor.u32 %v3650, %v3651
        %v3653 = vshll.u32 2131351028, %v3644
        %v3654 = vshrl.u32 2102212464, %v3645
        %v3655 = vor.u32 %v3653, %v3654
        %v3656 = vshll.u32 2102212464, %v3644
        %v3657 = vshrl.u32 920167782, %v3645
        %v3658 = vor.u32 %v3656, %v3657
        %v3659 = vshll.u32 920167782, %v3644
        %v3660 = vshrl.u32 1326507024, %v3645
        %v3661 = vor.u32 %v3659, %v3660
        %vm3662 = vcmp.lt.s32.totalorder %v3643, 1
        %vm3663 = vcmp.lt.s32.totalorder %v3643, 2
        %vm3664 = vcmp.lt.s32.totalorder %v3643, 3
        %vm3665 = vcmp.lt.s32.totalorder %v3643, 4
        %v3666 = vsel %vm3662, %v3646, %v3649
        %v3667 = vsel %vm3665, %v3655, 2102212464
        %v3668 = vsel %vm3664, %v3652, %v3667
        %v3669 = vsel %vm3663, %v3666, %v3668
        %v3670 = vsel %vm3662, %v3649, %v3652
        %v3671 = vsel %vm3665, %v3658, 920167782
        %v3672 = vsel %vm3664, %v3655, %v3671
        %v3673 = vsel %vm3663, %v3670, %v3672
        %v3674 = vsel %vm3662, %v3652, %v3655
        %v3675 = vsel %vm3665, %v3661, 1326507024
        %v3676 = vsel %vm3664, %v3658, %v3675
        %v3677 = vsel %vm3663, %v3674, %v3676
        %v3678 = vshll.u32 %v3638, 8
        %v3679 = vmul.u32.u64.compose %v3678, %v3677
        %v3680 = vextract.low.u32 %v3679
        %v3681 = vextract.high.u32 %v3679
        %v3682 = vmul.u32.u64.compose %v3678, %v3673
        %v3683 = vextract.low.u32 %v3682
        %v3684 = vextract.high.u32 %v3682
        %v3685 = vmul.u32 %v3678, %v3669
        %v3686 = vadd.s32 %v3681, %v3683
        %vm3687 = vc.u32 %v3681, %v3683
        %v3688 = vadd.s32 %v3684, 1
        %v3689 = vsel %vm3687, %v3688, %v3684
        %v3690 = vadd.s32 %v3685, %v3689
        %v3691 = vadd.s32 %v3690, 536870912
        %v3692 = vshrl.u32 %v3691, 30
        %v3693 = vshll.u32 %v3692, 30
        %v3694 = vsub.s32 %v3690, %v3693
        %vm3695 = vcmp.lt.s32.totalorder %v3694, 0
        %v3696 = vsub.s32 0, %v3694
        %v3697 = vsel %vm3695, %v3696, %v3694
        %v3698 = vclz %v3697
        %v3699 = vsub.s32 %v3698, 2
        %vm3700 = vcmp.gt.s32.totalorder 0, %v3699
        %v3701 = vsel %vm3700, 0, %v3699
        %v3702 = vsub.s32 32, %v3701
        %v3703 = vshll.u32 %v3694, %v3701
        %v3704 = vshrl.u32 %v3686, %v3702
        %v3705 = vor.u32 %v3703, %v3704
        %v3706 = vsub.s32 4294967266, %v3701
        %v3707 = vadd.s32 %v3706, 127
        %v3708 = vshll.u32 %v3707, 23
        %v3709 = vor.u32 4788187, %v3708
        %v3710 = vand.u32 2147483647, %v3709
        %v3712 = vcvt.s32.f32 %v3705
        %v3713 = vmul.f32 %v3712, %v3710
        %v3714 = vxor.u32 %v3713, 2147483648
        %v3715 = vsel %vm3632, %v3714, %v3713
        %v3716 = vsub.s32 4, %v3692
        %v3717 = vsel %vm3632, %v3716, %v3692
        %v3718 = vsel %vm3631, %v436, %v3715
        %v3719 = vsel %vm3631, 0, %v3717
        %v3720 = vcosq.f32.pop %v3718
        %v3721 = vsinq.f32.pop %v3718
        %vm3722 = vweird.f32 %v436
        %v3723 = vand.u32 %v3719, 3
        %vm3724 = vcmp.lt.s32.totalorder %v3723, 2
        %vm3725 = vcmp.eq.s32.totalorder %v3723, 0
        %v3726 = vxor.u32 %v3721, 2147483648
        %v3727 = vsel %vm3725, %v3720, %v3726
        %vm3728 = vcmp.eq.s32.totalorder %v3723, 2
        %v3729 = vxor.u32 %v3720, 2147483648
        %v3730 = vsel %vm3728, %v3729, %v3721
        %v3731 = vsel %vm3724, %v3727, %v3730
        %v3732 = vsel %vm3722, nan, %v3731
        %v3733 = vand.u32 2147483647, %v405
        %vm3734 = vcmp.le.f32.partialorder %v3733, 0.7853982
        %vm3735 = vcmp.lt.s32.totalorder %v405, 0
        %v3736 = vand.u32 %v405, 2139095040
        %v3737 = vshrl.u32 %v3736, 23
        %v3738 = vsub.s32 %v3737, 127
        %v3739 = vand.u32 2147483647, %v405
        %v3740 = vand.u32 %v3739, 8388607
        %v3741 = vor.u32 %v3740, 8388608
        %v3742 = vsub.s32 0, %v3741
        %v3743 = vadd.s32 %v3738, 1
        %vm3744 = vcmp.gt.s32.totalorder %v3743, 0
        %v3745 = vsel %vm3744, %v3743, 0
        %v3746 = vshrl.u32 %v3745, 5
        %v3747 = vand.u32 %v3745, 31
        %v3748 = vsub.s32 32, %v3747
        %v3749 = vshrl.u32 683565275, %v3748
        %v3750 = vshll.u32 683565275, %v3747
        %v3751 = vshrl.u32 2475754826, %v3748
        %v3752 = vor.u32 %v3750, %v3751
        %v3753 = vshll.u32 2475754826, %v3747
        %v3754 = vshrl.u32 2131351028, %v3748
        %v3755 = vor.u32 %v3753, %v3754
        %v3756 = vshll.u32 2131351028, %v3747
        %v3757 = vshrl.u32 2102212464, %v3748
        %v3758 = vor.u32 %v3756, %v3757
        %v3759 = vshll.u32 2102212464, %v3747
        %v3760 = vshrl.u32 920167782, %v3748
        %v3761 = vor.u32 %v3759, %v3760
        %v3762 = vshll.u32 920167782, %v3747
        %v3763 = vshrl.u32 1326507024, %v3748
        %v3764 = vor.u32 %v3762, %v3763
        %vm3765 = vcmp.lt.s32.totalorder %v3746, 1
        %vm3766 = vcmp.lt.s32.totalorder %v3746, 2
        %vm3767 = vcmp.lt.s32.totalorder %v3746, 3
        %vm3768 = vcmp.lt.s32.totalorder %v3746, 4
        %v3769 = vsel %vm3765, %v3749, %v3752
        %v3770 = vsel %vm3768, %v3758, 2102212464
        %v3771 = vsel %vm3767, %v3755, %v3770
        %v3772 = vsel %vm3766, %v3769, %v3771
        %v3773 = vsel %vm3765, %v3752, %v3755
        %v3774 = vsel %vm3768, %v3761, 920167782
        %v3775 = vsel %vm3767, %v3758, %v3774
        %v3776 = vsel %vm3766, %v3773, %v3775
        %v3777 = vsel %vm3765, %v3755, %v3758
        %v3778 = vsel %vm3768, %v3764, 1326507024
        %v3779 = vsel %vm3767, %v3761, %v3778
        %v3780 = vsel %vm3766, %v3777, %v3779
        %v3781 = vshll.u32 %v3741, 8
        %v3782 = vmul.u32.u64.compose %v3781, %v3780
        %v3783 = vextract.low.u32 %v3782
        %v3784 = vextract.high.u32 %v3782
        %v3785 = vmul.u32.u64.compose %v3781, %v3776
        %v3786 = vextract.low.u32 %v3785
        %v3787 = vextract.high.u32 %v3785
        %v3788 = vmul.u32 %v3781, %v3772
        %v3789 = vadd.s32 %v3784, %v3786
        %vm3790 = vc.u32 %v3784, %v3786
        %v3791 = vadd.s32 %v3787, 1
        %v3792 = vsel %vm3790, %v3791, %v3787
        %v3793 = vadd.s32 %v3788, %v3792
        %v3794 = vadd.s32 %v3793, 536870912
        %v3795 = vshrl.u32 %v3794, 30
        %v3796 = vshll.u32 %v3795, 30
        %v3797 = vsub.s32 %v3793, %v3796
        %vm3798 = vcmp.lt.s32.totalorder %v3797, 0
        %v3799 = vsub.s32 0, %v3797
        %v3800 = vsel %vm3798, %v3799, %v3797
        %v3801 = vclz %v3800
        %v3802 = vsub.s32 %v3801, 2
        %vm3803 = vcmp.gt.s32.totalorder 0, %v3802
        %v3804 = vsel %vm3803, 0, %v3802
        %v3805 = vsub.s32 32, %v3804
        %v3806 = vshll.u32 %v3797, %v3804
        %v3807 = vshrl.u32 %v3789, %v3805
        %v3808 = vor.u32 %v3806, %v3807
        %v3809 = vsub.s32 4294967266, %v3804
        %v3810 = vadd.s32 %v3809, 127
        %v3811 = vshll.u32 %v3810, 23
        %v3812 = vor.u32 4788187, %v3811
        %v3813 = vand.u32 2147483647, %v3812
        %v3815 = vcvt.s32.f32 %v3808
        %v3816 = vmul.f32 %v3815, %v3813
        %v3817 = vxor.u32 %v3816, 2147483648
        %v3818 = vsel %vm3735, %v3817, %v3816
        %v3819 = vsub.s32 4, %v3795
        %v3820 = vsel %vm3735, %v3819, %v3795
        %v3821 = vsel %vm3734, %v405, %v3818
        %v3822 = vsel %vm3734, 0, %v3820
        %v3823 = vcosq.f32.pop %v3821
        %v3824 = vsinq.f32.pop %v3821
        %vm3825 = vweird.f32 %v405
        %v3826 = vadd.s32 %v3822, 3
        %v3827 = vand.u32 %v3826, 3
        %vm3828 = vcmp.lt.s32.totalorder %v3827, 2
        %vm3829 = vcmp.eq.s32.totalorder %v3827, 0
        %v3830 = vxor.u32 %v3824, 2147483648
        %v3831 = vsel %vm3829, %v3823, %v3830
        %vm3832 = vcmp.eq.s32.totalorder %v3827, 2
        %v3833 = vxor.u32 %v3823, 2147483648
        %v3834 = vsel %vm3832, %v3833, %v3824
        %v3835 = vsel %vm3828, %v3831, %v3834
        %v3836 = vsel %vm3825, nan, %v3835
        %v3837 = vand.u32 2147483647, %v406
        %vm3838 = vcmp.le.f32.partialorder %v3837, 0.7853982
        %vm3839 = vcmp.lt.s32.totalorder %v406, 0
        %v3840 = vand.u32 %v406, 2139095040
        %v3841 = vshrl.u32 %v3840, 23
        %v3842 = vsub.s32 %v3841, 127
        %v3843 = vand.u32 2147483647, %v406
        %v3844 = vand.u32 %v3843, 8388607
        %v3845 = vor.u32 %v3844, 8388608
        %v3846 = vsub.s32 0, %v3845
        %v3847 = vadd.s32 %v3842, 1
        %vm3848 = vcmp.gt.s32.totalorder %v3847, 0
        %v3849 = vsel %vm3848, %v3847, 0
        %v3850 = vshrl.u32 %v3849, 5
        %v3851 = vand.u32 %v3849, 31
        %v3852 = vsub.s32 32, %v3851
        %v3853 = vshrl.u32 683565275, %v3852
        %v3854 = vshll.u32 683565275, %v3851
        %v3855 = vshrl.u32 2475754826, %v3852
        %v3856 = vor.u32 %v3854, %v3855
        %v3857 = vshll.u32 2475754826, %v3851
        %v3858 = vshrl.u32 2131351028, %v3852
        %v3859 = vor.u32 %v3857, %v3858
        %v3860 = vshll.u32 2131351028, %v3851
        %v3861 = vshrl.u32 2102212464, %v3852
        %v3862 = vor.u32 %v3860, %v3861
        %v3863 = vshll.u32 2102212464, %v3851
        %v3864 = vshrl.u32 920167782, %v3852
        %v3865 = vor.u32 %v3863, %v3864
        %v3866 = vshll.u32 920167782, %v3851
        %v3867 = vshrl.u32 1326507024, %v3852
        %v3868 = vor.u32 %v3866, %v3867
        %vm3869 = vcmp.lt.s32.totalorder %v3850, 1
        %vm3870 = vcmp.lt.s32.totalorder %v3850, 2
        %vm3871 = vcmp.lt.s32.totalorder %v3850, 3
        %vm3872 = vcmp.lt.s32.totalorder %v3850, 4
        %v3873 = vsel %vm3869, %v3853, %v3856
        %v3874 = vsel %vm3872, %v3862, 2102212464
        %v3875 = vsel %vm3871, %v3859, %v3874
        %v3876 = vsel %vm3870, %v3873, %v3875
        %v3877 = vsel %vm3869, %v3856, %v3859
        %v3878 = vsel %vm3872, %v3865, 920167782
        %v3879 = vsel %vm3871, %v3862, %v3878
        %v3880 = vsel %vm3870, %v3877, %v3879
        %v3881 = vsel %vm3869, %v3859, %v3862
        %v3882 = vsel %vm3872, %v3868, 1326507024
        %v3883 = vsel %vm3871, %v3865, %v3882
        %v3884 = vsel %vm3870, %v3881, %v3883
        %v3885 = vshll.u32 %v3845, 8
        %v3886 = vmul.u32.u64.compose %v3885, %v3884
        %v3887 = vextract.low.u32 %v3886
        %v3888 = vextract.high.u32 %v3886
        %v3889 = vmul.u32.u64.compose %v3885, %v3880
        %v3890 = vextract.low.u32 %v3889
        %v3891 = vextract.high.u32 %v3889
        %v3892 = vmul.u32 %v3885, %v3876
        %v3893 = vadd.s32 %v3888, %v3890
        %vm3894 = vc.u32 %v3888, %v3890
        %v3895 = vadd.s32 %v3891, 1
        %v3896 = vsel %vm3894, %v3895, %v3891
        %v3897 = vadd.s32 %v3892, %v3896
        %v3898 = vadd.s32 %v3897, 536870912
        %v3899 = vshrl.u32 %v3898, 30
        %v3900 = vshll.u32 %v3899, 30
        %v3901 = vsub.s32 %v3897, %v3900
        %vm3902 = vcmp.lt.s32.totalorder %v3901, 0
        %v3903 = vsub.s32 0, %v3901
        %v3904 = vsel %vm3902, %v3903, %v3901
        %v3905 = vclz %v3904
        %v3906 = vsub.s32 %v3905, 2
        %vm3907 = vcmp.gt.s32.totalorder 0, %v3906
        %v3908 = vsel %vm3907, 0, %v3906
        %v3909 = vsub.s32 32, %v3908
        %v3910 = vshll.u32 %v3901, %v3908
        %v3911 = vshrl.u32 %v3893, %v3909
        %v3912 = vor.u32 %v3910, %v3911
        %v3913 = vsub.s32 4294967266, %v3908
        %v3914 = vadd.s32 %v3913, 127
        %v3915 = vshll.u32 %v3914, 23
        %v3916 = vor.u32 4788187, %v3915
        %v3917 = vand.u32 2147483647, %v3916
        %v3919 = vcvt.s32.f32 %v3912
        %v3920 = vmul.f32 %v3919, %v3917
        %v3921 = vxor.u32 %v3920, 2147483648
        %v3922 = vsel %vm3839, %v3921, %v3920
        %v3923 = vsub.s32 4, %v3899
        %v3924 = vsel %vm3839, %v3923, %v3899
        %v3925 = vsel %vm3838, %v406, %v3922
        %v3926 = vsel %vm3838, 0, %v3924
        %v3927 = vcosq.f32.pop %v3925
        %v3928 = vsinq.f32.pop %v3925
        %vm3929 = vweird.f32 %v406
        %v3930 = vadd.s32 %v3926, 3
        %v3931 = vand.u32 %v3930, 3
        %vm3932 = vcmp.lt.s32.totalorder %v3931, 2
        %vm3933 = vcmp.eq.s32.totalorder %v3931, 0
        %v3934 = vxor.u32 %v3928, 2147483648
        %v3935 = vsel %vm3933, %v3927, %v3934
        %vm3936 = vcmp.eq.s32.totalorder %v3931, 2
        %v3937 = vxor.u32 %v3927, 2147483648
        %v3938 = vsel %vm3936, %v3937, %v3928
        %v3939 = vsel %vm3932, %v3935, %v3938
        %v3940 = vsel %vm3929, nan, %v3939
        %v3941 = vand.u32 2147483647, %v407
        %vm3942 = vcmp.le.f32.partialorder %v3941, 0.7853982
        %vm3943 = vcmp.lt.s32.totalorder %v407, 0
        %v3944 = vand.u32 %v407, 2139095040
        %v3945 = vshrl.u32 %v3944, 23
        %v3946 = vsub.s32 %v3945, 127
        %v3947 = vand.u32 2147483647, %v407
        %v3948 = vand.u32 %v3947, 8388607
        %v3949 = vor.u32 %v3948, 8388608
        %v3950 = vsub.s32 0, %v3949
        %v3951 = vadd.s32 %v3946, 1
        %vm3952 = vcmp.gt.s32.totalorder %v3951, 0
        %v3953 = vsel %vm3952, %v3951, 0
        %v3954 = vshrl.u32 %v3953, 5
        %v3955 = vand.u32 %v3953, 31
        %v3956 = vsub.s32 32, %v3955
        %v3957 = vshrl.u32 683565275, %v3956
        %v3958 = vshll.u32 683565275, %v3955
        %v3959 = vshrl.u32 2475754826, %v3956
        %v3960 = vor.u32 %v3958, %v3959
        %v3961 = vshll.u32 2475754826, %v3955
        %v3962 = vshrl.u32 2131351028, %v3956
        %v3963 = vor.u32 %v3961, %v3962
        %v3964 = vshll.u32 2131351028, %v3955
        %v3965 = vshrl.u32 2102212464, %v3956
        %v3966 = vor.u32 %v3964, %v3965
        %v3967 = vshll.u32 2102212464, %v3955
        %v3968 = vshrl.u32 920167782, %v3956
        %v3969 = vor.u32 %v3967, %v3968
        %v3970 = vshll.u32 920167782, %v3955
        %v3971 = vshrl.u32 1326507024, %v3956
        %v3972 = vor.u32 %v3970, %v3971
        %vm3973 = vcmp.lt.s32.totalorder %v3954, 1
        %vm3974 = vcmp.lt.s32.totalorder %v3954, 2
        %vm3975 = vcmp.lt.s32.totalorder %v3954, 3
        %vm3976 = vcmp.lt.s32.totalorder %v3954, 4
        %v3977 = vsel %vm3973, %v3957, %v3960
        %v3978 = vsel %vm3976, %v3966, 2102212464
        %v3979 = vsel %vm3975, %v3963, %v3978
        %v3980 = vsel %vm3974, %v3977, %v3979
        %v3981 = vsel %vm3973, %v3960, %v3963
        %v3982 = vsel %vm3976, %v3969, 920167782
        %v3983 = vsel %vm3975, %v3966, %v3982
        %v3984 = vsel %vm3974, %v3981, %v3983
        %v3985 = vsel %vm3973, %v3963, %v3966
        %v3986 = vsel %vm3976, %v3972, 1326507024
        %v3987 = vsel %vm3975, %v3969, %v3986
        %v3988 = vsel %vm3974, %v3985, %v3987
        %v3989 = vshll.u32 %v3949, 8
        %v3990 = vmul.u32.u64.compose %v3989, %v3988
        %v3991 = vextract.low.u32 %v3990
        %v3992 = vextract.high.u32 %v3990
        %v3993 = vmul.u32.u64.compose %v3989, %v3984
        %v3994 = vextract.low.u32 %v3993
        %v3995 = vextract.high.u32 %v3993
        %v3996 = vmul.u32 %v3989, %v3980
        %v3997 = vadd.s32 %v3992, %v3994
        %vm3998 = vc.u32 %v3992, %v3994
        %v3999 = vadd.s32 %v3995, 1
        %v4000 = vsel %vm3998, %v3999, %v3995
        %v4001 = vadd.s32 %v3996, %v4000
        %v4002 = vadd.s32 %v4001, 536870912
        %v4003 = vshrl.u32 %v4002, 30
        %v4004 = vshll.u32 %v4003, 30
        %v4005 = vsub.s32 %v4001, %v4004
        %vm4006 = vcmp.lt.s32.totalorder %v4005, 0
        %v4007 = vsub.s32 0, %v4005
        %v4008 = vsel %vm4006, %v4007, %v4005
        %v4009 = vclz %v4008
        %v4010 = vsub.s32 %v4009, 2
        %vm4011 = vcmp.gt.s32.totalorder 0, %v4010
        %v4012 = vsel %vm4011, 0, %v4010
        %v4013 = vsub.s32 32, %v4012
        %v4014 = vshll.u32 %v4005, %v4012
        %v4015 = vshrl.u32 %v3997, %v4013
        %v4016 = vor.u32 %v4014, %v4015
        %v4017 = vsub.s32 4294967266, %v4012
        %v4018 = vadd.s32 %v4017, 127
        %v4019 = vshll.u32 %v4018, 23
        %v4020 = vor.u32 4788187, %v4019
        %v4021 = vand.u32 2147483647, %v4020
        %v4023 = vcvt.s32.f32 %v4016
        %v4024 = vmul.f32 %v4023, %v4021
        %v4025 = vxor.u32 %v4024, 2147483648
        %v4026 = vsel %vm3943, %v4025, %v4024
        %v4027 = vsub.s32 4, %v4003
        %v4028 = vsel %vm3943, %v4027, %v4003
        %v4029 = vsel %vm3942, %v407, %v4026
        %v4030 = vsel %vm3942, 0, %v4028
        %v4031 = vcosq.f32.pop %v4029
        %v4032 = vsinq.f32.pop %v4029
        %vm4033 = vweird.f32 %v407
        %v4034 = vadd.s32 %v4030, 3
        %v4035 = vand.u32 %v4034, 3
        %vm4036 = vcmp.lt.s32.totalorder %v4035, 2
        %vm4037 = vcmp.eq.s32.totalorder %v4035, 0
        %v4038 = vxor.u32 %v4032, 2147483648
        %v4039 = vsel %vm4037, %v4031, %v4038
        %vm4040 = vcmp.eq.s32.totalorder %v4035, 2
        %v4041 = vxor.u32 %v4031, 2147483648
        %v4042 = vsel %vm4040, %v4041, %v4032
        %v4043 = vsel %vm4036, %v4039, %v4042
        %v4044 = vsel %vm4033, nan, %v4043
        %v4045 = vand.u32 2147483647, %v408
        %vm4046 = vcmp.le.f32.partialorder %v4045, 0.7853982
        %vm4047 = vcmp.lt.s32.totalorder %v408, 0
        %v4048 = vand.u32 %v408, 2139095040
        %v4049 = vshrl.u32 %v4048, 23
        %v4050 = vsub.s32 %v4049, 127
        %v4051 = vand.u32 2147483647, %v408
        %v4052 = vand.u32 %v4051, 8388607
        %v4053 = vor.u32 %v4052, 8388608
        %v4054 = vsub.s32 0, %v4053
        %v4055 = vadd.s32 %v4050, 1
        %vm4056 = vcmp.gt.s32.totalorder %v4055, 0
        %v4057 = vsel %vm4056, %v4055, 0
        %v4058 = vshrl.u32 %v4057, 5
        %v4059 = vand.u32 %v4057, 31
        %v4060 = vsub.s32 32, %v4059
        %v4061 = vshrl.u32 683565275, %v4060
        %v4062 = vshll.u32 683565275, %v4059
        %v4063 = vshrl.u32 2475754826, %v4060
        %v4064 = vor.u32 %v4062, %v4063
        %v4065 = vshll.u32 2475754826, %v4059
        %v4066 = vshrl.u32 2131351028, %v4060
        %v4067 = vor.u32 %v4065, %v4066
        %v4068 = vshll.u32 2131351028, %v4059
        %v4069 = vshrl.u32 2102212464, %v4060
        %v4070 = vor.u32 %v4068, %v4069
        %v4071 = vshll.u32 2102212464, %v4059
        %v4072 = vshrl.u32 920167782, %v4060
        %v4073 = vor.u32 %v4071, %v4072
        %v4074 = vshll.u32 920167782, %v4059
        %v4075 = vshrl.u32 1326507024, %v4060
        %v4076 = vor.u32 %v4074, %v4075
        %vm4077 = vcmp.lt.s32.totalorder %v4058, 1
        %vm4078 = vcmp.lt.s32.totalorder %v4058, 2
        %vm4079 = vcmp.lt.s32.totalorder %v4058, 3
        %vm4080 = vcmp.lt.s32.totalorder %v4058, 4
        %v4081 = vsel %vm4077, %v4061, %v4064
        %v4082 = vsel %vm4080, %v4070, 2102212464
        %v4083 = vsel %vm4079, %v4067, %v4082
        %v4084 = vsel %vm4078, %v4081, %v4083
        %v4085 = vsel %vm4077, %v4064, %v4067
        %v4086 = vsel %vm4080, %v4073, 920167782
        %v4087 = vsel %vm4079, %v4070, %v4086
        %v4088 = vsel %vm4078, %v4085, %v4087
        %v4089 = vsel %vm4077, %v4067, %v4070
        %v4090 = vsel %vm4080, %v4076, 1326507024
        %v4091 = vsel %vm4079, %v4073, %v4090
        %v4092 = vsel %vm4078, %v4089, %v4091
        %v4093 = vshll.u32 %v4053, 8
        %v4094 = vmul.u32.u64.compose %v4093, %v4092
        %v4095 = vextract.low.u32 %v4094
        %v4096 = vextract.high.u32 %v4094
        %v4097 = vmul.u32.u64.compose %v4093, %v4088
        %v4098 = vextract.low.u32 %v4097
        %v4099 = vextract.high.u32 %v4097
        %v4100 = vmul.u32 %v4093, %v4084
        %v4101 = vadd.s32 %v4096, %v4098
        %vm4102 = vc.u32 %v4096, %v4098
        %v4103 = vadd.s32 %v4099, 1
        %v4104 = vsel %vm4102, %v4103, %v4099
        %v4105 = vadd.s32 %v4100, %v4104
        %v4106 = vadd.s32 %v4105, 536870912
        %v4107 = vshrl.u32 %v4106, 30
        %v4108 = vshll.u32 %v4107, 30
        %v4109 = vsub.s32 %v4105, %v4108
        %vm4110 = vcmp.lt.s32.totalorder %v4109, 0
        %v4111 = vsub.s32 0, %v4109
        %v4112 = vsel %vm4110, %v4111, %v4109
        %v4113 = vclz %v4112
        %v4114 = vsub.s32 %v4113, 2
        %vm4115 = vcmp.gt.s32.totalorder 0, %v4114
        %v4116 = vsel %vm4115, 0, %v4114
        %v4117 = vsub.s32 32, %v4116
        %v4118 = vshll.u32 %v4109, %v4116
        %v4119 = vshrl.u32 %v4101, %v4117
        %v4120 = vor.u32 %v4118, %v4119
        %v4121 = vsub.s32 4294967266, %v4116
        %v4122 = vadd.s32 %v4121, 127
        %v4123 = vshll.u32 %v4122, 23
        %v4124 = vor.u32 4788187, %v4123
        %v4125 = vand.u32 2147483647, %v4124
        %v4127 = vcvt.s32.f32 %v4120
        %v4128 = vmul.f32 %v4127, %v4125
        %v4129 = vxor.u32 %v4128, 2147483648
        %v4130 = vsel %vm4047, %v4129, %v4128
        %v4131 = vsub.s32 4, %v4107
        %v4132 = vsel %vm4047, %v4131, %v4107
        %v4133 = vsel %vm4046, %v408, %v4130
        %v4134 = vsel %vm4046, 0, %v4132
        %v4135 = vcosq.f32.pop %v4133
        %v4136 = vsinq.f32.pop %v4133
        %vm4137 = vweird.f32 %v408
        %v4138 = vadd.s32 %v4134, 3
        %v4139 = vand.u32 %v4138, 3
        %vm4140 = vcmp.lt.s32.totalorder %v4139, 2
        %vm4141 = vcmp.eq.s32.totalorder %v4139, 0
        %v4142 = vxor.u32 %v4136, 2147483648
        %v4143 = vsel %vm4141, %v4135, %v4142
        %vm4144 = vcmp.eq.s32.totalorder %v4139, 2
        %v4145 = vxor.u32 %v4135, 2147483648
        %v4146 = vsel %vm4144, %v4145, %v4136
        %v4147 = vsel %vm4140, %v4143, %v4146
        %v4148 = vsel %vm4137, nan, %v4147
        %v4149 = vand.u32 2147483647, %v409
        %vm4150 = vcmp.le.f32.partialorder %v4149, 0.7853982
        %vm4151 = vcmp.lt.s32.totalorder %v409, 0
        %v4152 = vand.u32 %v409, 2139095040
        %v4153 = vshrl.u32 %v4152, 23
        %v4154 = vsub.s32 %v4153, 127
        %v4155 = vand.u32 2147483647, %v409
        %v4156 = vand.u32 %v4155, 8388607
        %v4157 = vor.u32 %v4156, 8388608
        %v4158 = vsub.s32 0, %v4157
        %v4159 = vadd.s32 %v4154, 1
        %vm4160 = vcmp.gt.s32.totalorder %v4159, 0
        %v4161 = vsel %vm4160, %v4159, 0
        %v4162 = vshrl.u32 %v4161, 5
        %v4163 = vand.u32 %v4161, 31
        %v4164 = vsub.s32 32, %v4163
        %v4165 = vshrl.u32 683565275, %v4164
        %v4166 = vshll.u32 683565275, %v4163
        %v4167 = vshrl.u32 2475754826, %v4164
        %v4168 = vor.u32 %v4166, %v4167
        %v4169 = vshll.u32 2475754826, %v4163
        %v4170 = vshrl.u32 2131351028, %v4164
        %v4171 = vor.u32 %v4169, %v4170
        %v4172 = vshll.u32 2131351028, %v4163
        %v4173 = vshrl.u32 2102212464, %v4164
        %v4174 = vor.u32 %v4172, %v4173
        %v4175 = vshll.u32 2102212464, %v4163
        %v4176 = vshrl.u32 920167782, %v4164
        %v4177 = vor.u32 %v4175, %v4176
        %v4178 = vshll.u32 920167782, %v4163
        %v4179 = vshrl.u32 1326507024, %v4164
        %v4180 = vor.u32 %v4178, %v4179
        %vm4181 = vcmp.lt.s32.totalorder %v4162, 1
        %vm4182 = vcmp.lt.s32.totalorder %v4162, 2
        %vm4183 = vcmp.lt.s32.totalorder %v4162, 3
        %vm4184 = vcmp.lt.s32.totalorder %v4162, 4
        %v4185 = vsel %vm4181, %v4165, %v4168
        %v4186 = vsel %vm4184, %v4174, 2102212464
        %v4187 = vsel %vm4183, %v4171, %v4186
        %v4188 = vsel %vm4182, %v4185, %v4187
        %v4189 = vsel %vm4181, %v4168, %v4171
        %v4190 = vsel %vm4184, %v4177, 920167782
        %v4191 = vsel %vm4183, %v4174, %v4190
        %v4192 = vsel %vm4182, %v4189, %v4191
        %v4193 = vsel %vm4181, %v4171, %v4174
        %v4194 = vsel %vm4184, %v4180, 1326507024
        %v4195 = vsel %vm4183, %v4177, %v4194
        %v4196 = vsel %vm4182, %v4193, %v4195
        %v4197 = vshll.u32 %v4157, 8
        %v4198 = vmul.u32.u64.compose %v4197, %v4196
        %v4199 = vextract.low.u32 %v4198
        %v4200 = vextract.high.u32 %v4198
        %v4201 = vmul.u32.u64.compose %v4197, %v4192
        %v4202 = vextract.low.u32 %v4201
        %v4203 = vextract.high.u32 %v4201
        %v4204 = vmul.u32 %v4197, %v4188
        %v4205 = vadd.s32 %v4200, %v4202
        %vm4206 = vc.u32 %v4200, %v4202
        %v4207 = vadd.s32 %v4203, 1
        %v4208 = vsel %vm4206, %v4207, %v4203
        %v4209 = vadd.s32 %v4204, %v4208
        %v4210 = vadd.s32 %v4209, 536870912
        %v4211 = vshrl.u32 %v4210, 30
        %v4212 = vshll.u32 %v4211, 30
        %v4213 = vsub.s32 %v4209, %v4212
        %vm4214 = vcmp.lt.s32.totalorder %v4213, 0
        %v4215 = vsub.s32 0, %v4213
        %v4216 = vsel %vm4214, %v4215, %v4213
        %v4217 = vclz %v4216
        %v4218 = vsub.s32 %v4217, 2
        %vm4219 = vcmp.gt.s32.totalorder 0, %v4218
        %v4220 = vsel %vm4219, 0, %v4218
        %v4221 = vsub.s32 32, %v4220
        %v4222 = vshll.u32 %v4213, %v4220
        %v4223 = vshrl.u32 %v4205, %v4221
        %v4224 = vor.u32 %v4222, %v4223
        %v4225 = vsub.s32 4294967266, %v4220
        %v4226 = vadd.s32 %v4225, 127
        %v4227 = vshll.u32 %v4226, 23
        %v4228 = vor.u32 4788187, %v4227
        %v4229 = vand.u32 2147483647, %v4228
        %v4231 = vcvt.s32.f32 %v4224
        %v4232 = vmul.f32 %v4231, %v4229
        %v4233 = vxor.u32 %v4232, 2147483648
        %v4234 = vsel %vm4151, %v4233, %v4232
        %v4235 = vsub.s32 4, %v4211
        %v4236 = vsel %vm4151, %v4235, %v4211
        %v4237 = vsel %vm4150, %v409, %v4234
        %v4238 = vsel %vm4150, 0, %v4236
        %v4239 = vcosq.f32.pop %v4237
        %v4240 = vsinq.f32.pop %v4237
        %vm4241 = vweird.f32 %v409
        %v4242 = vadd.s32 %v4238, 3
        %v4243 = vand.u32 %v4242, 3
        %vm4244 = vcmp.lt.s32.totalorder %v4243, 2
        %vm4245 = vcmp.eq.s32.totalorder %v4243, 0
        %v4246 = vxor.u32 %v4240, 2147483648
        %v4247 = vsel %vm4245, %v4239, %v4246
        %vm4248 = vcmp.eq.s32.totalorder %v4243, 2
        %v4249 = vxor.u32 %v4239, 2147483648
        %v4250 = vsel %vm4248, %v4249, %v4240
        %v4251 = vsel %vm4244, %v4247, %v4250
        %v4252 = vsel %vm4241, nan, %v4251
        %v4253 = vand.u32 2147483647, %v410
        %vm4254 = vcmp.le.f32.partialorder %v4253, 0.7853982
        %vm4255 = vcmp.lt.s32.totalorder %v410, 0
        %v4256 = vand.u32 %v410, 2139095040
        %v4257 = vshrl.u32 %v4256, 23
        %v4258 = vsub.s32 %v4257, 127
        %v4259 = vand.u32 2147483647, %v410
        %v4260 = vand.u32 %v4259, 8388607
        %v4261 = vor.u32 %v4260, 8388608
        %v4262 = vsub.s32 0, %v4261
        %v4263 = vadd.s32 %v4258, 1
        %vm4264 = vcmp.gt.s32.totalorder %v4263, 0
        %v4265 = vsel %vm4264, %v4263, 0
        %v4266 = vshrl.u32 %v4265, 5
        %v4267 = vand.u32 %v4265, 31
        %v4268 = vsub.s32 32, %v4267
        %v4269 = vshrl.u32 683565275, %v4268
        %v4270 = vshll.u32 683565275, %v4267
        %v4271 = vshrl.u32 2475754826, %v4268
        %v4272 = vor.u32 %v4270, %v4271
        %v4273 = vshll.u32 2475754826, %v4267
        %v4274 = vshrl.u32 2131351028, %v4268
        %v4275 = vor.u32 %v4273, %v4274
        %v4276 = vshll.u32 2131351028, %v4267
        %v4277 = vshrl.u32 2102212464, %v4268
        %v4278 = vor.u32 %v4276, %v4277
        %v4279 = vshll.u32 2102212464, %v4267
        %v4280 = vshrl.u32 920167782, %v4268
        %v4281 = vor.u32 %v4279, %v4280
        %v4282 = vshll.u32 920167782, %v4267
        %v4283 = vshrl.u32 1326507024, %v4268
        %v4284 = vor.u32 %v4282, %v4283
        %vm4285 = vcmp.lt.s32.totalorder %v4266, 1
        %vm4286 = vcmp.lt.s32.totalorder %v4266, 2
        %vm4287 = vcmp.lt.s32.totalorder %v4266, 3
        %vm4288 = vcmp.lt.s32.totalorder %v4266, 4
        %v4289 = vsel %vm4285, %v4269, %v4272
        %v4290 = vsel %vm4288, %v4278, 2102212464
        %v4291 = vsel %vm4287, %v4275, %v4290
        %v4292 = vsel %vm4286, %v4289, %v4291
        %v4293 = vsel %vm4285, %v4272, %v4275
        %v4294 = vsel %vm4288, %v4281, 920167782
        %v4295 = vsel %vm4287, %v4278, %v4294
        %v4296 = vsel %vm4286, %v4293, %v4295
        %v4297 = vsel %vm4285, %v4275, %v4278
        %v4298 = vsel %vm4288, %v4284, 1326507024
        %v4299 = vsel %vm4287, %v4281, %v4298
        %v4300 = vsel %vm4286, %v4297, %v4299
        %v4301 = vshll.u32 %v4261, 8
        %v4302 = vmul.u32.u64.compose %v4301, %v4300
        %v4303 = vextract.low.u32 %v4302
        %v4304 = vextract.high.u32 %v4302
        %v4305 = vmul.u32.u64.compose %v4301, %v4296
        %v4306 = vextract.low.u32 %v4305
        %v4307 = vextract.high.u32 %v4305
        %v4308 = vmul.u32 %v4301, %v4292
        %v4309 = vadd.s32 %v4304, %v4306
        %vm4310 = vc.u32 %v4304, %v4306
        %v4311 = vadd.s32 %v4307, 1
        %v4312 = vsel %vm4310, %v4311, %v4307
        %v4313 = vadd.s32 %v4308, %v4312
        %v4314 = vadd.s32 %v4313, 536870912
        %v4315 = vshrl.u32 %v4314, 30
        %v4316 = vshll.u32 %v4315, 30
        %v4317 = vsub.s32 %v4313, %v4316
        %vm4318 = vcmp.lt.s32.totalorder %v4317, 0
        %v4319 = vsub.s32 0, %v4317
        %v4320 = vsel %vm4318, %v4319, %v4317
        %v4321 = vclz %v4320
        %v4322 = vsub.s32 %v4321, 2
        %vm4323 = vcmp.gt.s32.totalorder 0, %v4322
        %v4324 = vsel %vm4323, 0, %v4322
        %v4325 = vsub.s32 32, %v4324
        %v4326 = vshll.u32 %v4317, %v4324
        %v4327 = vshrl.u32 %v4309, %v4325
        %v4328 = vor.u32 %v4326, %v4327
        %v4329 = vsub.s32 4294967266, %v4324
        %v4330 = vadd.s32 %v4329, 127
        %v4331 = vshll.u32 %v4330, 23
        %v4332 = vor.u32 4788187, %v4331
        %v4333 = vand.u32 2147483647, %v4332
        %v4335 = vcvt.s32.f32 %v4328
        %v4336 = vmul.f32 %v4335, %v4333
        %v4337 = vxor.u32 %v4336, 2147483648
        %v4338 = vsel %vm4255, %v4337, %v4336
        %v4339 = vsub.s32 4, %v4315
        %v4340 = vsel %vm4255, %v4339, %v4315
        %v4341 = vsel %vm4254, %v410, %v4338
        %v4342 = vsel %vm4254, 0, %v4340
        %v4343 = vcosq.f32.pop %v4341
        %v4344 = vsinq.f32.pop %v4341
        %vm4345 = vweird.f32 %v410
        %v4346 = vadd.s32 %v4342, 3
        %v4347 = vand.u32 %v4346, 3
        %vm4348 = vcmp.lt.s32.totalorder %v4347, 2
        %vm4349 = vcmp.eq.s32.totalorder %v4347, 0
        %v4350 = vxor.u32 %v4344, 2147483648
        %v4351 = vsel %vm4349, %v4343, %v4350
        %vm4352 = vcmp.eq.s32.totalorder %v4347, 2
        %v4353 = vxor.u32 %v4343, 2147483648
        %v4354 = vsel %vm4352, %v4353, %v4344
        %v4355 = vsel %vm4348, %v4351, %v4354
        %v4356 = vsel %vm4345, nan, %v4355
        %v4357 = vand.u32 2147483647, %v411
        %vm4358 = vcmp.le.f32.partialorder %v4357, 0.7853982
        %vm4359 = vcmp.lt.s32.totalorder %v411, 0
        %v4360 = vand.u32 %v411, 2139095040
        %v4361 = vshrl.u32 %v4360, 23
        %v4362 = vsub.s32 %v4361, 127
        %v4363 = vand.u32 2147483647, %v411
        %v4364 = vand.u32 %v4363, 8388607
        %v4365 = vor.u32 %v4364, 8388608
        %v4366 = vsub.s32 0, %v4365
        %v4367 = vadd.s32 %v4362, 1
        %vm4368 = vcmp.gt.s32.totalorder %v4367, 0
        %v4369 = vsel %vm4368, %v4367, 0
        %v4370 = vshrl.u32 %v4369, 5
        %v4371 = vand.u32 %v4369, 31
        %v4372 = vsub.s32 32, %v4371
        %v4373 = vshrl.u32 683565275, %v4372
        %v4374 = vshll.u32 683565275, %v4371
        %v4375 = vshrl.u32 2475754826, %v4372
        %v4376 = vor.u32 %v4374, %v4375
        %v4377 = vshll.u32 2475754826, %v4371
        %v4378 = vshrl.u32 2131351028, %v4372
        %v4379 = vor.u32 %v4377, %v4378
        %v4380 = vshll.u32 2131351028, %v4371
        %v4381 = vshrl.u32 2102212464, %v4372
        %v4382 = vor.u32 %v4380, %v4381
        %v4383 = vshll.u32 2102212464, %v4371
        %v4384 = vshrl.u32 920167782, %v4372
        %v4385 = vor.u32 %v4383, %v4384
        %v4386 = vshll.u32 920167782, %v4371
        %v4387 = vshrl.u32 1326507024, %v4372
        %v4388 = vor.u32 %v4386, %v4387
        %vm4389 = vcmp.lt.s32.totalorder %v4370, 1
        %vm4390 = vcmp.lt.s32.totalorder %v4370, 2
        %vm4391 = vcmp.lt.s32.totalorder %v4370, 3
        %vm4392 = vcmp.lt.s32.totalorder %v4370, 4
        %v4393 = vsel %vm4389, %v4373, %v4376
        %v4394 = vsel %vm4392, %v4382, 2102212464
        %v4395 = vsel %vm4391, %v4379, %v4394
        %v4396 = vsel %vm4390, %v4393, %v4395
        %v4397 = vsel %vm4389, %v4376, %v4379
        %v4398 = vsel %vm4392, %v4385, 920167782
        %v4399 = vsel %vm4391, %v4382, %v4398
        %v4400 = vsel %vm4390, %v4397, %v4399
        %v4401 = vsel %vm4389, %v4379, %v4382
        %v4402 = vsel %vm4392, %v4388, 1326507024
        %v4403 = vsel %vm4391, %v4385, %v4402
        %v4404 = vsel %vm4390, %v4401, %v4403
        %v4405 = vshll.u32 %v4365, 8
        %v4406 = vmul.u32.u64.compose %v4405, %v4404
        %v4407 = vextract.low.u32 %v4406
        %v4408 = vextract.high.u32 %v4406
        %v4409 = vmul.u32.u64.compose %v4405, %v4400
        %v4410 = vextract.low.u32 %v4409
        %v4411 = vextract.high.u32 %v4409
        %v4412 = vmul.u32 %v4405, %v4396
        %v4413 = vadd.s32 %v4408, %v4410
        %vm4414 = vc.u32 %v4408, %v4410
        %v4415 = vadd.s32 %v4411, 1
        %v4416 = vsel %vm4414, %v4415, %v4411
        %v4417 = vadd.s32 %v4412, %v4416
        %v4418 = vadd.s32 %v4417, 536870912
        %v4419 = vshrl.u32 %v4418, 30
        %v4420 = vshll.u32 %v4419, 30
        %v4421 = vsub.s32 %v4417, %v4420
        %vm4422 = vcmp.lt.s32.totalorder %v4421, 0
        %v4423 = vsub.s32 0, %v4421
        %v4424 = vsel %vm4422, %v4423, %v4421
        %v4425 = vclz %v4424
        %v4426 = vsub.s32 %v4425, 2
        %vm4427 = vcmp.gt.s32.totalorder 0, %v4426
        %v4428 = vsel %vm4427, 0, %v4426
        %v4429 = vsub.s32 32, %v4428
        %v4430 = vshll.u32 %v4421, %v4428
        %v4431 = vshrl.u32 %v4413, %v4429
        %v4432 = vor.u32 %v4430, %v4431
        %v4433 = vsub.s32 4294967266, %v4428
        %v4434 = vadd.s32 %v4433, 127
        %v4435 = vshll.u32 %v4434, 23
        %v4436 = vor.u32 4788187, %v4435
        %v4437 = vand.u32 2147483647, %v4436
        %v4439 = vcvt.s32.f32 %v4432
        %v4440 = vmul.f32 %v4439, %v4437
        %v4441 = vxor.u32 %v4440, 2147483648
        %v4442 = vsel %vm4359, %v4441, %v4440
        %v4443 = vsub.s32 4, %v4419
        %v4444 = vsel %vm4359, %v4443, %v4419
        %v4445 = vsel %vm4358, %v411, %v4442
        %v4446 = vsel %vm4358, 0, %v4444
        %v4447 = vcosq.f32.pop %v4445
        %v4448 = vsinq.f32.pop %v4445
        %vm4449 = vweird.f32 %v411
        %v4450 = vadd.s32 %v4446, 3
        %v4451 = vand.u32 %v4450, 3
        %vm4452 = vcmp.lt.s32.totalorder %v4451, 2
        %vm4453 = vcmp.eq.s32.totalorder %v4451, 0
        %v4454 = vxor.u32 %v4448, 2147483648
        %v4455 = vsel %vm4453, %v4447, %v4454
        %vm4456 = vcmp.eq.s32.totalorder %v4451, 2
        %v4457 = vxor.u32 %v4447, 2147483648
        %v4458 = vsel %vm4456, %v4457, %v4448
        %v4459 = vsel %vm4452, %v4455, %v4458
        %v4460 = vsel %vm4449, nan, %v4459
        %v4461 = vand.u32 2147483647, %v412
        %vm4462 = vcmp.le.f32.partialorder %v4461, 0.7853982
        %vm4463 = vcmp.lt.s32.totalorder %v412, 0
        %v4464 = vand.u32 %v412, 2139095040
        %v4465 = vshrl.u32 %v4464, 23
        %v4466 = vsub.s32 %v4465, 127
        %v4467 = vand.u32 2147483647, %v412
        %v4468 = vand.u32 %v4467, 8388607
        %v4469 = vor.u32 %v4468, 8388608
        %v4470 = vsub.s32 0, %v4469
        %v4471 = vadd.s32 %v4466, 1
        %vm4472 = vcmp.gt.s32.totalorder %v4471, 0
        %v4473 = vsel %vm4472, %v4471, 0
        %v4474 = vshrl.u32 %v4473, 5
        %v4475 = vand.u32 %v4473, 31
        %v4476 = vsub.s32 32, %v4475
        %v4477 = vshrl.u32 683565275, %v4476
        %v4478 = vshll.u32 683565275, %v4475
        %v4479 = vshrl.u32 2475754826, %v4476
        %v4480 = vor.u32 %v4478, %v4479
        %v4481 = vshll.u32 2475754826, %v4475
        %v4482 = vshrl.u32 2131351028, %v4476
        %v4483 = vor.u32 %v4481, %v4482
        %v4484 = vshll.u32 2131351028, %v4475
        %v4485 = vshrl.u32 2102212464, %v4476
        %v4486 = vor.u32 %v4484, %v4485
        %v4487 = vshll.u32 2102212464, %v4475
        %v4488 = vshrl.u32 920167782, %v4476
        %v4489 = vor.u32 %v4487, %v4488
        %v4490 = vshll.u32 920167782, %v4475
        %v4491 = vshrl.u32 1326507024, %v4476
        %v4492 = vor.u32 %v4490, %v4491
        %vm4493 = vcmp.lt.s32.totalorder %v4474, 1
        %vm4494 = vcmp.lt.s32.totalorder %v4474, 2
        %vm4495 = vcmp.lt.s32.totalorder %v4474, 3
        %vm4496 = vcmp.lt.s32.totalorder %v4474, 4
        %v4497 = vsel %vm4493, %v4477, %v4480
        %v4498 = vsel %vm4496, %v4486, 2102212464
        %v4499 = vsel %vm4495, %v4483, %v4498
        %v4500 = vsel %vm4494, %v4497, %v4499
        %v4501 = vsel %vm4493, %v4480, %v4483
        %v4502 = vsel %vm4496, %v4489, 920167782
        %v4503 = vsel %vm4495, %v4486, %v4502
        %v4504 = vsel %vm4494, %v4501, %v4503
        %v4505 = vsel %vm4493, %v4483, %v4486
        %v4506 = vsel %vm4496, %v4492, 1326507024
        %v4507 = vsel %vm4495, %v4489, %v4506
        %v4508 = vsel %vm4494, %v4505, %v4507
        %v4509 = vshll.u32 %v4469, 8
        %v4510 = vmul.u32.u64.compose %v4509, %v4508
        %v4511 = vextract.low.u32 %v4510
        %v4512 = vextract.high.u32 %v4510
        %v4513 = vmul.u32.u64.compose %v4509, %v4504
        %v4514 = vextract.low.u32 %v4513
        %v4515 = vextract.high.u32 %v4513
        %v4516 = vmul.u32 %v4509, %v4500
        %v4517 = vadd.s32 %v4512, %v4514
        %vm4518 = vc.u32 %v4512, %v4514
        %v4519 = vadd.s32 %v4515, 1
        %v4520 = vsel %vm4518, %v4519, %v4515
        %v4521 = vadd.s32 %v4516, %v4520
        %v4522 = vadd.s32 %v4521, 536870912
        %v4523 = vshrl.u32 %v4522, 30
        %v4524 = vshll.u32 %v4523, 30
        %v4525 = vsub.s32 %v4521, %v4524
        %vm4526 = vcmp.lt.s32.totalorder %v4525, 0
        %v4527 = vsub.s32 0, %v4525
        %v4528 = vsel %vm4526, %v4527, %v4525
        %v4529 = vclz %v4528
        %v4530 = vsub.s32 %v4529, 2
        %vm4531 = vcmp.gt.s32.totalorder 0, %v4530
        %v4532 = vsel %vm4531, 0, %v4530
        %v4533 = vsub.s32 32, %v4532
        %v4534 = vshll.u32 %v4525, %v4532
        %v4535 = vshrl.u32 %v4517, %v4533
        %v4536 = vor.u32 %v4534, %v4535
        %v4537 = vsub.s32 4294967266, %v4532
        %v4538 = vadd.s32 %v4537, 127
        %v4539 = vshll.u32 %v4538, 23
        %v4540 = vor.u32 4788187, %v4539
        %v4541 = vand.u32 2147483647, %v4540
        %v4543 = vcvt.s32.f32 %v4536
        %v4544 = vmul.f32 %v4543, %v4541
        %v4545 = vxor.u32 %v4544, 2147483648
        %v4546 = vsel %vm4463, %v4545, %v4544
        %v4547 = vsub.s32 4, %v4523
        %v4548 = vsel %vm4463, %v4547, %v4523
        %v4549 = vsel %vm4462, %v412, %v4546
        %v4550 = vsel %vm4462, 0, %v4548
        %v4551 = vcosq.f32.pop %v4549
        %v4552 = vsinq.f32.pop %v4549
        %vm4553 = vweird.f32 %v412
        %v4554 = vadd.s32 %v4550, 3
        %v4555 = vand.u32 %v4554, 3
        %vm4556 = vcmp.lt.s32.totalorder %v4555, 2
        %vm4557 = vcmp.eq.s32.totalorder %v4555, 0
        %v4558 = vxor.u32 %v4552, 2147483648
        %v4559 = vsel %vm4557, %v4551, %v4558
        %vm4560 = vcmp.eq.s32.totalorder %v4555, 2
        %v4561 = vxor.u32 %v4551, 2147483648
        %v4562 = vsel %vm4560, %v4561, %v4552
        %v4563 = vsel %vm4556, %v4559, %v4562
        %v4564 = vsel %vm4553, nan, %v4563
        %v4565 = vand.u32 2147483647, %v413
        %vm4566 = vcmp.le.f32.partialorder %v4565, 0.7853982
        %vm4567 = vcmp.lt.s32.totalorder %v413, 0
        %v4568 = vand.u32 %v413, 2139095040
        %v4569 = vshrl.u32 %v4568, 23
        %v4570 = vsub.s32 %v4569, 127
        %v4571 = vand.u32 2147483647, %v413
        %v4572 = vand.u32 %v4571, 8388607
        %v4573 = vor.u32 %v4572, 8388608
        %v4574 = vsub.s32 0, %v4573
        %v4575 = vadd.s32 %v4570, 1
        %vm4576 = vcmp.gt.s32.totalorder %v4575, 0
        %v4577 = vsel %vm4576, %v4575, 0
        %v4578 = vshrl.u32 %v4577, 5
        %v4579 = vand.u32 %v4577, 31
        %v4580 = vsub.s32 32, %v4579
        %v4581 = vshrl.u32 683565275, %v4580
        %v4582 = vshll.u32 683565275, %v4579
        %v4583 = vshrl.u32 2475754826, %v4580
        %v4584 = vor.u32 %v4582, %v4583
        %v4585 = vshll.u32 2475754826, %v4579
        %v4586 = vshrl.u32 2131351028, %v4580
        %v4587 = vor.u32 %v4585, %v4586
        %v4588 = vshll.u32 2131351028, %v4579
        %v4589 = vshrl.u32 2102212464, %v4580
        %v4590 = vor.u32 %v4588, %v4589
        %v4591 = vshll.u32 2102212464, %v4579
        %v4592 = vshrl.u32 920167782, %v4580
        %v4593 = vor.u32 %v4591, %v4592
        %v4594 = vshll.u32 920167782, %v4579
        %v4595 = vshrl.u32 1326507024, %v4580
        %v4596 = vor.u32 %v4594, %v4595
        %vm4597 = vcmp.lt.s32.totalorder %v4578, 1
        %vm4598 = vcmp.lt.s32.totalorder %v4578, 2
        %vm4599 = vcmp.lt.s32.totalorder %v4578, 3
        %vm4600 = vcmp.lt.s32.totalorder %v4578, 4
        %v4601 = vsel %vm4597, %v4581, %v4584
        %v4602 = vsel %vm4600, %v4590, 2102212464
        %v4603 = vsel %vm4599, %v4587, %v4602
        %v4604 = vsel %vm4598, %v4601, %v4603
        %v4605 = vsel %vm4597, %v4584, %v4587
        %v4606 = vsel %vm4600, %v4593, 920167782
        %v4607 = vsel %vm4599, %v4590, %v4606
        %v4608 = vsel %vm4598, %v4605, %v4607
        %v4609 = vsel %vm4597, %v4587, %v4590
        %v4610 = vsel %vm4600, %v4596, 1326507024
        %v4611 = vsel %vm4599, %v4593, %v4610
        %v4612 = vsel %vm4598, %v4609, %v4611
        %v4613 = vshll.u32 %v4573, 8
        %v4614 = vmul.u32.u64.compose %v4613, %v4612
        %v4615 = vextract.low.u32 %v4614
        %v4616 = vextract.high.u32 %v4614
        %v4617 = vmul.u32.u64.compose %v4613, %v4608
        %v4618 = vextract.low.u32 %v4617
        %v4619 = vextract.high.u32 %v4617
        %v4620 = vmul.u32 %v4613, %v4604
        %v4621 = vadd.s32 %v4616, %v4618
        %vm4622 = vc.u32 %v4616, %v4618
        %v4623 = vadd.s32 %v4619, 1
        %v4624 = vsel %vm4622, %v4623, %v4619
        %v4625 = vadd.s32 %v4620, %v4624
        %v4626 = vadd.s32 %v4625, 536870912
        %v4627 = vshrl.u32 %v4626, 30
        %v4628 = vshll.u32 %v4627, 30
        %v4629 = vsub.s32 %v4625, %v4628
        %vm4630 = vcmp.lt.s32.totalorder %v4629, 0
        %v4631 = vsub.s32 0, %v4629
        %v4632 = vsel %vm4630, %v4631, %v4629
        %v4633 = vclz %v4632
        %v4634 = vsub.s32 %v4633, 2
        %vm4635 = vcmp.gt.s32.totalorder 0, %v4634
        %v4636 = vsel %vm4635, 0, %v4634
        %v4637 = vsub.s32 32, %v4636
        %v4638 = vshll.u32 %v4629, %v4636
        %v4639 = vshrl.u32 %v4621, %v4637
        %v4640 = vor.u32 %v4638, %v4639
        %v4641 = vsub.s32 4294967266, %v4636
        %v4642 = vadd.s32 %v4641, 127
        %v4643 = vshll.u32 %v4642, 23
        %v4644 = vor.u32 4788187, %v4643
        %v4645 = vand.u32 2147483647, %v4644
        %v4647 = vcvt.s32.f32 %v4640
        %v4648 = vmul.f32 %v4647, %v4645
        %v4649 = vxor.u32 %v4648, 2147483648
        %v4650 = vsel %vm4567, %v4649, %v4648
        %v4651 = vsub.s32 4, %v4627
        %v4652 = vsel %vm4567, %v4651, %v4627
        %v4653 = vsel %vm4566, %v413, %v4650
        %v4654 = vsel %vm4566, 0, %v4652
        %v4655 = vcosq.f32.pop %v4653
        %v4656 = vsinq.f32.pop %v4653
        %vm4657 = vweird.f32 %v413
        %v4658 = vadd.s32 %v4654, 3
        %v4659 = vand.u32 %v4658, 3
        %vm4660 = vcmp.lt.s32.totalorder %v4659, 2
        %vm4661 = vcmp.eq.s32.totalorder %v4659, 0
        %v4662 = vxor.u32 %v4656, 2147483648
        %v4663 = vsel %vm4661, %v4655, %v4662
        %vm4664 = vcmp.eq.s32.totalorder %v4659, 2
        %v4665 = vxor.u32 %v4655, 2147483648
        %v4666 = vsel %vm4664, %v4665, %v4656
        %v4667 = vsel %vm4660, %v4663, %v4666
        %v4668 = vsel %vm4657, nan, %v4667
        %v4669 = vand.u32 2147483647, %v414
        %vm4670 = vcmp.le.f32.partialorder %v4669, 0.7853982
        %vm4671 = vcmp.lt.s32.totalorder %v414, 0
        %v4672 = vand.u32 %v414, 2139095040
        %v4673 = vshrl.u32 %v4672, 23
        %v4674 = vsub.s32 %v4673, 127
        %v4675 = vand.u32 2147483647, %v414
        %v4676 = vand.u32 %v4675, 8388607
        %v4677 = vor.u32 %v4676, 8388608
        %v4678 = vsub.s32 0, %v4677
        %v4679 = vadd.s32 %v4674, 1
        %vm4680 = vcmp.gt.s32.totalorder %v4679, 0
        %v4681 = vsel %vm4680, %v4679, 0
        %v4682 = vshrl.u32 %v4681, 5
        %v4683 = vand.u32 %v4681, 31
        %v4684 = vsub.s32 32, %v4683
        %v4685 = vshrl.u32 683565275, %v4684
        %v4686 = vshll.u32 683565275, %v4683
        %v4687 = vshrl.u32 2475754826, %v4684
        %v4688 = vor.u32 %v4686, %v4687
        %v4689 = vshll.u32 2475754826, %v4683
        %v4690 = vshrl.u32 2131351028, %v4684
        %v4691 = vor.u32 %v4689, %v4690
        %v4692 = vshll.u32 2131351028, %v4683
        %v4693 = vshrl.u32 2102212464, %v4684
        %v4694 = vor.u32 %v4692, %v4693
        %v4695 = vshll.u32 2102212464, %v4683
        %v4696 = vshrl.u32 920167782, %v4684
        %v4697 = vor.u32 %v4695, %v4696
        %v4698 = vshll.u32 920167782, %v4683
        %v4699 = vshrl.u32 1326507024, %v4684
        %v4700 = vor.u32 %v4698, %v4699
        %vm4701 = vcmp.lt.s32.totalorder %v4682, 1
        %vm4702 = vcmp.lt.s32.totalorder %v4682, 2
        %vm4703 = vcmp.lt.s32.totalorder %v4682, 3
        %vm4704 = vcmp.lt.s32.totalorder %v4682, 4
        %v4705 = vsel %vm4701, %v4685, %v4688
        %v4706 = vsel %vm4704, %v4694, 2102212464
        %v4707 = vsel %vm4703, %v4691, %v4706
        %v4708 = vsel %vm4702, %v4705, %v4707
        %v4709 = vsel %vm4701, %v4688, %v4691
        %v4710 = vsel %vm4704, %v4697, 920167782
        %v4711 = vsel %vm4703, %v4694, %v4710
        %v4712 = vsel %vm4702, %v4709, %v4711
        %v4713 = vsel %vm4701, %v4691, %v4694
        %v4714 = vsel %vm4704, %v4700, 1326507024
        %v4715 = vsel %vm4703, %v4697, %v4714
        %v4716 = vsel %vm4702, %v4713, %v4715
        %v4717 = vshll.u32 %v4677, 8
        %v4718 = vmul.u32.u64.compose %v4717, %v4716
        %v4719 = vextract.low.u32 %v4718
        %v4720 = vextract.high.u32 %v4718
        %v4721 = vmul.u32.u64.compose %v4717, %v4712
        %v4722 = vextract.low.u32 %v4721
        %v4723 = vextract.high.u32 %v4721
        %v4724 = vmul.u32 %v4717, %v4708
        %v4725 = vadd.s32 %v4720, %v4722
        %vm4726 = vc.u32 %v4720, %v4722
        %v4727 = vadd.s32 %v4723, 1
        %v4728 = vsel %vm4726, %v4727, %v4723
        %v4729 = vadd.s32 %v4724, %v4728
        %v4730 = vadd.s32 %v4729, 536870912
        %v4731 = vshrl.u32 %v4730, 30
        %v4732 = vshll.u32 %v4731, 30
        %v4733 = vsub.s32 %v4729, %v4732
        %vm4734 = vcmp.lt.s32.totalorder %v4733, 0
        %v4735 = vsub.s32 0, %v4733
        %v4736 = vsel %vm4734, %v4735, %v4733
        %v4737 = vclz %v4736
        %v4738 = vsub.s32 %v4737, 2
        %vm4739 = vcmp.gt.s32.totalorder 0, %v4738
        %v4740 = vsel %vm4739, 0, %v4738
        %v4741 = vsub.s32 32, %v4740
        %v4742 = vshll.u32 %v4733, %v4740
        %v4743 = vshrl.u32 %v4725, %v4741
        %v4744 = vor.u32 %v4742, %v4743
        %v4745 = vsub.s32 4294967266, %v4740
        %v4746 = vadd.s32 %v4745, 127
        %v4747 = vshll.u32 %v4746, 23
        %v4748 = vor.u32 4788187, %v4747
        %v4749 = vand.u32 2147483647, %v4748
        %v4751 = vcvt.s32.f32 %v4744
        %v4752 = vmul.f32 %v4751, %v4749
        %v4753 = vxor.u32 %v4752, 2147483648
        %v4754 = vsel %vm4671, %v4753, %v4752
        %v4755 = vsub.s32 4, %v4731
        %v4756 = vsel %vm4671, %v4755, %v4731
        %v4757 = vsel %vm4670, %v414, %v4754
        %v4758 = vsel %vm4670, 0, %v4756
        %v4759 = vcosq.f32.pop %v4757
        %v4760 = vsinq.f32.pop %v4757
        %vm4761 = vweird.f32 %v414
        %v4762 = vadd.s32 %v4758, 3
        %v4763 = vand.u32 %v4762, 3
        %vm4764 = vcmp.lt.s32.totalorder %v4763, 2
        %vm4765 = vcmp.eq.s32.totalorder %v4763, 0
        %v4766 = vxor.u32 %v4760, 2147483648
        %v4767 = vsel %vm4765, %v4759, %v4766
        %vm4768 = vcmp.eq.s32.totalorder %v4763, 2
        %v4769 = vxor.u32 %v4759, 2147483648
        %v4770 = vsel %vm4768, %v4769, %v4760
        %v4771 = vsel %vm4764, %v4767, %v4770
        %v4772 = vsel %vm4761, nan, %v4771
        %v4773 = vand.u32 2147483647, %v415
        %vm4774 = vcmp.le.f32.partialorder %v4773, 0.7853982
        %vm4775 = vcmp.lt.s32.totalorder %v415, 0
        %v4776 = vand.u32 %v415, 2139095040
        %v4777 = vshrl.u32 %v4776, 23
        %v4778 = vsub.s32 %v4777, 127
        %v4779 = vand.u32 2147483647, %v415
        %v4780 = vand.u32 %v4779, 8388607
        %v4781 = vor.u32 %v4780, 8388608
        %v4782 = vsub.s32 0, %v4781
        %v4783 = vadd.s32 %v4778, 1
        %vm4784 = vcmp.gt.s32.totalorder %v4783, 0
        %v4785 = vsel %vm4784, %v4783, 0
        %v4786 = vshrl.u32 %v4785, 5
        %v4787 = vand.u32 %v4785, 31
        %v4788 = vsub.s32 32, %v4787
        %v4789 = vshrl.u32 683565275, %v4788
        %v4790 = vshll.u32 683565275, %v4787
        %v4791 = vshrl.u32 2475754826, %v4788
        %v4792 = vor.u32 %v4790, %v4791
        %v4793 = vshll.u32 2475754826, %v4787
        %v4794 = vshrl.u32 2131351028, %v4788
        %v4795 = vor.u32 %v4793, %v4794
        %v4796 = vshll.u32 2131351028, %v4787
        %v4797 = vshrl.u32 2102212464, %v4788
        %v4798 = vor.u32 %v4796, %v4797
        %v4799 = vshll.u32 2102212464, %v4787
        %v4800 = vshrl.u32 920167782, %v4788
        %v4801 = vor.u32 %v4799, %v4800
        %v4802 = vshll.u32 920167782, %v4787
        %v4803 = vshrl.u32 1326507024, %v4788
        %v4804 = vor.u32 %v4802, %v4803
        %vm4805 = vcmp.lt.s32.totalorder %v4786, 1
        %vm4806 = vcmp.lt.s32.totalorder %v4786, 2
        %vm4807 = vcmp.lt.s32.totalorder %v4786, 3
        %vm4808 = vcmp.lt.s32.totalorder %v4786, 4
        %v4809 = vsel %vm4805, %v4789, %v4792
        %v4810 = vsel %vm4808, %v4798, 2102212464
        %v4811 = vsel %vm4807, %v4795, %v4810
        %v4812 = vsel %vm4806, %v4809, %v4811
        %v4813 = vsel %vm4805, %v4792, %v4795
        %v4814 = vsel %vm4808, %v4801, 920167782
        %v4815 = vsel %vm4807, %v4798, %v4814
        %v4816 = vsel %vm4806, %v4813, %v4815
        %v4817 = vsel %vm4805, %v4795, %v4798
        %v4818 = vsel %vm4808, %v4804, 1326507024
        %v4819 = vsel %vm4807, %v4801, %v4818
        %v4820 = vsel %vm4806, %v4817, %v4819
        %v4821 = vshll.u32 %v4781, 8
        %v4822 = vmul.u32.u64.compose %v4821, %v4820
        %v4823 = vextract.low.u32 %v4822
        %v4824 = vextract.high.u32 %v4822
        %v4825 = vmul.u32.u64.compose %v4821, %v4816
        %v4826 = vextract.low.u32 %v4825
        %v4827 = vextract.high.u32 %v4825
        %v4828 = vmul.u32 %v4821, %v4812
        %v4829 = vadd.s32 %v4824, %v4826
        %vm4830 = vc.u32 %v4824, %v4826
        %v4831 = vadd.s32 %v4827, 1
        %v4832 = vsel %vm4830, %v4831, %v4827
        %v4833 = vadd.s32 %v4828, %v4832
        %v4834 = vadd.s32 %v4833, 536870912
        %v4835 = vshrl.u32 %v4834, 30
        %v4836 = vshll.u32 %v4835, 30
        %v4837 = vsub.s32 %v4833, %v4836
        %vm4838 = vcmp.lt.s32.totalorder %v4837, 0
        %v4839 = vsub.s32 0, %v4837
        %v4840 = vsel %vm4838, %v4839, %v4837
        %v4841 = vclz %v4840
        %v4842 = vsub.s32 %v4841, 2
        %vm4843 = vcmp.gt.s32.totalorder 0, %v4842
        %v4844 = vsel %vm4843, 0, %v4842
        %v4845 = vsub.s32 32, %v4844
        %v4846 = vshll.u32 %v4837, %v4844
        %v4847 = vshrl.u32 %v4829, %v4845
        %v4848 = vor.u32 %v4846, %v4847
        %v4849 = vsub.s32 4294967266, %v4844
        %v4850 = vadd.s32 %v4849, 127
        %v4851 = vshll.u32 %v4850, 23
        %v4852 = vor.u32 4788187, %v4851
        %v4853 = vand.u32 2147483647, %v4852
        %v4855 = vcvt.s32.f32 %v4848
        %v4856 = vmul.f32 %v4855, %v4853
        %v4857 = vxor.u32 %v4856, 2147483648
        %v4858 = vsel %vm4775, %v4857, %v4856
        %v4859 = vsub.s32 4, %v4835
        %v4860 = vsel %vm4775, %v4859, %v4835
        %v4861 = vsel %vm4774, %v415, %v4858
        %v4862 = vsel %vm4774, 0, %v4860
        %v4863 = vcosq.f32.pop %v4861
        %v4864 = vsinq.f32.pop %v4861
        %vm4865 = vweird.f32 %v415
        %v4866 = vadd.s32 %v4862, 3
        %v4867 = vand.u32 %v4866, 3
        %vm4868 = vcmp.lt.s32.totalorder %v4867, 2
        %vm4869 = vcmp.eq.s32.totalorder %v4867, 0
        %v4870 = vxor.u32 %v4864, 2147483648
        %v4871 = vsel %vm4869, %v4863, %v4870
        %vm4872 = vcmp.eq.s32.totalorder %v4867, 2
        %v4873 = vxor.u32 %v4863, 2147483648
        %v4874 = vsel %vm4872, %v4873, %v4864
        %v4875 = vsel %vm4868, %v4871, %v4874
        %v4876 = vsel %vm4865, nan, %v4875
        %v4877 = vand.u32 2147483647, %v416
        %vm4878 = vcmp.le.f32.partialorder %v4877, 0.7853982
        %vm4879 = vcmp.lt.s32.totalorder %v416, 0
        %v4880 = vand.u32 %v416, 2139095040
        %v4881 = vshrl.u32 %v4880, 23
        %v4882 = vsub.s32 %v4881, 127
        %v4883 = vand.u32 2147483647, %v416
        %v4884 = vand.u32 %v4883, 8388607
        %v4885 = vor.u32 %v4884, 8388608
        %v4886 = vsub.s32 0, %v4885
        %v4887 = vadd.s32 %v4882, 1
        %vm4888 = vcmp.gt.s32.totalorder %v4887, 0
        %v4889 = vsel %vm4888, %v4887, 0
        %v4890 = vshrl.u32 %v4889, 5
        %v4891 = vand.u32 %v4889, 31
        %v4892 = vsub.s32 32, %v4891
        %v4893 = vshrl.u32 683565275, %v4892
        %v4894 = vshll.u32 683565275, %v4891
        %v4895 = vshrl.u32 2475754826, %v4892
        %v4896 = vor.u32 %v4894, %v4895
        %v4897 = vshll.u32 2475754826, %v4891
        %v4898 = vshrl.u32 2131351028, %v4892
        %v4899 = vor.u32 %v4897, %v4898
        %v4900 = vshll.u32 2131351028, %v4891
        %v4901 = vshrl.u32 2102212464, %v4892
        %v4902 = vor.u32 %v4900, %v4901
        %v4903 = vshll.u32 2102212464, %v4891
        %v4904 = vshrl.u32 920167782, %v4892
        %v4905 = vor.u32 %v4903, %v4904
        %v4906 = vshll.u32 920167782, %v4891
        %v4907 = vshrl.u32 1326507024, %v4892
        %v4908 = vor.u32 %v4906, %v4907
        %vm4909 = vcmp.lt.s32.totalorder %v4890, 1
        %vm4910 = vcmp.lt.s32.totalorder %v4890, 2
        %vm4911 = vcmp.lt.s32.totalorder %v4890, 3
        %vm4912 = vcmp.lt.s32.totalorder %v4890, 4
        %v4913 = vsel %vm4909, %v4893, %v4896
        %v4914 = vsel %vm4912, %v4902, 2102212464
        %v4915 = vsel %vm4911, %v4899, %v4914
        %v4916 = vsel %vm4910, %v4913, %v4915
        %v4917 = vsel %vm4909, %v4896, %v4899
        %v4918 = vsel %vm4912, %v4905, 920167782
        %v4919 = vsel %vm4911, %v4902, %v4918
        %v4920 = vsel %vm4910, %v4917, %v4919
        %v4921 = vsel %vm4909, %v4899, %v4902
        %v4922 = vsel %vm4912, %v4908, 1326507024
        %v4923 = vsel %vm4911, %v4905, %v4922
        %v4924 = vsel %vm4910, %v4921, %v4923
        %v4925 = vshll.u32 %v4885, 8
        %v4926 = vmul.u32.u64.compose %v4925, %v4924
        %v4927 = vextract.low.u32 %v4926
        %v4928 = vextract.high.u32 %v4926
        %v4929 = vmul.u32.u64.compose %v4925, %v4920
        %v4930 = vextract.low.u32 %v4929
        %v4931 = vextract.high.u32 %v4929
        %v4932 = vmul.u32 %v4925, %v4916
        %v4933 = vadd.s32 %v4928, %v4930
        %vm4934 = vc.u32 %v4928, %v4930
        %v4935 = vadd.s32 %v4931, 1
        %v4936 = vsel %vm4934, %v4935, %v4931
        %v4937 = vadd.s32 %v4932, %v4936
        %v4938 = vadd.s32 %v4937, 536870912
        %v4939 = vshrl.u32 %v4938, 30
        %v4940 = vshll.u32 %v4939, 30
        %v4941 = vsub.s32 %v4937, %v4940
        %vm4942 = vcmp.lt.s32.totalorder %v4941, 0
        %v4943 = vsub.s32 0, %v4941
        %v4944 = vsel %vm4942, %v4943, %v4941
        %v4945 = vclz %v4944
        %v4946 = vsub.s32 %v4945, 2
        %vm4947 = vcmp.gt.s32.totalorder 0, %v4946
        %v4948 = vsel %vm4947, 0, %v4946
        %v4949 = vsub.s32 32, %v4948
        %v4950 = vshll.u32 %v4941, %v4948
        %v4951 = vshrl.u32 %v4933, %v4949
        %v4952 = vor.u32 %v4950, %v4951
        %v4953 = vsub.s32 4294967266, %v4948
        %v4954 = vadd.s32 %v4953, 127
        %v4955 = vshll.u32 %v4954, 23
        %v4956 = vor.u32 4788187, %v4955
        %v4957 = vand.u32 2147483647, %v4956
        %v4959 = vcvt.s32.f32 %v4952
        %v4960 = vmul.f32 %v4959, %v4957
        %v4961 = vxor.u32 %v4960, 2147483648
        %v4962 = vsel %vm4879, %v4961, %v4960
        %v4963 = vsub.s32 4, %v4939
        %v4964 = vsel %vm4879, %v4963, %v4939
        %v4965 = vsel %vm4878, %v416, %v4962
        %v4966 = vsel %vm4878, 0, %v4964
        %v4967 = vcosq.f32.pop %v4965
        %v4968 = vsinq.f32.pop %v4965
        %vm4969 = vweird.f32 %v416
        %v4970 = vadd.s32 %v4966, 3
        %v4971 = vand.u32 %v4970, 3
        %vm4972 = vcmp.lt.s32.totalorder %v4971, 2
        %vm4973 = vcmp.eq.s32.totalorder %v4971, 0
        %v4974 = vxor.u32 %v4968, 2147483648
        %v4975 = vsel %vm4973, %v4967, %v4974
        %vm4976 = vcmp.eq.s32.totalorder %v4971, 2
        %v4977 = vxor.u32 %v4967, 2147483648
        %v4978 = vsel %vm4976, %v4977, %v4968
        %v4979 = vsel %vm4972, %v4975, %v4978
        %v4980 = vsel %vm4969, nan, %v4979
        %v4981 = vand.u32 2147483647, %v417
        %vm4982 = vcmp.le.f32.partialorder %v4981, 0.7853982
        %vm4983 = vcmp.lt.s32.totalorder %v417, 0
        %v4984 = vand.u32 %v417, 2139095040
        %v4985 = vshrl.u32 %v4984, 23
        %v4986 = vsub.s32 %v4985, 127
        %v4987 = vand.u32 2147483647, %v417
        %v4988 = vand.u32 %v4987, 8388607
        %v4989 = vor.u32 %v4988, 8388608
        %v4990 = vsub.s32 0, %v4989
        %v4991 = vadd.s32 %v4986, 1
        %vm4992 = vcmp.gt.s32.totalorder %v4991, 0
        %v4993 = vsel %vm4992, %v4991, 0
        %v4994 = vshrl.u32 %v4993, 5
        %v4995 = vand.u32 %v4993, 31
        %v4996 = vsub.s32 32, %v4995
        %v4997 = vshrl.u32 683565275, %v4996
        %v4998 = vshll.u32 683565275, %v4995
        %v4999 = vshrl.u32 2475754826, %v4996
        %v5000 = vor.u32 %v4998, %v4999
        %v5001 = vshll.u32 2475754826, %v4995
        %v5002 = vshrl.u32 2131351028, %v4996
        %v5003 = vor.u32 %v5001, %v5002
        %v5004 = vshll.u32 2131351028, %v4995
        %v5005 = vshrl.u32 2102212464, %v4996
        %v5006 = vor.u32 %v5004, %v5005
        %v5007 = vshll.u32 2102212464, %v4995
        %v5008 = vshrl.u32 920167782, %v4996
        %v5009 = vor.u32 %v5007, %v5008
        %v5010 = vshll.u32 920167782, %v4995
        %v5011 = vshrl.u32 1326507024, %v4996
        %v5012 = vor.u32 %v5010, %v5011
        %vm5013 = vcmp.lt.s32.totalorder %v4994, 1
        %vm5014 = vcmp.lt.s32.totalorder %v4994, 2
        %vm5015 = vcmp.lt.s32.totalorder %v4994, 3
        %vm5016 = vcmp.lt.s32.totalorder %v4994, 4
        %v5017 = vsel %vm5013, %v4997, %v5000
        %v5018 = vsel %vm5016, %v5006, 2102212464
        %v5019 = vsel %vm5015, %v5003, %v5018
        %v5020 = vsel %vm5014, %v5017, %v5019
        %v5021 = vsel %vm5013, %v5000, %v5003
        %v5022 = vsel %vm5016, %v5009, 920167782
        %v5023 = vsel %vm5015, %v5006, %v5022
        %v5024 = vsel %vm5014, %v5021, %v5023
        %v5025 = vsel %vm5013, %v5003, %v5006
        %v5026 = vsel %vm5016, %v5012, 1326507024
        %v5027 = vsel %vm5015, %v5009, %v5026
        %v5028 = vsel %vm5014, %v5025, %v5027
        %v5029 = vshll.u32 %v4989, 8
        %v5030 = vmul.u32.u64.compose %v5029, %v5028
        %v5031 = vextract.low.u32 %v5030
        %v5032 = vextract.high.u32 %v5030
        %v5033 = vmul.u32.u64.compose %v5029, %v5024
        %v5034 = vextract.low.u32 %v5033
        %v5035 = vextract.high.u32 %v5033
        %v5036 = vmul.u32 %v5029, %v5020
        %v5037 = vadd.s32 %v5032, %v5034
        %vm5038 = vc.u32 %v5032, %v5034
        %v5039 = vadd.s32 %v5035, 1
        %v5040 = vsel %vm5038, %v5039, %v5035
        %v5041 = vadd.s32 %v5036, %v5040
        %v5042 = vadd.s32 %v5041, 536870912
        %v5043 = vshrl.u32 %v5042, 30
        %v5044 = vshll.u32 %v5043, 30
        %v5045 = vsub.s32 %v5041, %v5044
        %vm5046 = vcmp.lt.s32.totalorder %v5045, 0
        %v5047 = vsub.s32 0, %v5045
        %v5048 = vsel %vm5046, %v5047, %v5045
        %v5049 = vclz %v5048
        %v5050 = vsub.s32 %v5049, 2
        %vm5051 = vcmp.gt.s32.totalorder 0, %v5050
        %v5052 = vsel %vm5051, 0, %v5050
        %v5053 = vsub.s32 32, %v5052
        %v5054 = vshll.u32 %v5045, %v5052
        %v5055 = vshrl.u32 %v5037, %v5053
        %v5056 = vor.u32 %v5054, %v5055
        %v5057 = vsub.s32 4294967266, %v5052
        %v5058 = vadd.s32 %v5057, 127
        %v5059 = vshll.u32 %v5058, 23
        %v5060 = vor.u32 4788187, %v5059
        %v5061 = vand.u32 2147483647, %v5060
        %v5063 = vcvt.s32.f32 %v5056
        %v5064 = vmul.f32 %v5063, %v5061
        %v5065 = vxor.u32 %v5064, 2147483648
        %v5066 = vsel %vm4983, %v5065, %v5064
        %v5067 = vsub.s32 4, %v5043
        %v5068 = vsel %vm4983, %v5067, %v5043
        %v5069 = vsel %vm4982, %v417, %v5066
        %v5070 = vsel %vm4982, 0, %v5068
        %v5071 = vcosq.f32.pop %v5069
        %v5072 = vsinq.f32.pop %v5069
        %vm5073 = vweird.f32 %v417
        %v5074 = vadd.s32 %v5070, 3
        %v5075 = vand.u32 %v5074, 3
        %vm5076 = vcmp.lt.s32.totalorder %v5075, 2
        %vm5077 = vcmp.eq.s32.totalorder %v5075, 0
        %v5078 = vxor.u32 %v5072, 2147483648
        %v5079 = vsel %vm5077, %v5071, %v5078
        %vm5080 = vcmp.eq.s32.totalorder %v5075, 2
        %v5081 = vxor.u32 %v5071, 2147483648
        %v5082 = vsel %vm5080, %v5081, %v5072
        %v5083 = vsel %vm5076, %v5079, %v5082
        %v5084 = vsel %vm5073, nan, %v5083
        %v5085 = vand.u32 2147483647, %v418
        %vm5086 = vcmp.le.f32.partialorder %v5085, 0.7853982
        %vm5087 = vcmp.lt.s32.totalorder %v418, 0
        %v5088 = vand.u32 %v418, 2139095040
        %v5089 = vshrl.u32 %v5088, 23
        %v5090 = vsub.s32 %v5089, 127
        %v5091 = vand.u32 2147483647, %v418
        %v5092 = vand.u32 %v5091, 8388607
        %v5093 = vor.u32 %v5092, 8388608
        %v5094 = vsub.s32 0, %v5093
        %v5095 = vadd.s32 %v5090, 1
        %vm5096 = vcmp.gt.s32.totalorder %v5095, 0
        %v5097 = vsel %vm5096, %v5095, 0
        %v5098 = vshrl.u32 %v5097, 5
        %v5099 = vand.u32 %v5097, 31
        %v5100 = vsub.s32 32, %v5099
        %v5101 = vshrl.u32 683565275, %v5100
        %v5102 = vshll.u32 683565275, %v5099
        %v5103 = vshrl.u32 2475754826, %v5100
        %v5104 = vor.u32 %v5102, %v5103
        %v5105 = vshll.u32 2475754826, %v5099
        %v5106 = vshrl.u32 2131351028, %v5100
        %v5107 = vor.u32 %v5105, %v5106
        %v5108 = vshll.u32 2131351028, %v5099
        %v5109 = vshrl.u32 2102212464, %v5100
        %v5110 = vor.u32 %v5108, %v5109
        %v5111 = vshll.u32 2102212464, %v5099
        %v5112 = vshrl.u32 920167782, %v5100
        %v5113 = vor.u32 %v5111, %v5112
        %v5114 = vshll.u32 920167782, %v5099
        %v5115 = vshrl.u32 1326507024, %v5100
        %v5116 = vor.u32 %v5114, %v5115
        %vm5117 = vcmp.lt.s32.totalorder %v5098, 1
        %vm5118 = vcmp.lt.s32.totalorder %v5098, 2
        %vm5119 = vcmp.lt.s32.totalorder %v5098, 3
        %vm5120 = vcmp.lt.s32.totalorder %v5098, 4
        %v5121 = vsel %vm5117, %v5101, %v5104
        %v5122 = vsel %vm5120, %v5110, 2102212464
        %v5123 = vsel %vm5119, %v5107, %v5122
        %v5124 = vsel %vm5118, %v5121, %v5123
        %v5125 = vsel %vm5117, %v5104, %v5107
        %v5126 = vsel %vm5120, %v5113, 920167782
        %v5127 = vsel %vm5119, %v5110, %v5126
        %v5128 = vsel %vm5118, %v5125, %v5127
        %v5129 = vsel %vm5117, %v5107, %v5110
        %v5130 = vsel %vm5120, %v5116, 1326507024
        %v5131 = vsel %vm5119, %v5113, %v5130
        %v5132 = vsel %vm5118, %v5129, %v5131
        %v5133 = vshll.u32 %v5093, 8
        %v5134 = vmul.u32.u64.compose %v5133, %v5132
        %v5135 = vextract.low.u32 %v5134
        %v5136 = vextract.high.u32 %v5134
        %v5137 = vmul.u32.u64.compose %v5133, %v5128
        %v5138 = vextract.low.u32 %v5137
        %v5139 = vextract.high.u32 %v5137
        %v5140 = vmul.u32 %v5133, %v5124
        %v5141 = vadd.s32 %v5136, %v5138
        %vm5142 = vc.u32 %v5136, %v5138
        %v5143 = vadd.s32 %v5139, 1
        %v5144 = vsel %vm5142, %v5143, %v5139
        %v5145 = vadd.s32 %v5140, %v5144
        %v5146 = vadd.s32 %v5145, 536870912
        %v5147 = vshrl.u32 %v5146, 30
        %v5148 = vshll.u32 %v5147, 30
        %v5149 = vsub.s32 %v5145, %v5148
        %vm5150 = vcmp.lt.s32.totalorder %v5149, 0
        %v5151 = vsub.s32 0, %v5149
        %v5152 = vsel %vm5150, %v5151, %v5149
        %v5153 = vclz %v5152
        %v5154 = vsub.s32 %v5153, 2
        %vm5155 = vcmp.gt.s32.totalorder 0, %v5154
        %v5156 = vsel %vm5155, 0, %v5154
        %v5157 = vsub.s32 32, %v5156
        %v5158 = vshll.u32 %v5149, %v5156
        %v5159 = vshrl.u32 %v5141, %v5157
        %v5160 = vor.u32 %v5158, %v5159
        %v5161 = vsub.s32 4294967266, %v5156
        %v5162 = vadd.s32 %v5161, 127
        %v5163 = vshll.u32 %v5162, 23
        %v5164 = vor.u32 4788187, %v5163
        %v5165 = vand.u32 2147483647, %v5164
        %v5167 = vcvt.s32.f32 %v5160
        %v5168 = vmul.f32 %v5167, %v5165
        %v5169 = vxor.u32 %v5168, 2147483648
        %v5170 = vsel %vm5087, %v5169, %v5168
        %v5171 = vsub.s32 4, %v5147
        %v5172 = vsel %vm5087, %v5171, %v5147
        %v5173 = vsel %vm5086, %v418, %v5170
        %v5174 = vsel %vm5086, 0, %v5172
        %v5175 = vcosq.f32.pop %v5173
        %v5176 = vsinq.f32.pop %v5173
        %vm5177 = vweird.f32 %v418
        %v5178 = vadd.s32 %v5174, 3
        %v5179 = vand.u32 %v5178, 3
        %vm5180 = vcmp.lt.s32.totalorder %v5179, 2
        %vm5181 = vcmp.eq.s32.totalorder %v5179, 0
        %v5182 = vxor.u32 %v5176, 2147483648
        %v5183 = vsel %vm5181, %v5175, %v5182
        %vm5184 = vcmp.eq.s32.totalorder %v5179, 2
        %v5185 = vxor.u32 %v5175, 2147483648
        %v5186 = vsel %vm5184, %v5185, %v5176
        %v5187 = vsel %vm5180, %v5183, %v5186
        %v5188 = vsel %vm5177, nan, %v5187
        %v5189 = vand.u32 2147483647, %v419
        %vm5190 = vcmp.le.f32.partialorder %v5189, 0.7853982
        %vm5191 = vcmp.lt.s32.totalorder %v419, 0
        %v5192 = vand.u32 %v419, 2139095040
        %v5193 = vshrl.u32 %v5192, 23
        %v5194 = vsub.s32 %v5193, 127
        %v5195 = vand.u32 2147483647, %v419
        %v5196 = vand.u32 %v5195, 8388607
        %v5197 = vor.u32 %v5196, 8388608
        %v5198 = vsub.s32 0, %v5197
        %v5199 = vadd.s32 %v5194, 1
        %vm5200 = vcmp.gt.s32.totalorder %v5199, 0
        %v5201 = vsel %vm5200, %v5199, 0
        %v5202 = vshrl.u32 %v5201, 5
        %v5203 = vand.u32 %v5201, 31
        %v5204 = vsub.s32 32, %v5203
        %v5205 = vshrl.u32 683565275, %v5204
        %v5206 = vshll.u32 683565275, %v5203
        %v5207 = vshrl.u32 2475754826, %v5204
        %v5208 = vor.u32 %v5206, %v5207
        %v5209 = vshll.u32 2475754826, %v5203
        %v5210 = vshrl.u32 2131351028, %v5204
        %v5211 = vor.u32 %v5209, %v5210
        %v5212 = vshll.u32 2131351028, %v5203
        %v5213 = vshrl.u32 2102212464, %v5204
        %v5214 = vor.u32 %v5212, %v5213
        %v5215 = vshll.u32 2102212464, %v5203
        %v5216 = vshrl.u32 920167782, %v5204
        %v5217 = vor.u32 %v5215, %v5216
        %v5218 = vshll.u32 920167782, %v5203
        %v5219 = vshrl.u32 1326507024, %v5204
        %v5220 = vor.u32 %v5218, %v5219
        %vm5221 = vcmp.lt.s32.totalorder %v5202, 1
        %vm5222 = vcmp.lt.s32.totalorder %v5202, 2
        %vm5223 = vcmp.lt.s32.totalorder %v5202, 3
        %vm5224 = vcmp.lt.s32.totalorder %v5202, 4
        %v5225 = vsel %vm5221, %v5205, %v5208
        %v5226 = vsel %vm5224, %v5214, 2102212464
        %v5227 = vsel %vm5223, %v5211, %v5226
        %v5228 = vsel %vm5222, %v5225, %v5227
        %v5229 = vsel %vm5221, %v5208, %v5211
        %v5230 = vsel %vm5224, %v5217, 920167782
        %v5231 = vsel %vm5223, %v5214, %v5230
        %v5232 = vsel %vm5222, %v5229, %v5231
        %v5233 = vsel %vm5221, %v5211, %v5214
        %v5234 = vsel %vm5224, %v5220, 1326507024
        %v5235 = vsel %vm5223, %v5217, %v5234
        %v5236 = vsel %vm5222, %v5233, %v5235
        %v5237 = vshll.u32 %v5197, 8
        %v5238 = vmul.u32.u64.compose %v5237, %v5236
        %v5239 = vextract.low.u32 %v5238
        %v5240 = vextract.high.u32 %v5238
        %v5241 = vmul.u32.u64.compose %v5237, %v5232
        %v5242 = vextract.low.u32 %v5241
        %v5243 = vextract.high.u32 %v5241
        %v5244 = vmul.u32 %v5237, %v5228
        %v5245 = vadd.s32 %v5240, %v5242
        %vm5246 = vc.u32 %v5240, %v5242
        %v5247 = vadd.s32 %v5243, 1
        %v5248 = vsel %vm5246, %v5247, %v5243
        %v5249 = vadd.s32 %v5244, %v5248
        %v5250 = vadd.s32 %v5249, 536870912
        %v5251 = vshrl.u32 %v5250, 30
        %v5252 = vshll.u32 %v5251, 30
        %v5253 = vsub.s32 %v5249, %v5252
        %vm5254 = vcmp.lt.s32.totalorder %v5253, 0
        %v5255 = vsub.s32 0, %v5253
        %v5256 = vsel %vm5254, %v5255, %v5253
        %v5257 = vclz %v5256
        %v5258 = vsub.s32 %v5257, 2
        %vm5259 = vcmp.gt.s32.totalorder 0, %v5258
        %v5260 = vsel %vm5259, 0, %v5258
        %v5261 = vsub.s32 32, %v5260
        %v5262 = vshll.u32 %v5253, %v5260
        %v5263 = vshrl.u32 %v5245, %v5261
        %v5264 = vor.u32 %v5262, %v5263
        %v5265 = vsub.s32 4294967266, %v5260
        %v5266 = vadd.s32 %v5265, 127
        %v5267 = vshll.u32 %v5266, 23
        %v5268 = vor.u32 4788187, %v5267
        %v5269 = vand.u32 2147483647, %v5268
        %v5271 = vcvt.s32.f32 %v5264
        %v5272 = vmul.f32 %v5271, %v5269
        %v5273 = vxor.u32 %v5272, 2147483648
        %v5274 = vsel %vm5191, %v5273, %v5272
        %v5275 = vsub.s32 4, %v5251
        %v5276 = vsel %vm5191, %v5275, %v5251
        %v5277 = vsel %vm5190, %v419, %v5274
        %v5278 = vsel %vm5190, 0, %v5276
        %v5279 = vcosq.f32.pop %v5277
        %v5280 = vsinq.f32.pop %v5277
        %vm5281 = vweird.f32 %v419
        %v5282 = vadd.s32 %v5278, 3
        %v5283 = vand.u32 %v5282, 3
        %vm5284 = vcmp.lt.s32.totalorder %v5283, 2
        %vm5285 = vcmp.eq.s32.totalorder %v5283, 0
        %v5286 = vxor.u32 %v5280, 2147483648
        %v5287 = vsel %vm5285, %v5279, %v5286
        %vm5288 = vcmp.eq.s32.totalorder %v5283, 2
        %v5289 = vxor.u32 %v5279, 2147483648
        %v5290 = vsel %vm5288, %v5289, %v5280
        %v5291 = vsel %vm5284, %v5287, %v5290
        %v5292 = vsel %vm5281, nan, %v5291
        %v5293 = vand.u32 2147483647, %v420
        %vm5294 = vcmp.le.f32.partialorder %v5293, 0.7853982
        %vm5295 = vcmp.lt.s32.totalorder %v420, 0
        %v5296 = vand.u32 %v420, 2139095040
        %v5297 = vshrl.u32 %v5296, 23
        %v5298 = vsub.s32 %v5297, 127
        %v5299 = vand.u32 2147483647, %v420
        %v5300 = vand.u32 %v5299, 8388607
        %v5301 = vor.u32 %v5300, 8388608
        %v5302 = vsub.s32 0, %v5301
        %v5303 = vadd.s32 %v5298, 1
        %vm5304 = vcmp.gt.s32.totalorder %v5303, 0
        %v5305 = vsel %vm5304, %v5303, 0
        %v5306 = vshrl.u32 %v5305, 5
        %v5307 = vand.u32 %v5305, 31
        %v5308 = vsub.s32 32, %v5307
        %v5309 = vshrl.u32 683565275, %v5308
        %v5310 = vshll.u32 683565275, %v5307
        %v5311 = vshrl.u32 2475754826, %v5308
        %v5312 = vor.u32 %v5310, %v5311
        %v5313 = vshll.u32 2475754826, %v5307
        %v5314 = vshrl.u32 2131351028, %v5308
        %v5315 = vor.u32 %v5313, %v5314
        %v5316 = vshll.u32 2131351028, %v5307
        %v5317 = vshrl.u32 2102212464, %v5308
        %v5318 = vor.u32 %v5316, %v5317
        %v5319 = vshll.u32 2102212464, %v5307
        %v5320 = vshrl.u32 920167782, %v5308
        %v5321 = vor.u32 %v5319, %v5320
        %v5322 = vshll.u32 920167782, %v5307
        %v5323 = vshrl.u32 1326507024, %v5308
        %v5324 = vor.u32 %v5322, %v5323
        %vm5325 = vcmp.lt.s32.totalorder %v5306, 1
        %vm5326 = vcmp.lt.s32.totalorder %v5306, 2
        %vm5327 = vcmp.lt.s32.totalorder %v5306, 3
        %vm5328 = vcmp.lt.s32.totalorder %v5306, 4
        %v5329 = vsel %vm5325, %v5309, %v5312
        %v5330 = vsel %vm5328, %v5318, 2102212464
        %v5331 = vsel %vm5327, %v5315, %v5330
        %v5332 = vsel %vm5326, %v5329, %v5331
        %v5333 = vsel %vm5325, %v5312, %v5315
        %v5334 = vsel %vm5328, %v5321, 920167782
        %v5335 = vsel %vm5327, %v5318, %v5334
        %v5336 = vsel %vm5326, %v5333, %v5335
        %v5337 = vsel %vm5325, %v5315, %v5318
        %v5338 = vsel %vm5328, %v5324, 1326507024
        %v5339 = vsel %vm5327, %v5321, %v5338
        %v5340 = vsel %vm5326, %v5337, %v5339
        %v5341 = vshll.u32 %v5301, 8
        %v5342 = vmul.u32.u64.compose %v5341, %v5340
        %v5343 = vextract.low.u32 %v5342
        %v5344 = vextract.high.u32 %v5342
        %v5345 = vmul.u32.u64.compose %v5341, %v5336
        %v5346 = vextract.low.u32 %v5345
        %v5347 = vextract.high.u32 %v5345
        %v5348 = vmul.u32 %v5341, %v5332
        %v5349 = vadd.s32 %v5344, %v5346
        %vm5350 = vc.u32 %v5344, %v5346
        %v5351 = vadd.s32 %v5347, 1
        %v5352 = vsel %vm5350, %v5351, %v5347
        %v5353 = vadd.s32 %v5348, %v5352
        %v5354 = vadd.s32 %v5353, 536870912
        %v5355 = vshrl.u32 %v5354, 30
        %v5356 = vshll.u32 %v5355, 30
        %v5357 = vsub.s32 %v5353, %v5356
        %vm5358 = vcmp.lt.s32.totalorder %v5357, 0
        %v5359 = vsub.s32 0, %v5357
        %v5360 = vsel %vm5358, %v5359, %v5357
        %v5361 = vclz %v5360
        %v5362 = vsub.s32 %v5361, 2
        %vm5363 = vcmp.gt.s32.totalorder 0, %v5362
        %v5364 = vsel %vm5363, 0, %v5362
        %v5365 = vsub.s32 32, %v5364
        %v5366 = vshll.u32 %v5357, %v5364
        %v5367 = vshrl.u32 %v5349, %v5365
        %v5368 = vor.u32 %v5366, %v5367
        %v5369 = vsub.s32 4294967266, %v5364
        %v5370 = vadd.s32 %v5369, 127
        %v5371 = vshll.u32 %v5370, 23
        %v5372 = vor.u32 4788187, %v5371
        %v5373 = vand.u32 2147483647, %v5372
        %v5375 = vcvt.s32.f32 %v5368
        %v5376 = vmul.f32 %v5375, %v5373
        %v5377 = vxor.u32 %v5376, 2147483648
        %v5378 = vsel %vm5295, %v5377, %v5376
        %v5379 = vsub.s32 4, %v5355
        %v5380 = vsel %vm5295, %v5379, %v5355
        %v5381 = vsel %vm5294, %v420, %v5378
        %v5382 = vsel %vm5294, 0, %v5380
        %v5383 = vcosq.f32.pop %v5381
        %v5384 = vsinq.f32.pop %v5381
        %vm5385 = vweird.f32 %v420
        %v5386 = vadd.s32 %v5382, 3
        %v5387 = vand.u32 %v5386, 3
        %vm5388 = vcmp.lt.s32.totalorder %v5387, 2
        %vm5389 = vcmp.eq.s32.totalorder %v5387, 0
        %v5390 = vxor.u32 %v5384, 2147483648
        %v5391 = vsel %vm5389, %v5383, %v5390
        %vm5392 = vcmp.eq.s32.totalorder %v5387, 2
        %v5393 = vxor.u32 %v5383, 2147483648
        %v5394 = vsel %vm5392, %v5393, %v5384
        %v5395 = vsel %vm5388, %v5391, %v5394
        %v5396 = vsel %vm5385, nan, %v5395
        %v5397 = vand.u32 2147483647, %v421
        %vm5398 = vcmp.le.f32.partialorder %v5397, 0.7853982
        %vm5399 = vcmp.lt.s32.totalorder %v421, 0
        %v5400 = vand.u32 %v421, 2139095040
        %v5401 = vshrl.u32 %v5400, 23
        %v5402 = vsub.s32 %v5401, 127
        %v5403 = vand.u32 2147483647, %v421
        %v5404 = vand.u32 %v5403, 8388607
        %v5405 = vor.u32 %v5404, 8388608
        %v5406 = vsub.s32 0, %v5405
        %v5407 = vadd.s32 %v5402, 1
        %vm5408 = vcmp.gt.s32.totalorder %v5407, 0
        %v5409 = vsel %vm5408, %v5407, 0
        %v5410 = vshrl.u32 %v5409, 5
        %v5411 = vand.u32 %v5409, 31
        %v5412 = vsub.s32 32, %v5411
        %v5413 = vshrl.u32 683565275, %v5412
        %v5414 = vshll.u32 683565275, %v5411
        %v5415 = vshrl.u32 2475754826, %v5412
        %v5416 = vor.u32 %v5414, %v5415
        %v5417 = vshll.u32 2475754826, %v5411
        %v5418 = vshrl.u32 2131351028, %v5412
        %v5419 = vor.u32 %v5417, %v5418
        %v5420 = vshll.u32 2131351028, %v5411
        %v5421 = vshrl.u32 2102212464, %v5412
        %v5422 = vor.u32 %v5420, %v5421
        %v5423 = vshll.u32 2102212464, %v5411
        %v5424 = vshrl.u32 920167782, %v5412
        %v5425 = vor.u32 %v5423, %v5424
        %v5426 = vshll.u32 920167782, %v5411
        %v5427 = vshrl.u32 1326507024, %v5412
        %v5428 = vor.u32 %v5426, %v5427
        %vm5429 = vcmp.lt.s32.totalorder %v5410, 1
        %vm5430 = vcmp.lt.s32.totalorder %v5410, 2
        %vm5431 = vcmp.lt.s32.totalorder %v5410, 3
        %vm5432 = vcmp.lt.s32.totalorder %v5410, 4
        %v5433 = vsel %vm5429, %v5413, %v5416
        %v5434 = vsel %vm5432, %v5422, 2102212464
        %v5435 = vsel %vm5431, %v5419, %v5434
        %v5436 = vsel %vm5430, %v5433, %v5435
        %v5437 = vsel %vm5429, %v5416, %v5419
        %v5438 = vsel %vm5432, %v5425, 920167782
        %v5439 = vsel %vm5431, %v5422, %v5438
        %v5440 = vsel %vm5430, %v5437, %v5439
        %v5441 = vsel %vm5429, %v5419, %v5422
        %v5442 = vsel %vm5432, %v5428, 1326507024
        %v5443 = vsel %vm5431, %v5425, %v5442
        %v5444 = vsel %vm5430, %v5441, %v5443
        %v5445 = vshll.u32 %v5405, 8
        %v5446 = vmul.u32.u64.compose %v5445, %v5444
        %v5447 = vextract.low.u32 %v5446
        %v5448 = vextract.high.u32 %v5446
        %v5449 = vmul.u32.u64.compose %v5445, %v5440
        %v5450 = vextract.low.u32 %v5449
        %v5451 = vextract.high.u32 %v5449
        %v5452 = vmul.u32 %v5445, %v5436
        %v5453 = vadd.s32 %v5448, %v5450
        %vm5454 = vc.u32 %v5448, %v5450
        %v5455 = vadd.s32 %v5451, 1
        %v5456 = vsel %vm5454, %v5455, %v5451
        %v5457 = vadd.s32 %v5452, %v5456
        %v5458 = vadd.s32 %v5457, 536870912
        %v5459 = vshrl.u32 %v5458, 30
        %v5460 = vshll.u32 %v5459, 30
        %v5461 = vsub.s32 %v5457, %v5460
        %vm5462 = vcmp.lt.s32.totalorder %v5461, 0
        %v5463 = vsub.s32 0, %v5461
        %v5464 = vsel %vm5462, %v5463, %v5461
        %v5465 = vclz %v5464
        %v5466 = vsub.s32 %v5465, 2
        %vm5467 = vcmp.gt.s32.totalorder 0, %v5466
        %v5468 = vsel %vm5467, 0, %v5466
        %v5469 = vsub.s32 32, %v5468
        %v5470 = vshll.u32 %v5461, %v5468
        %v5471 = vshrl.u32 %v5453, %v5469
        %v5472 = vor.u32 %v5470, %v5471
        %v5473 = vsub.s32 4294967266, %v5468
        %v5474 = vadd.s32 %v5473, 127
        %v5475 = vshll.u32 %v5474, 23
        %v5476 = vor.u32 4788187, %v5475
        %v5477 = vand.u32 2147483647, %v5476
        %v5479 = vcvt.s32.f32 %v5472
        %v5480 = vmul.f32 %v5479, %v5477
        %v5481 = vxor.u32 %v5480, 2147483648
        %v5482 = vsel %vm5399, %v5481, %v5480
        %v5483 = vsub.s32 4, %v5459
        %v5484 = vsel %vm5399, %v5483, %v5459
        %v5485 = vsel %vm5398, %v421, %v5482
        %v5486 = vsel %vm5398, 0, %v5484
        %v5487 = vcosq.f32.pop %v5485
        %v5488 = vsinq.f32.pop %v5485
        %vm5489 = vweird.f32 %v421
        %v5490 = vadd.s32 %v5486, 3
        %v5491 = vand.u32 %v5490, 3
        %vm5492 = vcmp.lt.s32.totalorder %v5491, 2
        %vm5493 = vcmp.eq.s32.totalorder %v5491, 0
        %v5494 = vxor.u32 %v5488, 2147483648
        %v5495 = vsel %vm5493, %v5487, %v5494
        %vm5496 = vcmp.eq.s32.totalorder %v5491, 2
        %v5497 = vxor.u32 %v5487, 2147483648
        %v5498 = vsel %vm5496, %v5497, %v5488
        %v5499 = vsel %vm5492, %v5495, %v5498
        %v5500 = vsel %vm5489, nan, %v5499
        %v5501 = vand.u32 2147483647, %v422
        %vm5502 = vcmp.le.f32.partialorder %v5501, 0.7853982
        %vm5503 = vcmp.lt.s32.totalorder %v422, 0
        %v5504 = vand.u32 %v422, 2139095040
        %v5505 = vshrl.u32 %v5504, 23
        %v5506 = vsub.s32 %v5505, 127
        %v5507 = vand.u32 2147483647, %v422
        %v5508 = vand.u32 %v5507, 8388607
        %v5509 = vor.u32 %v5508, 8388608
        %v5510 = vsub.s32 0, %v5509
        %v5511 = vadd.s32 %v5506, 1
        %vm5512 = vcmp.gt.s32.totalorder %v5511, 0
        %v5513 = vsel %vm5512, %v5511, 0
        %v5514 = vshrl.u32 %v5513, 5
        %v5515 = vand.u32 %v5513, 31
        %v5516 = vsub.s32 32, %v5515
        %v5517 = vshrl.u32 683565275, %v5516
        %v5518 = vshll.u32 683565275, %v5515
        %v5519 = vshrl.u32 2475754826, %v5516
        %v5520 = vor.u32 %v5518, %v5519
        %v5521 = vshll.u32 2475754826, %v5515
        %v5522 = vshrl.u32 2131351028, %v5516
        %v5523 = vor.u32 %v5521, %v5522
        %v5524 = vshll.u32 2131351028, %v5515
        %v5525 = vshrl.u32 2102212464, %v5516
        %v5526 = vor.u32 %v5524, %v5525
        %v5527 = vshll.u32 2102212464, %v5515
        %v5528 = vshrl.u32 920167782, %v5516
        %v5529 = vor.u32 %v5527, %v5528
        %v5530 = vshll.u32 920167782, %v5515
        %v5531 = vshrl.u32 1326507024, %v5516
        %v5532 = vor.u32 %v5530, %v5531
        %vm5533 = vcmp.lt.s32.totalorder %v5514, 1
        %vm5534 = vcmp.lt.s32.totalorder %v5514, 2
        %vm5535 = vcmp.lt.s32.totalorder %v5514, 3
        %vm5536 = vcmp.lt.s32.totalorder %v5514, 4
        %v5537 = vsel %vm5533, %v5517, %v5520
        %v5538 = vsel %vm5536, %v5526, 2102212464
        %v5539 = vsel %vm5535, %v5523, %v5538
        %v5540 = vsel %vm5534, %v5537, %v5539
        %v5541 = vsel %vm5533, %v5520, %v5523
        %v5542 = vsel %vm5536, %v5529, 920167782
        %v5543 = vsel %vm5535, %v5526, %v5542
        %v5544 = vsel %vm5534, %v5541, %v5543
        %v5545 = vsel %vm5533, %v5523, %v5526
        %v5546 = vsel %vm5536, %v5532, 1326507024
        %v5547 = vsel %vm5535, %v5529, %v5546
        %v5548 = vsel %vm5534, %v5545, %v5547
        %v5549 = vshll.u32 %v5509, 8
        %v5550 = vmul.u32.u64.compose %v5549, %v5548
        %v5551 = vextract.low.u32 %v5550
        %v5552 = vextract.high.u32 %v5550
        %v5553 = vmul.u32.u64.compose %v5549, %v5544
        %v5554 = vextract.low.u32 %v5553
        %v5555 = vextract.high.u32 %v5553
        %v5556 = vmul.u32 %v5549, %v5540
        %v5557 = vadd.s32 %v5552, %v5554
        %vm5558 = vc.u32 %v5552, %v5554
        %v5559 = vadd.s32 %v5555, 1
        %v5560 = vsel %vm5558, %v5559, %v5555
        %v5561 = vadd.s32 %v5556, %v5560
        %v5562 = vadd.s32 %v5561, 536870912
        %v5563 = vshrl.u32 %v5562, 30
        %v5564 = vshll.u32 %v5563, 30
        %v5565 = vsub.s32 %v5561, %v5564
        %vm5566 = vcmp.lt.s32.totalorder %v5565, 0
        %v5567 = vsub.s32 0, %v5565
        %v5568 = vsel %vm5566, %v5567, %v5565
        %v5569 = vclz %v5568
        %v5570 = vsub.s32 %v5569, 2
        %vm5571 = vcmp.gt.s32.totalorder 0, %v5570
        %v5572 = vsel %vm5571, 0, %v5570
        %v5573 = vsub.s32 32, %v5572
        %v5574 = vshll.u32 %v5565, %v5572
        %v5575 = vshrl.u32 %v5557, %v5573
        %v5576 = vor.u32 %v5574, %v5575
        %v5577 = vsub.s32 4294967266, %v5572
        %v5578 = vadd.s32 %v5577, 127
        %v5579 = vshll.u32 %v5578, 23
        %v5580 = vor.u32 4788187, %v5579
        %v5581 = vand.u32 2147483647, %v5580
        %v5583 = vcvt.s32.f32 %v5576
        %v5584 = vmul.f32 %v5583, %v5581
        %v5585 = vxor.u32 %v5584, 2147483648
        %v5586 = vsel %vm5503, %v5585, %v5584
        %v5587 = vsub.s32 4, %v5563
        %v5588 = vsel %vm5503, %v5587, %v5563
        %v5589 = vsel %vm5502, %v422, %v5586
        %v5590 = vsel %vm5502, 0, %v5588
        %v5591 = vcosq.f32.pop %v5589
        %v5592 = vsinq.f32.pop %v5589
        %vm5593 = vweird.f32 %v422
        %v5594 = vadd.s32 %v5590, 3
        %v5595 = vand.u32 %v5594, 3
        %vm5596 = vcmp.lt.s32.totalorder %v5595, 2
        %vm5597 = vcmp.eq.s32.totalorder %v5595, 0
        %v5598 = vxor.u32 %v5592, 2147483648
        %v5599 = vsel %vm5597, %v5591, %v5598
        %vm5600 = vcmp.eq.s32.totalorder %v5595, 2
        %v5601 = vxor.u32 %v5591, 2147483648
        %v5602 = vsel %vm5600, %v5601, %v5592
        %v5603 = vsel %vm5596, %v5599, %v5602
        %v5604 = vsel %vm5593, nan, %v5603
        %v5605 = vand.u32 2147483647, %v423
        %vm5606 = vcmp.le.f32.partialorder %v5605, 0.7853982
        %vm5607 = vcmp.lt.s32.totalorder %v423, 0
        %v5608 = vand.u32 %v423, 2139095040
        %v5609 = vshrl.u32 %v5608, 23
        %v5610 = vsub.s32 %v5609, 127
        %v5611 = vand.u32 2147483647, %v423
        %v5612 = vand.u32 %v5611, 8388607
        %v5613 = vor.u32 %v5612, 8388608
        %v5614 = vsub.s32 0, %v5613
        %v5615 = vadd.s32 %v5610, 1
        %vm5616 = vcmp.gt.s32.totalorder %v5615, 0
        %v5617 = vsel %vm5616, %v5615, 0
        %v5618 = vshrl.u32 %v5617, 5
        %v5619 = vand.u32 %v5617, 31
        %v5620 = vsub.s32 32, %v5619
        %v5621 = vshrl.u32 683565275, %v5620
        %v5622 = vshll.u32 683565275, %v5619
        %v5623 = vshrl.u32 2475754826, %v5620
        %v5624 = vor.u32 %v5622, %v5623
        %v5625 = vshll.u32 2475754826, %v5619
        %v5626 = vshrl.u32 2131351028, %v5620
        %v5627 = vor.u32 %v5625, %v5626
        %v5628 = vshll.u32 2131351028, %v5619
        %v5629 = vshrl.u32 2102212464, %v5620
        %v5630 = vor.u32 %v5628, %v5629
        %v5631 = vshll.u32 2102212464, %v5619
        %v5632 = vshrl.u32 920167782, %v5620
        %v5633 = vor.u32 %v5631, %v5632
        %v5634 = vshll.u32 920167782, %v5619
        %v5635 = vshrl.u32 1326507024, %v5620
        %v5636 = vor.u32 %v5634, %v5635
        %vm5637 = vcmp.lt.s32.totalorder %v5618, 1
        %vm5638 = vcmp.lt.s32.totalorder %v5618, 2
        %vm5639 = vcmp.lt.s32.totalorder %v5618, 3
        %vm5640 = vcmp.lt.s32.totalorder %v5618, 4
        %v5641 = vsel %vm5637, %v5621, %v5624
        %v5642 = vsel %vm5640, %v5630, 2102212464
        %v5643 = vsel %vm5639, %v5627, %v5642
        %v5644 = vsel %vm5638, %v5641, %v5643
        %v5645 = vsel %vm5637, %v5624, %v5627
        %v5646 = vsel %vm5640, %v5633, 920167782
        %v5647 = vsel %vm5639, %v5630, %v5646
        %v5648 = vsel %vm5638, %v5645, %v5647
        %v5649 = vsel %vm5637, %v5627, %v5630
        %v5650 = vsel %vm5640, %v5636, 1326507024
        %v5651 = vsel %vm5639, %v5633, %v5650
        %v5652 = vsel %vm5638, %v5649, %v5651
        %v5653 = vshll.u32 %v5613, 8
        %v5654 = vmul.u32.u64.compose %v5653, %v5652
        %v5655 = vextract.low.u32 %v5654
        %v5656 = vextract.high.u32 %v5654
        %v5657 = vmul.u32.u64.compose %v5653, %v5648
        %v5658 = vextract.low.u32 %v5657
        %v5659 = vextract.high.u32 %v5657
        %v5660 = vmul.u32 %v5653, %v5644
        %v5661 = vadd.s32 %v5656, %v5658
        %vm5662 = vc.u32 %v5656, %v5658
        %v5663 = vadd.s32 %v5659, 1
        %v5664 = vsel %vm5662, %v5663, %v5659
        %v5665 = vadd.s32 %v5660, %v5664
        %v5666 = vadd.s32 %v5665, 536870912
        %v5667 = vshrl.u32 %v5666, 30
        %v5668 = vshll.u32 %v5667, 30
        %v5669 = vsub.s32 %v5665, %v5668
        %vm5670 = vcmp.lt.s32.totalorder %v5669, 0
        %v5671 = vsub.s32 0, %v5669
        %v5672 = vsel %vm5670, %v5671, %v5669
        %v5673 = vclz %v5672
        %v5674 = vsub.s32 %v5673, 2
        %vm5675 = vcmp.gt.s32.totalorder 0, %v5674
        %v5676 = vsel %vm5675, 0, %v5674
        %v5677 = vsub.s32 32, %v5676
        %v5678 = vshll.u32 %v5669, %v5676
        %v5679 = vshrl.u32 %v5661, %v5677
        %v5680 = vor.u32 %v5678, %v5679
        %v5681 = vsub.s32 4294967266, %v5676
        %v5682 = vadd.s32 %v5681, 127
        %v5683 = vshll.u32 %v5682, 23
        %v5684 = vor.u32 4788187, %v5683
        %v5685 = vand.u32 2147483647, %v5684
        %v5687 = vcvt.s32.f32 %v5680
        %v5688 = vmul.f32 %v5687, %v5685
        %v5689 = vxor.u32 %v5688, 2147483648
        %v5690 = vsel %vm5607, %v5689, %v5688
        %v5691 = vsub.s32 4, %v5667
        %v5692 = vsel %vm5607, %v5691, %v5667
        %v5693 = vsel %vm5606, %v423, %v5690
        %v5694 = vsel %vm5606, 0, %v5692
        %v5695 = vcosq.f32.pop %v5693
        %v5696 = vsinq.f32.pop %v5693
        %vm5697 = vweird.f32 %v423
        %v5698 = vadd.s32 %v5694, 3
        %v5699 = vand.u32 %v5698, 3
        %vm5700 = vcmp.lt.s32.totalorder %v5699, 2
        %vm5701 = vcmp.eq.s32.totalorder %v5699, 0
        %v5702 = vxor.u32 %v5696, 2147483648
        %v5703 = vsel %vm5701, %v5695, %v5702
        %vm5704 = vcmp.eq.s32.totalorder %v5699, 2
        %v5705 = vxor.u32 %v5695, 2147483648
        %v5706 = vsel %vm5704, %v5705, %v5696
        %v5707 = vsel %vm5700, %v5703, %v5706
        %v5708 = vsel %vm5697, nan, %v5707
        %v5709 = vand.u32 2147483647, %v424
        %vm5710 = vcmp.le.f32.partialorder %v5709, 0.7853982
        %vm5711 = vcmp.lt.s32.totalorder %v424, 0
        %v5712 = vand.u32 %v424, 2139095040
        %v5713 = vshrl.u32 %v5712, 23
        %v5714 = vsub.s32 %v5713, 127
        %v5715 = vand.u32 2147483647, %v424
        %v5716 = vand.u32 %v5715, 8388607
        %v5717 = vor.u32 %v5716, 8388608
        %v5718 = vsub.s32 0, %v5717
        %v5719 = vadd.s32 %v5714, 1
        %vm5720 = vcmp.gt.s32.totalorder %v5719, 0
        %v5721 = vsel %vm5720, %v5719, 0
        %v5722 = vshrl.u32 %v5721, 5
        %v5723 = vand.u32 %v5721, 31
        %v5724 = vsub.s32 32, %v5723
        %v5725 = vshrl.u32 683565275, %v5724
        %v5726 = vshll.u32 683565275, %v5723
        %v5727 = vshrl.u32 2475754826, %v5724
        %v5728 = vor.u32 %v5726, %v5727
        %v5729 = vshll.u32 2475754826, %v5723
        %v5730 = vshrl.u32 2131351028, %v5724
        %v5731 = vor.u32 %v5729, %v5730
        %v5732 = vshll.u32 2131351028, %v5723
        %v5733 = vshrl.u32 2102212464, %v5724
        %v5734 = vor.u32 %v5732, %v5733
        %v5735 = vshll.u32 2102212464, %v5723
        %v5736 = vshrl.u32 920167782, %v5724
        %v5737 = vor.u32 %v5735, %v5736
        %v5738 = vshll.u32 920167782, %v5723
        %v5739 = vshrl.u32 1326507024, %v5724
        %v5740 = vor.u32 %v5738, %v5739
        %vm5741 = vcmp.lt.s32.totalorder %v5722, 1
        %vm5742 = vcmp.lt.s32.totalorder %v5722, 2
        %vm5743 = vcmp.lt.s32.totalorder %v5722, 3
        %vm5744 = vcmp.lt.s32.totalorder %v5722, 4
        %v5745 = vsel %vm5741, %v5725, %v5728
        %v5746 = vsel %vm5744, %v5734, 2102212464
        %v5747 = vsel %vm5743, %v5731, %v5746
        %v5748 = vsel %vm5742, %v5745, %v5747
        %v5749 = vsel %vm5741, %v5728, %v5731
        %v5750 = vsel %vm5744, %v5737, 920167782
        %v5751 = vsel %vm5743, %v5734, %v5750
        %v5752 = vsel %vm5742, %v5749, %v5751
        %v5753 = vsel %vm5741, %v5731, %v5734
        %v5754 = vsel %vm5744, %v5740, 1326507024
        %v5755 = vsel %vm5743, %v5737, %v5754
        %v5756 = vsel %vm5742, %v5753, %v5755
        %v5757 = vshll.u32 %v5717, 8
        %v5758 = vmul.u32.u64.compose %v5757, %v5756
        %v5759 = vextract.low.u32 %v5758
        %v5760 = vextract.high.u32 %v5758
        %v5761 = vmul.u32.u64.compose %v5757, %v5752
        %v5762 = vextract.low.u32 %v5761
        %v5763 = vextract.high.u32 %v5761
        %v5764 = vmul.u32 %v5757, %v5748
        %v5765 = vadd.s32 %v5760, %v5762
        %vm5766 = vc.u32 %v5760, %v5762
        %v5767 = vadd.s32 %v5763, 1
        %v5768 = vsel %vm5766, %v5767, %v5763
        %v5769 = vadd.s32 %v5764, %v5768
        %v5770 = vadd.s32 %v5769, 536870912
        %v5771 = vshrl.u32 %v5770, 30
        %v5772 = vshll.u32 %v5771, 30
        %v5773 = vsub.s32 %v5769, %v5772
        %vm5774 = vcmp.lt.s32.totalorder %v5773, 0
        %v5775 = vsub.s32 0, %v5773
        %v5776 = vsel %vm5774, %v5775, %v5773
        %v5777 = vclz %v5776
        %v5778 = vsub.s32 %v5777, 2
        %vm5779 = vcmp.gt.s32.totalorder 0, %v5778
        %v5780 = vsel %vm5779, 0, %v5778
        %v5781 = vsub.s32 32, %v5780
        %v5782 = vshll.u32 %v5773, %v5780
        %v5783 = vshrl.u32 %v5765, %v5781
        %v5784 = vor.u32 %v5782, %v5783
        %v5785 = vsub.s32 4294967266, %v5780
        %v5786 = vadd.s32 %v5785, 127
        %v5787 = vshll.u32 %v5786, 23
        %v5788 = vor.u32 4788187, %v5787
        %v5789 = vand.u32 2147483647, %v5788
        %v5791 = vcvt.s32.f32 %v5784
        %v5792 = vmul.f32 %v5791, %v5789
        %v5793 = vxor.u32 %v5792, 2147483648
        %v5794 = vsel %vm5711, %v5793, %v5792
        %v5795 = vsub.s32 4, %v5771
        %v5796 = vsel %vm5711, %v5795, %v5771
        %v5797 = vsel %vm5710, %v424, %v5794
        %v5798 = vsel %vm5710, 0, %v5796
        %v5799 = vcosq.f32.pop %v5797
        %v5800 = vsinq.f32.pop %v5797
        %vm5801 = vweird.f32 %v424
        %v5802 = vadd.s32 %v5798, 3
        %v5803 = vand.u32 %v5802, 3
        %vm5804 = vcmp.lt.s32.totalorder %v5803, 2
        %vm5805 = vcmp.eq.s32.totalorder %v5803, 0
        %v5806 = vxor.u32 %v5800, 2147483648
        %v5807 = vsel %vm5805, %v5799, %v5806
        %vm5808 = vcmp.eq.s32.totalorder %v5803, 2
        %v5809 = vxor.u32 %v5799, 2147483648
        %v5810 = vsel %vm5808, %v5809, %v5800
        %v5811 = vsel %vm5804, %v5807, %v5810
        %v5812 = vsel %vm5801, nan, %v5811
        %v5813 = vand.u32 2147483647, %v425
        %vm5814 = vcmp.le.f32.partialorder %v5813, 0.7853982
        %vm5815 = vcmp.lt.s32.totalorder %v425, 0
        %v5816 = vand.u32 %v425, 2139095040
        %v5817 = vshrl.u32 %v5816, 23
        %v5818 = vsub.s32 %v5817, 127
        %v5819 = vand.u32 2147483647, %v425
        %v5820 = vand.u32 %v5819, 8388607
        %v5821 = vor.u32 %v5820, 8388608
        %v5822 = vsub.s32 0, %v5821
        %v5823 = vadd.s32 %v5818, 1
        %vm5824 = vcmp.gt.s32.totalorder %v5823, 0
        %v5825 = vsel %vm5824, %v5823, 0
        %v5826 = vshrl.u32 %v5825, 5
        %v5827 = vand.u32 %v5825, 31
        %v5828 = vsub.s32 32, %v5827
        %v5829 = vshrl.u32 683565275, %v5828
        %v5830 = vshll.u32 683565275, %v5827
        %v5831 = vshrl.u32 2475754826, %v5828
        %v5832 = vor.u32 %v5830, %v5831
        %v5833 = vshll.u32 2475754826, %v5827
        %v5834 = vshrl.u32 2131351028, %v5828
        %v5835 = vor.u32 %v5833, %v5834
        %v5836 = vshll.u32 2131351028, %v5827
        %v5837 = vshrl.u32 2102212464, %v5828
        %v5838 = vor.u32 %v5836, %v5837
        %v5839 = vshll.u32 2102212464, %v5827
        %v5840 = vshrl.u32 920167782, %v5828
        %v5841 = vor.u32 %v5839, %v5840
        %v5842 = vshll.u32 920167782, %v5827
        %v5843 = vshrl.u32 1326507024, %v5828
        %v5844 = vor.u32 %v5842, %v5843
        %vm5845 = vcmp.lt.s32.totalorder %v5826, 1
        %vm5846 = vcmp.lt.s32.totalorder %v5826, 2
        %vm5847 = vcmp.lt.s32.totalorder %v5826, 3
        %vm5848 = vcmp.lt.s32.totalorder %v5826, 4
        %v5849 = vsel %vm5845, %v5829, %v5832
        %v5850 = vsel %vm5848, %v5838, 2102212464
        %v5851 = vsel %vm5847, %v5835, %v5850
        %v5852 = vsel %vm5846, %v5849, %v5851
        %v5853 = vsel %vm5845, %v5832, %v5835
        %v5854 = vsel %vm5848, %v5841, 920167782
        %v5855 = vsel %vm5847, %v5838, %v5854
        %v5856 = vsel %vm5846, %v5853, %v5855
        %v5857 = vsel %vm5845, %v5835, %v5838
        %v5858 = vsel %vm5848, %v5844, 1326507024
        %v5859 = vsel %vm5847, %v5841, %v5858
        %v5860 = vsel %vm5846, %v5857, %v5859
        %v5861 = vshll.u32 %v5821, 8
        %v5862 = vmul.u32.u64.compose %v5861, %v5860
        %v5863 = vextract.low.u32 %v5862
        %v5864 = vextract.high.u32 %v5862
        %v5865 = vmul.u32.u64.compose %v5861, %v5856
        %v5866 = vextract.low.u32 %v5865
        %v5867 = vextract.high.u32 %v5865
        %v5868 = vmul.u32 %v5861, %v5852
        %v5869 = vadd.s32 %v5864, %v5866
        %vm5870 = vc.u32 %v5864, %v5866
        %v5871 = vadd.s32 %v5867, 1
        %v5872 = vsel %vm5870, %v5871, %v5867
        %v5873 = vadd.s32 %v5868, %v5872
        %v5874 = vadd.s32 %v5873, 536870912
        %v5875 = vshrl.u32 %v5874, 30
        %v5876 = vshll.u32 %v5875, 30
        %v5877 = vsub.s32 %v5873, %v5876
        %vm5878 = vcmp.lt.s32.totalorder %v5877, 0
        %v5879 = vsub.s32 0, %v5877
        %v5880 = vsel %vm5878, %v5879, %v5877
        %v5881 = vclz %v5880
        %v5882 = vsub.s32 %v5881, 2
        %vm5883 = vcmp.gt.s32.totalorder 0, %v5882
        %v5884 = vsel %vm5883, 0, %v5882
        %v5885 = vsub.s32 32, %v5884
        %v5886 = vshll.u32 %v5877, %v5884
        %v5887 = vshrl.u32 %v5869, %v5885
        %v5888 = vor.u32 %v5886, %v5887
        %v5889 = vsub.s32 4294967266, %v5884
        %v5890 = vadd.s32 %v5889, 127
        %v5891 = vshll.u32 %v5890, 23
        %v5892 = vor.u32 4788187, %v5891
        %v5893 = vand.u32 2147483647, %v5892
        %v5895 = vcvt.s32.f32 %v5888
        %v5896 = vmul.f32 %v5895, %v5893
        %v5897 = vxor.u32 %v5896, 2147483648
        %v5898 = vsel %vm5815, %v5897, %v5896
        %v5899 = vsub.s32 4, %v5875
        %v5900 = vsel %vm5815, %v5899, %v5875
        %v5901 = vsel %vm5814, %v425, %v5898
        %v5902 = vsel %vm5814, 0, %v5900
        %v5903 = vcosq.f32.pop %v5901
        %v5904 = vsinq.f32.pop %v5901
        %vm5905 = vweird.f32 %v425
        %v5906 = vadd.s32 %v5902, 3
        %v5907 = vand.u32 %v5906, 3
        %vm5908 = vcmp.lt.s32.totalorder %v5907, 2
        %vm5909 = vcmp.eq.s32.totalorder %v5907, 0
        %v5910 = vxor.u32 %v5904, 2147483648
        %v5911 = vsel %vm5909, %v5903, %v5910
        %vm5912 = vcmp.eq.s32.totalorder %v5907, 2
        %v5913 = vxor.u32 %v5903, 2147483648
        %v5914 = vsel %vm5912, %v5913, %v5904
        %v5915 = vsel %vm5908, %v5911, %v5914
        %v5916 = vsel %vm5905, nan, %v5915
        %v5917 = vand.u32 2147483647, %v426
        %vm5918 = vcmp.le.f32.partialorder %v5917, 0.7853982
        %vm5919 = vcmp.lt.s32.totalorder %v426, 0
        %v5920 = vand.u32 %v426, 2139095040
        %v5921 = vshrl.u32 %v5920, 23
        %v5922 = vsub.s32 %v5921, 127
        %v5923 = vand.u32 2147483647, %v426
        %v5924 = vand.u32 %v5923, 8388607
        %v5925 = vor.u32 %v5924, 8388608
        %v5926 = vsub.s32 0, %v5925
        %v5927 = vadd.s32 %v5922, 1
        %vm5928 = vcmp.gt.s32.totalorder %v5927, 0
        %v5929 = vsel %vm5928, %v5927, 0
        %v5930 = vshrl.u32 %v5929, 5
        %v5931 = vand.u32 %v5929, 31
        %v5932 = vsub.s32 32, %v5931
        %v5933 = vshrl.u32 683565275, %v5932
        %v5934 = vshll.u32 683565275, %v5931
        %v5935 = vshrl.u32 2475754826, %v5932
        %v5936 = vor.u32 %v5934, %v5935
        %v5937 = vshll.u32 2475754826, %v5931
        %v5938 = vshrl.u32 2131351028, %v5932
        %v5939 = vor.u32 %v5937, %v5938
        %v5940 = vshll.u32 2131351028, %v5931
        %v5941 = vshrl.u32 2102212464, %v5932
        %v5942 = vor.u32 %v5940, %v5941
        %v5943 = vshll.u32 2102212464, %v5931
        %v5944 = vshrl.u32 920167782, %v5932
        %v5945 = vor.u32 %v5943, %v5944
        %v5946 = vshll.u32 920167782, %v5931
        %v5947 = vshrl.u32 1326507024, %v5932
        %v5948 = vor.u32 %v5946, %v5947
        %vm5949 = vcmp.lt.s32.totalorder %v5930, 1
        %vm5950 = vcmp.lt.s32.totalorder %v5930, 2
        %vm5951 = vcmp.lt.s32.totalorder %v5930, 3
        %vm5952 = vcmp.lt.s32.totalorder %v5930, 4
        %v5953 = vsel %vm5949, %v5933, %v5936
        %v5954 = vsel %vm5952, %v5942, 2102212464
        %v5955 = vsel %vm5951, %v5939, %v5954
        %v5956 = vsel %vm5950, %v5953, %v5955
        %v5957 = vsel %vm5949, %v5936, %v5939
        %v5958 = vsel %vm5952, %v5945, 920167782
        %v5959 = vsel %vm5951, %v5942, %v5958
        %v5960 = vsel %vm5950, %v5957, %v5959
        %v5961 = vsel %vm5949, %v5939, %v5942
        %v5962 = vsel %vm5952, %v5948, 1326507024
        %v5963 = vsel %vm5951, %v5945, %v5962
        %v5964 = vsel %vm5950, %v5961, %v5963
        %v5965 = vshll.u32 %v5925, 8
        %v5966 = vmul.u32.u64.compose %v5965, %v5964
        %v5967 = vextract.low.u32 %v5966
        %v5968 = vextract.high.u32 %v5966
        %v5969 = vmul.u32.u64.compose %v5965, %v5960
        %v5970 = vextract.low.u32 %v5969
        %v5971 = vextract.high.u32 %v5969
        %v5972 = vmul.u32 %v5965, %v5956
        %v5973 = vadd.s32 %v5968, %v5970
        %vm5974 = vc.u32 %v5968, %v5970
        %v5975 = vadd.s32 %v5971, 1
        %v5976 = vsel %vm5974, %v5975, %v5971
        %v5977 = vadd.s32 %v5972, %v5976
        %v5978 = vadd.s32 %v5977, 536870912
        %v5979 = vshrl.u32 %v5978, 30
        %v5980 = vshll.u32 %v5979, 30
        %v5981 = vsub.s32 %v5977, %v5980
        %vm5982 = vcmp.lt.s32.totalorder %v5981, 0
        %v5983 = vsub.s32 0, %v5981
        %v5984 = vsel %vm5982, %v5983, %v5981
        %v5985 = vclz %v5984
        %v5986 = vsub.s32 %v5985, 2
        %vm5987 = vcmp.gt.s32.totalorder 0, %v5986
        %v5988 = vsel %vm5987, 0, %v5986
        %v5989 = vsub.s32 32, %v5988
        %v5990 = vshll.u32 %v5981, %v5988
        %v5991 = vshrl.u32 %v5973, %v5989
        %v5992 = vor.u32 %v5990, %v5991
        %v5993 = vsub.s32 4294967266, %v5988
        %v5994 = vadd.s32 %v5993, 127
        %v5995 = vshll.u32 %v5994, 23
        %v5996 = vor.u32 4788187, %v5995
        %v5997 = vand.u32 2147483647, %v5996
        %v5999 = vcvt.s32.f32 %v5992
        %v6000 = vmul.f32 %v5999, %v5997
        %v6001 = vxor.u32 %v6000, 2147483648
        %v6002 = vsel %vm5919, %v6001, %v6000
        %v6003 = vsub.s32 4, %v5979
        %v6004 = vsel %vm5919, %v6003, %v5979
        %v6005 = vsel %vm5918, %v426, %v6002
        %v6006 = vsel %vm5918, 0, %v6004
        %v6007 = vcosq.f32.pop %v6005
        %v6008 = vsinq.f32.pop %v6005
        %vm6009 = vweird.f32 %v426
        %v6010 = vadd.s32 %v6006, 3
        %v6011 = vand.u32 %v6010, 3
        %vm6012 = vcmp.lt.s32.totalorder %v6011, 2
        %vm6013 = vcmp.eq.s32.totalorder %v6011, 0
        %v6014 = vxor.u32 %v6008, 2147483648
        %v6015 = vsel %vm6013, %v6007, %v6014
        %vm6016 = vcmp.eq.s32.totalorder %v6011, 2
        %v6017 = vxor.u32 %v6007, 2147483648
        %v6018 = vsel %vm6016, %v6017, %v6008
        %v6019 = vsel %vm6012, %v6015, %v6018
        %v6020 = vsel %vm6009, nan, %v6019
        %v6021 = vand.u32 2147483647, %v427
        %vm6022 = vcmp.le.f32.partialorder %v6021, 0.7853982
        %vm6023 = vcmp.lt.s32.totalorder %v427, 0
        %v6024 = vand.u32 %v427, 2139095040
        %v6025 = vshrl.u32 %v6024, 23
        %v6026 = vsub.s32 %v6025, 127
        %v6027 = vand.u32 2147483647, %v427
        %v6028 = vand.u32 %v6027, 8388607
        %v6029 = vor.u32 %v6028, 8388608
        %v6030 = vsub.s32 0, %v6029
        %v6031 = vadd.s32 %v6026, 1
        %vm6032 = vcmp.gt.s32.totalorder %v6031, 0
        %v6033 = vsel %vm6032, %v6031, 0
        %v6034 = vshrl.u32 %v6033, 5
        %v6035 = vand.u32 %v6033, 31
        %v6036 = vsub.s32 32, %v6035
        %v6037 = vshrl.u32 683565275, %v6036
        %v6038 = vshll.u32 683565275, %v6035
        %v6039 = vshrl.u32 2475754826, %v6036
        %v6040 = vor.u32 %v6038, %v6039
        %v6041 = vshll.u32 2475754826, %v6035
        %v6042 = vshrl.u32 2131351028, %v6036
        %v6043 = vor.u32 %v6041, %v6042
        %v6044 = vshll.u32 2131351028, %v6035
        %v6045 = vshrl.u32 2102212464, %v6036
        %v6046 = vor.u32 %v6044, %v6045
        %v6047 = vshll.u32 2102212464, %v6035
        %v6048 = vshrl.u32 920167782, %v6036
        %v6049 = vor.u32 %v6047, %v6048
        %v6050 = vshll.u32 920167782, %v6035
        %v6051 = vshrl.u32 1326507024, %v6036
        %v6052 = vor.u32 %v6050, %v6051
        %vm6053 = vcmp.lt.s32.totalorder %v6034, 1
        %vm6054 = vcmp.lt.s32.totalorder %v6034, 2
        %vm6055 = vcmp.lt.s32.totalorder %v6034, 3
        %vm6056 = vcmp.lt.s32.totalorder %v6034, 4
        %v6057 = vsel %vm6053, %v6037, %v6040
        %v6058 = vsel %vm6056, %v6046, 2102212464
        %v6059 = vsel %vm6055, %v6043, %v6058
        %v6060 = vsel %vm6054, %v6057, %v6059
        %v6061 = vsel %vm6053, %v6040, %v6043
        %v6062 = vsel %vm6056, %v6049, 920167782
        %v6063 = vsel %vm6055, %v6046, %v6062
        %v6064 = vsel %vm6054, %v6061, %v6063
        %v6065 = vsel %vm6053, %v6043, %v6046
        %v6066 = vsel %vm6056, %v6052, 1326507024
        %v6067 = vsel %vm6055, %v6049, %v6066
        %v6068 = vsel %vm6054, %v6065, %v6067
        %v6069 = vshll.u32 %v6029, 8
        %v6070 = vmul.u32.u64.compose %v6069, %v6068
        %v6071 = vextract.low.u32 %v6070
        %v6072 = vextract.high.u32 %v6070
        %v6073 = vmul.u32.u64.compose %v6069, %v6064
        %v6074 = vextract.low.u32 %v6073
        %v6075 = vextract.high.u32 %v6073
        %v6076 = vmul.u32 %v6069, %v6060
        %v6077 = vadd.s32 %v6072, %v6074
        %vm6078 = vc.u32 %v6072, %v6074
        %v6079 = vadd.s32 %v6075, 1
        %v6080 = vsel %vm6078, %v6079, %v6075
        %v6081 = vadd.s32 %v6076, %v6080
        %v6082 = vadd.s32 %v6081, 536870912
        %v6083 = vshrl.u32 %v6082, 30
        %v6084 = vshll.u32 %v6083, 30
        %v6085 = vsub.s32 %v6081, %v6084
        %vm6086 = vcmp.lt.s32.totalorder %v6085, 0
        %v6087 = vsub.s32 0, %v6085
        %v6088 = vsel %vm6086, %v6087, %v6085
        %v6089 = vclz %v6088
        %v6090 = vsub.s32 %v6089, 2
        %vm6091 = vcmp.gt.s32.totalorder 0, %v6090
        %v6092 = vsel %vm6091, 0, %v6090
        %v6093 = vsub.s32 32, %v6092
        %v6094 = vshll.u32 %v6085, %v6092
        %v6095 = vshrl.u32 %v6077, %v6093
        %v6096 = vor.u32 %v6094, %v6095
        %v6097 = vsub.s32 4294967266, %v6092
        %v6098 = vadd.s32 %v6097, 127
        %v6099 = vshll.u32 %v6098, 23
        %v6100 = vor.u32 4788187, %v6099
        %v6101 = vand.u32 2147483647, %v6100
        %v6103 = vcvt.s32.f32 %v6096
        %v6104 = vmul.f32 %v6103, %v6101
        %v6105 = vxor.u32 %v6104, 2147483648
        %v6106 = vsel %vm6023, %v6105, %v6104
        %v6107 = vsub.s32 4, %v6083
        %v6108 = vsel %vm6023, %v6107, %v6083
        %v6109 = vsel %vm6022, %v427, %v6106
        %v6110 = vsel %vm6022, 0, %v6108
        %v6111 = vcosq.f32.pop %v6109
        %v6112 = vsinq.f32.pop %v6109
        %vm6113 = vweird.f32 %v427
        %v6114 = vadd.s32 %v6110, 3
        %v6115 = vand.u32 %v6114, 3
        %vm6116 = vcmp.lt.s32.totalorder %v6115, 2
        %vm6117 = vcmp.eq.s32.totalorder %v6115, 0
        %v6118 = vxor.u32 %v6112, 2147483648
        %v6119 = vsel %vm6117, %v6111, %v6118
        %vm6120 = vcmp.eq.s32.totalorder %v6115, 2
        %v6121 = vxor.u32 %v6111, 2147483648
        %v6122 = vsel %vm6120, %v6121, %v6112
        %v6123 = vsel %vm6116, %v6119, %v6122
        %v6124 = vsel %vm6113, nan, %v6123
        %v6125 = vand.u32 2147483647, %v428
        %vm6126 = vcmp.le.f32.partialorder %v6125, 0.7853982
        %vm6127 = vcmp.lt.s32.totalorder %v428, 0
        %v6128 = vand.u32 %v428, 2139095040
        %v6129 = vshrl.u32 %v6128, 23
        %v6130 = vsub.s32 %v6129, 127
        %v6131 = vand.u32 2147483647, %v428
        %v6132 = vand.u32 %v6131, 8388607
        %v6133 = vor.u32 %v6132, 8388608
        %v6134 = vsub.s32 0, %v6133
        %v6135 = vadd.s32 %v6130, 1
        %vm6136 = vcmp.gt.s32.totalorder %v6135, 0
        %v6137 = vsel %vm6136, %v6135, 0
        %v6138 = vshrl.u32 %v6137, 5
        %v6139 = vand.u32 %v6137, 31
        %v6140 = vsub.s32 32, %v6139
        %v6141 = vshrl.u32 683565275, %v6140
        %v6142 = vshll.u32 683565275, %v6139
        %v6143 = vshrl.u32 2475754826, %v6140
        %v6144 = vor.u32 %v6142, %v6143
        %v6145 = vshll.u32 2475754826, %v6139
        %v6146 = vshrl.u32 2131351028, %v6140
        %v6147 = vor.u32 %v6145, %v6146
        %v6148 = vshll.u32 2131351028, %v6139
        %v6149 = vshrl.u32 2102212464, %v6140
        %v6150 = vor.u32 %v6148, %v6149
        %v6151 = vshll.u32 2102212464, %v6139
        %v6152 = vshrl.u32 920167782, %v6140
        %v6153 = vor.u32 %v6151, %v6152
        %v6154 = vshll.u32 920167782, %v6139
        %v6155 = vshrl.u32 1326507024, %v6140
        %v6156 = vor.u32 %v6154, %v6155
        %vm6157 = vcmp.lt.s32.totalorder %v6138, 1
        %vm6158 = vcmp.lt.s32.totalorder %v6138, 2
        %vm6159 = vcmp.lt.s32.totalorder %v6138, 3
        %vm6160 = vcmp.lt.s32.totalorder %v6138, 4
        %v6161 = vsel %vm6157, %v6141, %v6144
        %v6162 = vsel %vm6160, %v6150, 2102212464
        %v6163 = vsel %vm6159, %v6147, %v6162
        %v6164 = vsel %vm6158, %v6161, %v6163
        %v6165 = vsel %vm6157, %v6144, %v6147
        %v6166 = vsel %vm6160, %v6153, 920167782
        %v6167 = vsel %vm6159, %v6150, %v6166
        %v6168 = vsel %vm6158, %v6165, %v6167
        %v6169 = vsel %vm6157, %v6147, %v6150
        %v6170 = vsel %vm6160, %v6156, 1326507024
        %v6171 = vsel %vm6159, %v6153, %v6170
        %v6172 = vsel %vm6158, %v6169, %v6171
        %v6173 = vshll.u32 %v6133, 8
        %v6174 = vmul.u32.u64.compose %v6173, %v6172
        %v6175 = vextract.low.u32 %v6174
        %v6176 = vextract.high.u32 %v6174
        %v6177 = vmul.u32.u64.compose %v6173, %v6168
        %v6178 = vextract.low.u32 %v6177
        %v6179 = vextract.high.u32 %v6177
        %v6180 = vmul.u32 %v6173, %v6164
        %v6181 = vadd.s32 %v6176, %v6178
        %vm6182 = vc.u32 %v6176, %v6178
        %v6183 = vadd.s32 %v6179, 1
        %v6184 = vsel %vm6182, %v6183, %v6179
        %v6185 = vadd.s32 %v6180, %v6184
        %v6186 = vadd.s32 %v6185, 536870912
        %v6187 = vshrl.u32 %v6186, 30
        %v6188 = vshll.u32 %v6187, 30
        %v6189 = vsub.s32 %v6185, %v6188
        %vm6190 = vcmp.lt.s32.totalorder %v6189, 0
        %v6191 = vsub.s32 0, %v6189
        %v6192 = vsel %vm6190, %v6191, %v6189
        %v6193 = vclz %v6192
        %v6194 = vsub.s32 %v6193, 2
        %vm6195 = vcmp.gt.s32.totalorder 0, %v6194
        %v6196 = vsel %vm6195, 0, %v6194
        %v6197 = vsub.s32 32, %v6196
        %v6198 = vshll.u32 %v6189, %v6196
        %v6199 = vshrl.u32 %v6181, %v6197
        %v6200 = vor.u32 %v6198, %v6199
        %v6201 = vsub.s32 4294967266, %v6196
        %v6202 = vadd.s32 %v6201, 127
        %v6203 = vshll.u32 %v6202, 23
        %v6204 = vor.u32 4788187, %v6203
        %v6205 = vand.u32 2147483647, %v6204
        %v6207 = vcvt.s32.f32 %v6200
        %v6208 = vmul.f32 %v6207, %v6205
        %v6209 = vxor.u32 %v6208, 2147483648
        %v6210 = vsel %vm6127, %v6209, %v6208
        %v6211 = vsub.s32 4, %v6187
        %v6212 = vsel %vm6127, %v6211, %v6187
        %v6213 = vsel %vm6126, %v428, %v6210
        %v6214 = vsel %vm6126, 0, %v6212
        %v6215 = vcosq.f32.pop %v6213
        %v6216 = vsinq.f32.pop %v6213
        %vm6217 = vweird.f32 %v428
        %v6218 = vadd.s32 %v6214, 3
        %v6219 = vand.u32 %v6218, 3
        %vm6220 = vcmp.lt.s32.totalorder %v6219, 2
        %vm6221 = vcmp.eq.s32.totalorder %v6219, 0
        %v6222 = vxor.u32 %v6216, 2147483648
        %v6223 = vsel %vm6221, %v6215, %v6222
        %vm6224 = vcmp.eq.s32.totalorder %v6219, 2
        %v6225 = vxor.u32 %v6215, 2147483648
        %v6226 = vsel %vm6224, %v6225, %v6216
        %v6227 = vsel %vm6220, %v6223, %v6226
        %v6228 = vsel %vm6217, nan, %v6227
        %v6229 = vand.u32 2147483647, %v429
        %vm6230 = vcmp.le.f32.partialorder %v6229, 0.7853982
        %vm6231 = vcmp.lt.s32.totalorder %v429, 0
        %v6232 = vand.u32 %v429, 2139095040
        %v6233 = vshrl.u32 %v6232, 23
        %v6234 = vsub.s32 %v6233, 127
        %v6235 = vand.u32 2147483647, %v429
        %v6236 = vand.u32 %v6235, 8388607
        %v6237 = vor.u32 %v6236, 8388608
        %v6238 = vsub.s32 0, %v6237
        %v6239 = vadd.s32 %v6234, 1
        %vm6240 = vcmp.gt.s32.totalorder %v6239, 0
        %v6241 = vsel %vm6240, %v6239, 0
        %v6242 = vshrl.u32 %v6241, 5
        %v6243 = vand.u32 %v6241, 31
        %v6244 = vsub.s32 32, %v6243
        %v6245 = vshrl.u32 683565275, %v6244
        %v6246 = vshll.u32 683565275, %v6243
        %v6247 = vshrl.u32 2475754826, %v6244
        %v6248 = vor.u32 %v6246, %v6247
        %v6249 = vshll.u32 2475754826, %v6243
        %v6250 = vshrl.u32 2131351028, %v6244
        %v6251 = vor.u32 %v6249, %v6250
        %v6252 = vshll.u32 2131351028, %v6243
        %v6253 = vshrl.u32 2102212464, %v6244
        %v6254 = vor.u32 %v6252, %v6253
        %v6255 = vshll.u32 2102212464, %v6243
        %v6256 = vshrl.u32 920167782, %v6244
        %v6257 = vor.u32 %v6255, %v6256
        %v6258 = vshll.u32 920167782, %v6243
        %v6259 = vshrl.u32 1326507024, %v6244
        %v6260 = vor.u32 %v6258, %v6259
        %vm6261 = vcmp.lt.s32.totalorder %v6242, 1
        %vm6262 = vcmp.lt.s32.totalorder %v6242, 2
        %vm6263 = vcmp.lt.s32.totalorder %v6242, 3
        %vm6264 = vcmp.lt.s32.totalorder %v6242, 4
        %v6265 = vsel %vm6261, %v6245, %v6248
        %v6266 = vsel %vm6264, %v6254, 2102212464
        %v6267 = vsel %vm6263, %v6251, %v6266
        %v6268 = vsel %vm6262, %v6265, %v6267
        %v6269 = vsel %vm6261, %v6248, %v6251
        %v6270 = vsel %vm6264, %v6257, 920167782
        %v6271 = vsel %vm6263, %v6254, %v6270
        %v6272 = vsel %vm6262, %v6269, %v6271
        %v6273 = vsel %vm6261, %v6251, %v6254
        %v6274 = vsel %vm6264, %v6260, 1326507024
        %v6275 = vsel %vm6263, %v6257, %v6274
        %v6276 = vsel %vm6262, %v6273, %v6275
        %v6277 = vshll.u32 %v6237, 8
        %v6278 = vmul.u32.u64.compose %v6277, %v6276
        %v6279 = vextract.low.u32 %v6278
        %v6280 = vextract.high.u32 %v6278
        %v6281 = vmul.u32.u64.compose %v6277, %v6272
        %v6282 = vextract.low.u32 %v6281
        %v6283 = vextract.high.u32 %v6281
        %v6284 = vmul.u32 %v6277, %v6268
        %v6285 = vadd.s32 %v6280, %v6282
        %vm6286 = vc.u32 %v6280, %v6282
        %v6287 = vadd.s32 %v6283, 1
        %v6288 = vsel %vm6286, %v6287, %v6283
        %v6289 = vadd.s32 %v6284, %v6288
        %v6290 = vadd.s32 %v6289, 536870912
        %v6291 = vshrl.u32 %v6290, 30
        %v6292 = vshll.u32 %v6291, 30
        %v6293 = vsub.s32 %v6289, %v6292
        %vm6294 = vcmp.lt.s32.totalorder %v6293, 0
        %v6295 = vsub.s32 0, %v6293
        %v6296 = vsel %vm6294, %v6295, %v6293
        %v6297 = vclz %v6296
        %v6298 = vsub.s32 %v6297, 2
        %vm6299 = vcmp.gt.s32.totalorder 0, %v6298
        %v6300 = vsel %vm6299, 0, %v6298
        %v6301 = vsub.s32 32, %v6300
        %v6302 = vshll.u32 %v6293, %v6300
        %v6303 = vshrl.u32 %v6285, %v6301
        %v6304 = vor.u32 %v6302, %v6303
        %v6305 = vsub.s32 4294967266, %v6300
        %v6306 = vadd.s32 %v6305, 127
        %v6307 = vshll.u32 %v6306, 23
        %v6308 = vor.u32 4788187, %v6307
        %v6309 = vand.u32 2147483647, %v6308
        %v6311 = vcvt.s32.f32 %v6304
        %v6312 = vmul.f32 %v6311, %v6309
        %v6313 = vxor.u32 %v6312, 2147483648
        %v6314 = vsel %vm6231, %v6313, %v6312
        %v6315 = vsub.s32 4, %v6291
        %v6316 = vsel %vm6231, %v6315, %v6291
        %v6317 = vsel %vm6230, %v429, %v6314
        %v6318 = vsel %vm6230, 0, %v6316
        %v6319 = vcosq.f32.pop %v6317
        %v6320 = vsinq.f32.pop %v6317
        %vm6321 = vweird.f32 %v429
        %v6322 = vadd.s32 %v6318, 3
        %v6323 = vand.u32 %v6322, 3
        %vm6324 = vcmp.lt.s32.totalorder %v6323, 2
        %vm6325 = vcmp.eq.s32.totalorder %v6323, 0
        %v6326 = vxor.u32 %v6320, 2147483648
        %v6327 = vsel %vm6325, %v6319, %v6326
        %vm6328 = vcmp.eq.s32.totalorder %v6323, 2
        %v6329 = vxor.u32 %v6319, 2147483648
        %v6330 = vsel %vm6328, %v6329, %v6320
        %v6331 = vsel %vm6324, %v6327, %v6330
        %v6332 = vsel %vm6321, nan, %v6331
        %v6333 = vand.u32 2147483647, %v430
        %vm6334 = vcmp.le.f32.partialorder %v6333, 0.7853982
        %vm6335 = vcmp.lt.s32.totalorder %v430, 0
        %v6336 = vand.u32 %v430, 2139095040
        %v6337 = vshrl.u32 %v6336, 23
        %v6338 = vsub.s32 %v6337, 127
        %v6339 = vand.u32 2147483647, %v430
        %v6340 = vand.u32 %v6339, 8388607
        %v6341 = vor.u32 %v6340, 8388608
        %v6342 = vsub.s32 0, %v6341
        %v6343 = vadd.s32 %v6338, 1
        %vm6344 = vcmp.gt.s32.totalorder %v6343, 0
        %v6345 = vsel %vm6344, %v6343, 0
        %v6346 = vshrl.u32 %v6345, 5
        %v6347 = vand.u32 %v6345, 31
        %v6348 = vsub.s32 32, %v6347
        %v6349 = vshrl.u32 683565275, %v6348
        %v6350 = vshll.u32 683565275, %v6347
        %v6351 = vshrl.u32 2475754826, %v6348
        %v6352 = vor.u32 %v6350, %v6351
        %v6353 = vshll.u32 2475754826, %v6347
        %v6354 = vshrl.u32 2131351028, %v6348
        %v6355 = vor.u32 %v6353, %v6354
        %v6356 = vshll.u32 2131351028, %v6347
        %v6357 = vshrl.u32 2102212464, %v6348
        %v6358 = vor.u32 %v6356, %v6357
        %v6359 = vshll.u32 2102212464, %v6347
        %v6360 = vshrl.u32 920167782, %v6348
        %v6361 = vor.u32 %v6359, %v6360
        %v6362 = vshll.u32 920167782, %v6347
        %v6363 = vshrl.u32 1326507024, %v6348
        %v6364 = vor.u32 %v6362, %v6363
        %vm6365 = vcmp.lt.s32.totalorder %v6346, 1
        %vm6366 = vcmp.lt.s32.totalorder %v6346, 2
        %vm6367 = vcmp.lt.s32.totalorder %v6346, 3
        %vm6368 = vcmp.lt.s32.totalorder %v6346, 4
        %v6369 = vsel %vm6365, %v6349, %v6352
        %v6370 = vsel %vm6368, %v6358, 2102212464
        %v6371 = vsel %vm6367, %v6355, %v6370
        %v6372 = vsel %vm6366, %v6369, %v6371
        %v6373 = vsel %vm6365, %v6352, %v6355
        %v6374 = vsel %vm6368, %v6361, 920167782
        %v6375 = vsel %vm6367, %v6358, %v6374
        %v6376 = vsel %vm6366, %v6373, %v6375
        %v6377 = vsel %vm6365, %v6355, %v6358
        %v6378 = vsel %vm6368, %v6364, 1326507024
        %v6379 = vsel %vm6367, %v6361, %v6378
        %v6380 = vsel %vm6366, %v6377, %v6379
        %v6381 = vshll.u32 %v6341, 8
        %v6382 = vmul.u32.u64.compose %v6381, %v6380
        %v6383 = vextract.low.u32 %v6382
        %v6384 = vextract.high.u32 %v6382
        %v6385 = vmul.u32.u64.compose %v6381, %v6376
        %v6386 = vextract.low.u32 %v6385
        %v6387 = vextract.high.u32 %v6385
        %v6388 = vmul.u32 %v6381, %v6372
        %v6389 = vadd.s32 %v6384, %v6386
        %vm6390 = vc.u32 %v6384, %v6386
        %v6391 = vadd.s32 %v6387, 1
        %v6392 = vsel %vm6390, %v6391, %v6387
        %v6393 = vadd.s32 %v6388, %v6392
        %v6394 = vadd.s32 %v6393, 536870912
        %v6395 = vshrl.u32 %v6394, 30
        %v6396 = vshll.u32 %v6395, 30
        %v6397 = vsub.s32 %v6393, %v6396
        %vm6398 = vcmp.lt.s32.totalorder %v6397, 0
        %v6399 = vsub.s32 0, %v6397
        %v6400 = vsel %vm6398, %v6399, %v6397
        %v6401 = vclz %v6400
        %v6402 = vsub.s32 %v6401, 2
        %vm6403 = vcmp.gt.s32.totalorder 0, %v6402
        %v6404 = vsel %vm6403, 0, %v6402
        %v6405 = vsub.s32 32, %v6404
        %v6406 = vshll.u32 %v6397, %v6404
        %v6407 = vshrl.u32 %v6389, %v6405
        %v6408 = vor.u32 %v6406, %v6407
        %v6409 = vsub.s32 4294967266, %v6404
        %v6410 = vadd.s32 %v6409, 127
        %v6411 = vshll.u32 %v6410, 23
        %v6412 = vor.u32 4788187, %v6411
        %v6413 = vand.u32 2147483647, %v6412
        %v6415 = vcvt.s32.f32 %v6408
        %v6416 = vmul.f32 %v6415, %v6413
        %v6417 = vxor.u32 %v6416, 2147483648
        %v6418 = vsel %vm6335, %v6417, %v6416
        %v6419 = vsub.s32 4, %v6395
        %v6420 = vsel %vm6335, %v6419, %v6395
        %v6421 = vsel %vm6334, %v430, %v6418
        %v6422 = vsel %vm6334, 0, %v6420
        %v6423 = vcosq.f32.pop %v6421
        %v6424 = vsinq.f32.pop %v6421
        %vm6425 = vweird.f32 %v430
        %v6426 = vadd.s32 %v6422, 3
        %v6427 = vand.u32 %v6426, 3
        %vm6428 = vcmp.lt.s32.totalorder %v6427, 2
        %vm6429 = vcmp.eq.s32.totalorder %v6427, 0
        %v6430 = vxor.u32 %v6424, 2147483648
        %v6431 = vsel %vm6429, %v6423, %v6430
        %vm6432 = vcmp.eq.s32.totalorder %v6427, 2
        %v6433 = vxor.u32 %v6423, 2147483648
        %v6434 = vsel %vm6432, %v6433, %v6424
        %v6435 = vsel %vm6428, %v6431, %v6434
        %v6436 = vsel %vm6425, nan, %v6435
        %v6437 = vand.u32 2147483647, %v431
        %vm6438 = vcmp.le.f32.partialorder %v6437, 0.7853982
        %vm6439 = vcmp.lt.s32.totalorder %v431, 0
        %v6440 = vand.u32 %v431, 2139095040
        %v6441 = vshrl.u32 %v6440, 23
        %v6442 = vsub.s32 %v6441, 127
        %v6443 = vand.u32 2147483647, %v431
        %v6444 = vand.u32 %v6443, 8388607
        %v6445 = vor.u32 %v6444, 8388608
        %v6446 = vsub.s32 0, %v6445
        %v6447 = vadd.s32 %v6442, 1
        %vm6448 = vcmp.gt.s32.totalorder %v6447, 0
        %v6449 = vsel %vm6448, %v6447, 0
        %v6450 = vshrl.u32 %v6449, 5
        %v6451 = vand.u32 %v6449, 31
        %v6452 = vsub.s32 32, %v6451
        %v6453 = vshrl.u32 683565275, %v6452
        %v6454 = vshll.u32 683565275, %v6451
        %v6455 = vshrl.u32 2475754826, %v6452
        %v6456 = vor.u32 %v6454, %v6455
        %v6457 = vshll.u32 2475754826, %v6451
        %v6458 = vshrl.u32 2131351028, %v6452
        %v6459 = vor.u32 %v6457, %v6458
        %v6460 = vshll.u32 2131351028, %v6451
        %v6461 = vshrl.u32 2102212464, %v6452
        %v6462 = vor.u32 %v6460, %v6461
        %v6463 = vshll.u32 2102212464, %v6451
        %v6464 = vshrl.u32 920167782, %v6452
        %v6465 = vor.u32 %v6463, %v6464
        %v6466 = vshll.u32 920167782, %v6451
        %v6467 = vshrl.u32 1326507024, %v6452
        %v6468 = vor.u32 %v6466, %v6467
        %vm6469 = vcmp.lt.s32.totalorder %v6450, 1
        %vm6470 = vcmp.lt.s32.totalorder %v6450, 2
        %vm6471 = vcmp.lt.s32.totalorder %v6450, 3
        %vm6472 = vcmp.lt.s32.totalorder %v6450, 4
        %v6473 = vsel %vm6469, %v6453, %v6456
        %v6474 = vsel %vm6472, %v6462, 2102212464
        %v6475 = vsel %vm6471, %v6459, %v6474
        %v6476 = vsel %vm6470, %v6473, %v6475
        %v6477 = vsel %vm6469, %v6456, %v6459
        %v6478 = vsel %vm6472, %v6465, 920167782
        %v6479 = vsel %vm6471, %v6462, %v6478
        %v6480 = vsel %vm6470, %v6477, %v6479
        %v6481 = vsel %vm6469, %v6459, %v6462
        %v6482 = vsel %vm6472, %v6468, 1326507024
        %v6483 = vsel %vm6471, %v6465, %v6482
        %v6484 = vsel %vm6470, %v6481, %v6483
        %v6485 = vshll.u32 %v6445, 8
        %v6486 = vmul.u32.u64.compose %v6485, %v6484
        %v6487 = vextract.low.u32 %v6486
        %v6488 = vextract.high.u32 %v6486
        %v6489 = vmul.u32.u64.compose %v6485, %v6480
        %v6490 = vextract.low.u32 %v6489
        %v6491 = vextract.high.u32 %v6489
        %v6492 = vmul.u32 %v6485, %v6476
        %v6493 = vadd.s32 %v6488, %v6490
        %vm6494 = vc.u32 %v6488, %v6490
        %v6495 = vadd.s32 %v6491, 1
        %v6496 = vsel %vm6494, %v6495, %v6491
        %v6497 = vadd.s32 %v6492, %v6496
        %v6498 = vadd.s32 %v6497, 536870912
        %v6499 = vshrl.u32 %v6498, 30
        %v6500 = vshll.u32 %v6499, 30
        %v6501 = vsub.s32 %v6497, %v6500
        %vm6502 = vcmp.lt.s32.totalorder %v6501, 0
        %v6503 = vsub.s32 0, %v6501
        %v6504 = vsel %vm6502, %v6503, %v6501
        %v6505 = vclz %v6504
        %v6506 = vsub.s32 %v6505, 2
        %vm6507 = vcmp.gt.s32.totalorder 0, %v6506
        %v6508 = vsel %vm6507, 0, %v6506
        %v6509 = vsub.s32 32, %v6508
        %v6510 = vshll.u32 %v6501, %v6508
        %v6511 = vshrl.u32 %v6493, %v6509
        %v6512 = vor.u32 %v6510, %v6511
        %v6513 = vsub.s32 4294967266, %v6508
        %v6514 = vadd.s32 %v6513, 127
        %v6515 = vshll.u32 %v6514, 23
        %v6516 = vor.u32 4788187, %v6515
        %v6517 = vand.u32 2147483647, %v6516
        %v6519 = vcvt.s32.f32 %v6512
        %v6520 = vmul.f32 %v6519, %v6517
        %v6521 = vxor.u32 %v6520, 2147483648
        %v6522 = vsel %vm6439, %v6521, %v6520
        %v6523 = vsub.s32 4, %v6499
        %v6524 = vsel %vm6439, %v6523, %v6499
        %v6525 = vsel %vm6438, %v431, %v6522
        %v6526 = vsel %vm6438, 0, %v6524
        %v6527 = vcosq.f32.pop %v6525
        %v6528 = vsinq.f32.pop %v6525
        %vm6529 = vweird.f32 %v431
        %v6530 = vadd.s32 %v6526, 3
        %v6531 = vand.u32 %v6530, 3
        %vm6532 = vcmp.lt.s32.totalorder %v6531, 2
        %vm6533 = vcmp.eq.s32.totalorder %v6531, 0
        %v6534 = vxor.u32 %v6528, 2147483648
        %v6535 = vsel %vm6533, %v6527, %v6534
        %vm6536 = vcmp.eq.s32.totalorder %v6531, 2
        %v6537 = vxor.u32 %v6527, 2147483648
        %v6538 = vsel %vm6536, %v6537, %v6528
        %v6539 = vsel %vm6532, %v6535, %v6538
        %v6540 = vsel %vm6529, nan, %v6539
        %v6541 = vand.u32 2147483647, %v432
        %vm6542 = vcmp.le.f32.partialorder %v6541, 0.7853982
        %vm6543 = vcmp.lt.s32.totalorder %v432, 0
        %v6544 = vand.u32 %v432, 2139095040
        %v6545 = vshrl.u32 %v6544, 23
        %v6546 = vsub.s32 %v6545, 127
        %v6547 = vand.u32 2147483647, %v432
        %v6548 = vand.u32 %v6547, 8388607
        %v6549 = vor.u32 %v6548, 8388608
        %v6550 = vsub.s32 0, %v6549
        %v6551 = vadd.s32 %v6546, 1
        %vm6552 = vcmp.gt.s32.totalorder %v6551, 0
        %v6553 = vsel %vm6552, %v6551, 0
        %v6554 = vshrl.u32 %v6553, 5
        %v6555 = vand.u32 %v6553, 31
        %v6556 = vsub.s32 32, %v6555
        %v6557 = vshrl.u32 683565275, %v6556
        %v6558 = vshll.u32 683565275, %v6555
        %v6559 = vshrl.u32 2475754826, %v6556
        %v6560 = vor.u32 %v6558, %v6559
        %v6561 = vshll.u32 2475754826, %v6555
        %v6562 = vshrl.u32 2131351028, %v6556
        %v6563 = vor.u32 %v6561, %v6562
        %v6564 = vshll.u32 2131351028, %v6555
        %v6565 = vshrl.u32 2102212464, %v6556
        %v6566 = vor.u32 %v6564, %v6565
        %v6567 = vshll.u32 2102212464, %v6555
        %v6568 = vshrl.u32 920167782, %v6556
        %v6569 = vor.u32 %v6567, %v6568
        %v6570 = vshll.u32 920167782, %v6555
        %v6571 = vshrl.u32 1326507024, %v6556
        %v6572 = vor.u32 %v6570, %v6571
        %vm6573 = vcmp.lt.s32.totalorder %v6554, 1
        %vm6574 = vcmp.lt.s32.totalorder %v6554, 2
        %vm6575 = vcmp.lt.s32.totalorder %v6554, 3
        %vm6576 = vcmp.lt.s32.totalorder %v6554, 4
        %v6577 = vsel %vm6573, %v6557, %v6560
        %v6578 = vsel %vm6576, %v6566, 2102212464
        %v6579 = vsel %vm6575, %v6563, %v6578
        %v6580 = vsel %vm6574, %v6577, %v6579
        %v6581 = vsel %vm6573, %v6560, %v6563
        %v6582 = vsel %vm6576, %v6569, 920167782
        %v6583 = vsel %vm6575, %v6566, %v6582
        %v6584 = vsel %vm6574, %v6581, %v6583
        %v6585 = vsel %vm6573, %v6563, %v6566
        %v6586 = vsel %vm6576, %v6572, 1326507024
        %v6587 = vsel %vm6575, %v6569, %v6586
        %v6588 = vsel %vm6574, %v6585, %v6587
        %v6589 = vshll.u32 %v6549, 8
        %v6590 = vmul.u32.u64.compose %v6589, %v6588
        %v6591 = vextract.low.u32 %v6590
        %v6592 = vextract.high.u32 %v6590
        %v6593 = vmul.u32.u64.compose %v6589, %v6584
        %v6594 = vextract.low.u32 %v6593
        %v6595 = vextract.high.u32 %v6593
        %v6596 = vmul.u32 %v6589, %v6580
        %v6597 = vadd.s32 %v6592, %v6594
        %vm6598 = vc.u32 %v6592, %v6594
        %v6599 = vadd.s32 %v6595, 1
        %v6600 = vsel %vm6598, %v6599, %v6595
        %v6601 = vadd.s32 %v6596, %v6600
        %v6602 = vadd.s32 %v6601, 536870912
        %v6603 = vshrl.u32 %v6602, 30
        %v6604 = vshll.u32 %v6603, 30
        %v6605 = vsub.s32 %v6601, %v6604
        %vm6606 = vcmp.lt.s32.totalorder %v6605, 0
        %v6607 = vsub.s32 0, %v6605
        %v6608 = vsel %vm6606, %v6607, %v6605
        %v6609 = vclz %v6608
        %v6610 = vsub.s32 %v6609, 2
        %vm6611 = vcmp.gt.s32.totalorder 0, %v6610
        %v6612 = vsel %vm6611, 0, %v6610
        %v6613 = vsub.s32 32, %v6612
        %v6614 = vshll.u32 %v6605, %v6612
        %v6615 = vshrl.u32 %v6597, %v6613
        %v6616 = vor.u32 %v6614, %v6615
        %v6617 = vsub.s32 4294967266, %v6612
        %v6618 = vadd.s32 %v6617, 127
        %v6619 = vshll.u32 %v6618, 23
        %v6620 = vor.u32 4788187, %v6619
        %v6621 = vand.u32 2147483647, %v6620
        %v6623 = vcvt.s32.f32 %v6616
        %v6624 = vmul.f32 %v6623, %v6621
        %v6625 = vxor.u32 %v6624, 2147483648
        %v6626 = vsel %vm6543, %v6625, %v6624
        %v6627 = vsub.s32 4, %v6603
        %v6628 = vsel %vm6543, %v6627, %v6603
        %v6629 = vsel %vm6542, %v432, %v6626
        %v6630 = vsel %vm6542, 0, %v6628
        %v6631 = vcosq.f32.pop %v6629
        %v6632 = vsinq.f32.pop %v6629
        %vm6633 = vweird.f32 %v432
        %v6634 = vadd.s32 %v6630, 3
        %v6635 = vand.u32 %v6634, 3
        %vm6636 = vcmp.lt.s32.totalorder %v6635, 2
        %vm6637 = vcmp.eq.s32.totalorder %v6635, 0
        %v6638 = vxor.u32 %v6632, 2147483648
        %v6639 = vsel %vm6637, %v6631, %v6638
        %vm6640 = vcmp.eq.s32.totalorder %v6635, 2
        %v6641 = vxor.u32 %v6631, 2147483648
        %v6642 = vsel %vm6640, %v6641, %v6632
        %v6643 = vsel %vm6636, %v6639, %v6642
        %v6644 = vsel %vm6633, nan, %v6643
        %v6645 = vand.u32 2147483647, %v433
        %vm6646 = vcmp.le.f32.partialorder %v6645, 0.7853982
        %vm6647 = vcmp.lt.s32.totalorder %v433, 0
        %v6648 = vand.u32 %v433, 2139095040
        %v6649 = vshrl.u32 %v6648, 23
        %v6650 = vsub.s32 %v6649, 127
        %v6651 = vand.u32 2147483647, %v433
        %v6652 = vand.u32 %v6651, 8388607
        %v6653 = vor.u32 %v6652, 8388608
        %v6654 = vsub.s32 0, %v6653
        %v6655 = vadd.s32 %v6650, 1
        %vm6656 = vcmp.gt.s32.totalorder %v6655, 0
        %v6657 = vsel %vm6656, %v6655, 0
        %v6658 = vshrl.u32 %v6657, 5
        %v6659 = vand.u32 %v6657, 31
        %v6660 = vsub.s32 32, %v6659
        %v6661 = vshrl.u32 683565275, %v6660
        %v6662 = vshll.u32 683565275, %v6659
        %v6663 = vshrl.u32 2475754826, %v6660
        %v6664 = vor.u32 %v6662, %v6663
        %v6665 = vshll.u32 2475754826, %v6659
        %v6666 = vshrl.u32 2131351028, %v6660
        %v6667 = vor.u32 %v6665, %v6666
        %v6668 = vshll.u32 2131351028, %v6659
        %v6669 = vshrl.u32 2102212464, %v6660
        %v6670 = vor.u32 %v6668, %v6669
        %v6671 = vshll.u32 2102212464, %v6659
        %v6672 = vshrl.u32 920167782, %v6660
        %v6673 = vor.u32 %v6671, %v6672
        %v6674 = vshll.u32 920167782, %v6659
        %v6675 = vshrl.u32 1326507024, %v6660
        %v6676 = vor.u32 %v6674, %v6675
        %vm6677 = vcmp.lt.s32.totalorder %v6658, 1
        %vm6678 = vcmp.lt.s32.totalorder %v6658, 2
        %vm6679 = vcmp.lt.s32.totalorder %v6658, 3
        %vm6680 = vcmp.lt.s32.totalorder %v6658, 4
        %v6681 = vsel %vm6677, %v6661, %v6664
        %v6682 = vsel %vm6680, %v6670, 2102212464
        %v6683 = vsel %vm6679, %v6667, %v6682
        %v6684 = vsel %vm6678, %v6681, %v6683
        %v6685 = vsel %vm6677, %v6664, %v6667
        %v6686 = vsel %vm6680, %v6673, 920167782
        %v6687 = vsel %vm6679, %v6670, %v6686
        %v6688 = vsel %vm6678, %v6685, %v6687
        %v6689 = vsel %vm6677, %v6667, %v6670
        %v6690 = vsel %vm6680, %v6676, 1326507024
        %v6691 = vsel %vm6679, %v6673, %v6690
        %v6692 = vsel %vm6678, %v6689, %v6691
        %v6693 = vshll.u32 %v6653, 8
        %v6694 = vmul.u32.u64.compose %v6693, %v6692
        %v6695 = vextract.low.u32 %v6694
        %v6696 = vextract.high.u32 %v6694
        %v6697 = vmul.u32.u64.compose %v6693, %v6688
        %v6698 = vextract.low.u32 %v6697
        %v6699 = vextract.high.u32 %v6697
        %v6700 = vmul.u32 %v6693, %v6684
        %v6701 = vadd.s32 %v6696, %v6698
        %vm6702 = vc.u32 %v6696, %v6698
        %v6703 = vadd.s32 %v6699, 1
        %v6704 = vsel %vm6702, %v6703, %v6699
        %v6705 = vadd.s32 %v6700, %v6704
        %v6706 = vadd.s32 %v6705, 536870912
        %v6707 = vshrl.u32 %v6706, 30
        %v6708 = vshll.u32 %v6707, 30
        %v6709 = vsub.s32 %v6705, %v6708
        %vm6710 = vcmp.lt.s32.totalorder %v6709, 0
        %v6711 = vsub.s32 0, %v6709
        %v6712 = vsel %vm6710, %v6711, %v6709
        %v6713 = vclz %v6712
        %v6714 = vsub.s32 %v6713, 2
        %vm6715 = vcmp.gt.s32.totalorder 0, %v6714
        %v6716 = vsel %vm6715, 0, %v6714
        %v6717 = vsub.s32 32, %v6716
        %v6718 = vshll.u32 %v6709, %v6716
        %v6719 = vshrl.u32 %v6701, %v6717
        %v6720 = vor.u32 %v6718, %v6719
        %v6721 = vsub.s32 4294967266, %v6716
        %v6722 = vadd.s32 %v6721, 127
        %v6723 = vshll.u32 %v6722, 23
        %v6724 = vor.u32 4788187, %v6723
        %v6725 = vand.u32 2147483647, %v6724
        %v6727 = vcvt.s32.f32 %v6720
        %v6728 = vmul.f32 %v6727, %v6725
        %v6729 = vxor.u32 %v6728, 2147483648
        %v6730 = vsel %vm6647, %v6729, %v6728
        %v6731 = vsub.s32 4, %v6707
        %v6732 = vsel %vm6647, %v6731, %v6707
        %v6733 = vsel %vm6646, %v433, %v6730
        %v6734 = vsel %vm6646, 0, %v6732
        %v6735 = vcosq.f32.pop %v6733
        %v6736 = vsinq.f32.pop %v6733
        %vm6737 = vweird.f32 %v433
        %v6738 = vadd.s32 %v6734, 3
        %v6739 = vand.u32 %v6738, 3
        %vm6740 = vcmp.lt.s32.totalorder %v6739, 2
        %vm6741 = vcmp.eq.s32.totalorder %v6739, 0
        %v6742 = vxor.u32 %v6736, 2147483648
        %v6743 = vsel %vm6741, %v6735, %v6742
        %vm6744 = vcmp.eq.s32.totalorder %v6739, 2
        %v6745 = vxor.u32 %v6735, 2147483648
        %v6746 = vsel %vm6744, %v6745, %v6736
        %v6747 = vsel %vm6740, %v6743, %v6746
        %v6748 = vsel %vm6737, nan, %v6747
        %v6749 = vand.u32 2147483647, %v434
        %vm6750 = vcmp.le.f32.partialorder %v6749, 0.7853982
        %vm6751 = vcmp.lt.s32.totalorder %v434, 0
        %v6752 = vand.u32 %v434, 2139095040
        %v6753 = vshrl.u32 %v6752, 23
        %v6754 = vsub.s32 %v6753, 127
        %v6755 = vand.u32 2147483647, %v434
        %v6756 = vand.u32 %v6755, 8388607
        %v6757 = vor.u32 %v6756, 8388608
        %v6758 = vsub.s32 0, %v6757
        %v6759 = vadd.s32 %v6754, 1
        %vm6760 = vcmp.gt.s32.totalorder %v6759, 0
        %v6761 = vsel %vm6760, %v6759, 0
        %v6762 = vshrl.u32 %v6761, 5
        %v6763 = vand.u32 %v6761, 31
        %v6764 = vsub.s32 32, %v6763
        %v6765 = vshrl.u32 683565275, %v6764
        %v6766 = vshll.u32 683565275, %v6763
        %v6767 = vshrl.u32 2475754826, %v6764
        %v6768 = vor.u32 %v6766, %v6767
        %v6769 = vshll.u32 2475754826, %v6763
        %v6770 = vshrl.u32 2131351028, %v6764
        %v6771 = vor.u32 %v6769, %v6770
        %v6772 = vshll.u32 2131351028, %v6763
        %v6773 = vshrl.u32 2102212464, %v6764
        %v6774 = vor.u32 %v6772, %v6773
        %v6775 = vshll.u32 2102212464, %v6763
        %v6776 = vshrl.u32 920167782, %v6764
        %v6777 = vor.u32 %v6775, %v6776
        %v6778 = vshll.u32 920167782, %v6763
        %v6779 = vshrl.u32 1326507024, %v6764
        %v6780 = vor.u32 %v6778, %v6779
        %vm6781 = vcmp.lt.s32.totalorder %v6762, 1
        %vm6782 = vcmp.lt.s32.totalorder %v6762, 2
        %vm6783 = vcmp.lt.s32.totalorder %v6762, 3
        %vm6784 = vcmp.lt.s32.totalorder %v6762, 4
        %v6785 = vsel %vm6781, %v6765, %v6768
        %v6786 = vsel %vm6784, %v6774, 2102212464
        %v6787 = vsel %vm6783, %v6771, %v6786
        %v6788 = vsel %vm6782, %v6785, %v6787
        %v6789 = vsel %vm6781, %v6768, %v6771
        %v6790 = vsel %vm6784, %v6777, 920167782
        %v6791 = vsel %vm6783, %v6774, %v6790
        %v6792 = vsel %vm6782, %v6789, %v6791
        %v6793 = vsel %vm6781, %v6771, %v6774
        %v6794 = vsel %vm6784, %v6780, 1326507024
        %v6795 = vsel %vm6783, %v6777, %v6794
        %v6796 = vsel %vm6782, %v6793, %v6795
        %v6797 = vshll.u32 %v6757, 8
        %v6798 = vmul.u32.u64.compose %v6797, %v6796
        %v6799 = vextract.low.u32 %v6798
        %v6800 = vextract.high.u32 %v6798
        %v6801 = vmul.u32.u64.compose %v6797, %v6792
        %v6802 = vextract.low.u32 %v6801
        %v6803 = vextract.high.u32 %v6801
        %v6804 = vmul.u32 %v6797, %v6788
        %v6805 = vadd.s32 %v6800, %v6802
        %vm6806 = vc.u32 %v6800, %v6802
        %v6807 = vadd.s32 %v6803, 1
        %v6808 = vsel %vm6806, %v6807, %v6803
        %v6809 = vadd.s32 %v6804, %v6808
        %v6810 = vadd.s32 %v6809, 536870912
        %v6811 = vshrl.u32 %v6810, 30
        %v6812 = vshll.u32 %v6811, 30
        %v6813 = vsub.s32 %v6809, %v6812
        %vm6814 = vcmp.lt.s32.totalorder %v6813, 0
        %v6815 = vsub.s32 0, %v6813
        %v6816 = vsel %vm6814, %v6815, %v6813
        %v6817 = vclz %v6816
        %v6818 = vsub.s32 %v6817, 2
        %vm6819 = vcmp.gt.s32.totalorder 0, %v6818
        %v6820 = vsel %vm6819, 0, %v6818
        %v6821 = vsub.s32 32, %v6820
        %v6822 = vshll.u32 %v6813, %v6820
        %v6823 = vshrl.u32 %v6805, %v6821
        %v6824 = vor.u32 %v6822, %v6823
        %v6825 = vsub.s32 4294967266, %v6820
        %v6826 = vadd.s32 %v6825, 127
        %v6827 = vshll.u32 %v6826, 23
        %v6828 = vor.u32 4788187, %v6827
        %v6829 = vand.u32 2147483647, %v6828
        %v6831 = vcvt.s32.f32 %v6824
        %v6832 = vmul.f32 %v6831, %v6829
        %v6833 = vxor.u32 %v6832, 2147483648
        %v6834 = vsel %vm6751, %v6833, %v6832
        %v6835 = vsub.s32 4, %v6811
        %v6836 = vsel %vm6751, %v6835, %v6811
        %v6837 = vsel %vm6750, %v434, %v6834
        %v6838 = vsel %vm6750, 0, %v6836
        %v6839 = vcosq.f32.pop %v6837
        %v6840 = vsinq.f32.pop %v6837
        %vm6841 = vweird.f32 %v434
        %v6842 = vadd.s32 %v6838, 3
        %v6843 = vand.u32 %v6842, 3
        %vm6844 = vcmp.lt.s32.totalorder %v6843, 2
        %vm6845 = vcmp.eq.s32.totalorder %v6843, 0
        %v6846 = vxor.u32 %v6840, 2147483648
        %v6847 = vsel %vm6845, %v6839, %v6846
        %vm6848 = vcmp.eq.s32.totalorder %v6843, 2
        %v6849 = vxor.u32 %v6839, 2147483648
        %v6850 = vsel %vm6848, %v6849, %v6840
        %v6851 = vsel %vm6844, %v6847, %v6850
        %v6852 = vsel %vm6841, nan, %v6851
        %v6853 = vand.u32 2147483647, %v435
        %vm6854 = vcmp.le.f32.partialorder %v6853, 0.7853982
        %vm6855 = vcmp.lt.s32.totalorder %v435, 0
        %v6856 = vand.u32 %v435, 2139095040
        %v6857 = vshrl.u32 %v6856, 23
        %v6858 = vsub.s32 %v6857, 127
        %v6859 = vand.u32 2147483647, %v435
        %v6860 = vand.u32 %v6859, 8388607
        %v6861 = vor.u32 %v6860, 8388608
        %v6862 = vsub.s32 0, %v6861
        %v6863 = vadd.s32 %v6858, 1
        %vm6864 = vcmp.gt.s32.totalorder %v6863, 0
        %v6865 = vsel %vm6864, %v6863, 0
        %v6866 = vshrl.u32 %v6865, 5
        %v6867 = vand.u32 %v6865, 31
        %v6868 = vsub.s32 32, %v6867
        %v6869 = vshrl.u32 683565275, %v6868
        %v6870 = vshll.u32 683565275, %v6867
        %v6871 = vshrl.u32 2475754826, %v6868
        %v6872 = vor.u32 %v6870, %v6871
        %v6873 = vshll.u32 2475754826, %v6867
        %v6874 = vshrl.u32 2131351028, %v6868
        %v6875 = vor.u32 %v6873, %v6874
        %v6876 = vshll.u32 2131351028, %v6867
        %v6877 = vshrl.u32 2102212464, %v6868
        %v6878 = vor.u32 %v6876, %v6877
        %v6879 = vshll.u32 2102212464, %v6867
        %v6880 = vshrl.u32 920167782, %v6868
        %v6881 = vor.u32 %v6879, %v6880
        %v6882 = vshll.u32 920167782, %v6867
        %v6883 = vshrl.u32 1326507024, %v6868
        %v6884 = vor.u32 %v6882, %v6883
        %vm6885 = vcmp.lt.s32.totalorder %v6866, 1
        %vm6886 = vcmp.lt.s32.totalorder %v6866, 2
        %vm6887 = vcmp.lt.s32.totalorder %v6866, 3
        %vm6888 = vcmp.lt.s32.totalorder %v6866, 4
        %v6889 = vsel %vm6885, %v6869, %v6872
        %v6890 = vsel %vm6888, %v6878, 2102212464
        %v6891 = vsel %vm6887, %v6875, %v6890
        %v6892 = vsel %vm6886, %v6889, %v6891
        %v6893 = vsel %vm6885, %v6872, %v6875
        %v6894 = vsel %vm6888, %v6881, 920167782
        %v6895 = vsel %vm6887, %v6878, %v6894
        %v6896 = vsel %vm6886, %v6893, %v6895
        %v6897 = vsel %vm6885, %v6875, %v6878
        %v6898 = vsel %vm6888, %v6884, 1326507024
        %v6899 = vsel %vm6887, %v6881, %v6898
        %v6900 = vsel %vm6886, %v6897, %v6899
        %v6901 = vshll.u32 %v6861, 8
        %v6902 = vmul.u32.u64.compose %v6901, %v6900
        %v6903 = vextract.low.u32 %v6902
        %v6904 = vextract.high.u32 %v6902
        %v6905 = vmul.u32.u64.compose %v6901, %v6896
        %v6906 = vextract.low.u32 %v6905
        %v6907 = vextract.high.u32 %v6905
        %v6908 = vmul.u32 %v6901, %v6892
        %v6909 = vadd.s32 %v6904, %v6906
        %vm6910 = vc.u32 %v6904, %v6906
        %v6911 = vadd.s32 %v6907, 1
        %v6912 = vsel %vm6910, %v6911, %v6907
        %v6913 = vadd.s32 %v6908, %v6912
        %v6914 = vadd.s32 %v6913, 536870912
        %v6915 = vshrl.u32 %v6914, 30
        %v6916 = vshll.u32 %v6915, 30
        %v6917 = vsub.s32 %v6913, %v6916
        %vm6918 = vcmp.lt.s32.totalorder %v6917, 0
        %v6919 = vsub.s32 0, %v6917
        %v6920 = vsel %vm6918, %v6919, %v6917
        %v6921 = vclz %v6920
        %v6922 = vsub.s32 %v6921, 2
        %vm6923 = vcmp.gt.s32.totalorder 0, %v6922
        %v6924 = vsel %vm6923, 0, %v6922
        %v6925 = vsub.s32 32, %v6924
        %v6926 = vshll.u32 %v6917, %v6924
        %v6927 = vshrl.u32 %v6909, %v6925
        %v6928 = vor.u32 %v6926, %v6927
        %v6929 = vsub.s32 4294967266, %v6924
        %v6930 = vadd.s32 %v6929, 127
        %v6931 = vshll.u32 %v6930, 23
        %v6932 = vor.u32 4788187, %v6931
        %v6933 = vand.u32 2147483647, %v6932
        %v6935 = vcvt.s32.f32 %v6928
        %v6936 = vmul.f32 %v6935, %v6933
        %v6937 = vxor.u32 %v6936, 2147483648
        %v6938 = vsel %vm6855, %v6937, %v6936
        %v6939 = vsub.s32 4, %v6915
        %v6940 = vsel %vm6855, %v6939, %v6915
        %v6941 = vsel %vm6854, %v435, %v6938
        %v6942 = vsel %vm6854, 0, %v6940
        %v6943 = vcosq.f32.pop %v6941
        %v6944 = vsinq.f32.pop %v6941
        %vm6945 = vweird.f32 %v435
        %v6946 = vadd.s32 %v6942, 3
        %v6947 = vand.u32 %v6946, 3
        %vm6948 = vcmp.lt.s32.totalorder %v6947, 2
        %vm6949 = vcmp.eq.s32.totalorder %v6947, 0
        %v6950 = vxor.u32 %v6944, 2147483648
        %v6951 = vsel %vm6949, %v6943, %v6950
        %vm6952 = vcmp.eq.s32.totalorder %v6947, 2
        %v6953 = vxor.u32 %v6943, 2147483648
        %v6954 = vsel %vm6952, %v6953, %v6944
        %v6955 = vsel %vm6948, %v6951, %v6954
        %v6956 = vsel %vm6945, nan, %v6955
        %v6957 = vand.u32 2147483647, %v436
        %vm6958 = vcmp.le.f32.partialorder %v6957, 0.7853982
        %vm6959 = vcmp.lt.s32.totalorder %v436, 0
        %v6960 = vand.u32 %v436, 2139095040
        %v6961 = vshrl.u32 %v6960, 23
        %v6962 = vsub.s32 %v6961, 127
        %v6963 = vand.u32 2147483647, %v436
        %v6964 = vand.u32 %v6963, 8388607
        %v6965 = vor.u32 %v6964, 8388608
        %v6966 = vsub.s32 0, %v6965
        %v6967 = vadd.s32 %v6962, 1
        %vm6968 = vcmp.gt.s32.totalorder %v6967, 0
        %v6969 = vsel %vm6968, %v6967, 0
        %v6970 = vshrl.u32 %v6969, 5
        %v6971 = vand.u32 %v6969, 31
        %v6972 = vsub.s32 32, %v6971
        %v6973 = vshrl.u32 683565275, %v6972
        %v6974 = vshll.u32 683565275, %v6971
        %v6975 = vshrl.u32 2475754826, %v6972
        %v6976 = vor.u32 %v6974, %v6975
        %v6977 = vshll.u32 2475754826, %v6971
        %v6978 = vshrl.u32 2131351028, %v6972
        %v6979 = vor.u32 %v6977, %v6978
        %v6980 = vshll.u32 2131351028, %v6971
        %v6981 = vshrl.u32 2102212464, %v6972
        %v6982 = vor.u32 %v6980, %v6981
        %v6983 = vshll.u32 2102212464, %v6971
        %v6984 = vshrl.u32 920167782, %v6972
        %v6985 = vor.u32 %v6983, %v6984
        %v6986 = vshll.u32 920167782, %v6971
        %v6987 = vshrl.u32 1326507024, %v6972
        %v6988 = vor.u32 %v6986, %v6987
        %vm6989 = vcmp.lt.s32.totalorder %v6970, 1
        %vm6990 = vcmp.lt.s32.totalorder %v6970, 2
        %vm6991 = vcmp.lt.s32.totalorder %v6970, 3
        %vm6992 = vcmp.lt.s32.totalorder %v6970, 4
        %v6993 = vsel %vm6989, %v6973, %v6976
        %v6994 = vsel %vm6992, %v6982, 2102212464
        %v6995 = vsel %vm6991, %v6979, %v6994
        %v6996 = vsel %vm6990, %v6993, %v6995
        %v6997 = vsel %vm6989, %v6976, %v6979
        %v6998 = vsel %vm6992, %v6985, 920167782
        %v6999 = vsel %vm6991, %v6982, %v6998
        %v7000 = vsel %vm6990, %v6997, %v6999
        %v7001 = vsel %vm6989, %v6979, %v6982
        %v7002 = vsel %vm6992, %v6988, 1326507024
        %v7003 = vsel %vm6991, %v6985, %v7002
        %v7004 = vsel %vm6990, %v7001, %v7003
        %v7005 = vshll.u32 %v6965, 8
        %v7006 = vmul.u32.u64.compose %v7005, %v7004
        %v7007 = vextract.low.u32 %v7006
        %v7008 = vextract.high.u32 %v7006
        %v7009 = vmul.u32.u64.compose %v7005, %v7000
        %v7010 = vextract.low.u32 %v7009
        %v7011 = vextract.high.u32 %v7009
        %v7012 = vmul.u32 %v7005, %v6996
        %v7013 = vadd.s32 %v7008, %v7010
        %vm7014 = vc.u32 %v7008, %v7010
        %v7015 = vadd.s32 %v7011, 1
        %v7016 = vsel %vm7014, %v7015, %v7011
        %v7017 = vadd.s32 %v7012, %v7016
        %v7018 = vadd.s32 %v7017, 536870912
        %v7019 = vshrl.u32 %v7018, 30
        %v7020 = vshll.u32 %v7019, 30
        %v7021 = vsub.s32 %v7017, %v7020
        %vm7022 = vcmp.lt.s32.totalorder %v7021, 0
        %v7023 = vsub.s32 0, %v7021
        %v7024 = vsel %vm7022, %v7023, %v7021
        %v7025 = vclz %v7024
        %v7026 = vsub.s32 %v7025, 2
        %vm7027 = vcmp.gt.s32.totalorder 0, %v7026
        %v7028 = vsel %vm7027, 0, %v7026
        %v7029 = vsub.s32 32, %v7028
        %v7030 = vshll.u32 %v7021, %v7028
        %v7031 = vshrl.u32 %v7013, %v7029
        %v7032 = vor.u32 %v7030, %v7031
        %v7033 = vsub.s32 4294967266, %v7028
        %v7034 = vadd.s32 %v7033, 127
        %v7035 = vshll.u32 %v7034, 23
        %v7036 = vor.u32 4788187, %v7035
        %v7037 = vand.u32 2147483647, %v7036
        %v7039 = vcvt.s32.f32 %v7032
        %v7040 = vmul.f32 %v7039, %v7037
        %v7041 = vxor.u32 %v7040, 2147483648
        %v7042 = vsel %vm6959, %v7041, %v7040
        %v7043 = vsub.s32 4, %v7019
        %v7044 = vsel %vm6959, %v7043, %v7019
        %v7045 = vsel %vm6958, %v436, %v7042
        %v7046 = vsel %vm6958, 0, %v7044
        %v7047 = vcosq.f32.pop %v7045
        %v7048 = vsinq.f32.pop %v7045
        %vm7049 = vweird.f32 %v436
        %v7050 = vadd.s32 %v7046, 3
        %v7051 = vand.u32 %v7050, 3
        %vm7052 = vcmp.lt.s32.totalorder %v7051, 2
        %vm7053 = vcmp.eq.s32.totalorder %v7051, 0
        %v7054 = vxor.u32 %v7048, 2147483648
        %v7055 = vsel %vm7053, %v7047, %v7054
        %vm7056 = vcmp.eq.s32.totalorder %v7051, 2
        %v7057 = vxor.u32 %v7047, 2147483648
        %v7058 = vsel %vm7056, %v7057, %v7048
        %v7059 = vsel %vm7052, %v7055, %v7058
        %v7060 = vsel %vm7049, nan, %v7059
        %v7061 = vmul.f32 %v309, %v539
        %v7062 = vmul.f32 %v311, %v745
        %v7063 = vmul.f32 %v313, %v951
        %v7064 = vmul.f32 %v315, %v1157
        %v7065 = vmul.f32 %v317, %v1363
        %v7066 = vmul.f32 %v319, %v1569
        %v7067 = vmul.f32 %v321, %v1775
        %v7068 = vmul.f32 %v323, %v1981
        %v7069 = vmul.f32 %v325, %v2187
        %v7070 = vmul.f32 %v327, %v2393
        %v7071 = vmul.f32 %v329, %v2599
        %v7072 = vmul.f32 %v331, %v2805
        %v7073 = vmul.f32 %v333, %v3011
        %v7074 = vmul.f32 %v335, %v3217
        %v7075 = vmul.f32 %v337, %v3423
        %v7076 = vmul.f32 %v339, %v3629
        %v7077 = vmul.f32 %v310, %v3836
        %v7078 = vmul.f32 %v312, %v4044
        %v7079 = vmul.f32 %v314, %v4252
        %v7080 = vmul.f32 %v316, %v4460
        %v7081 = vmul.f32 %v318, %v4668
        %v7082 = vmul.f32 %v320, %v4876
        %v7083 = vmul.f32 %v322, %v5084
        %v7084 = vmul.f32 %v324, %v5292
        %v7085 = vmul.f32 %v326, %v5500
        %v7086 = vmul.f32 %v328, %v5708
        %v7087 = vmul.f32 %v330, %v5916
        %v7088 = vmul.f32 %v332, %v6124
        %v7089 = vmul.f32 %v334, %v6332
        %v7090 = vmul.f32 %v336, %v6540
        %v7091 = vmul.f32 %v338, %v6748
        %v7092 = vmul.f32 %v340, %v6956
        %v7093 = vsub.f32 %v7061, %v7077
        %v7094 = vsub.f32 %v7062, %v7078
        %v7095 = vsub.f32 %v7063, %v7079
        %v7096 = vsub.f32 %v7064, %v7080
        %v7097 = vsub.f32 %v7065, %v7081
        %v7098 = vsub.f32 %v7066, %v7082
        %v7099 = vsub.f32 %v7067, %v7083
        %v7100 = vsub.f32 %v7068, %v7084
        %v7101 = vsub.f32 %v7069, %v7085
        %v7102 = vsub.f32 %v7070, %v7086
        %v7103 = vsub.f32 %v7071, %v7087
        %v7104 = vsub.f32 %v7072, %v7088
        %v7105 = vsub.f32 %v7073, %v7089
        %v7106 = vsub.f32 %v7074, %v7090
        %v7107 = vsub.f32 %v7075, %v7091
        %v7108 = vsub.f32 %v7076, %v7092
        %v7109 = vmul.f32 %v309, %v3836
        %v7110 = vmul.f32 %v311, %v4044
        %v7111 = vmul.f32 %v313, %v4252
        %v7112 = vmul.f32 %v315, %v4460
        %v7113 = vmul.f32 %v317, %v4668
        %v7114 = vmul.f32 %v319, %v4876
        %v7115 = vmul.f32 %v321, %v5084
        %v7116 = vmul.f32 %v323, %v5292
        %v7117 = vmul.f32 %v325, %v5500
        %v7118 = vmul.f32 %v327, %v5708
        %v7119 = vmul.f32 %v329, %v5916
        %v7120 = vmul.f32 %v331, %v6124
        %v7121 = vmul.f32 %v333, %v6332
        %v7122 = vmul.f32 %v335, %v6540
        %v7123 = vmul.f32 %v337, %v6748
        %v7124 = vmul.f32 %v339, %v6956
        %v7125 = vmul.f32 %v310, %v539
        %v7126 = vmul.f32 %v312, %v745
        %v7127 = vmul.f32 %v314, %v951
        %v7128 = vmul.f32 %v316, %v1157
        %v7129 = vmul.f32 %v318, %v1363
        %v7130 = vmul.f32 %v320, %v1569
        %v7131 = vmul.f32 %v322, %v1775
        %v7132 = vmul.f32 %v324, %v1981
        %v7133 = vmul.f32 %v326, %v2187
        %v7134 = vmul.f32 %v328, %v2393
        %v7135 = vmul.f32 %v330, %v2599
        %v7136 = vmul.f32 %v332, %v2805
        %v7137 = vmul.f32 %v334, %v3011
        %v7138 = vmul.f32 %v336, %v3217
        %v7139 = vmul.f32 %v338, %v3423
        %v7140 = vmul.f32 %v340, %v3629
        %v7141 = vadd.f32 %v7109, %v7125
        %v7142 = vadd.f32 %v7110, %v7126
        %v7143 = vadd.f32 %v7111, %v7127
        %v7144 = vadd.f32 %v7112, %v7128
        %v7145 = vadd.f32 %v7113, %v7129
        %v7146 = vadd.f32 %v7114, %v7130
        %v7147 = vadd.f32 %v7115, %v7131
        %v7148 = vadd.f32 %v7116, %v7132
        %v7149 = vadd.f32 %v7117, %v7133
        %v7150 = vadd.f32 %v7118, %v7134
        %v7151 = vadd.f32 %v7119, %v7135
        %v7152 = vadd.f32 %v7120, %v7136
        %v7153 = vadd.f32 %v7121, %v7137
        %v7154 = vadd.f32 %v7122, %v7138
        %v7155 = vadd.f32 %v7123, %v7139
        %v7156 = vadd.f32 %v7124, %v7140
        %v7157 = vmul.f32 %v373, %v642
        %v7158 = vmul.f32 %v375, %v848
        %v7159 = vmul.f32 %v377, %v1054
        %v7160 = vmul.f32 %v379, %v1260
        %v7161 = vmul.f32 %v381, %v1466
        %v7162 = vmul.f32 %v383, %v1672
        %v7163 = vmul.f32 %v385, %v1878
        %v7164 = vmul.f32 %v387, %v2084
        %v7165 = vmul.f32 %v389, %v2290
        %v7166 = vmul.f32 %v391, %v2496
        %v7167 = vmul.f32 %v393, %v2702
        %v7168 = vmul.f32 %v395, %v2908
        %v7169 = vmul.f32 %v397, %v3114
        %v7170 = vmul.f32 %v399, %v3320
        %v7171 = vmul.f32 %v401, %v3526
        %v7172 = vmul.f32 %v403, %v3732
        %v7173 = vmul.f32 %v374, %v3940
        %v7174 = vmul.f32 %v376, %v4148
        %v7175 = vmul.f32 %v378, %v4356
        %v7176 = vmul.f32 %v380, %v4564
        %v7177 = vmul.f32 %v382, %v4772
        %v7178 = vmul.f32 %v384, %v4980
        %v7179 = vmul.f32 %v386, %v5188
        %v7180 = vmul.f32 %v388, %v5396
        %v7181 = vmul.f32 %v390, %v5604
        %v7182 = vmul.f32 %v392, %v5812
        %v7183 = vmul.f32 %v394, %v6020
        %v7184 = vmul.f32 %v396, %v6228
        %v7185 = vmul.f32 %v398, %v6436
        %v7186 = vmul.f32 %v400, %v6644
        %v7187 = vmul.f32 %v402, %v6852
        %v7188 = vmul.f32 %v404, %v7060
        %v7189 = vsub.f32 %v7157, %v7173
        %v7190 = vsub.f32 %v7158, %v7174
        %v7191 = vsub.f32 %v7159, %v7175
        %v7192 = vsub.f32 %v7160, %v7176
        %v7193 = vsub.f32 %v7161, %v7177
        %v7194 = vsub.f32 %v7162, %v7178
        %v7195 = vsub.f32 %v7163, %v7179
        %v7196 = vsub.f32 %v7164, %v7180
        %v7197 = vsub.f32 %v7165, %v7181
        %v7198 = vsub.f32 %v7166, %v7182
        %v7199 = vsub.f32 %v7167, %v7183
        %v7200 = vsub.f32 %v7168, %v7184
        %v7201 = vsub.f32 %v7169, %v7185
        %v7202 = vsub.f32 %v7170, %v7186
        %v7203 = vsub.f32 %v7171, %v7187
        %v7204 = vsub.f32 %v7172, %v7188
        %v7205 = vmul.f32 %v373, %v3940
        %v7206 = vmul.f32 %v375, %v4148
        %v7207 = vmul.f32 %v377, %v4356
        %v7208 = vmul.f32 %v379, %v4564
        %v7209 = vmul.f32 %v381, %v4772
        %v7210 = vmul.f32 %v383, %v4980
        %v7211 = vmul.f32 %v385, %v5188
        %v7212 = vmul.f32 %v387, %v5396
        %v7213 = vmul.f32 %v389, %v5604
        %v7214 = vmul.f32 %v391, %v5812
        %v7215 = vmul.f32 %v393, %v6020
        %v7216 = vmul.f32 %v395, %v6228
        %v7217 = vmul.f32 %v397, %v6436
        %v7218 = vmul.f32 %v399, %v6644
        %v7219 = vmul.f32 %v401, %v6852
        %v7220 = vmul.f32 %v403, %v7060
        %v7221 = vmul.f32 %v374, %v642
        %v7222 = vmul.f32 %v376, %v848
        %v7223 = vmul.f32 %v378, %v1054
        %v7224 = vmul.f32 %v380, %v1260
        %v7225 = vmul.f32 %v382, %v1466
        %v7226 = vmul.f32 %v384, %v1672
        %v7227 = vmul.f32 %v386, %v1878
        %v7228 = vmul.f32 %v388, %v2084
        %v7229 = vmul.f32 %v390, %v2290
        %v7230 = vmul.f32 %v392, %v2496
        %v7231 = vmul.f32 %v394, %v2702
        %v7232 = vmul.f32 %v396, %v2908
        %v7233 = vmul.f32 %v398, %v3114
        %v7234 = vmul.f32 %v400, %v3320
        %v7235 = vmul.f32 %v402, %v3526
        %v7236 = vmul.f32 %v404, %v3732
        %v7237 = vadd.f32 %v7205, %v7221
        %v7238 = vadd.f32 %v7206, %v7222
        %v7239 = vadd.f32 %v7207, %v7223
        %v7240 = vadd.f32 %v7208, %v7224
        %v7241 = vadd.f32 %v7209, %v7225
        %v7242 = vadd.f32 %v7210, %v7226
        %v7243 = vadd.f32 %v7211, %v7227
        %v7244 = vadd.f32 %v7212, %v7228
        %v7245 = vadd.f32 %v7213, %v7229
        %v7246 = vadd.f32 %v7214, %v7230
        %v7247 = vadd.f32 %v7215, %v7231
        %v7248 = vadd.f32 %v7216, %v7232
        %v7249 = vadd.f32 %v7217, %v7233
        %v7250 = vadd.f32 %v7218, %v7234
        %v7251 = vadd.f32 %v7219, %v7235
        %v7252 = vadd.f32 %v7220, %v7236
        %v7253 = vsub.f32 %v7093, %v7189
        %v7254 = vsub.f32 %v7094, %v7190
        %v7255 = vsub.f32 %v7095, %v7191
        %v7256 = vsub.f32 %v7096, %v7192
        %v7257 = vsub.f32 %v7097, %v7193
        %v7258 = vsub.f32 %v7098, %v7194
        %v7259 = vsub.f32 %v7099, %v7195
        %v7260 = vsub.f32 %v7100, %v7196
        %v7261 = vsub.f32 %v7101, %v7197
        %v7262 = vsub.f32 %v7102, %v7198
        %v7263 = vsub.f32 %v7103, %v7199
        %v7264 = vsub.f32 %v7104, %v7200
        %v7265 = vsub.f32 %v7105, %v7201
        %v7266 = vsub.f32 %v7106, %v7202
        %v7267 = vsub.f32 %v7107, %v7203
        %v7268 = vsub.f32 %v7108, %v7204
        %v7269 = vsub.f32 %v7141, %v7237
        %v7270 = vsub.f32 %v7142, %v7238
        %v7271 = vsub.f32 %v7143, %v7239
        %v7272 = vsub.f32 %v7144, %v7240
        %v7273 = vsub.f32 %v7145, %v7241
        %v7274 = vsub.f32 %v7146, %v7242
        %v7275 = vsub.f32 %v7147, %v7243
        %v7276 = vsub.f32 %v7148, %v7244
        %v7277 = vsub.f32 %v7149, %v7245
        %v7278 = vsub.f32 %v7150, %v7246
        %v7279 = vsub.f32 %v7151, %v7247
        %v7280 = vsub.f32 %v7152, %v7248
        %v7281 = vsub.f32 %v7153, %v7249
        %v7282 = vsub.f32 %v7154, %v7250
        %v7283 = vsub.f32 %v7155, %v7251
        %v7284 = vsub.f32 %v7156, %v7252
        %v7285 = vmul.f32 %v7253, %v7253
        %v7286 = vmul.f32 %v7254, %v7254
        %v7287 = vmul.f32 %v7255, %v7255
        %v7288 = vmul.f32 %v7256, %v7256
        %v7289 = vmul.f32 %v7257, %v7257
        %v7290 = vmul.f32 %v7258, %v7258
        %v7291 = vmul.f32 %v7259, %v7259
        %v7292 = vmul.f32 %v7260, %v7260
        %v7293 = vmul.f32 %v7261, %v7261
        %v7294 = vmul.f32 %v7262, %v7262
        %v7295 = vmul.f32 %v7263, %v7263
        %v7296 = vmul.f32 %v7264, %v7264
        %v7297 = vmul.f32 %v7265, %v7265
        %v7298 = vmul.f32 %v7266, %v7266
        %v7299 = vmul.f32 %v7267, %v7267
        %v7300 = vmul.f32 %v7268, %v7268
        %v7301 = vmul.f32 %v7269, %v7269
        %v7302 = vmul.f32 %v7270, %v7270
        %v7303 = vmul.f32 %v7271, %v7271
        %v7304 = vmul.f32 %v7272, %v7272
        %v7305 = vmul.f32 %v7273, %v7273
        %v7306 = vmul.f32 %v7274, %v7274
        %v7307 = vmul.f32 %v7275, %v7275
        %v7308 = vmul.f32 %v7276, %v7276
        %v7309 = vmul.f32 %v7277, %v7277
        %v7310 = vmul.f32 %v7278, %v7278
        %v7311 = vmul.f32 %v7279, %v7279
        %v7312 = vmul.f32 %v7280, %v7280
        %v7313 = vmul.f32 %v7281, %v7281
        %v7314 = vmul.f32 %v7282, %v7282
        %v7315 = vmul.f32 %v7283, %v7283
        %v7316 = vmul.f32 %v7284, %v7284
        %v7317 = vadd.f32 %v7285, %v7301
        %v7318 = vadd.f32 %v7286, %v7302
        %v7319 = vadd.f32 %v7287, %v7303
        %v7320 = vadd.f32 %v7288, %v7304
        %v7321 = vadd.f32 %v7289, %v7305
        %v7322 = vadd.f32 %v7290, %v7306
        %v7323 = vadd.f32 %v7291, %v7307
        %v7324 = vadd.f32 %v7292, %v7308
        %v7325 = vadd.f32 %v7293, %v7309
        %v7326 = vadd.f32 %v7294, %v7310
        %v7327 = vadd.f32 %v7295, %v7311
        %v7328 = vadd.f32 %v7296, %v7312
        %v7329 = vadd.f32 %v7297, %v7313
        %v7330 = vadd.f32 %v7298, %v7314
        %v7331 = vadd.f32 %v7299, %v7315
        %v7332 = vadd.f32 %v7300, %v7316
        %v7333 = vmax.f32 %v7317, 1e-30
        %v7334 = vmax.f32 %v7318, 1e-30
        %v7335 = vmax.f32 %v7319, 1e-30
        %v7336 = vmax.f32 %v7320, 1e-30
        %v7337 = vmax.f32 %v7321, 1e-30
        %v7338 = vmax.f32 %v7322, 1e-30
        %v7339 = vmax.f32 %v7323, 1e-30
        %v7340 = vmax.f32 %v7324, 1e-30
        %v7341 = vmax.f32 %v7325, 1e-30
        %v7342 = vmax.f32 %v7326, 1e-30
        %v7343 = vmax.f32 %v7327, 1e-30
        %v7344 = vmax.f32 %v7328, 1e-30
        %v7345 = vmax.f32 %v7329, 1e-30
        %v7346 = vmax.f32 %v7330, 1e-30
        %v7347 = vmax.f32 %v7331, 1e-30
        %v7348 = vmax.f32 %v7332, 1e-30
        %v7349 = vrsqrt.pop %v7333
        %v7350 = vrsqrt.pop %v7334
        %v7351 = vrsqrt.pop %v7335
        %v7352 = vrsqrt.pop %v7336
        %v7353 = vrsqrt.pop %v7337
        %v7354 = vrsqrt.pop %v7338
        %v7355 = vrsqrt.pop %v7339
        %v7356 = vrsqrt.pop %v7340
        %v7357 = vrsqrt.pop %v7341
        %v7358 = vrsqrt.pop %v7342
        %v7359 = vrsqrt.pop %v7343
        %v7360 = vrsqrt.pop %v7344
        %v7361 = vrsqrt.pop %v7345
        %v7362 = vrsqrt.pop %v7346
        %v7363 = vrsqrt.pop %v7347
        %v7364 = vrsqrt.pop %v7348
        %v7365 = vmul.f32 %v7317, %v7349
        %v7366 = vmul.f32 %v7318, %v7350
        %v7367 = vmul.f32 %v7319, %v7351
        %v7368 = vmul.f32 %v7320, %v7352
        %v7369 = vmul.f32 %v7321, %v7353
        %v7370 = vmul.f32 %v7322, %v7354
        %v7371 = vmul.f32 %v7323, %v7355
        %v7372 = vmul.f32 %v7324, %v7356
        %v7373 = vmul.f32 %v7325, %v7357
        %v7374 = vmul.f32 %v7326, %v7358
        %v7375 = vmul.f32 %v7327, %v7359
        %v7376 = vmul.f32 %v7328, %v7360
        %v7377 = vmul.f32 %v7329, %v7361
        %v7378 = vmul.f32 %v7330, %v7362
        %v7379 = vmul.f32 %v7331, %v7363
        %v7380 = vmul.f32 %v7332, %v7364
        %7381 = vadd.xlane.f32.xlu0 %v7365
        %v7382 = vpop.xlane.xlu0 %7381
        %7383 = vadd.xlane.f32.xlu0 %v7366
        %v7384 = vpop.xlane.xlu0 %7383
        %7385 = vadd.xlane.f32.xlu0 %v7367
        %v7386 = vpop.xlane.xlu0 %7385
        %7387 = vadd.xlane.f32.xlu0 %v7368
        %v7388 = vpop.xlane.xlu0 %7387
        %7389 = vadd.xlane.f32.xlu0 %v7369
        %v7390 = vpop.xlane.xlu0 %7389
        %7391 = vadd.xlane.f32.xlu0 %v7370
        %v7392 = vpop.xlane.xlu0 %7391
        %7393 = vadd.xlane.f32.xlu0 %v7371
        %v7394 = vpop.xlane.xlu0 %7393
        %7395 = vadd.xlane.f32.xlu0 %v7372
        %v7396 = vpop.xlane.xlu0 %7395
        %7397 = vadd.xlane.f32.xlu0 %v7373
        %v7398 = vpop.xlane.xlu0 %7397
        %7399 = vadd.xlane.f32.xlu0 %v7374
        %v7400 = vpop.xlane.xlu0 %7399
        %7401 = vadd.xlane.f32.xlu0 %v7375
        %v7402 = vpop.xlane.xlu0 %7401
        %7403 = vadd.xlane.f32.xlu0 %v7376
        %v7404 = vpop.xlane.xlu0 %7403
        %7405 = vadd.xlane.f32.xlu0 %v7377
        %v7406 = vpop.xlane.xlu0 %7405
        %7407 = vadd.xlane.f32.xlu0 %v7378
        %v7408 = vpop.xlane.xlu0 %7407
        %7409 = vadd.xlane.f32.xlu0 %v7379
        %v7410 = vpop.xlane.xlu0 %7409
        %7411 = vadd.xlane.f32.xlu0 %v7380
        %v7412 = vpop.xlane.xlu0 %7411
        %v7413 = vsub.f32 12.0, %v7382
        %v7414 = vsub.f32 12.0, %v7384
        %v7415 = vsub.f32 12.0, %v7386
        %v7416 = vsub.f32 12.0, %v7388
        %v7417 = vsub.f32 12.0, %v7390
        %v7418 = vsub.f32 12.0, %v7392
        %v7419 = vsub.f32 12.0, %v7394
        %v7420 = vsub.f32 12.0, %v7396
        %v7421 = vsub.f32 12.0, %v7398
        %v7422 = vsub.f32 12.0, %v7400
        %v7423 = vsub.f32 12.0, %v7402
        %v7424 = vsub.f32 12.0, %v7404
        %v7425 = vsub.f32 12.0, %v7406
        %v7426 = vsub.f32 12.0, %v7408
        %v7427 = vsub.f32 12.0, %v7410
        %v7428 = vsub.f32 12.0, %v7412
        %vm7429 = vcmask 7168
        %7430 = vst.msk [vmem:[%s285] sm:$0xff] %vm7429, %v7413
        %7431 = vst.msk [vmem:[%s285 + $0x8] sm:$0xff] %vm7429, %v7414
        %7432 = vst.msk [vmem:[%s285 + $0x10] sm:$0xff] %vm7429, %v7415
        %7433 = vst.msk [vmem:[%s285 + $0x18] sm:$0xff] %vm7429, %v7416
        %7434 = vst.msk [vmem:[%s285 + $0x20] sm:$0xff] %vm7429, %v7417
        %7435 = vst.msk [vmem:[%s285 + $0x28] sm:$0xff] %vm7429, %v7418
        %7436 = vst.msk [vmem:[%s285 + $0x30] sm:$0xff] %vm7429, %v7419
        %7437 = vst.msk [vmem:[%s285 + $0x38] sm:$0xff] %vm7429, %v7420
        %7438 = vst.msk [vmem:[%s285 + $0x40] sm:$0xff] %vm7429, %v7421
        %7439 = vst.msk [vmem:[%s285 + $0x48] sm:$0xff] %vm7429, %v7422
        %7440 = vst.msk [vmem:[%s285 + $0x50] sm:$0xff] %vm7429, %v7423
        %7441 = vst.msk [vmem:[%s285 + $0x58] sm:$0xff] %vm7429, %v7424
        %7442 = vst.msk [vmem:[%s285 + $0x60] sm:$0xff] %vm7429, %v7425
        %7443 = vst.msk [vmem:[%s285 + $0x68] sm:$0xff] %vm7429, %v7426
        %7444 = vst.msk [vmem:[%s285 + $0x70] sm:$0xff] %vm7429, %v7427
        %7445 = vst.msk [vmem:[%s285 + $0x78] sm:$0xff] %vm7429, %v7428
        %s7446 = sand.u32 %s106, 1
        %s7447 = sand.u32 %s106, 1
        %s7448 = smul.addr %s7447, 128
        %s7449 = scalar_lea.vmem [#allocation7], %s7448
        // Predicated region
        $region45: #{tpu_custom_call.1} parent=31 // pred_check
          %p7450 = pneg %p116
        $region46: #{tpu_custom_call.1} parent=31 // pred_check_branch
          %7452 = sbr.rel (%p7450) target = $region48
        $region47: #{tpu_custom_call.1} parent=31 // pred_region
          %s7453 = smul.u32 16, %s20
          %s7454 = ssub.s32 38, %s7453
          %p7455 = scmp.lt.s32.totalorder %s7454, 16
          %s7456 = scalar_select %p7455, %s7454, 16
          %s7457 = smul.u32 128, %s7456
          %p7458 = scmp.ne.s32.totalorder 0, %s7457
          %s7459 = smul.addr %s7453, 8
          %s7460 = scalar_lea.vmem %s3, %s7459
          // Predicated region
          $region49: #{tpu_custom_call.1} parent=47 // pred_check
            %p7461 = pneg %p7458
          $region50: #{tpu_custom_call.1} parent=47 // pred_check_branch
            %7463 = sbr.rel (%p7461) target = $region52
          $region51: #{tpu_custom_call.1} parent=47 // pred_region
            // Predicated region
            $region53: #{tpu_custom_call.1} parent=51 // pred_check
              _
            $region54: #{tpu_custom_call.1} parent=51 // pred_check_branch
              %7465 = sbr.rel (0) target = $region56
            $region55: #{tpu_custom_call.1} parent=51 // pred_region
              // Predicated region
              $region75: #{tpu_custom_call.1} parent=55 // pred_check
                _
              $region76: #{tpu_custom_call.1} parent=55 // pred_check_branch
                %7544 = sbr.rel (0) target = $region78
              $region77: #{tpu_custom_call.1} parent=55 // pred_region
                %s7545 = sshrl.u32 %s7456, 4
                // While loop
                $region79: #{tpu_custom_call.1} parent=77 // loop_pre_header
                  _
                $region80: #{tpu_custom_call.1} parent=77 // loop_header
                  %s7547 = sphi 0, %s7549
                  %p7548 = scmp.ge.s32.totalorder %s7547, %s7545
                  %s7552 = sphi 0, %s7589
                  %s7553 = sphi %s7449, %s7592
                  %s7554 = sphi %s7460, %s7593
                $region81: #{tpu_custom_call.1} parent=77 // loop_header_branch
                  %7551 = sbr.rel (%p7548) target = $region85
                $region82: #{tpu_custom_call.1} parent=77 // loop_body
                  %v7555 = vld [vmem:[%s7553] sm:$0xff]
                  %7556 = vst [vmem:[%s7554] sm:$0xff] %v7555
                  %v7557 = vld [vmem:[%s7553 + $0x8] sm:$0xff]
                  %7558 = vst [vmem:[%s7554 + $0x8] sm:$0xff] %v7557
                  %v7559 = vld [vmem:[%s7553 + $0x10] sm:$0xff]
                  %7560 = vst [vmem:[%s7554 + $0x10] sm:$0xff] %v7559
                  %v7561 = vld [vmem:[%s7553 + $0x18] sm:$0xff]
                  %7562 = vst [vmem:[%s7554 + $0x18] sm:$0xff] %v7561
                  %v7563 = vld [vmem:[%s7553 + $0x20] sm:$0xff]
                  %7564 = vst [vmem:[%s7554 + $0x20] sm:$0xff] %v7563
                  %v7565 = vld [vmem:[%s7553 + $0x28] sm:$0xff]
                  %7566 = vst [vmem:[%s7554 + $0x28] sm:$0xff] %v7565
                  %v7567 = vld [vmem:[%s7553 + $0x30] sm:$0xff]
                  %7568 = vst [vmem:[%s7554 + $0x30] sm:$0xff] %v7567
                  %v7569 = vld [vmem:[%s7553 + $0x38] sm:$0xff]
                  %7570 = vst [vmem:[%s7554 + $0x38] sm:$0xff] %v7569
                  %v7571 = vld [vmem:[%s7553 + $0x40] sm:$0xff]
                  %7572 = vst [vmem:[%s7554 + $0x40] sm:$0xff] %v7571
                  %v7573 = vld [vmem:[%s7553 + $0x48] sm:$0xff]
                  %7574 = vst [vmem:[%s7554 + $0x48] sm:$0xff] %v7573
                  %v7575 = vld [vmem:[%s7553 + $0x50] sm:$0xff]
                  %7576 = vst [vmem:[%s7554 + $0x50] sm:$0xff] %v7575
                  %v7577 = vld [vmem:[%s7553 + $0x58] sm:$0xff]
                  %7578 = vst [vmem:[%s7554 + $0x58] sm:$0xff] %v7577
                  %v7579 = vld [vmem:[%s7553 + $0x60] sm:$0xff]
                  %7580 = vst [vmem:[%s7554 + $0x60] sm:$0xff] %v7579
                  %v7581 = vld [vmem:[%s7553 + $0x68] sm:$0xff]
                  %7582 = vst [vmem:[%s7554 + $0x68] sm:$0xff] %v7581
                  %v7583 = vld [vmem:[%s7553 + $0x70] sm:$0xff]
                  %7584 = vst [vmem:[%s7554 + $0x70] sm:$0xff] %v7583
                  %v7585 = vld [vmem:[%s7553 + $0x78] sm:$0xff]
                  %7586 = vst [vmem:[%s7554 + $0x78] sm:$0xff] %v7585
                  %s7587 = sadd.s32 1, %s7552
                  %p7588 = scmp.ge.s32.totalorder %s7587, %s7545
                  %s7589 = scalar_select %p7588, 0, %s7587
                  %s7590 = smul.u32 %s7589, 128
                  %s7591 = smul.u32 %s7589, 128
                  %s7592 = scalar_lea.vmem %s7449, %s7590 [#allocation7]
                  %s7593 = scalar_lea.vmem %s7460, %s7591
                $region83: #{tpu_custom_call.1} parent=77 // loop_footer
                  %s7549 = sadd.s32 %s7547, 1
                $region84: #{tpu_custom_call.1} parent=77 // loop_footer_branch
                  %7546 = sbr.rel target = $region80
                $region85: #{tpu_custom_call.1} parent=77 // loop_exit
                  _
                %s7594 = sshrl.u32 %s7456, 4
                %s7595 = sand.u32 %s7456, 15
                %s7596 = smul.u32 %s7594, 16
                %s7597 = smul.u32 8, %s7596
                %s7598 = scalar_lea.vmem %s7449, %s7597 [#allocation7]
                %s7599 = smul.u32 8, %s7596
                %s7600 = scalar_lea.vmem %s7460, %s7599
                // While loop
                $region86: #{tpu_custom_call.1} parent=77 // loop_pre_header
                  _
                $region87: #{tpu_custom_call.1} parent=77 // loop_header
                  %s7602 = sphi 0, %s7604
                  %p7603 = scmp.ge.s32.totalorder %s7602, %s7595
                  %s7607 = sphi 0, %s7614
                  %s7608 = sphi %s7598, %s7617
                  %s7609 = sphi %s7600, %s7618
                $region88: #{tpu_custom_call.1} parent=77 // loop_header_branch
                  %7606 = sbr.rel (%p7603) target = $region92
                $region89: #{tpu_custom_call.1} parent=77 // loop_body
                  %v7610 = vld [vmem:[%s7608] sm:$0xff]
                  %7611 = vst [vmem:[%s7609] sm:$0xff] %v7610
                  %s7612 = sadd.s32 1, %s7607
                  %p7613 = scmp.ge.s32.totalorder %s7612, %s7595
                  %s7614 = scalar_select %p7613, 0, %s7612
                  %s7615 = smul.u32 %s7614, 8
                  %s7616 = smul.u32 %s7614, 8
                  %s7617 = scalar_lea.vmem %s7598, %s7615 [#allocation7]
                  %s7618 = scalar_lea.vmem %s7600, %s7616
                $region90: #{tpu_custom_call.1} parent=77 // loop_footer
                  %s7604 = sadd.s32 %s7602, 1
                $region91: #{tpu_custom_call.1} parent=77 // loop_footer_branch
                  %7601 = sbr.rel target = $region87
                $region92: #{tpu_custom_call.1} parent=77 // loop_exit
                  _
              $region78: #{tpu_custom_call.1} parent=55 // pred_fallthru
                _
              // Predicated region
              $region93: #{tpu_custom_call.1} parent=55 // pred_check
                _
              $region94: #{tpu_custom_call.1} parent=55 // pred_check_branch
                %7620 = sbr.rel target = $region96
              $region95: #{tpu_custom_call.1} parent=55 // pred_region
                _
              $region96: #{tpu_custom_call.1} parent=55 // pred_fallthru
                _
            $region56: #{tpu_custom_call.1} parent=51 // pred_fallthru
              _
            // Predicated region
            $region57: #{tpu_custom_call.1} parent=51 // pred_check
              _
            $region58: #{tpu_custom_call.1} parent=51 // pred_check_branch
              %7467 = sbr.rel target = $region60
            $region59: #{tpu_custom_call.1} parent=51 // pred_region
              %s7469 = sshrl.u32 %s7456, 4
              // While loop
              $region61: #{tpu_custom_call.1} parent=59 // loop_pre_header
                _
              $region62: #{tpu_custom_call.1} parent=59 // loop_header
                %s7471 = sphi 0, %s7473
                %p7472 = scmp.ge.s32.totalorder %s7471, %s7469
                %s7476 = sphi 0, %s7513
                %s7477 = sphi %s7449, %s7516
                %s7478 = sphi %s7460, %s7517
              $region63: #{tpu_custom_call.1} parent=59 // loop_header_branch
                %7475 = sbr.rel (%p7472) target = $region67
              $region64: #{tpu_custom_call.1} parent=59 // loop_body
                %v7479 = vld [vmem:[%s7477] sm:$0xff]
                %7480 = vst [vmem:[%s7478] sm:$0xff] %v7479
                %v7481 = vld [vmem:[%s7477 + $0x8] sm:$0xff]
                %7482 = vst [vmem:[%s7478 + $0x8] sm:$0xff] %v7481
                %v7483 = vld [vmem:[%s7477 + $0x10] sm:$0xff]
                %7484 = vst [vmem:[%s7478 + $0x10] sm:$0xff] %v7483
                %v7485 = vld [vmem:[%s7477 + $0x18] sm:$0xff]
                %7486 = vst [vmem:[%s7478 + $0x18] sm:$0xff] %v7485
                %v7487 = vld [vmem:[%s7477 + $0x20] sm:$0xff]
                %7488 = vst [vmem:[%s7478 + $0x20] sm:$0xff] %v7487
                %v7489 = vld [vmem:[%s7477 + $0x28] sm:$0xff]
                %7490 = vst [vmem:[%s7478 + $0x28] sm:$0xff] %v7489
                %v7491 = vld [vmem:[%s7477 + $0x30] sm:$0xff]
                %7492 = vst [vmem:[%s7478 + $0x30] sm:$0xff] %v7491
                %v7493 = vld [vmem:[%s7477 + $0x38] sm:$0xff]
                %7494 = vst [vmem:[%s7478 + $0x38] sm:$0xff] %v7493
                %v7495 = vld [vmem:[%s7477 + $0x40] sm:$0xff]
                %7496 = vst [vmem:[%s7478 + $0x40] sm:$0xff] %v7495
                %v7497 = vld [vmem:[%s7477 + $0x48] sm:$0xff]
                %7498 = vst [vmem:[%s7478 + $0x48] sm:$0xff] %v7497
                %v7499 = vld [vmem:[%s7477 + $0x50] sm:$0xff]
                %7500 = vst [vmem:[%s7478 + $0x50] sm:$0xff] %v7499
                %v7501 = vld [vmem:[%s7477 + $0x58] sm:$0xff]
                %7502 = vst [vmem:[%s7478 + $0x58] sm:$0xff] %v7501
                %v7503 = vld [vmem:[%s7477 + $0x60] sm:$0xff]
                %7504 = vst [vmem:[%s7478 + $0x60] sm:$0xff] %v7503
                %v7505 = vld [vmem:[%s7477 + $0x68] sm:$0xff]
                %7506 = vst [vmem:[%s7478 + $0x68] sm:$0xff] %v7505
                %v7507 = vld [vmem:[%s7477 + $0x70] sm:$0xff]
                %7508 = vst [vmem:[%s7478 + $0x70] sm:$0xff] %v7507
                %v7509 = vld [vmem:[%s7477 + $0x78] sm:$0xff]
                %7510 = vst [vmem:[%s7478 + $0x78] sm:$0xff] %v7509
                %s7511 = sadd.s32 1, %s7476
                %p7512 = scmp.ge.s32.totalorder %s7511, %s7469
                %s7513 = scalar_select %p7512, 0, %s7511
                %s7514 = smul.u32 %s7513, 128
                %s7515 = smul.u32 %s7513, 128
                %s7516 = scalar_lea.vmem %s7449, %s7514 [#allocation7]
                %s7517 = scalar_lea.vmem %s7460, %s7515
              $region65: #{tpu_custom_call.1} parent=59 // loop_footer
                %s7473 = sadd.s32 %s7471, 1
              $region66: #{tpu_custom_call.1} parent=59 // loop_footer_branch
                %7470 = sbr.rel target = $region62
              $region67: #{tpu_custom_call.1} parent=59 // loop_exit
                _
              %s7518 = sshrl.u32 %s7456, 4
              %s7519 = sand.u32 %s7456, 15
              %s7520 = smul.u32 %s7518, 16
              %s7521 = smul.u32 8, %s7520
              %s7522 = scalar_lea.vmem %s7449, %s7521 [#allocation7]
              %s7523 = smul.u32 8, %s7520
              %s7524 = scalar_lea.vmem %s7460, %s7523
              // While loop
              $region68: #{tpu_custom_call.1} parent=59 // loop_pre_header
                _
              $region69: #{tpu_custom_call.1} parent=59 // loop_header
                %s7526 = sphi 0, %s7528
                %p7527 = scmp.ge.s32.totalorder %s7526, %s7519
                %s7531 = sphi 0, %s7538
                %s7532 = sphi %s7522, %s7541
                %s7533 = sphi %s7524, %s7542
              $region70: #{tpu_custom_call.1} parent=59 // loop_header_branch
                %7530 = sbr.rel (%p7527) target = $region74
              $region71: #{tpu_custom_call.1} parent=59 // loop_body
                %v7534 = vld [vmem:[%s7532] sm:$0xff]
                %7535 = vst [vmem:[%s7533] sm:$0xff] %v7534
                %s7536 = sadd.s32 1, %s7531
                %p7537 = scmp.ge.s32.totalorder %s7536, %s7519
                %s7538 = scalar_select %p7537, 0, %s7536
                %s7539 = smul.u32 %s7538, 8
                %s7540 = smul.u32 %s7538, 8
                %s7541 = scalar_lea.vmem %s7522, %s7539 [#allocation7]
                %s7542 = scalar_lea.vmem %s7524, %s7540
              $region72: #{tpu_custom_call.1} parent=59 // loop_footer
                %s7528 = sadd.s32 %s7526, 1
              $region73: #{tpu_custom_call.1} parent=59 // loop_footer_branch
                %7525 = sbr.rel target = $region69
              $region74: #{tpu_custom_call.1} parent=59 // loop_exit
                _
            $region60: #{tpu_custom_call.1} parent=51 // pred_fallthru
              _
          $region52: #{tpu_custom_call.1} parent=47 // pred_fallthru
            _
          %7621 = vnop
        $region48: #{tpu_custom_call.1} parent=31 // pred_fallthru
          _
      $region32: #{tpu_custom_call.1} parent=5 // pred_fallthru
        _
      %p7622 = scmp.le.s32.totalorder 2, %s15
      // Predicated region
      $region97: #{tpu_custom_call.1} parent=5 // pred_check
        %p7623 = pneg %p7622
      $region98: #{tpu_custom_call.1} parent=5 // pred_check_branch
        %7625 = sbr.rel (%p7623) target = $region100
      $region99: #{tpu_custom_call.1} parent=5 // pred_region
        %s7626 = ssub.s32 %s15, 2
        // Predicated region
        $region101: #{tpu_custom_call.1} parent=99 // pred_check
          %p7627 = pneg %p122
        $region102: #{tpu_custom_call.1} parent=99 // pred_check_branch
          %7629 = sbr.rel (%p7627) target = $region104
        $region103: #{tpu_custom_call.1} parent=99 // pred_region
          %s7630 = sand.u32 %s107, 1
          %s7631 = sand.u32 %s107, 1
          %s7632 = smul.addr %s7631, 128
          %s7633 = scalar_lea.vmem [#allocation7], %s7632
        $region104: #{tpu_custom_call.1} parent=99 // pred_fallthru
          _
      $region100: #{tpu_custom_call.1} parent=5 // pred_fallthru
        _
    $region6: #{tpu_custom_call.1} parent=1 // loop_footer
      %s19 = sadd.s32 1, %s15
    $region7: #{tpu_custom_call.1} parent=1 // loop_footer_branch
      %14 = sbr.rel target = $region3
    $region8: #{tpu_custom_call.1} parent=1 // loop_exit
      _
    %7634 = vsyncpa [#allocation3], 1
    %s7635 = scalar_lea.sflag [#allocation3], 1
    %7636 = vsyncpa %s7635, 1
    %7637 = vsyncpa [#allocation5], 1
    %s7638 = scalar_lea.sflag [#allocation5], 1
    %7639 = vsyncpa %s7638, 1

</llo_original>
